<compile_context>
chip_gen: v6e
topology: v6e:2x2x1
jax: 0.10.0
libtpu: 0.0.40
codegen_flags: <defaults>
</compile_context>

<pallas_src>
import functools

import jax
import jax.numpy as jnp
from jax import lax
from jax.experimental import pallas as pl
from jax.experimental.pallas import tpu as pltpu

RATIO = 0.8          # TopKPooling ratio
F = 128              # GraphConv hidden width
NEG = -jnp.inf


# ------------------------------- fused forward kernel -------------------------------

def net_kernel(num_graphs,
               x_ref, a_ref, b_ref, m0_ref,
               wconv_ref, wmlp_ref, vec_ref,
               o_ref):
    """One graph-batch: 3x (conv + top-k pool + readout) + MLP head, all VMEM resident."""
    f32, bf16 = jnp.float32, jnp.bfloat16
    N = x_ref.shape[0]
    G = num_graphs
    NPG = N // G                                   # node slots per graph (contiguous layout)

    h = x_ref[...]                                 # (N,F) f32 node features (zero padded)
    m_c = m0_ref[...]                              # (N,1) f32 alive mask (1 real / 0 padding)
    ones_col = jnp.ones((N, 1), f32)               # RHS for MXU row-sums

    gmp_sum = jnp.zeros((G, F), f32)
    gap_sum = jnp.zeros((G, F), f32)

    for l in range(3):
        w_rel = wconv_ref[(2 * l) * F:(2 * l + 1) * F, :]          # (F,F) bf16
        w_root = wconv_ref[(2 * l + 1) * F:(2 * l + 2) * F, :]     # (F,F) bf16
        p_col = wconv_ref[6 * F:7 * F, l:l + 1]                    # (F,1) bf16, p/||p||
        bias = vec_ref[l:l + 1, :]                                 # (1,F) f32

        # ---- GraphConv + ReLU:  relu((A@h) @ W_rel + h @ W_root + b)   (two MXU dots)
        hb = h.astype(bf16)
        agg = jnp.dot(a_ref[...], hb, preferred_element_type=f32)              # (N,F)
        h = jnp.maximum(
            jnp.dot(agg.astype(bf16), w_rel, preferred_element_type=f32)
            + jnp.dot(hb, w_root, preferred_element_type=f32) + bias, 0.0)

        # ---- TopKPooling(ratio): dense pairwise ranking, row-sums on the MXU
        raw_c = jnp.dot(h.astype(bf16), p_col, preferred_element_type=f32)     # (N,1) = h @ p_hat
        score_c = jnp.tanh(raw_c)                                              # (N,1)
        s_c = jnp.where(m_c > 0, score_c, NEG)                                 # (N,1)
        s_i = jnp.broadcast_to(s_c, (N, N))                                    # score_i at [i,j]
        s_j = jnp.transpose(s_i)                                               # score_j at [i,j]

        ii = lax.broadcasted_iota(jnp.int32, (N, 1), 0)                        # node index i
        jj = lax.broadcasted_iota(jnp.int32, (1, N), 1)                        # node index j
        g_i = jnp.floor((ii.astype(f32) + 0.5) * (1.0 / NPG))                  # graph of i
        g_j = jnp.floor((jj.astype(f32) + 0.5) * (1.0 / NPG))                  # graph of j
        alive_pair = (g_i == g_j) & (m_c > 0) & (s_j > -2.0)                   # (N,N)
        beats = (s_j > s_i) | ((s_j == s_i) & (jj < ii))                       # j outranks i
        rank_c = jnp.dot(jnp.where(alive_pair & beats, 1.0, 0.0), ones_col,
                         preferred_element_type=f32)                           # (N,1)
        n_c = jnp.dot(jnp.where(alive_pair, 1.0, 0.0), ones_col,
                      preferred_element_type=f32)                              # alive / graph
        keep_c = ((rank_c < jnp.ceil(RATIO * n_c)) & (m_c > 0)).astype(f32)    # (N,1)

        h = h * (score_c * keep_c)      # gate kept nodes by tanh score; dropped rows -> 0
        m_c = keep_c                    # A / B are never modified (masking handles drops)

        # ---- Readout over kept nodes: [global_max_pool | global_mean_pool]
        counts = jnp.dot(b_ref[...], m_c.astype(bf16), preferred_element_type=f32)  # (G,1)
        h3 = h.reshape(G, NPG, F)
        hm3 = jnp.where(m_c > 0, h, NEG).reshape(G, NPG, F)
        gmp = jnp.max(hm3, axis=1)                                             # (G,F)
        gmp_sum = gmp_sum + jnp.where(counts > 0, gmp, 0.0)                    # empty-graph guard
        gap_sum = gap_sum + jnp.sum(h3, axis=1) / jnp.maximum(counts, 1.0)     # exact mean

    # ---- MLP head (F.dropout with training=False is the identity)
    wl1a = wmlp_ref[0:F, :]                       # lin1 rows for the max-pool half
    wl1b = wmlp_ref[F:2 * F, :]                   # lin1 rows for the mean-pool half
    wl2 = wmlp_ref[2 * F:3 * F, :]                # lin2, zero-padded to (F,F)
    bl1 = vec_ref[3:4, :]
    bl2 = vec_ref[4:5, :]
    wl3 = vec_ref[5:6, :]
    bl3 = vec_ref[6:7, 0:1]
    z = jnp.maximum(jnp.dot(gmp_sum.astype(jnp.bfloat16), wl1a, preferred_element_type=f32)
                    + jnp.dot(gap_sum.astype(jnp.bfloat16), wl1b, preferred_element_type=f32)
                    + bl1, 0.0)
    z = jnp.maximum(jnp.dot(z.astype(jnp.bfloat16), wl2, preferred_element_type=f32) + bl2, 0.0)
    # final 64 -> 1 projection as a lane reduction (avoids a 1-lane-wide MXU output)
    o_ref[...] = jnp.sum(z * wl3, axis=1, keepdims=True) + bl3


# ------------------------------- weight packing + wrapper -------------------------------

def _pack_params(params):
    """Pack all weights into 3 VMEM slabs (few, large input DMAs instead of 17 small ones)."""
    f32, bf16 = jnp.float32, jnp.bfloat16

    def pad2(w, rows, cols):
        return jnp.zeros((rows, cols), f32).at[:w.shape[0], :w.shape[1]].set(w)

    # conv slab: [W_rel1; W_root1; W_rel2; W_root2; W_rel3; W_root3; P], P[:, l] = p_l / ||p_l||
    blocks = []
    for name in ("conv1", "conv2", "conv3"):
        w_rel, w_root, _ = params[name]
        blocks += [pad2(w_rel, F, F), pad2(w_root, F, F)]
    p_block = jnp.zeros((F, F), f32)
    for l, name in enumerate(("p1", "p2", "p3")):
        p = params[name]
        p_block = p_block.at[:, l].set(p / jnp.sqrt(jnp.sum(p * p)))
    wconv = jnp.concatenate(blocks + [p_block], axis=0).astype(bf16)          # (7F, F)

    # MLP slab: [W_lin1 (2F,F); W_lin2 zero-padded to (F,F)]
    wl1, bl1 = params["lin1"]
    wl2, bl2 = params["lin2"]
    wl3, bl3 = params["lin3"]
    wmlp = jnp.concatenate([wl1, pad2(wl2, F, F)], axis=0).astype(bf16)       # (3F, F)

    # small f32 vectors in one (8,F) tile: conv biases, lin1/lin2 biases, lin3 weight/bias
    def row(v):
        v = jnp.reshape(v, (-1,)).astype(f32)
        return jnp.zeros((F,), f32).at[:v.shape[0]].set(v)

    vecs = jnp.stack([row(params["conv1"][2]), row(params["conv2"][2]),
                      row(params["conv3"][2]),
                      row(bl1), row(bl2), row(wl3),
                      jnp.full((F,), jnp.reshape(bl3, ()).astype(f32)),
                      jnp.zeros((F,), f32)])                                  # (8, F)
    return wconv, wmlp, vecs


def net_forward(x, A, B, params):
    """x:(NB,N,f_in)  A:(NB,N,N) 0/1 adjacency (A[i,j]=1 iff edge j->i)  B:(NB,G,N) one-hot batch.
    Nodes must be laid out graph-contiguously: graph g owns node rows [g*N//G, (g+1)*N//G);
    unused rows inside a slot are padding (their B column is all zero)."""
    NB, N, f_in = x.shape
    G = B.shape[1]
    assert N % G == 0, "graph-contiguous layout with N//G node slots per graph is required"

    x_pad = jnp.zeros((NB, N, F), jnp.float32).at[:, :, :f_in].set(x)
    node_mask = jnp.swapaxes(
        (jnp.sum(B, axis=1, keepdims=True) > 0).astype(jnp.float32), 1, 2)    # (NB,N,1)
    wconv, wmlp, vecs = _pack_params(params)

    return pl.pallas_call(
        functools.partial(net_kernel, G),
        grid=(NB,),
        in_specs=[
            pl.BlockSpec((None, N, F), lambda b: (b, 0, 0)),   # x (zero padded)
            pl.BlockSpec((None, N, N), lambda b: (b, 0, 0)),   # A, bf16, resident
            pl.BlockSpec((None, G, N), lambda b: (b, 0, 0)),   # B, bf16, resident
            pl.BlockSpec((None, N, 1), lambda b: (b, 0, 0)),   # initial alive mask
            pl.BlockSpec((7 * F, F), lambda b: (0, 0)),        # conv weights + score vectors
            pl.BlockSpec((3 * F, F), lambda b: (0, 0)),        # MLP weights
            pl.BlockSpec((8, F), lambda b: (0, 0)),            # biases / small f32 vectors
        ],
        out_specs=pl.BlockSpec((None, G, 1), lambda b: (b, 0, 0)),
        out_shape=jax.ShapeDtypeStruct((NB, G, 1), jnp.float32),
        compiler_params=pltpu.CompilerParams(
            dimension_semantics=("parallel",)),     # v7x: graph-batches split across both TCs
    )(x_pad, A.astype(jnp.bfloat16), B.astype(jnp.bfloat16), node_mask,
      wconv, wmlp, vecs)


# ------------------------------- parameter init -------------------------------

def _linear_init(key, f_in, f_out):
    kw, kb = jax.random.split(key)
    w = jax.random.normal(kw, (f_in, f_out), jnp.float32) / jnp.sqrt(jnp.float32(f_in))
    b = 0.01 * jax.random.normal(kb, (1, f_out), jnp.float32)
    return w, b


def init_params(key):
    keys = jax.random.split(key, 9)
    p = {}
    # GraphConv(20,128), GraphConv(128,128) x2 : (W_rel, W_root, bias)
    for name, (fi, fo), k in [("conv1", (20, F), keys[0]),
                              ("conv2", (F, F), keys[1]),
                              ("conv3", (F, F), keys[2])]:
        k1, k2 = jax.random.split(k)
        wrel, b = _linear_init(k1, fi, fo)
        wroot, _ = _linear_init(k2, fi, fo)
        p[name] = (wrel, wroot, b)
    # TopKPooling score vectors
    p["p1"] = jax.random.normal(keys[3], (F,), jnp.float32)
    p["p2"] = jax.random.normal(keys[4], (F,), jnp.float32)
    p["p3"] = jax.random.normal(keys[5], (F,), jnp.float32)
    # MLP head
    p["lin1"] = _linear_init(keys[6], 2 * F, 128)
    p["lin2"] = _linear_init(keys[7], 128, 64)
    p["lin3"] = _linear_init(keys[8], 64, 1)
    return p


# ------------------------------- main -------------------------------

if __name__ == "__main__":
    NB, G, NPG, F_IN = 2, 8, 16, 20        # 2 graph-batches of 8 graphs x 16 nodes = 128 rows
    N = G * NPG

    key = jax.random.PRNGKey(0)
    kx, ka, kp = jax.random.split(key, 3)

    x = jax.random.normal(kx, (NB, N, F_IN), jnp.float32)

    # G graphs of NPG contiguous nodes each
    batch = jnp.repeat(jnp.arange(G, dtype=jnp.int32), NPG)                          # (N,)
    B = jnp.broadcast_to((jnp.arange(G)[:, None] == batch[None, :])
                         .astype(jnp.float32), (NB, G, N))                           # (NB,G,N)

    # random block-diagonal adjacency (edges only within a graph), A[i,j] = edge j -> i
    same_graph = (batch[:, None] == batch[None, :]).astype(jnp.float32)              # (N,N)
    A = (jax.random.uniform(ka, (NB, N, N)) < 0.15).astype(jnp.float32) * same_graph

    params = init_params(kp)

    out = jax.jit(net_forward)(x, A, B, params)
    out = jax.block_until_ready(out)
    assert out.shape == (NB, G, 1) and bool(jnp.all(jnp.isfinite(out)))
    print("KERNEL_OK")
</pallas_src>

<mosaic_0001>
module attributes {stable_mosaic.version = 11 : i64} {
  func.func @net_kernel(%arg0: i32, %arg1: memref<1x128x128xf32, #tpu.memory_space<vmem>>, %arg2: memref<1x128x128xbf16, #tpu.memory_space<vmem>>, %arg3: memref<1x8x128xbf16, #tpu.memory_space<vmem>>, %arg4: memref<1x128x1xf32, #tpu.memory_space<vmem>>, %arg5: memref<896x128xbf16, #tpu.memory_space<vmem>>, %arg6: memref<384x128xbf16, #tpu.memory_space<vmem>>, %arg7: memref<8x128xf32, #tpu.memory_space<vmem>>, %arg8: memref<1x8x1xf32, #tpu.memory_space<vmem>>) attributes {dimension_semantics = [#tpu.dimension_semantics<parallel>], iteration_bounds = array<i64: 2>, scalar_prefetch = 0 : i64, scratch_operands = 0 : i64, tpu.core_type = #tpu.core_type<tc>, window_params = [{transform_indices = @transform_0, window_bounds = array<i64: 1, 128, 128>}, {transform_indices = @transform_1, window_bounds = array<i64: 1, 128, 128>}, {transform_indices = @transform_2, window_bounds = array<i64: 1, 8, 128>}, {transform_indices = @transform_3, window_bounds = array<i64: 1, 128, 1>}, {pipeline_mode = #tpu.pipeline_mode<synchronous>, transform_indices = @transform_4, window_bounds = array<i64: 896, 128>}, {pipeline_mode = #tpu.pipeline_mode<synchronous>, transform_indices = @transform_5, window_bounds = array<i64: 384, 128>}, {pipeline_mode = #tpu.pipeline_mode<synchronous>, transform_indices = @transform_6, window_bounds = array<i64: 8, 128>}, {transform_indices = @transform_7, window_bounds = array<i64: 1, 8, 1>}]} {
    %c0 = arith.constant 0 : index
    %c0_0 = arith.constant 0 : index
    %c0_1 = arith.constant 0 : index
    %0 = vector.load %arg1[%c0, %c0_0, %c0_1] : memref<1x128x128xf32, #tpu.memory_space<vmem>>, vector<1x128x128xf32>
    %1 = vector.shape_cast %0 : vector<1x128x128xf32> to vector<128x128xf32>
    %c0_2 = arith.constant 0 : index
    %c0_3 = arith.constant 0 : index
    %c0_4 = arith.constant 0 : index
    %2 = vector.load %arg4[%c0_2, %c0_3, %c0_4] : memref<1x128x1xf32, #tpu.memory_space<vmem>>, vector<1x128x1xf32>
    %3 = vector.shape_cast %2 : vector<1x128x1xf32> to vector<128x1xf32>
    %cst = arith.constant 1.000000e+00 : f32
    %4 = vector.broadcast %cst : f32 to vector<128x1xf32>
    %cst_5 = arith.constant 0.000000e+00 : f32
    %5 = vector.broadcast %cst_5 : f32 to vector<8x128xf32>
    %cst_6 = arith.constant 0.000000e+00 : f32
    %6 = vector.broadcast %cst_6 : f32 to vector<8x128xf32>
    %c0_7 = arith.constant 0 : index
    %c0_8 = arith.constant 0 : index
    %7 = vector.load %arg5[%c0_7, %c0_8] : memref<896x128xbf16, #tpu.memory_space<vmem>>, vector<128x128xbf16>
    %c128 = arith.constant 128 : index
    %c0_9 = arith.constant 0 : index
    %8 = vector.load %arg5[%c128, %c0_9] : memref<896x128xbf16, #tpu.memory_space<vmem>>, vector<128x128xbf16>
    %c768 = arith.constant 768 : index
    %c0_10 = arith.constant 0 : index
    %9 = vector.load %arg5[%c768, %c0_10] : memref<896x128xbf16, #tpu.memory_space<vmem>>, vector<128x1xbf16>
    %c0_11 = arith.constant 0 : index
    %c0_12 = arith.constant 0 : index
    %10 = vector.load %arg7[%c0_11, %c0_12] : memref<8x128xf32, #tpu.memory_space<vmem>>, vector<1x128xf32>
    %11 = arith.truncf %1 : vector<128x128xf32> to vector<128x128xbf16>
    %c0_13 = arith.constant 0 : index
    %c0_14 = arith.constant 0 : index
    %c0_15 = arith.constant 0 : index
    %12 = vector.load %arg2[%c0_13, %c0_14, %c0_15] : memref<1x128x128xbf16, #tpu.memory_space<vmem>>, vector<1x128x128xbf16>
    %13 = vector.shape_cast %12 : vector<1x128x128xbf16> to vector<128x128xbf16>
    %cst_16 = arith.constant dense<0.000000e+00> : vector<128x128xf32>
    %14 = tpu.matmul %13, %11, %cst_16 {dimension_numbers = #tpu.dot_dimension_numbers<[1], [0], [0], [1], [0, 0, 1, 1], [], []>} : vector<128x128xbf16>, vector<128x128xbf16>, vector<128x128xf32> -> vector<128x128xf32>
    %15 = arith.truncf %14 : vector<128x128xf32> to vector<128x128xbf16>
    %cst_17 = arith.constant dense<0.000000e+00> : vector<128x128xf32>
    %16 = tpu.matmul %15, %7, %cst_17 {dimension_numbers = #tpu.dot_dimension_numbers<[1], [0], [0], [1], [0, 0, 1, 1], [], []>} : vector<128x128xbf16>, vector<128x128xbf16>, vector<128x128xf32> -> vector<128x128xf32>
    %cst_18 = arith.constant dense<0.000000e+00> : vector<128x128xf32>
    %17 = tpu.matmul %11, %8, %cst_18 {dimension_numbers = #tpu.dot_dimension_numbers<[1], [0], [0], [1], [0, 0, 1, 1], [], []>} : vector<128x128xbf16>, vector<128x128xbf16>, vector<128x128xf32> -> vector<128x128xf32>
    %18 = arith.addf %16, %17 : vector<128x128xf32>
    %19 = vector.broadcast %10 : vector<1x128xf32> to vector<128x128xf32>
    %20 = arith.addf %18, %19 : vector<128x128xf32>
    %cst_19 = arith.constant 0.000000e+00 : f32
    %21 = vector.broadcast %cst_19 : f32 to vector<128x128xf32>
    %22 = arith.maximumf %20, %21 : vector<128x128xf32>
    %23 = arith.truncf %22 : vector<128x128xf32> to vector<128x128xbf16>
    %cst_20 = arith.constant dense<0.000000e+00> : vector<128x1xf32>
    %24 = tpu.matmul %23, %9, %cst_20 {dimension_numbers = #tpu.dot_dimension_numbers<[1], [0], [0], [1], [0, 0, 1, 1], [], []>} : vector<128x128xbf16>, vector<128x1xbf16>, vector<128x1xf32> -> vector<128x1xf32>
    %25 = math.tanh %24 : vector<128x1xf32>
    %cst_21 = arith.constant 0.000000e+00 : f32
    %26 = vector.broadcast %cst_21 : f32 to vector<128x1xf32>
    %27 = arith.cmpf ogt, %3, %26 : vector<128x1xf32>
    %cst_22 = arith.constant 0xFF800000 : f32
    %28 = vector.broadcast %cst_22 : f32 to vector<128x1xf32>
    %29 = arith.select %27, %25, %28 : vector<128x1xi1>, vector<128x1xf32>
    %30 = vector.shape_cast %29 : vector<128x1xf32> to vector<128x1xf32>
    %31 = vector.broadcast %30 : vector<128x1xf32> to vector<128x128xf32>
    %32 = tpu.transpose %31, [1, 0] : vector<128x128xf32> -> vector<128x128xf32>
    %33 = tpu.iota {dimensions = array<i32: 0>} : vector<128x1xi32>
    %34 = tpu.iota {dimensions = array<i32: 1>} : vector<1x128xi32>
    %35 = arith.sitofp %33 : vector<128x1xi32> to vector<128x1xf32>
    %cst_23 = arith.constant 5.000000e-01 : f32
    %36 = vector.broadcast %cst_23 : f32 to vector<128x1xf32>
    %37 = arith.addf %35, %36 : vector<128x1xf32>
    %cst_24 = arith.constant 6.250000e-02 : f32
    %38 = vector.broadcast %cst_24 : f32 to vector<128x1xf32>
    %39 = arith.mulf %37, %38 : vector<128x1xf32>
    %40 = math.floor %39 : vector<128x1xf32>
    %41 = arith.sitofp %34 : vector<1x128xi32> to vector<1x128xf32>
    %cst_25 = arith.constant 5.000000e-01 : f32
    %42 = vector.broadcast %cst_25 : f32 to vector<1x128xf32>
    %43 = arith.addf %41, %42 : vector<1x128xf32>
    %cst_26 = arith.constant 6.250000e-02 : f32
    %44 = vector.broadcast %cst_26 : f32 to vector<1x128xf32>
    %45 = arith.mulf %43, %44 : vector<1x128xf32>
    %46 = math.floor %45 : vector<1x128xf32>
    %47 = vector.broadcast %40 : vector<128x1xf32> to vector<128x128xf32>
    %48 = vector.broadcast %46 : vector<1x128xf32> to vector<128x128xf32>
    %49 = arith.cmpf oeq, %47, %48 : vector<128x128xf32>
    %cst_27 = arith.constant 0.000000e+00 : f32
    %50 = vector.broadcast %cst_27 : f32 to vector<128x1xf32>
    %51 = arith.cmpf ogt, %3, %50 : vector<128x1xf32>
    %52 = vector.broadcast %51 : vector<128x1xi1> to vector<128x128xi1>
    %53 = arith.andi %49, %52 : vector<128x128xi1>
    %cst_28 = arith.constant -2.000000e+00 : f32
    %54 = vector.broadcast %cst_28 : f32 to vector<128x128xf32>
    %55 = arith.cmpf ogt, %32, %54 : vector<128x128xf32>
    %56 = arith.andi %53, %55 : vector<128x128xi1>
    %57 = arith.cmpf ogt, %32, %31 : vector<128x128xf32>
    %58 = arith.cmpf oeq, %32, %31 : vector<128x128xf32>
    %59 = vector.broadcast %34 : vector<1x128xi32> to vector<128x128xi32>
    %60 = vector.broadcast %33 : vector<128x1xi32> to vector<128x128xi32>
    %61 = arith.cmpi slt, %59, %60 : vector<128x128xi32>
    %62 = arith.andi %58, %61 : vector<128x128xi1>
    %63 = arith.ori %57, %62 : vector<128x128xi1>
    %64 = arith.andi %56, %63 : vector<128x128xi1>
    %cst_29 = arith.constant 1.000000e+00 : f32
    %cst_30 = arith.constant 0.000000e+00 : f32
    %65 = vector.broadcast %cst_29 : f32 to vector<128x128xf32>
    %66 = vector.broadcast %cst_30 : f32 to vector<128x128xf32>
    %67 = arith.select %64, %65, %66 : vector<128x128xi1>, vector<128x128xf32>
    %cst_31 = arith.constant dense<0.000000e+00> : vector<128x1xf32>
    %68 = tpu.matmul %67, %4, %cst_31 {dimension_numbers = #tpu.dot_dimension_numbers<[1], [0], [0], [1], [0, 0, 1, 1], [], []>} : vector<128x128xf32>, vector<128x1xf32>, vector<128x1xf32> -> vector<128x1xf32>
    %cst_32 = arith.constant 1.000000e+00 : f32
    %cst_33 = arith.constant 0.000000e+00 : f32
    %69 = vector.broadcast %cst_32 : f32 to vector<128x128xf32>
    %70 = vector.broadcast %cst_33 : f32 to vector<128x128xf32>
    %71 = arith.select %56, %69, %70 : vector<128x128xi1>, vector<128x128xf32>
    %cst_34 = arith.constant dense<0.000000e+00> : vector<128x1xf32>
    %72 = tpu.matmul %71, %4, %cst_34 {dimension_numbers = #tpu.dot_dimension_numbers<[1], [0], [0], [1], [0, 0, 1, 1], [], []>} : vector<128x128xf32>, vector<128x1xf32>, vector<128x1xf32> -> vector<128x1xf32>
    %cst_35 = arith.constant 8.000000e-01 : f32
    %73 = vector.broadcast %cst_35 : f32 to vector<128x1xf32>
    %74 = arith.mulf %73, %72 : vector<128x1xf32>
    %75 = math.ceil %74 : vector<128x1xf32>
    %76 = arith.cmpf olt, %68, %75 : vector<128x1xf32>
    %cst_36 = arith.constant 0.000000e+00 : f32
    %77 = vector.broadcast %cst_36 : f32 to vector<128x1xf32>
    %78 = arith.cmpf ogt, %3, %77 : vector<128x1xf32>
    %79 = arith.andi %76, %78 : vector<128x1xi1>
    %80 = arith.extui %79 : vector<128x1xi1> to vector<128x1xi32>
    %81 = arith.sitofp %80 : vector<128x1xi32> to vector<128x1xf32>
    %82 = arith.mulf %25, %81 : vector<128x1xf32>
    %83 = vector.broadcast %82 : vector<128x1xf32> to vector<128x128xf32>
    %84 = arith.mulf %22, %83 : vector<128x128xf32>
    %c0_37 = arith.constant 0 : index
    %c0_38 = arith.constant 0 : index
    %c0_39 = arith.constant 0 : index
    %85 = vector.load %arg3[%c0_37, %c0_38, %c0_39] : memref<1x8x128xbf16, #tpu.memory_space<vmem>>, vector<1x8x128xbf16>
    %86 = vector.shape_cast %85 : vector<1x8x128xbf16> to vector<8x128xbf16>
    %87 = arith.truncf %81 : vector<128x1xf32> to vector<128x1xbf16>
    %cst_40 = arith.constant dense<0.000000e+00> : vector<8x1xf32>
    %88 = tpu.matmul %86, %87, %cst_40 {dimension_numbers = #tpu.dot_dimension_numbers<[1], [0], [0], [1], [0, 0, 1, 1], [], []>} : vector<8x128xbf16>, vector<128x1xbf16>, vector<8x1xf32> -> vector<8x1xf32>
    %89 = vector.shape_cast %84 : vector<128x128xf32> to vector<8x16x128xf32>
    %cst_41 = arith.constant 0.000000e+00 : f32
    %90 = vector.broadcast %cst_41 : f32 to vector<128x1xf32>
    %91 = arith.cmpf ogt, %81, %90 : vector<128x1xf32>
    %cst_42 = arith.constant 0xFF800000 : f32
    %92 = vector.shape_cast %91 : vector<128x1xi1> to vector<128x1xi1>
    %93 = vector.broadcast %92 : vector<128x1xi1> to vector<128x128xi1>
    %94 = vector.broadcast %cst_42 : f32 to vector<128x128xf32>
    %95 = arith.select %93, %84, %94 : vector<128x128xi1>, vector<128x128xf32>
    %96 = vector.shape_cast %95 : vector<128x128xf32> to vector<8x16x128xf32>
    %cst_43 = arith.constant dense<0xFF800000> : vector<8x128xf32>
    %97 = vector.multi_reduction <maximumf>, %96, %cst_43 [1] : vector<8x16x128xf32> to vector<8x128xf32>
    %cst_44 = arith.constant 0.000000e+00 : f32
    %98 = vector.broadcast %cst_44 : f32 to vector<8x1xf32>
    %99 = arith.cmpf ogt, %88, %98 : vector<8x1xf32>
    %cst_45 = arith.constant 0.000000e+00 : f32
    %100 = vector.shape_cast %99 : vector<8x1xi1> to vector<8x1xi1>
    %101 = vector.broadcast %100 : vector<8x1xi1> to vector<8x128xi1>
    %102 = vector.broadcast %cst_45 : f32 to vector<8x128xf32>
    %103 = arith.select %101, %97, %102 : vector<8x128xi1>, vector<8x128xf32>
    %104 = arith.addf %5, %103 : vector<8x128xf32>
    %cst_46 = arith.constant dense<0.000000e+00> : vector<8x128xf32>
    %105 = vector.multi_reduction <add>, %89, %cst_46 [1] : vector<8x16x128xf32> to vector<8x128xf32>
    %cst_47 = arith.constant 1.000000e+00 : f32
    %106 = vector.broadcast %cst_47 : f32 to vector<8x1xf32>
    %107 = arith.maximumf %88, %106 : vector<8x1xf32>
    %108 = vector.broadcast %107 : vector<8x1xf32> to vector<8x128xf32>
    %109 = arith.divf %105, %108 : vector<8x128xf32>
    %110 = arith.addf %6, %109 : vector<8x128xf32>
    %c256 = arith.constant 256 : index
    %c0_48 = arith.constant 0 : index
    %111 = vector.load %arg5[%c256, %c0_48] : memref<896x128xbf16, #tpu.memory_space<vmem>>, vector<128x128xbf16>
    %c384 = arith.constant 384 : index
    %c0_49 = arith.constant 0 : index
    %112 = vector.load %arg5[%c384, %c0_49] : memref<896x128xbf16, #tpu.memory_space<vmem>>, vector<128x128xbf16>
    %c768_50 = arith.constant 768 : index
    %c1 = arith.constant 1 : index
    %113 = vector.load %arg5[%c768_50, %c1] : memref<896x128xbf16, #tpu.memory_space<vmem>>, vector<128x1xbf16>
    %c1_51 = arith.constant 1 : index
    %c0_52 = arith.constant 0 : index
    %114 = vector.load %arg7[%c1_51, %c0_52] : memref<8x128xf32, #tpu.memory_space<vmem>>, vector<1x128xf32>
    %115 = arith.truncf %84 : vector<128x128xf32> to vector<128x128xbf16>
    %c0_53 = arith.constant 0 : index
    %c0_54 = arith.constant 0 : index
    %c0_55 = arith.constant 0 : index
    %116 = vector.load %arg2[%c0_53, %c0_54, %c0_55] : memref<1x128x128xbf16, #tpu.memory_space<vmem>>, vector<1x128x128xbf16>
    %117 = vector.shape_cast %116 : vector<1x128x128xbf16> to vector<128x128xbf16>
    %cst_56 = arith.constant dense<0.000000e+00> : vector<128x128xf32>
    %118 = tpu.matmul %117, %115, %cst_56 {dimension_numbers = #tpu.dot_dimension_numbers<[1], [0], [0], [1], [0, 0, 1, 1], [], []>} : vector<128x128xbf16>, vector<128x128xbf16>, vector<128x128xf32> -> vector<128x128xf32>
    %119 = arith.truncf %118 : vector<128x128xf32> to vector<128x128xbf16>
    %cst_57 = arith.constant dense<0.000000e+00> : vector<128x128xf32>
    %120 = tpu.matmul %119, %111, %cst_57 {dimension_numbers = #tpu.dot_dimension_numbers<[1], [0], [0], [1], [0, 0, 1, 1], [], []>} : vector<128x128xbf16>, vector<128x128xbf16>, vector<128x128xf32> -> vector<128x128xf32>
    %cst_58 = arith.constant dense<0.000000e+00> : vector<128x128xf32>
    %121 = tpu.matmul %115, %112, %cst_58 {dimension_numbers = #tpu.dot_dimension_numbers<[1], [0], [0], [1], [0, 0, 1, 1], [], []>} : vector<128x128xbf16>, vector<128x128xbf16>, vector<128x128xf32> -> vector<128x128xf32>
    %122 = arith.addf %120, %121 : vector<128x128xf32>
    %123 = vector.broadcast %114 : vector<1x128xf32> to vector<128x128xf32>
    %124 = arith.addf %122, %123 : vector<128x128xf32>
    %cst_59 = arith.constant 0.000000e+00 : f32
    %125 = vector.broadcast %cst_59 : f32 to vector<128x128xf32>
    %126 = arith.maximumf %124, %125 : vector<128x128xf32>
    %127 = arith.truncf %126 : vector<128x128xf32> to vector<128x128xbf16>
    %cst_60 = arith.constant dense<0.000000e+00> : vector<128x1xf32>
    %128 = tpu.matmul %127, %113, %cst_60 {dimension_numbers = #tpu.dot_dimension_numbers<[1], [0], [0], [1], [0, 0, 1, 1], [], []>} : vector<128x128xbf16>, vector<128x1xbf16>, vector<128x1xf32> -> vector<128x1xf32>
    %129 = math.tanh %128 : vector<128x1xf32>
    %cst_61 = arith.constant 0.000000e+00 : f32
    %130 = vector.broadcast %cst_61 : f32 to vector<128x1xf32>
    %131 = arith.cmpf ogt, %81, %130 : vector<128x1xf32>
    %cst_62 = arith.constant 0xFF800000 : f32
    %132 = vector.broadcast %cst_62 : f32 to vector<128x1xf32>
    %133 = arith.select %131, %129, %132 : vector<128x1xi1>, vector<128x1xf32>
    %134 = vector.shape_cast %133 : vector<128x1xf32> to vector<128x1xf32>
    %135 = vector.broadcast %134 : vector<128x1xf32> to vector<128x128xf32>
    %136 = tpu.transpose %135, [1, 0] : vector<128x128xf32> -> vector<128x128xf32>
    %137 = tpu.iota {dimensions = array<i32: 0>} : vector<128x1xi32>
    %138 = tpu.iota {dimensions = array<i32: 1>} : vector<1x128xi32>
    %139 = arith.sitofp %137 : vector<128x1xi32> to vector<128x1xf32>
    %cst_63 = arith.constant 5.000000e-01 : f32
    %140 = vector.broadcast %cst_63 : f32 to vector<128x1xf32>
    %141 = arith.addf %139, %140 : vector<128x1xf32>
    %cst_64 = arith.constant 6.250000e-02 : f32
    %142 = vector.broadcast %cst_64 : f32 to vector<128x1xf32>
    %143 = arith.mulf %141, %142 : vector<128x1xf32>
    %144 = math.floor %143 : vector<128x1xf32>
    %145 = arith.sitofp %138 : vector<1x128xi32> to vector<1x128xf32>
    %cst_65 = arith.constant 5.000000e-01 : f32
    %146 = vector.broadcast %cst_65 : f32 to vector<1x128xf32>
    %147 = arith.addf %145, %146 : vector<1x128xf32>
    %cst_66 = arith.constant 6.250000e-02 : f32
    %148 = vector.broadcast %cst_66 : f32 to vector<1x128xf32>
    %149 = arith.mulf %147, %148 : vector<1x128xf32>
    %150 = math.floor %149 : vector<1x128xf32>
    %151 = vector.broadcast %144 : vector<128x1xf32> to vector<128x128xf32>
    %152 = vector.broadcast %150 : vector<1x128xf32> to vector<128x128xf32>
    %153 = arith.cmpf oeq, %151, %152 : vector<128x128xf32>
    %cst_67 = arith.constant 0.000000e+00 : f32
    %154 = vector.broadcast %cst_67 : f32 to vector<128x1xf32>
    %155 = arith.cmpf ogt, %81, %154 : vector<128x1xf32>
    %156 = vector.broadcast %155 : vector<128x1xi1> to vector<128x128xi1>
    %157 = arith.andi %153, %156 : vector<128x128xi1>
    %cst_68 = arith.constant -2.000000e+00 : f32
    %158 = vector.broadcast %cst_68 : f32 to vector<128x128xf32>
    %159 = arith.cmpf ogt, %136, %158 : vector<128x128xf32>
    %160 = arith.andi %157, %159 : vector<128x128xi1>
    %161 = arith.cmpf ogt, %136, %135 : vector<128x128xf32>
    %162 = arith.cmpf oeq, %136, %135 : vector<128x128xf32>
    %163 = vector.broadcast %138 : vector<1x128xi32> to vector<128x128xi32>
    %164 = vector.broadcast %137 : vector<128x1xi32> to vector<128x128xi32>
    %165 = arith.cmpi slt, %163, %164 : vector<128x128xi32>
    %166 = arith.andi %162, %165 : vector<128x128xi1>
    %167 = arith.ori %161, %166 : vector<128x128xi1>
    %168 = arith.andi %160, %167 : vector<128x128xi1>
    %cst_69 = arith.constant 1.000000e+00 : f32
    %cst_70 = arith.constant 0.000000e+00 : f32
    %169 = vector.broadcast %cst_69 : f32 to vector<128x128xf32>
    %170 = vector.broadcast %cst_70 : f32 to vector<128x128xf32>
    %171 = arith.select %168, %169, %170 : vector<128x128xi1>, vector<128x128xf32>
    %cst_71 = arith.constant dense<0.000000e+00> : vector<128x1xf32>
    %172 = tpu.matmul %171, %4, %cst_71 {dimension_numbers = #tpu.dot_dimension_numbers<[1], [0], [0], [1], [0, 0, 1, 1], [], []>} : vector<128x128xf32>, vector<128x1xf32>, vector<128x1xf32> -> vector<128x1xf32>
    %cst_72 = arith.constant 1.000000e+00 : f32
    %cst_73 = arith.constant 0.000000e+00 : f32
    %173 = vector.broadcast %cst_72 : f32 to vector<128x128xf32>
    %174 = vector.broadcast %cst_73 : f32 to vector<128x128xf32>
    %175 = arith.select %160, %173, %174 : vector<128x128xi1>, vector<128x128xf32>
    %cst_74 = arith.constant dense<0.000000e+00> : vector<128x1xf32>
    %176 = tpu.matmul %175, %4, %cst_74 {dimension_numbers = #tpu.dot_dimension_numbers<[1], [0], [0], [1], [0, 0, 1, 1], [], []>} : vector<128x128xf32>, vector<128x1xf32>, vector<128x1xf32> -> vector<128x1xf32>
    %cst_75 = arith.constant 8.000000e-01 : f32
    %177 = vector.broadcast %cst_75 : f32 to vector<128x1xf32>
    %178 = arith.mulf %177, %176 : vector<128x1xf32>
    %179 = math.ceil %178 : vector<128x1xf32>
    %180 = arith.cmpf olt, %172, %179 : vector<128x1xf32>
    %cst_76 = arith.constant 0.000000e+00 : f32
    %181 = vector.broadcast %cst_76 : f32 to vector<128x1xf32>
    %182 = arith.cmpf ogt, %81, %181 : vector<128x1xf32>
    %183 = arith.andi %180, %182 : vector<128x1xi1>
    %184 = arith.extui %183 : vector<128x1xi1> to vector<128x1xi32>
    %185 = arith.sitofp %184 : vector<128x1xi32> to vector<128x1xf32>
    %186 = arith.mulf %129, %185 : vector<128x1xf32>
    %187 = vector.broadcast %186 : vector<128x1xf32> to vector<128x128xf32>
    %188 = arith.mulf %126, %187 : vector<128x128xf32>
    %c0_77 = arith.constant 0 : index
    %c0_78 = arith.constant 0 : index
    %c0_79 = arith.constant 0 : index
    %189 = vector.load %arg3[%c0_77, %c0_78, %c0_79] : memref<1x8x128xbf16, #tpu.memory_space<vmem>>, vector<1x8x128xbf16>
    %190 = vector.shape_cast %189 : vector<1x8x128xbf16> to vector<8x128xbf16>
    %191 = arith.truncf %185 : vector<128x1xf32> to vector<128x1xbf16>
    %cst_80 = arith.constant dense<0.000000e+00> : vector<8x1xf32>
    %192 = tpu.matmul %190, %191, %cst_80 {dimension_numbers = #tpu.dot_dimension_numbers<[1], [0], [0], [1], [0, 0, 1, 1], [], []>} : vector<8x128xbf16>, vector<128x1xbf16>, vector<8x1xf32> -> vector<8x1xf32>
    %193 = vector.shape_cast %188 : vector<128x128xf32> to vector<8x16x128xf32>
    %cst_81 = arith.constant 0.000000e+00 : f32
    %194 = vector.broadcast %cst_81 : f32 to vector<128x1xf32>
    %195 = arith.cmpf ogt, %185, %194 : vector<128x1xf32>
    %cst_82 = arith.constant 0xFF800000 : f32
    %196 = vector.shape_cast %195 : vector<128x1xi1> to vector<128x1xi1>
    %197 = vector.broadcast %196 : vector<128x1xi1> to vector<128x128xi1>
    %198 = vector.broadcast %cst_82 : f32 to vector<128x128xf32>
    %199 = arith.select %197, %188, %198 : vector<128x128xi1>, vector<128x128xf32>
    %200 = vector.shape_cast %199 : vector<128x128xf32> to vector<8x16x128xf32>
    %cst_83 = arith.constant dense<0xFF800000> : vector<8x128xf32>
    %201 = vector.multi_reduction <maximumf>, %200, %cst_83 [1] : vector<8x16x128xf32> to vector<8x128xf32>
    %cst_84 = arith.constant 0.000000e+00 : f32
    %202 = vector.broadcast %cst_84 : f32 to vector<8x1xf32>
    %203 = arith.cmpf ogt, %192, %202 : vector<8x1xf32>
    %cst_85 = arith.constant 0.000000e+00 : f32
    %204 = vector.shape_cast %203 : vector<8x1xi1> to vector<8x1xi1>
    %205 = vector.broadcast %204 : vector<8x1xi1> to vector<8x128xi1>
    %206 = vector.broadcast %cst_85 : f32 to vector<8x128xf32>
    %207 = arith.select %205, %201, %206 : vector<8x128xi1>, vector<8x128xf32>
    %208 = arith.addf %104, %207 : vector<8x128xf32>
    %cst_86 = arith.constant dense<0.000000e+00> : vector<8x128xf32>
    %209 = vector.multi_reduction <add>, %193, %cst_86 [1] : vector<8x16x128xf32> to vector<8x128xf32>
    %cst_87 = arith.constant 1.000000e+00 : f32
    %210 = vector.broadcast %cst_87 : f32 to vector<8x1xf32>
    %211 = arith.maximumf %192, %210 : vector<8x1xf32>
    %212 = vector.broadcast %211 : vector<8x1xf32> to vector<8x128xf32>
    %213 = arith.divf %209, %212 : vector<8x128xf32>
    %214 = arith.addf %110, %213 : vector<8x128xf32>
    %c512 = arith.constant 512 : index
    %c0_88 = arith.constant 0 : index
    %215 = vector.load %arg5[%c512, %c0_88] : memref<896x128xbf16, #tpu.memory_space<vmem>>, vector<128x128xbf16>
    %c640 = arith.constant 640 : index
    %c0_89 = arith.constant 0 : index
    %216 = vector.load %arg5[%c640, %c0_89] : memref<896x128xbf16, #tpu.memory_space<vmem>>, vector<128x128xbf16>
    %c768_90 = arith.constant 768 : index
    %c2 = arith.constant 2 : index
    %217 = vector.load %arg5[%c768_90, %c2] : memref<896x128xbf16, #tpu.memory_space<vmem>>, vector<128x1xbf16>
    %c2_91 = arith.constant 2 : index
    %c0_92 = arith.constant 0 : index
    %218 = vector.load %arg7[%c2_91, %c0_92] : memref<8x128xf32, #tpu.memory_space<vmem>>, vector<1x128xf32>
    %219 = arith.truncf %188 : vector<128x128xf32> to vector<128x128xbf16>
    %c0_93 = arith.constant 0 : index
    %c0_94 = arith.constant 0 : index
    %c0_95 = arith.constant 0 : index
    %220 = vector.load %arg2[%c0_93, %c0_94, %c0_95] : memref<1x128x128xbf16, #tpu.memory_space<vmem>>, vector<1x128x128xbf16>
    %221 = vector.shape_cast %220 : vector<1x128x128xbf16> to vector<128x128xbf16>
    %cst_96 = arith.constant dense<0.000000e+00> : vector<128x128xf32>
    %222 = tpu.matmul %221, %219, %cst_96 {dimension_numbers = #tpu.dot_dimension_numbers<[1], [0], [0], [1], [0, 0, 1, 1], [], []>} : vector<128x128xbf16>, vector<128x128xbf16>, vector<128x128xf32> -> vector<128x128xf32>
    %223 = arith.truncf %222 : vector<128x128xf32> to vector<128x128xbf16>
    %cst_97 = arith.constant dense<0.000000e+00> : vector<128x128xf32>
    %224 = tpu.matmul %223, %215, %cst_97 {dimension_numbers = #tpu.dot_dimension_numbers<[1], [0], [0], [1], [0, 0, 1, 1], [], []>} : vector<128x128xbf16>, vector<128x128xbf16>, vector<128x128xf32> -> vector<128x128xf32>
    %cst_98 = arith.constant dense<0.000000e+00> : vector<128x128xf32>
    %225 = tpu.matmul %219, %216, %cst_98 {dimension_numbers = #tpu.dot_dimension_numbers<[1], [0], [0], [1], [0, 0, 1, 1], [], []>} : vector<128x128xbf16>, vector<128x128xbf16>, vector<128x128xf32> -> vector<128x128xf32>
    %226 = arith.addf %224, %225 : vector<128x128xf32>
    %227 = vector.broadcast %218 : vector<1x128xf32> to vector<128x128xf32>
    %228 = arith.addf %226, %227 : vector<128x128xf32>
    %cst_99 = arith.constant 0.000000e+00 : f32
    %229 = vector.broadcast %cst_99 : f32 to vector<128x128xf32>
    %230 = arith.maximumf %228, %229 : vector<128x128xf32>
    %231 = arith.truncf %230 : vector<128x128xf32> to vector<128x128xbf16>
    %cst_100 = arith.constant dense<0.000000e+00> : vector<128x1xf32>
    %232 = tpu.matmul %231, %217, %cst_100 {dimension_numbers = #tpu.dot_dimension_numbers<[1], [0], [0], [1], [0, 0, 1, 1], [], []>} : vector<128x128xbf16>, vector<128x1xbf16>, vector<128x1xf32> -> vector<128x1xf32>
    %233 = math.tanh %232 : vector<128x1xf32>
    %cst_101 = arith.constant 0.000000e+00 : f32
    %234 = vector.broadcast %cst_101 : f32 to vector<128x1xf32>
    %235 = arith.cmpf ogt, %185, %234 : vector<128x1xf32>
    %cst_102 = arith.constant 0xFF800000 : f32
    %236 = vector.broadcast %cst_102 : f32 to vector<128x1xf32>
    %237 = arith.select %235, %233, %236 : vector<128x1xi1>, vector<128x1xf32>
    %238 = vector.shape_cast %237 : vector<128x1xf32> to vector<128x1xf32>
    %239 = vector.broadcast %238 : vector<128x1xf32> to vector<128x128xf32>
    %240 = tpu.transpose %239, [1, 0] : vector<128x128xf32> -> vector<128x128xf32>
    %241 = tpu.iota {dimensions = array<i32: 0>} : vector<128x1xi32>
    %242 = tpu.iota {dimensions = array<i32: 1>} : vector<1x128xi32>
    %243 = arith.sitofp %241 : vector<128x1xi32> to vector<128x1xf32>
    %cst_103 = arith.constant 5.000000e-01 : f32
    %244 = vector.broadcast %cst_103 : f32 to vector<128x1xf32>
    %245 = arith.addf %243, %244 : vector<128x1xf32>
    %cst_104 = arith.constant 6.250000e-02 : f32
    %246 = vector.broadcast %cst_104 : f32 to vector<128x1xf32>
    %247 = arith.mulf %245, %246 : vector<128x1xf32>
    %248 = math.floor %247 : vector<128x1xf32>
    %249 = arith.sitofp %242 : vector<1x128xi32> to vector<1x128xf32>
    %cst_105 = arith.constant 5.000000e-01 : f32
    %250 = vector.broadcast %cst_105 : f32 to vector<1x128xf32>
    %251 = arith.addf %249, %250 : vector<1x128xf32>
    %cst_106 = arith.constant 6.250000e-02 : f32
    %252 = vector.broadcast %cst_106 : f32 to vector<1x128xf32>
    %253 = arith.mulf %251, %252 : vector<1x128xf32>
    %254 = math.floor %253 : vector<1x128xf32>
    %255 = vector.broadcast %248 : vector<128x1xf32> to vector<128x128xf32>
    %256 = vector.broadcast %254 : vector<1x128xf32> to vector<128x128xf32>
    %257 = arith.cmpf oeq, %255, %256 : vector<128x128xf32>
    %cst_107 = arith.constant 0.000000e+00 : f32
    %258 = vector.broadcast %cst_107 : f32 to vector<128x1xf32>
    %259 = arith.cmpf ogt, %185, %258 : vector<128x1xf32>
    %260 = vector.broadcast %259 : vector<128x1xi1> to vector<128x128xi1>
    %261 = arith.andi %257, %260 : vector<128x128xi1>
    %cst_108 = arith.constant -2.000000e+00 : f32
    %262 = vector.broadcast %cst_108 : f32 to vector<128x128xf32>
    %263 = arith.cmpf ogt, %240, %262 : vector<128x128xf32>
    %264 = arith.andi %261, %263 : vector<128x128xi1>
    %265 = arith.cmpf ogt, %240, %239 : vector<128x128xf32>
    %266 = arith.cmpf oeq, %240, %239 : vector<128x128xf32>
    %267 = vector.broadcast %242 : vector<1x128xi32> to vector<128x128xi32>
    %268 = vector.broadcast %241 : vector<128x1xi32> to vector<128x128xi32>
    %269 = arith.cmpi slt, %267, %268 : vector<128x128xi32>
    %270 = arith.andi %266, %269 : vector<128x128xi1>
    %271 = arith.ori %265, %270 : vector<128x128xi1>
    %272 = arith.andi %264, %271 : vector<128x128xi1>
    %cst_109 = arith.constant 1.000000e+00 : f32
    %cst_110 = arith.constant 0.000000e+00 : f32
    %273 = vector.broadcast %cst_109 : f32 to vector<128x128xf32>
    %274 = vector.broadcast %cst_110 : f32 to vector<128x128xf32>
    %275 = arith.select %272, %273, %274 : vector<128x128xi1>, vector<128x128xf32>
    %cst_111 = arith.constant dense<0.000000e+00> : vector<128x1xf32>
    %276 = tpu.matmul %275, %4, %cst_111 {dimension_numbers = #tpu.dot_dimension_numbers<[1], [0], [0], [1], [0, 0, 1, 1], [], []>} : vector<128x128xf32>, vector<128x1xf32>, vector<128x1xf32> -> vector<128x1xf32>
    %cst_112 = arith.constant 1.000000e+00 : f32
    %cst_113 = arith.constant 0.000000e+00 : f32
    %277 = vector.broadcast %cst_112 : f32 to vector<128x128xf32>
    %278 = vector.broadcast %cst_113 : f32 to vector<128x128xf32>
    %279 = arith.select %264, %277, %278 : vector<128x128xi1>, vector<128x128xf32>
    %cst_114 = arith.constant dense<0.000000e+00> : vector<128x1xf32>
    %280 = tpu.matmul %279, %4, %cst_114 {dimension_numbers = #tpu.dot_dimension_numbers<[1], [0], [0], [1], [0, 0, 1, 1], [], []>} : vector<128x128xf32>, vector<128x1xf32>, vector<128x1xf32> -> vector<128x1xf32>
    %cst_115 = arith.constant 8.000000e-01 : f32
    %281 = vector.broadcast %cst_115 : f32 to vector<128x1xf32>
    %282 = arith.mulf %281, %280 : vector<128x1xf32>
    %283 = math.ceil %282 : vector<128x1xf32>
    %284 = arith.cmpf olt, %276, %283 : vector<128x1xf32>
    %cst_116 = arith.constant 0.000000e+00 : f32
    %285 = vector.broadcast %cst_116 : f32 to vector<128x1xf32>
    %286 = arith.cmpf ogt, %185, %285 : vector<128x1xf32>
    %287 = arith.andi %284, %286 : vector<128x1xi1>
    %288 = arith.extui %287 : vector<128x1xi1> to vector<128x1xi32>
    %289 = arith.sitofp %288 : vector<128x1xi32> to vector<128x1xf32>
    %290 = arith.mulf %233, %289 : vector<128x1xf32>
    %291 = vector.broadcast %290 : vector<128x1xf32> to vector<128x128xf32>
    %292 = arith.mulf %230, %291 : vector<128x128xf32>
    %c0_117 = arith.constant 0 : index
    %c0_118 = arith.constant 0 : index
    %c0_119 = arith.constant 0 : index
    %293 = vector.load %arg3[%c0_117, %c0_118, %c0_119] : memref<1x8x128xbf16, #tpu.memory_space<vmem>>, vector<1x8x128xbf16>
    %294 = vector.shape_cast %293 : vector<1x8x128xbf16> to vector<8x128xbf16>
    %295 = arith.truncf %289 : vector<128x1xf32> to vector<128x1xbf16>
    %cst_120 = arith.constant dense<0.000000e+00> : vector<8x1xf32>
    %296 = tpu.matmul %294, %295, %cst_120 {dimension_numbers = #tpu.dot_dimension_numbers<[1], [0], [0], [1], [0, 0, 1, 1], [], []>} : vector<8x128xbf16>, vector<128x1xbf16>, vector<8x1xf32> -> vector<8x1xf32>
    %297 = vector.shape_cast %292 : vector<128x128xf32> to vector<8x16x128xf32>
    %cst_121 = arith.constant 0.000000e+00 : f32
    %298 = vector.broadcast %cst_121 : f32 to vector<128x1xf32>
    %299 = arith.cmpf ogt, %289, %298 : vector<128x1xf32>
    %cst_122 = arith.constant 0xFF800000 : f32
    %300 = vector.shape_cast %299 : vector<128x1xi1> to vector<128x1xi1>
    %301 = vector.broadcast %300 : vector<128x1xi1> to vector<128x128xi1>
    %302 = vector.broadcast %cst_122 : f32 to vector<128x128xf32>
    %303 = arith.select %301, %292, %302 : vector<128x128xi1>, vector<128x128xf32>
    %304 = vector.shape_cast %303 : vector<128x128xf32> to vector<8x16x128xf32>
    %cst_123 = arith.constant dense<0xFF800000> : vector<8x128xf32>
    %305 = vector.multi_reduction <maximumf>, %304, %cst_123 [1] : vector<8x16x128xf32> to vector<8x128xf32>
    %cst_124 = arith.constant 0.000000e+00 : f32
    %306 = vector.broadcast %cst_124 : f32 to vector<8x1xf32>
    %307 = arith.cmpf ogt, %296, %306 : vector<8x1xf32>
    %cst_125 = arith.constant 0.000000e+00 : f32
    %308 = vector.shape_cast %307 : vector<8x1xi1> to vector<8x1xi1>
    %309 = vector.broadcast %308 : vector<8x1xi1> to vector<8x128xi1>
    %310 = vector.broadcast %cst_125 : f32 to vector<8x128xf32>
    %311 = arith.select %309, %305, %310 : vector<8x128xi1>, vector<8x128xf32>
    %312 = arith.addf %208, %311 : vector<8x128xf32>
    %cst_126 = arith.constant dense<0.000000e+00> : vector<8x128xf32>
    %313 = vector.multi_reduction <add>, %297, %cst_126 [1] : vector<8x16x128xf32> to vector<8x128xf32>
    %cst_127 = arith.constant 1.000000e+00 : f32
    %314 = vector.broadcast %cst_127 : f32 to vector<8x1xf32>
    %315 = arith.maximumf %296, %314 : vector<8x1xf32>
    %316 = vector.broadcast %315 : vector<8x1xf32> to vector<8x128xf32>
    %317 = arith.divf %313, %316 : vector<8x128xf32>
    %318 = arith.addf %214, %317 : vector<8x128xf32>
    %c0_128 = arith.constant 0 : index
    %c0_129 = arith.constant 0 : index
    %319 = vector.load %arg6[%c0_128, %c0_129] : memref<384x128xbf16, #tpu.memory_space<vmem>>, vector<128x128xbf16>
    %c128_130 = arith.constant 128 : index
    %c0_131 = arith.constant 0 : index
    %320 = vector.load %arg6[%c128_130, %c0_131] : memref<384x128xbf16, #tpu.memory_space<vmem>>, vector<128x128xbf16>
    %c256_132 = arith.constant 256 : index
    %c0_133 = arith.constant 0 : index
    %321 = vector.load %arg6[%c256_132, %c0_133] : memref<384x128xbf16, #tpu.memory_space<vmem>>, vector<128x128xbf16>
    %c3 = arith.constant 3 : index
    %c0_134 = arith.constant 0 : index
    %322 = vector.load %arg7[%c3, %c0_134] : memref<8x128xf32, #tpu.memory_space<vmem>>, vector<1x128xf32>
    %c4 = arith.constant 4 : index
    %c0_135 = arith.constant 0 : index
    %323 = vector.load %arg7[%c4, %c0_135] : memref<8x128xf32, #tpu.memory_space<vmem>>, vector<1x128xf32>
    %c5 = arith.constant 5 : index
    %c0_136 = arith.constant 0 : index
    %324 = vector.load %arg7[%c5, %c0_136] : memref<8x128xf32, #tpu.memory_space<vmem>>, vector<1x128xf32>
    %c6 = arith.constant 6 : index
    %c0_137 = arith.constant 0 : index
    %325 = vector.load %arg7[%c6, %c0_137] : memref<8x128xf32, #tpu.memory_space<vmem>>, vector<1x1xf32>
    %326 = arith.truncf %312 : vector<8x128xf32> to vector<8x128xbf16>
    %cst_138 = arith.constant dense<0.000000e+00> : vector<8x128xf32>
    %327 = tpu.matmul %326, %319, %cst_138 {dimension_numbers = #tpu.dot_dimension_numbers<[1], [0], [0], [1], [0, 0, 1, 1], [], []>} : vector<8x128xbf16>, vector<128x128xbf16>, vector<8x128xf32> -> vector<8x128xf32>
    %328 = arith.truncf %318 : vector<8x128xf32> to vector<8x128xbf16>
    %cst_139 = arith.constant dense<0.000000e+00> : vector<8x128xf32>
    %329 = tpu.matmul %328, %320, %cst_139 {dimension_numbers = #tpu.dot_dimension_numbers<[1], [0], [0], [1], [0, 0, 1, 1], [], []>} : vector<8x128xbf16>, vector<128x128xbf16>, vector<8x128xf32> -> vector<8x128xf32>
    %330 = arith.addf %327, %329 : vector<8x128xf32>
    %331 = vector.broadcast %322 : vector<1x128xf32> to vector<8x128xf32>
    %332 = arith.addf %330, %331 : vector<8x128xf32>
    %cst_140 = arith.constant 0.000000e+00 : f32
    %333 = vector.broadcast %cst_140 : f32 to vector<8x128xf32>
    %334 = arith.maximumf %332, %333 : vector<8x128xf32>
    %335 = arith.truncf %334 : vector<8x128xf32> to vector<8x128xbf16>
    %cst_141 = arith.constant dense<0.000000e+00> : vector<8x128xf32>
    %336 = tpu.matmul %335, %321, %cst_141 {dimension_numbers = #tpu.dot_dimension_numbers<[1], [0], [0], [1], [0, 0, 1, 1], [], []>} : vector<8x128xbf16>, vector<128x128xbf16>, vector<8x128xf32> -> vector<8x128xf32>
    %337 = vector.broadcast %323 : vector<1x128xf32> to vector<8x128xf32>
    %338 = arith.addf %336, %337 : vector<8x128xf32>
    %cst_142 = arith.constant 0.000000e+00 : f32
    %339 = vector.broadcast %cst_142 : f32 to vector<8x128xf32>
    %340 = arith.maximumf %338, %339 : vector<8x128xf32>
    %341 = vector.broadcast %324 : vector<1x128xf32> to vector<8x128xf32>
    %342 = arith.mulf %340, %341 : vector<8x128xf32>
    %cst_143 = arith.constant dense<0.000000e+00> : vector<8xf32>
    %343 = vector.multi_reduction <add>, %342, %cst_143 [1] : vector<8x128xf32> to vector<8xf32>
    %344 = vector.shape_cast %343 : vector<8xf32> to vector<8x1xf32>
    %345 = vector.broadcast %325 : vector<1x1xf32> to vector<8x1xf32>
    %346 = arith.addf %344, %345 : vector<8x1xf32>
    %c0_144 = arith.constant 0 : index
    %c0_145 = arith.constant 0 : index
    %c0_146 = arith.constant 0 : index
    %347 = vector.load %arg8[%c0_144, %c0_145, %c0_146] : memref<1x8x1xf32, #tpu.memory_space<vmem>>, vector<1x8x1xf32>
    %348 = vector.shape_cast %347 : vector<1x8x1xf32> to vector<8x1xf32>
    %349 = vector.shape_cast %346 : vector<8x1xf32> to vector<1x8x1xf32>
    tpu.vector_store %arg8[%c0_144, %c0_145, %c0_146], %349 {strides = array<i32>} : memref<1x8x1xf32, #tpu.memory_space<vmem>>, vector<1x8x1xf32>,
    return
  }
  func.func @transform_0(%arg0: i32) -> (i32, i32, i32) {
    %c0_i32 = arith.constant 0 : i32
    %c0_i32_0 = arith.constant 0 : i32
    %c0_i32_1 = arith.constant 0 : i32
    return %arg0, %c0_i32, %c0_i32_0 : i32, i32, i32
  }
  func.func @transform_1(%arg0: i32) -> (i32, i32, i32) {
    %c0_i32 = arith.constant 0 : i32
    %c0_i32_0 = arith.constant 0 : i32
    %c0_i32_1 = arith.constant 0 : i32
    return %arg0, %c0_i32, %c0_i32_0 : i32, i32, i32
  }
  func.func @transform_2(%arg0: i32) -> (i32, i32, i32) {
    %c0_i32 = arith.constant 0 : i32
    %c0_i32_0 = arith.constant 0 : i32
    %c0_i32_1 = arith.constant 0 : i32
    return %arg0, %c0_i32, %c0_i32_0 : i32, i32, i32
  }
  func.func @transform_3(%arg0: i32) -> (i32, i32, i32) {
    %c0_i32 = arith.constant 0 : i32
    %c0_i32_0 = arith.constant 0 : i32
    %c0_i32_1 = arith.constant 0 : i32
    return %arg0, %c0_i32, %c0_i32_0 : i32, i32, i32
  }
  func.func @transform_4(%arg0: i32) -> (i32, i32) {
    %c0_i32 = arith.constant 0 : i32
    %c0_i32_0 = arith.constant 0 : i32
    %c0_i32_1 = arith.constant 0 : i32
    return %c0_i32, %c0_i32_0 : i32, i32
  }
  func.func @transform_5(%arg0: i32) -> (i32, i32) {
    %c0_i32 = arith.constant 0 : i32
    %c0_i32_0 = arith.constant 0 : i32
    %c0_i32_1 = arith.constant 0 : i32
    return %c0_i32, %c0_i32_0 : i32, i32
  }
  func.func @transform_6(%arg0: i32) -> (i32, i32) {
    %c0_i32 = arith.constant 0 : i32
    %c0_i32_0 = arith.constant 0 : i32
    %c0_i32_1 = arith.constant 0 : i32
    return %c0_i32, %c0_i32_0 : i32, i32
  }
  func.func @transform_7(%arg0: i32) -> (i32, i32, i32) {
    %c0_i32 = arith.constant 0 : i32
    %c0_i32_0 = arith.constant 0 : i32
    %c0_i32_1 = arith.constant 0 : i32
    return %arg0, %c0_i32, %c0_i32_0 : i32, i32, i32
  }
}

</mosaic_0001>

<llo_original>
// kernel: net_forward.1
$region0: #{net_forward.1}
  #allocation0 [shape = 'u32[]', space=smem, size = 0x4, offset = 0x4, fixed_abs, tag = 'smem constant byte address 0x4 - core index']
  #allocation1 [shape = 'u32[144,128]{1,0:T(1,128)}', space=vmem, size = 0x12000, scoped, tag = 'internal scratch']
  %s0 = inlined_call_operand.vmem [shape: f32[2,128,128], index: 0, kind: input, shape index: {}]
  %s1 = inlined_call_operand.vmem [shape: bf16[2,128,128], index: 1, kind: input, shape index: {}]
  %s2 = inlined_call_operand.vmem [shape: bf16[2,8,128], index: 2, kind: input, shape index: {}]
  %s3 = inlined_call_operand.vmem [shape: f32[2,128,1], index: 3, kind: input, shape index: {}]
  %s4 = inlined_call_operand.vmem [shape: bf16[896,128], index: 4, kind: input, shape index: {}]
  %s5 = inlined_call_operand.vmem [shape: bf16[384,128], index: 5, kind: input, shape index: {}]
  %s6 = inlined_call_operand.vmem [shape: f32[8,128], index: 6, kind: input, shape index: {}]
  %s7 = inlined_call_operand.vmem [shape: f32[2,8,1], index: 7, kind: output, shape index: {}]
  %s8 = sld [smem:[#allocation0]]
  $region61: #{net_forward.1} parent=0
    _
  %s10 = ssub.s32 1, %s8
  %s11 = scalar_select 0, %s10, %s8
  loop: start=0, step=1, limit=4
  $region2: #{net_forward.1} parent=0 // loop_pre_header
    _
  $region3: #{net_forward.1} parent=0 // loop_header
    %s13 = sphi 0, %s17
    %p14 = scmp.ge.s32.totalorder %s13, 4
    %s23 = sphi 0, %s25
    %s26 = sphi 0, %s23
    %s27 = sphi 0, %s26
    %s43 = sphi 0, %s27
    %s49 = sphi 0, %s51
    %s52 = sphi 0, %s49
    %s53 = sphi 0, %s52
    %s69 = sphi 0, %s53
    %s75 = sphi 0, %s77
    %s78 = sphi 0, %s75
    %s79 = sphi 0, %s78
    %s95 = sphi 0, %s79
    %s101 = sphi 0, %s103
    %s104 = sphi 0, %s101
    %s105 = sphi 0, %s104
    %s121 = sphi 0, %s105
    %s125 = sphi 0, %s125
    %s127 = sphi 0, %s125
    %s128 = sphi 0, %s127
    %s142 = sphi 0, %s128
    %s146 = sphi 0, %s146
    %s148 = sphi 0, %s146
    %s149 = sphi 0, %s148
    %s163 = sphi 0, %s149
    %s167 = sphi 0, %s167
    %s169 = sphi 0, %s167
    %s170 = sphi 0, %s169
    %s184 = sphi 0, %s170
    %s190 = sphi 0, %s192
    %s193 = sphi 0, %s190
    %s194 = sphi 0, %s193
    %s210 = sphi 0, %s194
  $region4: #{net_forward.1} parent=0 // loop_header_branch
    %16 = sbr.rel (%p14) target = $region8
  $region5: #{net_forward.1} parent=0 // loop_body
    %s18 = ssub.s32 %s13, 1
    %s19 = ssub.s32 %s13, 2
    %s20 = sadd.s32 %s13, 1
    %s21 = ssub.s32 %s13, %s20
    %p22 = scmp.eq.s32.totalorder %s21, 0
    %s24 = sadd.s32 %s23, 1
    %s25 = scalar_select %p22, %s23, %s24
    %p28 = pneg %p22
    %p29 = scmp.eq.s32.totalorder %s13, 1
    %p30 = por %p28, %p29
    %p31 = scmp.ne.s32.totalorder %s23, %s26
    %p32 = scmp.eq.s32.totalorder %s13, 0
    %p33 = por %p31, %p32
    %p34 = scmp.ne.s32.totalorder %s23, %s26
    %p35 = scmp.eq.s32.totalorder %s18, 1
    %p36 = por %p34, %p35
    %p37 = scmp.ne.s32.totalorder %s26, %s27
    %p38 = scmp.eq.s32.totalorder %s18, 0
    %p39 = por %p37, %p38
    %p40 = scmp.ne.s32.totalorder %s26, %s27
    %p41 = scmp.eq.s32.totalorder %s19, 1
    %p42 = por %p40, %p41
    %p44 = scmp.ne.s32.totalorder %s27, %s43
    %p45 = scmp.eq.s32.totalorder %s19, 0
    %p46 = por %p44, %p45
    %s47 = ssub.s32 %s13, %s20
    %p48 = scmp.eq.s32.totalorder %s47, 0
    %s50 = sadd.s32 %s49, 1
    %s51 = scalar_select %p48, %s49, %s50
    %p54 = pneg %p48
    %p55 = scmp.eq.s32.totalorder %s13, 1
    %p56 = por %p54, %p55
    %p57 = scmp.ne.s32.totalorder %s49, %s52
    %p58 = scmp.eq.s32.totalorder %s13, 0
    %p59 = por %p57, %p58
    %p60 = scmp.ne.s32.totalorder %s49, %s52
    %p61 = scmp.eq.s32.totalorder %s18, 1
    %p62 = por %p60, %p61
    %p63 = scmp.ne.s32.totalorder %s52, %s53
    %p64 = scmp.eq.s32.totalorder %s18, 0
    %p65 = por %p63, %p64
    %p66 = scmp.ne.s32.totalorder %s52, %s53
    %p67 = scmp.eq.s32.totalorder %s19, 1
    %p68 = por %p66, %p67
    %p70 = scmp.ne.s32.totalorder %s53, %s69
    %p71 = scmp.eq.s32.totalorder %s19, 0
    %p72 = por %p70, %p71
    %s73 = ssub.s32 %s13, %s20
    %p74 = scmp.eq.s32.totalorder %s73, 0
    %s76 = sadd.s32 %s75, 1
    %s77 = scalar_select %p74, %s75, %s76
    %p80 = pneg %p74
    %p81 = scmp.eq.s32.totalorder %s13, 1
    %p82 = por %p80, %p81
    %p83 = scmp.ne.s32.totalorder %s75, %s78
    %p84 = scmp.eq.s32.totalorder %s13, 0
    %p85 = por %p83, %p84
    %p86 = scmp.ne.s32.totalorder %s75, %s78
    %p87 = scmp.eq.s32.totalorder %s18, 1
    %p88 = por %p86, %p87
    %p89 = scmp.ne.s32.totalorder %s78, %s79
    %p90 = scmp.eq.s32.totalorder %s18, 0
    %p91 = por %p89, %p90
    %p92 = scmp.ne.s32.totalorder %s78, %s79
    %p93 = scmp.eq.s32.totalorder %s19, 1
    %p94 = por %p92, %p93
    %p96 = scmp.ne.s32.totalorder %s79, %s95
    %p97 = scmp.eq.s32.totalorder %s19, 0
    %p98 = por %p96, %p97
    %s99 = ssub.s32 %s13, %s20
    %p100 = scmp.eq.s32.totalorder %s99, 0
    %s102 = sadd.s32 %s101, 1
    %s103 = scalar_select %p100, %s101, %s102
    %p106 = pneg %p100
    %p107 = scmp.eq.s32.totalorder %s13, 1
    %p108 = por %p106, %p107
    %p109 = scmp.ne.s32.totalorder %s101, %s104
    %p110 = scmp.eq.s32.totalorder %s13, 0
    %p111 = por %p109, %p110
    %p112 = scmp.ne.s32.totalorder %s101, %s104
    %p113 = scmp.eq.s32.totalorder %s18, 1
    %p114 = por %p112, %p113
    %p115 = scmp.ne.s32.totalorder %s104, %s105
    %p116 = scmp.eq.s32.totalorder %s18, 0
    %p117 = por %p115, %p116
    %p118 = scmp.ne.s32.totalorder %s104, %s105
    %p119 = scmp.eq.s32.totalorder %s19, 1
    %p120 = por %p118, %p119
    %p122 = scmp.ne.s32.totalorder %s105, %s121
    %p123 = scmp.eq.s32.totalorder %s19, 0
    %p124 = por %p122, %p123
    %s126 = sadd.s32 %s125, 1
    %p129 = scmp.eq.s32.totalorder %s13, 1
    %p130 = scmp.ne.s32.totalorder %s125, %s127
    %p131 = scmp.eq.s32.totalorder %s13, 0
    %p132 = por %p130, %p131
    %p133 = scmp.ne.s32.totalorder %s125, %s127
    %p134 = scmp.eq.s32.totalorder %s18, 1
    %p135 = por %p133, %p134
    %p136 = scmp.ne.s32.totalorder %s127, %s128
    %p137 = scmp.eq.s32.totalorder %s18, 0
    %p138 = por %p136, %p137
    %p139 = scmp.ne.s32.totalorder %s127, %s128
    %p140 = scmp.eq.s32.totalorder %s19, 1
    %p141 = por %p139, %p140
    %p143 = scmp.ne.s32.totalorder %s128, %s142
    %p144 = scmp.eq.s32.totalorder %s19, 0
    %p145 = por %p143, %p144
    %s147 = sadd.s32 %s146, 1
    %p150 = scmp.eq.s32.totalorder %s13, 1
    %p151 = scmp.ne.s32.totalorder %s146, %s148
    %p152 = scmp.eq.s32.totalorder %s13, 0
    %p153 = por %p151, %p152
    %p154 = scmp.ne.s32.totalorder %s146, %s148
    %p155 = scmp.eq.s32.totalorder %s18, 1
    %p156 = por %p154, %p155
    %p157 = scmp.ne.s32.totalorder %s148, %s149
    %p158 = scmp.eq.s32.totalorder %s18, 0
    %p159 = por %p157, %p158
    %p160 = scmp.ne.s32.totalorder %s148, %s149
    %p161 = scmp.eq.s32.totalorder %s19, 1
    %p162 = por %p160, %p161
    %p164 = scmp.ne.s32.totalorder %s149, %s163
    %p165 = scmp.eq.s32.totalorder %s19, 0
    %p166 = por %p164, %p165
    %s168 = sadd.s32 %s167, 1
    %p171 = scmp.eq.s32.totalorder %s13, 1
    %p172 = scmp.ne.s32.totalorder %s167, %s169
    %p173 = scmp.eq.s32.totalorder %s13, 0
    %p174 = por %p172, %p173
    %p175 = scmp.ne.s32.totalorder %s167, %s169
    %p176 = scmp.eq.s32.totalorder %s18, 1
    %p177 = por %p175, %p176
    %p178 = scmp.ne.s32.totalorder %s169, %s170
    %p179 = scmp.eq.s32.totalorder %s18, 0
    %p180 = por %p178, %p179
    %p181 = scmp.ne.s32.totalorder %s169, %s170
    %p182 = scmp.eq.s32.totalorder %s19, 1
    %p183 = por %p181, %p182
    %p185 = scmp.ne.s32.totalorder %s170, %s184
    %p186 = scmp.eq.s32.totalorder %s19, 0
    %p187 = por %p185, %p186
    %s188 = ssub.s32 %s13, %s20
    %p189 = scmp.eq.s32.totalorder %s188, 0
    %s191 = sadd.s32 %s190, 1
    %s192 = scalar_select %p189, %s190, %s191
    %p195 = pneg %p189
    %p196 = scmp.eq.s32.totalorder %s13, 1
    %p197 = por %p195, %p196
    %p198 = scmp.ne.s32.totalorder %s190, %s193
    %p199 = scmp.eq.s32.totalorder %s13, 0
    %p200 = por %p198, %p199
    %p201 = scmp.ne.s32.totalorder %s190, %s193
    %p202 = scmp.eq.s32.totalorder %s18, 1
    %p203 = por %p201, %p202
    %p204 = scmp.ne.s32.totalorder %s193, %s194
    %p205 = scmp.eq.s32.totalorder %s18, 0
    %p206 = por %p204, %p205
    %p207 = scmp.ne.s32.totalorder %s193, %s194
    %p208 = scmp.eq.s32.totalorder %s19, 1
    %p209 = por %p207, %p208
    %p211 = scmp.ne.s32.totalorder %s194, %s210
    %p212 = scmp.eq.s32.totalorder %s19, 0
    %p213 = por %p211, %p212
    %p214 = scmp.le.s32.totalorder 1, %s13
    %p215 = scmp.lt.s32.totalorder %s13, 3
    %p216 = pnand %p214, %p215
    %p217 = pneg %p216
    // Predicated region
    $region9: #{net_forward.1} parent=5 // pred_check
      _
    $region10: #{net_forward.1} parent=5 // pred_check_branch
      %219 = sbr.rel (%p216) target = $region12
    $region11: #{net_forward.1} parent=5 // pred_region
      %s220 = ssub.s32 %s13, 1
      // Predicated region
      $region13: #{net_forward.1} parent=11 // pred_check
        %p221 = pneg %p138
      $region14: #{net_forward.1} parent=11 // pred_check_branch
        %223 = sbr.rel (%p221) target = $region16
      $region15: #{net_forward.1} parent=11 // pred_region
        _
      $region16: #{net_forward.1} parent=11 // pred_fallthru
        _
      // Predicated region
      $region17: #{net_forward.1} parent=11 // pred_check
        %p224 = pneg %p159
      $region18: #{net_forward.1} parent=11 // pred_check_branch
        %226 = sbr.rel (%p224) target = $region20
      $region19: #{net_forward.1} parent=11 // pred_region
        _
      $region20: #{net_forward.1} parent=11 // pred_fallthru
        _
      // Predicated region
      $region21: #{net_forward.1} parent=11 // pred_check
        %p227 = pneg %p180
      $region22: #{net_forward.1} parent=11 // pred_check_branch
        %229 = sbr.rel (%p227) target = $region24
      $region23: #{net_forward.1} parent=11 // pred_region
        _
      $region24: #{net_forward.1} parent=11 // pred_fallthru
        _
    $region12: #{net_forward.1} parent=5 // pred_fallthru
      _
    %p230 = scmp.lt.s32.totalorder %s13, 2
    // Predicated region
    $region25: #{net_forward.1} parent=5 // pred_check
      %p231 = pneg %p230
    $region26: #{net_forward.1} parent=5 // pred_check_branch
      %233 = sbr.rel (%p231) target = $region28
    $region27: #{net_forward.1} parent=5 // pred_region
      // Predicated region
      $region29: #{net_forward.1} parent=27 // pred_check
        %p234 = pneg %p33
      $region30: #{net_forward.1} parent=27 // pred_check_branch
        %236 = sbr.rel (%p234) target = $region32
      $region31: #{net_forward.1} parent=27 // pred_region
        %p237 = scmp.lt.s32.totalorder %s13, 1
        %s238 = scalar_select %p237, %s13, 1
        %s239 = smul.addr %s238, 16
        %s240 = smul.addr %s239, 8
        %s241 = scalar_lea.vmem %s0, %s240
      $region32: #{net_forward.1} parent=27 // pred_fallthru
        _
      // Predicated region
      $region33: #{net_forward.1} parent=27 // pred_check
        %p242 = pneg %p59
      $region34: #{net_forward.1} parent=27 // pred_check_branch
        %244 = sbr.rel (%p242) target = $region36
      $region35: #{net_forward.1} parent=27 // pred_region
        %p245 = scmp.lt.s32.totalorder %s13, 1
        %s246 = scalar_select %p245, %s13, 1
        %s247 = smul.addr %s246, 16
        %s248 = smul.addr %s247, 4
        %s249 = scalar_lea.vmem %s1, %s248
      $region36: #{net_forward.1} parent=27 // pred_fallthru
        _
      // Predicated region
      $region37: #{net_forward.1} parent=27 // pred_check
        %p250 = pneg %p85
      $region38: #{net_forward.1} parent=27 // pred_check_branch
        %252 = sbr.rel (%p250) target = $region40
      $region39: #{net_forward.1} parent=27 // pred_region
        %p253 = scmp.lt.s32.totalorder %s13, 1
        %s254 = scalar_select %p253, %s13, 1
        %s255 = smul.addr %s254, 4
        %s256 = scalar_lea.vmem %s2, %s255
      $region40: #{net_forward.1} parent=27 // pred_fallthru
        _
      // Predicated region
      $region41: #{net_forward.1} parent=27 // pred_check
        %p257 = pneg %p111
      $region42: #{net_forward.1} parent=27 // pred_check_branch
        %259 = sbr.rel (%p257) target = $region44
      $region43: #{net_forward.1} parent=27 // pred_region
        %p260 = scmp.lt.s32.totalorder %s13, 1
        %s261 = scalar_select %p260, %s13, 1
        %s262 = smul.addr %s261, 16
        %s263 = smul.addr %s262, 8
        %s264 = scalar_lea.vmem %s3, %s263
      $region44: #{net_forward.1} parent=27 // pred_fallthru
        _
    $region28: #{net_forward.1} parent=5 // pred_fallthru
      _
    %p265 = scmp.le.s32.totalorder 1, %s13
    %p266 = scmp.lt.s32.totalorder %s13, 3
    %p267 = pnand %p265, %p266
    %p268 = pneg %p267
    // Predicated region
    $region45: #{net_forward.1} parent=5 // pred_check
      _
    $region46: #{net_forward.1} parent=5 // pred_check_branch
      %270 = sbr.rel (%p267) target = $region48
    $region47: #{net_forward.1} parent=5 // pred_region
      %s271 = ssub.s32 %s13, 1
      %p272 = scmp.lt.s32.totalorder %s18, 1
      %s273 = scalar_select %p272, %s18, 1
      %s274 = smul.addr %s273, 16
      %s275 = smul.addr %s274, 8
      %s276 = scalar_lea.vmem %s0, %s275
      %p277 = pneg %p39
      %p278 = pneg %p36
      %p279 = scmp.lt.s32.totalorder %s18, 1
      %s280 = scalar_select %p279, %s18, 1
      %s281 = smul.addr %s280, 16
      %s282 = smul.addr %s281, 4
      %s283 = scalar_lea.vmem %s1, %s282
      %p284 = pneg %p65
      %p285 = pneg %p62
      %p286 = scmp.lt.s32.totalorder %s18, 1
      %s287 = scalar_select %p286, %s18, 1
      %s288 = smul.addr %s287, 4
      %s289 = scalar_lea.vmem %s2, %s288
      %p290 = pneg %p91
      %p291 = pneg %p88
      %p292 = scmp.lt.s32.totalorder %s18, 1
      %s293 = scalar_select %p292, %s18, 1
      %s294 = smul.addr %s293, 16
      %s295 = smul.addr %s294, 8
      %s296 = scalar_lea.vmem %s3, %s295
      %p297 = pneg %p117
      %p298 = pneg %p114
      %p299 = pneg %p138
      %p300 = pneg %p135
      %p301 = pneg %p159
      %p302 = pneg %p156
      %p303 = pneg %p180
      %p304 = pneg %p177
      %p305 = pneg %p206
      %p306 = pneg %p203
      %p307 = scmp.lt.s32.totalorder %s18, 1
      %s308 = scalar_select %p307, %s18, 1
      %s309 = smul.addr %s308, 8
      %s310 = scalar_lea.vmem %s7, %s309
      %p311 = scmp.lt.s32.totalorder %s18, 1
      %s312 = scalar_select %p311, %s18, 1
      %s313 = smul.addr %s312, 16
      %s314 = smul.addr %s313, 8
      %s315 = scalar_lea.vmem %s0, %s314
      %p316 = scmp.lt.s32.totalorder %s18, 1
      %s317 = scalar_select %p316, %s18, 1
      %s318 = smul.addr %s317, 16
      %s319 = smul.addr %s318, 4
      %s320 = scalar_lea.vmem %s1, %s319
      %p321 = scmp.lt.s32.totalorder %s18, 1
      %s322 = scalar_select %p321, %s18, 1
      %s323 = smul.addr %s322, 4
      %s324 = scalar_lea.vmem %s2, %s323
      %p325 = scmp.lt.s32.totalorder %s18, 1
      %s326 = scalar_select %p325, %s18, 1
      %s327 = smul.addr %s326, 16
      %s328 = smul.addr %s327, 8
      %s329 = scalar_lea.vmem %s3, %s328
      %p330 = scmp.lt.s32.totalorder %s18, 1
      %s331 = scalar_select %p330, %s18, 1
      %s332 = smul.addr %s331, 8
      %s333 = scalar_lea.vmem %s7, %s332
      %v335 = vld [vmem:[%s315] sm:$0xff]
      %v336 = vld [vmem:[%s315 + $0x8] sm:$0xff]
      %v337 = vld [vmem:[%s315 + $0x10] sm:$0xff]
      %v338 = vld [vmem:[%s315 + $0x18] sm:$0xff]
      %v339 = vld [vmem:[%s315 + $0x20] sm:$0xff]
      %v340 = vld [vmem:[%s315 + $0x28] sm:$0xff]
      %v341 = vld [vmem:[%s315 + $0x30] sm:$0xff]
      %v342 = vld [vmem:[%s315 + $0x38] sm:$0xff]
      %v343 = vld [vmem:[%s315 + $0x40] sm:$0xff]
      %v344 = vld [vmem:[%s315 + $0x48] sm:$0xff]
      %v345 = vld [vmem:[%s315 + $0x50] sm:$0xff]
      %v346 = vld [vmem:[%s315 + $0x58] sm:$0xff]
      %v347 = vld [vmem:[%s315 + $0x60] sm:$0xff]
      %v348 = vld [vmem:[%s315 + $0x68] sm:$0xff]
      %v349 = vld [vmem:[%s315 + $0x70] sm:$0xff]
      %v350 = vld [vmem:[%s315 + $0x78] sm:$0xff]
      %v351 = vld [vmem:[%s329] sm:$0xff]
      %v352 = vld [vmem:[%s329 + $0x8] sm:$0xff]
      %v353 = vld [vmem:[%s329 + $0x10] sm:$0xff]
      %v354 = vld [vmem:[%s329 + $0x18] sm:$0xff]
      %v355 = vld [vmem:[%s329 + $0x20] sm:$0xff]
      %v356 = vld [vmem:[%s329 + $0x28] sm:$0xff]
      %v357 = vld [vmem:[%s329 + $0x30] sm:$0xff]
      %v358 = vld [vmem:[%s329 + $0x38] sm:$0xff]
      %v359 = vld [vmem:[%s329 + $0x40] sm:$0xff]
      %v360 = vld [vmem:[%s329 + $0x48] sm:$0xff]
      %v361 = vld [vmem:[%s329 + $0x50] sm:$0xff]
      %v362 = vld [vmem:[%s329 + $0x58] sm:$0xff]
      %v363 = vld [vmem:[%s329 + $0x60] sm:$0xff]
      %v364 = vld [vmem:[%s329 + $0x68] sm:$0xff]
      %v365 = vld [vmem:[%s329 + $0x70] sm:$0xff]
      %v366 = vld [vmem:[%s329 + $0x78] sm:$0xff]
      %v367 = vld [vmem:[%s4] sm:$0xf]
      %v368 = vld [vmem:[%s4 + $0x4] sm:$0xf]
      %v369 = vld [vmem:[%s4 + $0x8] sm:$0xf]
      %v370 = vld [vmem:[%s4 + $0xc] sm:$0xf]
      %v371 = vld [vmem:[%s4 + $0x10] sm:$0xf]
      %v372 = vld [vmem:[%s4 + $0x14] sm:$0xf]
      %v373 = vld [vmem:[%s4 + $0x18] sm:$0xf]
      %v374 = vld [vmem:[%s4 + $0x1c] sm:$0xf]
      %v375 = vld [vmem:[%s4 + $0x20] sm:$0xf]
      %v376 = vld [vmem:[%s4 + $0x24] sm:$0xf]
      %v377 = vld [vmem:[%s4 + $0x28] sm:$0xf]
      %v378 = vld [vmem:[%s4 + $0x2c] sm:$0xf]
      %v379 = vld [vmem:[%s4 + $0x30] sm:$0xf]
      %v380 = vld [vmem:[%s4 + $0x34] sm:$0xf]
      %v381 = vld [vmem:[%s4 + $0x38] sm:$0xf]
      %v382 = vld [vmem:[%s4 + $0x3c] sm:$0xf]
      %v383 = vld [vmem:[%s4 + $0x40] sm:$0xf]
      %v384 = vld [vmem:[%s4 + $0x44] sm:$0xf]
      %v385 = vld [vmem:[%s4 + $0x48] sm:$0xf]
      %v386 = vld [vmem:[%s4 + $0x4c] sm:$0xf]
      %v387 = vld [vmem:[%s4 + $0x50] sm:$0xf]
      %v388 = vld [vmem:[%s4 + $0x54] sm:$0xf]
      %v389 = vld [vmem:[%s4 + $0x58] sm:$0xf]
      %v390 = vld [vmem:[%s4 + $0x5c] sm:$0xf]
      %v391 = vld [vmem:[%s4 + $0x60] sm:$0xf]
      %v392 = vld [vmem:[%s4 + $0x64] sm:$0xf]
      %v393 = vld [vmem:[%s4 + $0x68] sm:$0xf]
      %v394 = vld [vmem:[%s4 + $0x6c] sm:$0xf]
      %v395 = vld [vmem:[%s4 + $0x70] sm:$0xf]
      %v396 = vld [vmem:[%s4 + $0x74] sm:$0xf]
      %v397 = vld [vmem:[%s4 + $0x78] sm:$0xf]
      %v398 = vld [vmem:[%s4 + $0x7c] sm:$0xf]
      %v399 = vld [vmem:[%s4 + $0x180] sm:$0xf]
      %v400 = vld [vmem:[%s4 + $0x184] sm:$0xf]
      %v401 = vld [vmem:[%s4 + $0x188] sm:$0xf]
      %v402 = vld [vmem:[%s4 + $0x18c] sm:$0xf]
      %v403 = vld [vmem:[%s4 + $0x190] sm:$0xf]
      %v404 = vld [vmem:[%s4 + $0x194] sm:$0xf]
      %v405 = vld [vmem:[%s4 + $0x198] sm:$0xf]
      %v406 = vld [vmem:[%s4 + $0x19c] sm:$0xf]
      %v407 = vld [vmem:[%s4 + $0x1a0] sm:$0xf]
      %v408 = vld [vmem:[%s4 + $0x1a4] sm:$0xf]
      %v409 = vld [vmem:[%s4 + $0x1a8] sm:$0xf]
      %v410 = vld [vmem:[%s4 + $0x1ac] sm:$0xf]
      %v411 = vld [vmem:[%s4 + $0x1b0] sm:$0xf]
      %v412 = vld [vmem:[%s4 + $0x1b4] sm:$0xf]
      %v413 = vld [vmem:[%s4 + $0x1b8] sm:$0xf]
      %v414 = vld [vmem:[%s4 + $0x1bc] sm:$0xf]
      %v415 = vld [vmem:[%s6] sm:$0x1]
      %v416 = vpack.c.bf16 %v336, %v335
      %v417 = vpack.c.bf16 %v338, %v337
      %v418 = vpack.c.bf16 %v340, %v339
      %v419 = vpack.c.bf16 %v342, %v341
      %v420 = vpack.c.bf16 %v344, %v343
      %v421 = vpack.c.bf16 %v346, %v345
      %v422 = vpack.c.bf16 %v348, %v347
      %v423 = vpack.c.bf16 %v350, %v349
      %v424 = vld [vmem:[%s320] sm:$0xf]
      %v425 = vld [vmem:[%s320 + $0x4] sm:$0xf]
      %v426 = vld [vmem:[%s320 + $0x8] sm:$0xf]
      %v427 = vld [vmem:[%s320 + $0xc] sm:$0xf]
      %v428 = vld [vmem:[%s320 + $0x10] sm:$0xf]
      %v429 = vld [vmem:[%s320 + $0x14] sm:$0xf]
      %v430 = vld [vmem:[%s320 + $0x18] sm:$0xf]
      %v431 = vld [vmem:[%s320 + $0x1c] sm:$0xf]
      %v432 = vld [vmem:[%s320 + $0x20] sm:$0xf]
      %v433 = vld [vmem:[%s320 + $0x24] sm:$0xf]
      %v434 = vld [vmem:[%s320 + $0x28] sm:$0xf]
      %v435 = vld [vmem:[%s320 + $0x2c] sm:$0xf]
      %v436 = vld [vmem:[%s320 + $0x30] sm:$0xf]
      %v437 = vld [vmem:[%s320 + $0x34] sm:$0xf]
      %v438 = vld [vmem:[%s320 + $0x38] sm:$0xf]
      %v439 = vld [vmem:[%s320 + $0x3c] sm:$0xf]
      %v456 = vunpack.c.l.b16 %v424
      %v457 = vunpack.c.l.b16 %v425
      %v458 = vunpack.c.l.b16 %v426
      %v459 = vunpack.c.l.b16 %v427
      %v460 = vunpack.c.l.b16 %v428
      %v461 = vunpack.c.l.b16 %v429
      %v462 = vunpack.c.l.b16 %v430
      %v463 = vunpack.c.l.b16 %v431
      %v464 = vunpack.c.l.b16 %v432
      %v465 = vunpack.c.l.b16 %v433
      %v466 = vunpack.c.l.b16 %v434
      %v467 = vunpack.c.l.b16 %v435
      %v468 = vunpack.c.l.b16 %v436
      %v469 = vunpack.c.l.b16 %v437
      %v470 = vunpack.c.l.b16 %v438
      %v471 = vunpack.c.l.b16 %v439
      %v472 = vpack.c.b16 %v457, %v456
      %v473 = vpack.c.b16 %v459, %v458
      %v474 = vpack.c.b16 %v461, %v460
      %v475 = vpack.c.b16 %v463, %v462
      %v476 = vpack.c.b16 %v465, %v464
      %v477 = vpack.c.b16 %v467, %v466
      %v478 = vpack.c.b16 %v469, %v468
      %v479 = vpack.c.b16 %v471, %v470
      %488 = vmatprep.subr.bf16.mxu0 0
      %489 = vmatpush1.bf16.msra.mxu0 %v423
      %490 = vmatprep.subr.bf16.mxu0 0
      %491 = vmatpush1.bf16.msra.mxu0 %v422
      %492 = vmatprep.subr.bf16.mxu0 0
      %493 = vmatpush1.bf16.msra.mxu0 %v421
      %494 = vmatprep.subr.bf16.mxu0 0
      %495 = vmatpush1.bf16.msra.mxu0 %v420
      %496 = vmatprep.subr.bf16.mxu0 0
      %497 = vmatpush1.bf16.msra.mxu0 %v419
      %498 = vmatprep.subr.bf16.mxu0 0
      %499 = vmatpush1.bf16.msra.mxu0 %v418
      %500 = vmatprep.subr.bf16.mxu0 0
      %501 = vmatpush1.bf16.msra.mxu0 %v417
      %502 = vmatprep.subr.bf16.mxu0 0
      %503 = vmatpush1.bf16.msra.mxu0 %v416
      %504 = vmatprep.subr.bf16.mxu0 0
      %505 = vmatpush2.bf16.msra.mxu0 0
      %506 = vmatprep.subr.bf16.mxu0 0
      %507 = vmatpush2.bf16.msra.mxu0 0
      %508 = vmatprep.subr.bf16.mxu0 0
      %509 = vmatpush2.bf16.msra.mxu0 0
      %510 = vmatprep.subr.bf16.mxu0 0
      %511 = vmatpush2.bf16.msra.mxu0 0
      %512 = vmatprep.subr.bf16.mxu0 0
      %513 = vmatpush2.bf16.msra.mxu0 0
      %514 = vmatprep.subr.bf16.mxu0 0
      %515 = vmatpush2.bf16.msra.mxu0 0
      %516 = vmatprep.subr.bf16.mxu0 0
      %517 = vmatpush2.bf16.msra.mxu0 0
      %518 = vmatprep.subr.bf16.mxu0 0
      %519 = vmatpush2.bf16.msra.mxu0 0
      %520 = vmatprep.mubr.bf16.mxu0 0
      %521 = vmatmul.mubr.bf16.gmra.mxu0 %v472
      %v522 = vpop.f32.mrf.mxu0
      %v523 = vadd.f32 0.0, %v522
      %v524 = vpop.f32.mrf.mxu0
      %v525 = vpop.f32.mrf.mxu0
      %v526 = vadd.f32 0.0, %v525
      %v527 = vpop.f32.mrf.mxu0
      %528 = vmatprep.mubr.bf16.mxu0 0
      %529 = vmatmul.mubr.bf16.gmra.mxu0 %v473
      %v530 = vpop.f32.mrf.mxu0
      %v531 = vadd.f32 0.0, %v530
      %v532 = vpop.f32.mrf.mxu0
      %v533 = vpop.f32.mrf.mxu0
      %v534 = vadd.f32 0.0, %v533
      %v535 = vpop.f32.mrf.mxu0
      %536 = vmatprep.mubr.bf16.mxu0 0
      %537 = vmatmul.mubr.bf16.gmra.mxu0 %v474
      %v538 = vpop.f32.mrf.mxu0
      %v539 = vadd.f32 0.0, %v538
      %v540 = vpop.f32.mrf.mxu0
      %v541 = vpop.f32.mrf.mxu0
      %v542 = vadd.f32 0.0, %v541
      %v543 = vpop.f32.mrf.mxu0
      %544 = vmatprep.mubr.bf16.mxu0 0
      %545 = vmatmul.mubr.bf16.gmra.mxu0 %v475
      %v546 = vpop.f32.mrf.mxu0
      %v547 = vadd.f32 0.0, %v546
      %v548 = vpop.f32.mrf.mxu0
      %v549 = vpop.f32.mrf.mxu0
      %v550 = vadd.f32 0.0, %v549
      %v551 = vpop.f32.mrf.mxu0
      %552 = vmatprep.mubr.bf16.mxu0 0
      %553 = vmatmul.mubr.bf16.gmra.mxu0 %v476
      %v554 = vpop.f32.mrf.mxu0
      %v555 = vadd.f32 0.0, %v554
      %v556 = vpop.f32.mrf.mxu0
      %v557 = vpop.f32.mrf.mxu0
      %v558 = vadd.f32 0.0, %v557
      %v559 = vpop.f32.mrf.mxu0
      %560 = vmatprep.mubr.bf16.mxu0 0
      %561 = vmatmul.mubr.bf16.gmra.mxu0 %v477
      %v562 = vpop.f32.mrf.mxu0
      %v563 = vadd.f32 0.0, %v562
      %v564 = vpop.f32.mrf.mxu0
      %v565 = vpop.f32.mrf.mxu0
      %v566 = vadd.f32 0.0, %v565
      %v567 = vpop.f32.mrf.mxu0
      %568 = vmatprep.mubr.bf16.mxu0 0
      %569 = vmatmul.mubr.bf16.gmra.mxu0 %v478
      %v570 = vpop.f32.mrf.mxu0
      %v571 = vadd.f32 0.0, %v570
      %v572 = vpop.f32.mrf.mxu0
      %v573 = vpop.f32.mrf.mxu0
      %v574 = vadd.f32 0.0, %v573
      %v575 = vpop.f32.mrf.mxu0
      %576 = vmatprep.mubr.bf16.mxu0 0
      %577 = vmatmul.mubr.bf16.gmra.mxu0 %v479
      %v578 = vpop.f32.mrf.mxu0
      %v579 = vadd.f32 0.0, %v578
      %v580 = vpop.f32.mrf.mxu0
      %v581 = vpop.f32.mrf.mxu0
      %v582 = vadd.f32 0.0, %v581
      %v583 = vpop.f32.mrf.mxu0
      %584 = vdwg.mxu0
      %v585 = vpack.c.bf16 %v526, %v523
      %v586 = vpack.c.bf16 %v534, %v531
      %v587 = vpack.c.bf16 %v542, %v539
      %v588 = vpack.c.bf16 %v550, %v547
      %v589 = vpack.c.bf16 %v558, %v555
      %v590 = vpack.c.bf16 %v566, %v563
      %v591 = vpack.c.bf16 %v574, %v571
      %v592 = vpack.c.bf16 %v582, %v579
      %v609 = vunpack.c.l.b16 %v383
      %v610 = vunpack.c.l.b16 %v384
      %v611 = vunpack.c.l.b16 %v385
      %v612 = vunpack.c.l.b16 %v386
      %v613 = vunpack.c.l.b16 %v387
      %v614 = vunpack.c.l.b16 %v388
      %v615 = vunpack.c.l.b16 %v389
      %v616 = vunpack.c.l.b16 %v390
      %v617 = vunpack.c.l.b16 %v391
      %v618 = vunpack.c.l.b16 %v392
      %v619 = vunpack.c.l.b16 %v393
      %v620 = vunpack.c.l.b16 %v394
      %v621 = vunpack.c.l.b16 %v395
      %v622 = vunpack.c.l.b16 %v396
      %v623 = vunpack.c.l.b16 %v397
      %v624 = vunpack.c.l.b16 %v398
      %v625 = vpack.c.b16 %v610, %v609
      %v626 = vpack.c.b16 %v612, %v611
      %v627 = vpack.c.b16 %v614, %v613
      %v628 = vpack.c.b16 %v616, %v615
      %v629 = vpack.c.b16 %v618, %v617
      %v630 = vpack.c.b16 %v620, %v619
      %v631 = vpack.c.b16 %v622, %v621
      %v632 = vpack.c.b16 %v624, %v623
      %641 = vmatprep.subr.bf16.mxu0 0
      %642 = vmatpush1.bf16.msra.mxu0 %v632
      %643 = vmatprep.subr.bf16.mxu0 0
      %644 = vmatpush1.bf16.msra.mxu0 %v631
      %645 = vmatprep.subr.bf16.mxu0 0
      %646 = vmatpush1.bf16.msra.mxu0 %v630
      %647 = vmatprep.subr.bf16.mxu0 0
      %648 = vmatpush1.bf16.msra.mxu0 %v629
      %649 = vmatprep.subr.bf16.mxu0 0
      %650 = vmatpush1.bf16.msra.mxu0 %v628
      %651 = vmatprep.subr.bf16.mxu0 0
      %652 = vmatpush1.bf16.msra.mxu0 %v627
      %653 = vmatprep.subr.bf16.mxu0 0
      %654 = vmatpush1.bf16.msra.mxu0 %v626
      %655 = vmatprep.subr.bf16.mxu0 0
      %656 = vmatpush1.bf16.msra.mxu0 %v625
      %657 = vmatprep.subr.bf16.mxu0 0
      %658 = vmatpush2.bf16.msra.mxu0 0
      %659 = vmatprep.subr.bf16.mxu0 0
      %660 = vmatpush2.bf16.msra.mxu0 0
      %661 = vmatprep.subr.bf16.mxu0 0
      %662 = vmatpush2.bf16.msra.mxu0 0
      %663 = vmatprep.subr.bf16.mxu0 0
      %664 = vmatpush2.bf16.msra.mxu0 0
      %665 = vmatprep.subr.bf16.mxu0 0
      %666 = vmatpush2.bf16.msra.mxu0 0
      %667 = vmatprep.subr.bf16.mxu0 0
      %668 = vmatpush2.bf16.msra.mxu0 0
      %669 = vmatprep.subr.bf16.mxu0 0
      %670 = vmatpush2.bf16.msra.mxu0 0
      %671 = vmatprep.subr.bf16.mxu0 0
      %672 = vmatpush2.bf16.msra.mxu0 0
      %673 = vmatprep.mubr.bf16.mxu0 0
      %674 = vmatmul.mubr.bf16.gmra.mxu0 %v416
      %v675 = vpop.f32.mrf.mxu0
      %v676 = vadd.f32 0.0, %v675
      %v677 = vpop.f32.mrf.mxu0
      %v678 = vpop.f32.mrf.mxu0
      %v679 = vadd.f32 0.0, %v678
      %v680 = vpop.f32.mrf.mxu0
      %681 = vmatprep.mubr.bf16.mxu0 0
      %682 = vmatmul.mubr.bf16.gmra.mxu0 %v417
      %v683 = vpop.f32.mrf.mxu0
      %v684 = vadd.f32 0.0, %v683
      %v685 = vpop.f32.mrf.mxu0
      %v686 = vpop.f32.mrf.mxu0
      %v687 = vadd.f32 0.0, %v686
      %v688 = vpop.f32.mrf.mxu0
      %689 = vmatprep.mubr.bf16.mxu0 0
      %690 = vmatmul.mubr.bf16.gmra.mxu0 %v418
      %v691 = vpop.f32.mrf.mxu0
      %v692 = vadd.f32 0.0, %v691
      %v693 = vpop.f32.mrf.mxu0
      %v694 = vpop.f32.mrf.mxu0
      %v695 = vadd.f32 0.0, %v694
      %v696 = vpop.f32.mrf.mxu0
      %697 = vmatprep.mubr.bf16.mxu0 0
      %698 = vmatmul.mubr.bf16.gmra.mxu0 %v419
      %v699 = vpop.f32.mrf.mxu0
      %v700 = vadd.f32 0.0, %v699
      %v701 = vpop.f32.mrf.mxu0
      %v702 = vpop.f32.mrf.mxu0
      %v703 = vadd.f32 0.0, %v702
      %v704 = vpop.f32.mrf.mxu0
      %705 = vmatprep.mubr.bf16.mxu0 0
      %706 = vmatmul.mubr.bf16.gmra.mxu0 %v420
      %v707 = vpop.f32.mrf.mxu0
      %v708 = vadd.f32 0.0, %v707
      %v709 = vpop.f32.mrf.mxu0
      %v710 = vpop.f32.mrf.mxu0
      %v711 = vadd.f32 0.0, %v710
      %v712 = vpop.f32.mrf.mxu0
      %713 = vmatprep.mubr.bf16.mxu0 0
      %714 = vmatmul.mubr.bf16.gmra.mxu0 %v421
      %v715 = vpop.f32.mrf.mxu0
      %v716 = vadd.f32 0.0, %v715
      %v717 = vpop.f32.mrf.mxu0
      %v718 = vpop.f32.mrf.mxu0
      %v719 = vadd.f32 0.0, %v718
      %v720 = vpop.f32.mrf.mxu0
      %721 = vmatprep.mubr.bf16.mxu0 0
      %722 = vmatmul.mubr.bf16.gmra.mxu0 %v422
      %v723 = vpop.f32.mrf.mxu0
      %v724 = vadd.f32 0.0, %v723
      %v725 = vpop.f32.mrf.mxu0
      %v726 = vpop.f32.mrf.mxu0
      %v727 = vadd.f32 0.0, %v726
      %v728 = vpop.f32.mrf.mxu0
      %729 = vmatprep.mubr.bf16.mxu0 0
      %730 = vmatmul.mubr.bf16.gmra.mxu0 %v423
      %v731 = vpop.f32.mrf.mxu0
      %v732 = vadd.f32 0.0, %v731
      %v733 = vpop.f32.mrf.mxu0
      %v734 = vpop.f32.mrf.mxu0
      %v735 = vadd.f32 0.0, %v734
      %v736 = vpop.f32.mrf.mxu0
      %737 = vdwg.mxu0
      %v754 = vunpack.c.l.b16 %v367
      %v755 = vunpack.c.l.b16 %v368
      %v756 = vunpack.c.l.b16 %v369
      %v757 = vunpack.c.l.b16 %v370
      %v758 = vunpack.c.l.b16 %v371
      %v759 = vunpack.c.l.b16 %v372
      %v760 = vunpack.c.l.b16 %v373
      %v761 = vunpack.c.l.b16 %v374
      %v762 = vunpack.c.l.b16 %v375
      %v763 = vunpack.c.l.b16 %v376
      %v764 = vunpack.c.l.b16 %v377
      %v765 = vunpack.c.l.b16 %v378
      %v766 = vunpack.c.l.b16 %v379
      %v767 = vunpack.c.l.b16 %v380
      %v768 = vunpack.c.l.b16 %v381
      %v769 = vunpack.c.l.b16 %v382
      %v770 = vpack.c.b16 %v755, %v754
      %v771 = vpack.c.b16 %v757, %v756
      %v772 = vpack.c.b16 %v759, %v758
      %v773 = vpack.c.b16 %v761, %v760
      %v774 = vpack.c.b16 %v763, %v762
      %v775 = vpack.c.b16 %v765, %v764
      %v776 = vpack.c.b16 %v767, %v766
      %v777 = vpack.c.b16 %v769, %v768
      %786 = vmatprep.subr.bf16.mxu0 0
      %787 = vmatpush1.bf16.msra.mxu0 %v777
      %788 = vmatprep.subr.bf16.mxu0 0
      %789 = vmatpush1.bf16.msra.mxu0 %v776
      %790 = vmatprep.subr.bf16.mxu0 0
      %791 = vmatpush1.bf16.msra.mxu0 %v775
      %792 = vmatprep.subr.bf16.mxu0 0
      %793 = vmatpush1.bf16.msra.mxu0 %v774
      %794 = vmatprep.subr.bf16.mxu0 0
      %795 = vmatpush1.bf16.msra.mxu0 %v773
      %796 = vmatprep.subr.bf16.mxu0 0
      %797 = vmatpush1.bf16.msra.mxu0 %v772
      %798 = vmatprep.subr.bf16.mxu0 0
      %799 = vmatpush1.bf16.msra.mxu0 %v771
      %800 = vmatprep.subr.bf16.mxu0 0
      %801 = vmatpush1.bf16.msra.mxu0 %v770
      %802 = vmatprep.subr.bf16.mxu0 0
      %803 = vmatpush2.bf16.msra.mxu0 0
      %804 = vmatprep.subr.bf16.mxu0 0
      %805 = vmatpush2.bf16.msra.mxu0 0
      %806 = vmatprep.subr.bf16.mxu0 0
      %807 = vmatpush2.bf16.msra.mxu0 0
      %808 = vmatprep.subr.bf16.mxu0 0
      %809 = vmatpush2.bf16.msra.mxu0 0
      %810 = vmatprep.subr.bf16.mxu0 0
      %811 = vmatpush2.bf16.msra.mxu0 0
      %812 = vmatprep.subr.bf16.mxu0 0
      %813 = vmatpush2.bf16.msra.mxu0 0
      %814 = vmatprep.subr.bf16.mxu0 0
      %815 = vmatpush2.bf16.msra.mxu0 0
      %816 = vmatprep.subr.bf16.mxu0 0
      %817 = vmatpush2.bf16.msra.mxu0 0
      %818 = vmatprep.mubr.bf16.mxu0 0
      %819 = vmatmul.mubr.bf16.gmra.mxu0 %v585
      %v820 = vpop.f32.mrf.mxu0
      %v821 = vadd.f32 %v676, %v820
      %v822 = vpop.f32.mrf.mxu0
      %v823 = vpop.f32.mrf.mxu0
      %v824 = vadd.f32 %v679, %v823
      %v825 = vpop.f32.mrf.mxu0
      %826 = vmatprep.mubr.bf16.mxu0 0
      %827 = vmatmul.mubr.bf16.gmra.mxu0 %v586
      %v828 = vpop.f32.mrf.mxu0
      %v829 = vadd.f32 %v684, %v828
      %v830 = vpop.f32.mrf.mxu0
      %v831 = vpop.f32.mrf.mxu0
      %v832 = vadd.f32 %v687, %v831
      %v833 = vpop.f32.mrf.mxu0
      %834 = vmatprep.mubr.bf16.mxu0 0
      %835 = vmatmul.mubr.bf16.gmra.mxu0 %v587
      %v836 = vpop.f32.mrf.mxu0
      %v837 = vadd.f32 %v692, %v836
      %v838 = vpop.f32.mrf.mxu0
      %v839 = vpop.f32.mrf.mxu0
      %v840 = vadd.f32 %v695, %v839
      %v841 = vpop.f32.mrf.mxu0
      %842 = vmatprep.mubr.bf16.mxu0 0
      %843 = vmatmul.mubr.bf16.gmra.mxu0 %v588
      %v844 = vpop.f32.mrf.mxu0
      %v845 = vadd.f32 %v700, %v844
      %v846 = vpop.f32.mrf.mxu0
      %v847 = vpop.f32.mrf.mxu0
      %v848 = vadd.f32 %v703, %v847
      %v849 = vpop.f32.mrf.mxu0
      %850 = vmatprep.mubr.bf16.mxu0 0
      %851 = vmatmul.mubr.bf16.gmra.mxu0 %v589
      %v852 = vpop.f32.mrf.mxu0
      %v853 = vadd.f32 %v708, %v852
      %v854 = vpop.f32.mrf.mxu0
      %v855 = vpop.f32.mrf.mxu0
      %v856 = vadd.f32 %v711, %v855
      %v857 = vpop.f32.mrf.mxu0
      %858 = vmatprep.mubr.bf16.mxu0 0
      %859 = vmatmul.mubr.bf16.gmra.mxu0 %v590
      %v860 = vpop.f32.mrf.mxu0
      %v861 = vadd.f32 %v716, %v860
      %v862 = vpop.f32.mrf.mxu0
      %v863 = vpop.f32.mrf.mxu0
      %v864 = vadd.f32 %v719, %v863
      %v865 = vpop.f32.mrf.mxu0
      %866 = vmatprep.mubr.bf16.mxu0 0
      %867 = vmatmul.mubr.bf16.gmra.mxu0 %v591
      %v868 = vpop.f32.mrf.mxu0
      %v869 = vadd.f32 %v724, %v868
      %v870 = vpop.f32.mrf.mxu0
      %v871 = vpop.f32.mrf.mxu0
      %v872 = vadd.f32 %v727, %v871
      %v873 = vpop.f32.mrf.mxu0
      %874 = vmatprep.mubr.bf16.mxu0 0
      %875 = vmatmul.mubr.bf16.gmra.mxu0 %v592
      %v876 = vpop.f32.mrf.mxu0
      %v877 = vadd.f32 %v732, %v876
      %v878 = vpop.f32.mrf.mxu0
      %v879 = vpop.f32.mrf.mxu0
      %v880 = vadd.f32 %v735, %v879
      %v881 = vpop.f32.mrf.mxu0
      %882 = vdwg.mxu0
      %v883 = vlaneseq
      %v884 = vshrl.u32 %v883, 7
      %v885 = vsub.s32 0, %v884
      %v886 = vrot.slane %v415, %v885
      %v887 = vadd.f32 %v821, %v886
      %v888 = vadd.f32 %v824, %v886
      %v889 = vadd.f32 %v829, %v886
      %v890 = vadd.f32 %v832, %v886
      %v891 = vadd.f32 %v837, %v886
      %v892 = vadd.f32 %v840, %v886
      %v893 = vadd.f32 %v845, %v886
      %v894 = vadd.f32 %v848, %v886
      %v895 = vadd.f32 %v853, %v886
      %v896 = vadd.f32 %v856, %v886
      %v897 = vadd.f32 %v861, %v886
      %v898 = vadd.f32 %v864, %v886
      %v899 = vadd.f32 %v869, %v886
      %v900 = vadd.f32 %v872, %v886
      %v901 = vadd.f32 %v877, %v886
      %v902 = vadd.f32 %v880, %v886
      %v903 = vmax.f32 %v887, 0.0
      %v904 = vmax.f32 %v888, 0.0
      %v905 = vmax.f32 %v889, 0.0
      %v906 = vmax.f32 %v890, 0.0
      %v907 = vmax.f32 %v891, 0.0
      %v908 = vmax.f32 %v892, 0.0
      %v909 = vmax.f32 %v893, 0.0
      %v910 = vmax.f32 %v894, 0.0
      %v911 = vmax.f32 %v895, 0.0
      %v912 = vmax.f32 %v896, 0.0
      %v913 = vmax.f32 %v897, 0.0
      %v914 = vmax.f32 %v898, 0.0
      %v915 = vmax.f32 %v899, 0.0
      %v916 = vmax.f32 %v900, 0.0
      %v917 = vmax.f32 %v901, 0.0
      %v918 = vmax.f32 %v902, 0.0
      %v919 = vpack.c.bf16 %v904, %v903
      %v920 = vpack.c.bf16 %v906, %v905
      %v921 = vpack.c.bf16 %v908, %v907
      %v922 = vpack.c.bf16 %v910, %v909
      %v923 = vpack.c.bf16 %v912, %v911
      %v924 = vpack.c.bf16 %v914, %v913
      %v925 = vpack.c.bf16 %v916, %v915
      %v926 = vpack.c.bf16 %v918, %v917
      %v943 = vunpack.c.l.b16 %v399
      %v944 = vunpack.c.l.b16 %v400
      %v945 = vunpack.c.l.b16 %v401
      %v946 = vunpack.c.l.b16 %v402
      %v947 = vunpack.c.l.b16 %v403
      %v948 = vunpack.c.l.b16 %v404
      %v949 = vunpack.c.l.b16 %v405
      %v950 = vunpack.c.l.b16 %v406
      %v951 = vunpack.c.l.b16 %v407
      %v952 = vunpack.c.l.b16 %v408
      %v953 = vunpack.c.l.b16 %v409
      %v954 = vunpack.c.l.b16 %v410
      %v955 = vunpack.c.l.b16 %v411
      %v956 = vunpack.c.l.b16 %v412
      %v957 = vunpack.c.l.b16 %v413
      %v958 = vunpack.c.l.b16 %v414
      %v959 = vpack.c.b16 %v944, %v943
      %v960 = vpack.c.b16 %v946, %v945
      %v961 = vpack.c.b16 %v948, %v947
      %v962 = vpack.c.b16 %v950, %v949
      %v963 = vpack.c.b16 %v952, %v951
      %v964 = vpack.c.b16 %v954, %v953
      %v965 = vpack.c.b16 %v956, %v955
      %v966 = vpack.c.b16 %v958, %v957
      %975 = vmatprep.subr.bf16.mxu0 0
      %976 = vmatpush1.bf16.msra.mxu0 %v966
      %977 = vmatprep.subr.bf16.mxu0 0
      %978 = vmatpush1.bf16.msra.mxu0 %v965
      %979 = vmatprep.subr.bf16.mxu0 0
      %980 = vmatpush1.bf16.msra.mxu0 %v964
      %981 = vmatprep.subr.bf16.mxu0 0
      %982 = vmatpush1.bf16.msra.mxu0 %v963
      %983 = vmatprep.subr.bf16.mxu0 0
      %984 = vmatpush1.bf16.msra.mxu0 %v962
      %985 = vmatprep.subr.bf16.mxu0 0
      %986 = vmatpush1.bf16.msra.mxu0 %v961
      %987 = vmatprep.subr.bf16.mxu0 0
      %988 = vmatpush1.bf16.msra.mxu0 %v960
      %989 = vmatprep.subr.bf16.mxu0 0
      %990 = vmatpush1.bf16.msra.mxu0 %v959
      %991 = vmatprep.subr.bf16.mxu0 0
      %992 = vmatpush2.bf16.msra.mxu0 0
      %993 = vmatprep.subr.bf16.mxu0 0
      %994 = vmatpush2.bf16.msra.mxu0 0
      %995 = vmatprep.subr.bf16.mxu0 0
      %996 = vmatpush2.bf16.msra.mxu0 0
      %997 = vmatprep.subr.bf16.mxu0 0
      %998 = vmatpush2.bf16.msra.mxu0 0
      %999 = vmatprep.subr.bf16.mxu0 0
      %1000 = vmatpush2.bf16.msra.mxu0 0
      %1001 = vmatprep.subr.bf16.mxu0 0
      %1002 = vmatpush2.bf16.msra.mxu0 0
      %1003 = vmatprep.subr.bf16.mxu0 0
      %1004 = vmatpush2.bf16.msra.mxu0 0
      %1005 = vmatprep.subr.bf16.mxu0 0
      %1006 = vmatpush2.bf16.msra.mxu0 0
      %1007 = vmatprep.mubr.bf16.mxu0 0
      %1008 = vmatmul.mubr.bf16.gmra.mxu0 %v919
      %v1009 = vpop.f32.mrf.mxu0
      %v1010 = vadd.f32 0.0, %v1009
      %v1011 = vpop.f32.mrf.mxu0
      %v1012 = vpop.f32.mrf.mxu0
      %v1013 = vadd.f32 0.0, %v1012
      %v1014 = vpop.f32.mrf.mxu0
      %1015 = vmatprep.mubr.bf16.mxu0 0
      %1016 = vmatmul.mubr.bf16.gmra.mxu0 %v920
      %v1017 = vpop.f32.mrf.mxu0
      %v1018 = vadd.f32 0.0, %v1017
      %v1019 = vpop.f32.mrf.mxu0
      %v1020 = vpop.f32.mrf.mxu0
      %v1021 = vadd.f32 0.0, %v1020
      %v1022 = vpop.f32.mrf.mxu0
      %1023 = vmatprep.mubr.bf16.mxu0 0
      %1024 = vmatmul.mubr.bf16.gmra.mxu0 %v921
      %v1025 = vpop.f32.mrf.mxu0
      %v1026 = vadd.f32 0.0, %v1025
      %v1027 = vpop.f32.mrf.mxu0
      %v1028 = vpop.f32.mrf.mxu0
      %v1029 = vadd.f32 0.0, %v1028
      %v1030 = vpop.f32.mrf.mxu0
      %1031 = vmatprep.mubr.bf16.mxu0 0
      %1032 = vmatmul.mubr.bf16.gmra.mxu0 %v922
      %v1033 = vpop.f32.mrf.mxu0
      %v1034 = vadd.f32 0.0, %v1033
      %v1035 = vpop.f32.mrf.mxu0
      %v1036 = vpop.f32.mrf.mxu0
      %v1037 = vadd.f32 0.0, %v1036
      %v1038 = vpop.f32.mrf.mxu0
      %1039 = vmatprep.mubr.bf16.mxu0 0
      %1040 = vmatmul.mubr.bf16.gmra.mxu0 %v923
      %v1041 = vpop.f32.mrf.mxu0
      %v1042 = vadd.f32 0.0, %v1041
      %v1043 = vpop.f32.mrf.mxu0
      %v1044 = vpop.f32.mrf.mxu0
      %v1045 = vadd.f32 0.0, %v1044
      %v1046 = vpop.f32.mrf.mxu0
      %1047 = vmatprep.mubr.bf16.mxu0 0
      %1048 = vmatmul.mubr.bf16.gmra.mxu0 %v924
      %v1049 = vpop.f32.mrf.mxu0
      %v1050 = vadd.f32 0.0, %v1049
      %v1051 = vpop.f32.mrf.mxu0
      %v1052 = vpop.f32.mrf.mxu0
      %v1053 = vadd.f32 0.0, %v1052
      %v1054 = vpop.f32.mrf.mxu0
      %1055 = vmatprep.mubr.bf16.mxu0 0
      %1056 = vmatmul.mubr.bf16.gmra.mxu0 %v925
      %v1057 = vpop.f32.mrf.mxu0
      %v1058 = vadd.f32 0.0, %v1057
      %v1059 = vpop.f32.mrf.mxu0
      %v1060 = vpop.f32.mrf.mxu0
      %v1061 = vadd.f32 0.0, %v1060
      %v1062 = vpop.f32.mrf.mxu0
      %1063 = vmatprep.mubr.bf16.mxu0 0
      %1064 = vmatmul.mubr.bf16.gmra.mxu0 %v926
      %v1065 = vpop.f32.mrf.mxu0
      %v1066 = vadd.f32 0.0, %v1065
      %v1067 = vpop.f32.mrf.mxu0
      %v1068 = vpop.f32.mrf.mxu0
      %v1069 = vadd.f32 0.0, %v1068
      %v1070 = vpop.f32.mrf.mxu0
      %1071 = vdwg.mxu0
      %v1072 = vtanh.pop %v1010
      %v1073 = vtanh.pop %v1013
      %v1074 = vtanh.pop %v1018
      %v1075 = vtanh.pop %v1021
      %v1076 = vtanh.pop %v1026
      %v1077 = vtanh.pop %v1029
      %v1078 = vtanh.pop %v1034
      %v1079 = vtanh.pop %v1037
      %v1080 = vtanh.pop %v1042
      %v1081 = vtanh.pop %v1045
      %v1082 = vtanh.pop %v1050
      %v1083 = vtanh.pop %v1053
      %v1084 = vtanh.pop %v1058
      %v1085 = vtanh.pop %v1061
      %v1086 = vtanh.pop %v1066
      %v1087 = vtanh.pop %v1069
      %vm1088 = vcmp.gt.f32.partialorder %v351, 0.0
      %vm1089 = vcmp.gt.f32.partialorder %v352, 0.0
      %vm1090 = vcmp.gt.f32.partialorder %v353, 0.0
      %vm1091 = vcmp.gt.f32.partialorder %v354, 0.0
      %vm1092 = vcmp.gt.f32.partialorder %v355, 0.0
      %vm1093 = vcmp.gt.f32.partialorder %v356, 0.0
      %vm1094 = vcmp.gt.f32.partialorder %v357, 0.0
      %vm1095 = vcmp.gt.f32.partialorder %v358, 0.0
      %vm1096 = vcmp.gt.f32.partialorder %v359, 0.0
      %vm1097 = vcmp.gt.f32.partialorder %v360, 0.0
      %vm1098 = vcmp.gt.f32.partialorder %v361, 0.0
      %vm1099 = vcmp.gt.f32.partialorder %v362, 0.0
      %vm1100 = vcmp.gt.f32.partialorder %v363, 0.0
      %vm1101 = vcmp.gt.f32.partialorder %v364, 0.0
      %vm1102 = vcmp.gt.f32.partialorder %v365, 0.0
      %vm1103 = vcmp.gt.f32.partialorder %v366, 0.0
      %v1104 = vsel %vm1088, %v1072, -inf
      %v1105 = vsel %vm1089, %v1073, -inf
      %v1106 = vsel %vm1090, %v1074, -inf
      %v1107 = vsel %vm1091, %v1075, -inf
      %v1108 = vsel %vm1092, %v1076, -inf
      %v1109 = vsel %vm1093, %v1077, -inf
      %v1110 = vsel %vm1094, %v1078, -inf
      %v1111 = vsel %vm1095, %v1079, -inf
      %v1112 = vsel %vm1096, %v1080, -inf
      %v1113 = vsel %vm1097, %v1081, -inf
      %v1114 = vsel %vm1098, %v1082, -inf
      %v1115 = vsel %vm1099, %v1083, -inf
      %v1116 = vsel %vm1100, %v1084, -inf
      %v1117 = vsel %vm1101, %v1085, -inf
      %v1118 = vsel %vm1102, %v1086, -inf
      %v1119 = vsel %vm1103, %v1087, -inf
      %1121 = vset.pattern.permute.xlu0 0
      %1122 = vperm.xlu0 %1121, %v1104
      %v1123 = vpop.permute.xlu0 %1122
      %1126 = vset.pattern.permute.xlu0 0
      %1127 = vperm.xlu0 %1126, %v1105
      %v1128 = vpop.permute.xlu0 %1127
      %1131 = vset.pattern.permute.xlu0 0
      %1132 = vperm.xlu0 %1131, %v1106
      %v1133 = vpop.permute.xlu0 %1132
      %1136 = vset.pattern.permute.xlu0 0
      %1137 = vperm.xlu0 %1136, %v1107
      %v1138 = vpop.permute.xlu0 %1137
      %1141 = vset.pattern.permute.xlu0 0
      %1142 = vperm.xlu0 %1141, %v1108
      %v1143 = vpop.permute.xlu0 %1142
      %1146 = vset.pattern.permute.xlu0 0
      %1147 = vperm.xlu0 %1146, %v1109
      %v1148 = vpop.permute.xlu0 %1147
      %1151 = vset.pattern.permute.xlu0 0
      %1152 = vperm.xlu0 %1151, %v1110
      %v1153 = vpop.permute.xlu0 %1152
      %1156 = vset.pattern.permute.xlu0 0
      %1157 = vperm.xlu0 %1156, %v1111
      %v1158 = vpop.permute.xlu0 %1157
      %1161 = vset.pattern.permute.xlu0 0
      %1162 = vperm.xlu0 %1161, %v1112
      %v1163 = vpop.permute.xlu0 %1162
      %1166 = vset.pattern.permute.xlu0 0
      %1167 = vperm.xlu0 %1166, %v1113
      %v1168 = vpop.permute.xlu0 %1167
      %1171 = vset.pattern.permute.xlu0 0
      %1172 = vperm.xlu0 %1171, %v1114
      %v1173 = vpop.permute.xlu0 %1172
      %1176 = vset.pattern.permute.xlu0 0
      %1177 = vperm.xlu0 %1176, %v1115
      %v1178 = vpop.permute.xlu0 %1177
      %1181 = vset.pattern.permute.xlu0 0
      %1182 = vperm.xlu0 %1181, %v1116
      %v1183 = vpop.permute.xlu0 %1182
      %1186 = vset.pattern.permute.xlu0 0
      %1187 = vperm.xlu0 %1186, %v1117
      %v1188 = vpop.permute.xlu0 %1187
      %1191 = vset.pattern.permute.xlu0 0
      %1192 = vperm.xlu0 %1191, %v1118
      %v1193 = vpop.permute.xlu0 %1192
      %1196 = vset.pattern.permute.xlu0 0
      %1197 = vperm.xlu0 %1196, %v1119
      %v1198 = vpop.permute.xlu0 %1197
      %1200 = vxpose.xlu0.b32.start [1/16] %v1123, 128
      %1201 = vxpose.xlu0.b32.cont [2/16] %v1128, 128
      %1202 = vxpose.xlu0.b32.cont [3/16] %v1133, 128
      %1203 = vxpose.xlu0.b32.cont [4/16] %v1138, 128
      %1204 = vxpose.xlu0.b32.cont [5/16] %v1143, 128
      %1205 = vxpose.xlu0.b32.cont [6/16] %v1148, 128
      %1206 = vxpose.xlu0.b32.cont [7/16] %v1153, 128
      %1207 = vxpose.xlu0.b32.cont [8/16] %v1158, 128
      %1208 = vxpose.xlu0.b32.cont [9/16] %v1163, 128
      %1209 = vxpose.xlu0.b32.cont [10/16] %v1168, 128
      %1210 = vxpose.xlu0.b32.cont [11/16] %v1173, 128
      %1211 = vxpose.xlu0.b32.cont [12/16] %v1178, 128
      %1212 = vxpose.xlu0.b32.cont [13/16] %v1183, 128
      %1213 = vxpose.xlu0.b32.cont [14/16] %v1188, 128
      %1214 = vxpose.xlu0.b32.cont [15/16] %v1193, 128
      %1215 = vxpose.xlu0.b32.end [16/16] %v1198, 128
      %v1216 = vpop.trf.xlu0
      %v1217 = vpop.trf.xlu0
      %v1218 = vpop.trf.xlu0
      %v1219 = vpop.trf.xlu0
      %v1220 = vpop.trf.xlu0
      %v1221 = vpop.trf.xlu0
      %v1222 = vpop.trf.xlu0
      %v1223 = vpop.trf.xlu0
      %v1224 = vpop.trf.xlu0
      %v1225 = vpop.trf.xlu0
      %v1226 = vpop.trf.xlu0
      %v1227 = vpop.trf.xlu0
      %v1228 = vpop.trf.xlu0
      %v1229 = vpop.trf.xlu0
      %v1230 = vpop.trf.xlu0
      %v1231 = vpop.trf.xlu0
      %v1232 = vlaneseq
      %v1233 = vshrl.u32 %v1232, 7
      %v1234 = vadd.s32 %v1233, 8
      %v1235 = vadd.s32 %v1233, 16
      %v1236 = vadd.s32 %v1233, 24
      %v1237 = vadd.s32 %v1233, 32
      %v1238 = vadd.s32 %v1233, 40
      %v1239 = vadd.s32 %v1233, 48
      %v1240 = vadd.s32 %v1233, 56
      %v1241 = vadd.s32 %v1233, 64
      %v1242 = vadd.s32 %v1233, 72
      %v1243 = vadd.s32 %v1233, 80
      %v1244 = vadd.s32 %v1233, 88
      %v1245 = vadd.s32 %v1233, 96
      %v1246 = vadd.s32 %v1233, 104
      %v1247 = vadd.s32 %v1233, 112
      %v1248 = vadd.s32 %v1233, 120
      %v1249 = vlaneseq
      %v1250 = vand.u32 %v1249, 127
      %v1251 = vcvt.s32.f32 %v1233
      %v1252 = vcvt.s32.f32 %v1234
      %v1253 = vcvt.s32.f32 %v1235
      %v1254 = vcvt.s32.f32 %v1236
      %v1255 = vcvt.s32.f32 %v1237
      %v1256 = vcvt.s32.f32 %v1238
      %v1257 = vcvt.s32.f32 %v1239
      %v1258 = vcvt.s32.f32 %v1240
      %v1259 = vcvt.s32.f32 %v1241
      %v1260 = vcvt.s32.f32 %v1242
      %v1261 = vcvt.s32.f32 %v1243
      %v1262 = vcvt.s32.f32 %v1244
      %v1263 = vcvt.s32.f32 %v1245
      %v1264 = vcvt.s32.f32 %v1246
      %v1265 = vcvt.s32.f32 %v1247
      %v1266 = vcvt.s32.f32 %v1248
      %v1267 = vadd.f32 %v1251, 0.5
      %v1268 = vadd.f32 %v1252, 0.5
      %v1269 = vadd.f32 %v1253, 0.5
      %v1270 = vadd.f32 %v1254, 0.5
      %v1271 = vadd.f32 %v1255, 0.5
      %v1272 = vadd.f32 %v1256, 0.5
      %v1273 = vadd.f32 %v1257, 0.5
      %v1274 = vadd.f32 %v1258, 0.5
      %v1275 = vadd.f32 %v1259, 0.5
      %v1276 = vadd.f32 %v1260, 0.5
      %v1277 = vadd.f32 %v1261, 0.5
      %v1278 = vadd.f32 %v1262, 0.5
      %v1279 = vadd.f32 %v1263, 0.5
      %v1280 = vadd.f32 %v1264, 0.5
      %v1281 = vadd.f32 %v1265, 0.5
      %v1282 = vadd.f32 %v1266, 0.5
      %v1283 = vmul.f32 %v1267, 0.0625
      %v1284 = vmul.f32 %v1268, 0.0625
      %v1285 = vmul.f32 %v1269, 0.0625
      %v1286 = vmul.f32 %v1270, 0.0625
      %v1287 = vmul.f32 %v1271, 0.0625
      %v1288 = vmul.f32 %v1272, 0.0625
      %v1289 = vmul.f32 %v1273, 0.0625
      %v1290 = vmul.f32 %v1274, 0.0625
      %v1291 = vmul.f32 %v1275, 0.0625
      %v1292 = vmul.f32 %v1276, 0.0625
      %v1293 = vmul.f32 %v1277, 0.0625
      %v1294 = vmul.f32 %v1278, 0.0625
      %v1295 = vmul.f32 %v1279, 0.0625
      %v1296 = vmul.f32 %v1280, 0.0625
      %v1297 = vmul.f32 %v1281, 0.0625
      %v1298 = vmul.f32 %v1282, 0.0625
      %v1299 = vfloor.f32 %v1283
      %v1300 = vfloor.f32 %v1284
      %v1301 = vfloor.f32 %v1285
      %v1302 = vfloor.f32 %v1286
      %v1303 = vfloor.f32 %v1287
      %v1304 = vfloor.f32 %v1288
      %v1305 = vfloor.f32 %v1289
      %v1306 = vfloor.f32 %v1290
      %v1307 = vfloor.f32 %v1291
      %v1308 = vfloor.f32 %v1292
      %v1309 = vfloor.f32 %v1293
      %v1310 = vfloor.f32 %v1294
      %v1311 = vfloor.f32 %v1295
      %v1312 = vfloor.f32 %v1296
      %v1313 = vfloor.f32 %v1297
      %v1314 = vfloor.f32 %v1298
      %v1315 = vcvt.s32.f32 %v1250
      %v1316 = vadd.f32 %v1315, 0.5
      %v1317 = vmul.f32 %v1316, 0.0625
      %v1318 = vfloor.f32 %v1317
      %vm1319 = vcmp.eq.f32.partialorder %v1299, %v1318
      %vm1320 = vcmp.eq.f32.partialorder %v1300, %v1318
      %vm1321 = vcmp.eq.f32.partialorder %v1301, %v1318
      %vm1322 = vcmp.eq.f32.partialorder %v1302, %v1318
      %vm1323 = vcmp.eq.f32.partialorder %v1303, %v1318
      %vm1324 = vcmp.eq.f32.partialorder %v1304, %v1318
      %vm1325 = vcmp.eq.f32.partialorder %v1305, %v1318
      %vm1326 = vcmp.eq.f32.partialorder %v1306, %v1318
      %vm1327 = vcmp.eq.f32.partialorder %v1307, %v1318
      %vm1328 = vcmp.eq.f32.partialorder %v1308, %v1318
      %vm1329 = vcmp.eq.f32.partialorder %v1309, %v1318
      %vm1330 = vcmp.eq.f32.partialorder %v1310, %v1318
      %vm1331 = vcmp.eq.f32.partialorder %v1311, %v1318
      %vm1332 = vcmp.eq.f32.partialorder %v1312, %v1318
      %vm1333 = vcmp.eq.f32.partialorder %v1313, %v1318
      %vm1334 = vcmp.eq.f32.partialorder %v1314, %v1318
      %v1335 = vsel %vm1088, 1, 0
      %v1336 = vsel %vm1089, 1, 0
      %v1337 = vsel %vm1090, 1, 0
      %v1338 = vsel %vm1091, 1, 0
      %v1339 = vsel %vm1092, 1, 0
      %v1340 = vsel %vm1093, 1, 0
      %v1341 = vsel %vm1094, 1, 0
      %v1342 = vsel %vm1095, 1, 0
      %v1343 = vsel %vm1096, 1, 0
      %v1344 = vsel %vm1097, 1, 0
      %v1345 = vsel %vm1098, 1, 0
      %v1346 = vsel %vm1099, 1, 0
      %v1347 = vsel %vm1100, 1, 0
      %v1348 = vsel %vm1101, 1, 0
      %v1349 = vsel %vm1102, 1, 0
      %v1350 = vsel %vm1103, 1, 0
      %1351 = vset.pattern.permute.xlu0 0
      %1352 = vperm.xlu0 %1351, %v1335
      %v1353 = vpop.permute.xlu0 %1352
      %1354 = vset.pattern.permute.xlu0 0
      %1355 = vperm.xlu0 %1354, %v1336
      %v1356 = vpop.permute.xlu0 %1355
      %1357 = vset.pattern.permute.xlu0 0
      %1358 = vperm.xlu0 %1357, %v1337
      %v1359 = vpop.permute.xlu0 %1358
      %1360 = vset.pattern.permute.xlu0 0
      %1361 = vperm.xlu0 %1360, %v1338
      %v1362 = vpop.permute.xlu0 %1361
      %1363 = vset.pattern.permute.xlu0 0
      %1364 = vperm.xlu0 %1363, %v1339
      %v1365 = vpop.permute.xlu0 %1364
      %1366 = vset.pattern.permute.xlu0 0
      %1367 = vperm.xlu0 %1366, %v1340
      %v1368 = vpop.permute.xlu0 %1367
      %1369 = vset.pattern.permute.xlu0 0
      %1370 = vperm.xlu0 %1369, %v1341
      %v1371 = vpop.permute.xlu0 %1370
      %1372 = vset.pattern.permute.xlu0 0
      %1373 = vperm.xlu0 %1372, %v1342
      %v1374 = vpop.permute.xlu0 %1373
      %1375 = vset.pattern.permute.xlu0 0
      %1376 = vperm.xlu0 %1375, %v1343
      %v1377 = vpop.permute.xlu0 %1376
      %1378 = vset.pattern.permute.xlu0 0
      %1379 = vperm.xlu0 %1378, %v1344
      %v1380 = vpop.permute.xlu0 %1379
      %1381 = vset.pattern.permute.xlu0 0
      %1382 = vperm.xlu0 %1381, %v1345
      %v1383 = vpop.permute.xlu0 %1382
      %1384 = vset.pattern.permute.xlu0 0
      %1385 = vperm.xlu0 %1384, %v1346
      %v1386 = vpop.permute.xlu0 %1385
      %1387 = vset.pattern.permute.xlu0 0
      %1388 = vperm.xlu0 %1387, %v1347
      %v1389 = vpop.permute.xlu0 %1388
      %1390 = vset.pattern.permute.xlu0 0
      %1391 = vperm.xlu0 %1390, %v1348
      %v1392 = vpop.permute.xlu0 %1391
      %1393 = vset.pattern.permute.xlu0 0
      %1394 = vperm.xlu0 %1393, %v1349
      %v1395 = vpop.permute.xlu0 %1394
      %1396 = vset.pattern.permute.xlu0 0
      %1397 = vperm.xlu0 %1396, %v1350
      %v1398 = vpop.permute.xlu0 %1397
      %vm1399 = vcmp.eq.s32.totalorder %v1353, 1
      %vm1400 = vcmp.eq.s32.totalorder %v1356, 1
      %vm1401 = vcmp.eq.s32.totalorder %v1359, 1
      %vm1402 = vcmp.eq.s32.totalorder %v1362, 1
      %vm1403 = vcmp.eq.s32.totalorder %v1365, 1
      %vm1404 = vcmp.eq.s32.totalorder %v1368, 1
      %vm1405 = vcmp.eq.s32.totalorder %v1371, 1
      %vm1406 = vcmp.eq.s32.totalorder %v1374, 1
      %vm1407 = vcmp.eq.s32.totalorder %v1377, 1
      %vm1408 = vcmp.eq.s32.totalorder %v1380, 1
      %vm1409 = vcmp.eq.s32.totalorder %v1383, 1
      %vm1410 = vcmp.eq.s32.totalorder %v1386, 1
      %vm1411 = vcmp.eq.s32.totalorder %v1389, 1
      %vm1412 = vcmp.eq.s32.totalorder %v1392, 1
      %vm1413 = vcmp.eq.s32.totalorder %v1395, 1
      %vm1414 = vcmp.eq.s32.totalorder %v1398, 1
      %vm1415 = vmand %vm1319, %vm1399
      %vm1416 = vmand %vm1320, %vm1400
      %vm1417 = vmand %vm1321, %vm1401
      %vm1418 = vmand %vm1322, %vm1402
      %vm1419 = vmand %vm1323, %vm1403
      %vm1420 = vmand %vm1324, %vm1404
      %vm1421 = vmand %vm1325, %vm1405
      %vm1422 = vmand %vm1326, %vm1406
      %vm1423 = vmand %vm1327, %vm1407
      %vm1424 = vmand %vm1328, %vm1408
      %vm1425 = vmand %vm1329, %vm1409
      %vm1426 = vmand %vm1330, %vm1410
      %vm1427 = vmand %vm1331, %vm1411
      %vm1428 = vmand %vm1332, %vm1412
      %vm1429 = vmand %vm1333, %vm1413
      %vm1430 = vmand %vm1334, %vm1414
      %vm1431 = vcmp.gt.f32.partialorder %v1216, -2.0
      %vm1432 = vcmp.gt.f32.partialorder %v1217, -2.0
      %vm1433 = vcmp.gt.f32.partialorder %v1218, -2.0
      %vm1434 = vcmp.gt.f32.partialorder %v1219, -2.0
      %vm1435 = vcmp.gt.f32.partialorder %v1220, -2.0
      %vm1436 = vcmp.gt.f32.partialorder %v1221, -2.0
      %vm1437 = vcmp.gt.f32.partialorder %v1222, -2.0
      %vm1438 = vcmp.gt.f32.partialorder %v1223, -2.0
      %vm1439 = vcmp.gt.f32.partialorder %v1224, -2.0
      %vm1440 = vcmp.gt.f32.partialorder %v1225, -2.0
      %vm1441 = vcmp.gt.f32.partialorder %v1226, -2.0
      %vm1442 = vcmp.gt.f32.partialorder %v1227, -2.0
      %vm1443 = vcmp.gt.f32.partialorder %v1228, -2.0
      %vm1444 = vcmp.gt.f32.partialorder %v1229, -2.0
      %vm1445 = vcmp.gt.f32.partialorder %v1230, -2.0
      %vm1446 = vcmp.gt.f32.partialorder %v1231, -2.0
      %vm1447 = vmand %vm1415, %vm1431
      %vm1448 = vmand %vm1416, %vm1432
      %vm1449 = vmand %vm1417, %vm1433
      %vm1450 = vmand %vm1418, %vm1434
      %vm1451 = vmand %vm1419, %vm1435
      %vm1452 = vmand %vm1420, %vm1436
      %vm1453 = vmand %vm1421, %vm1437
      %vm1454 = vmand %vm1422, %vm1438
      %vm1455 = vmand %vm1423, %vm1439
      %vm1456 = vmand %vm1424, %vm1440
      %vm1457 = vmand %vm1425, %vm1441
      %vm1458 = vmand %vm1426, %vm1442
      %vm1459 = vmand %vm1427, %vm1443
      %vm1460 = vmand %vm1428, %vm1444
      %vm1461 = vmand %vm1429, %vm1445
      %vm1462 = vmand %vm1430, %vm1446
      %vm1463 = vcmp.gt.f32.partialorder %v1216, %v1123
      %vm1464 = vcmp.gt.f32.partialorder %v1217, %v1128
      %vm1465 = vcmp.gt.f32.partialorder %v1218, %v1133
      %vm1466 = vcmp.gt.f32.partialorder %v1219, %v1138
      %vm1467 = vcmp.gt.f32.partialorder %v1220, %v1143
      %vm1468 = vcmp.gt.f32.partialorder %v1221, %v1148
      %vm1469 = vcmp.gt.f32.partialorder %v1222, %v1153
      %vm1470 = vcmp.gt.f32.partialorder %v1223, %v1158
      %vm1471 = vcmp.gt.f32.partialorder %v1224, %v1163
      %vm1472 = vcmp.gt.f32.partialorder %v1225, %v1168
      %vm1473 = vcmp.gt.f32.partialorder %v1226, %v1173
      %vm1474 = vcmp.gt.f32.partialorder %v1227, %v1178
      %vm1475 = vcmp.gt.f32.partialorder %v1228, %v1183
      %vm1476 = vcmp.gt.f32.partialorder %v1229, %v1188
      %vm1477 = vcmp.gt.f32.partialorder %v1230, %v1193
      %vm1478 = vcmp.gt.f32.partialorder %v1231, %v1198
      %vm1479 = vcmp.eq.f32.partialorder %v1216, %v1123
      %vm1480 = vcmp.eq.f32.partialorder %v1217, %v1128
      %vm1481 = vcmp.eq.f32.partialorder %v1218, %v1133
      %vm1482 = vcmp.eq.f32.partialorder %v1219, %v1138
      %vm1483 = vcmp.eq.f32.partialorder %v1220, %v1143
      %vm1484 = vcmp.eq.f32.partialorder %v1221, %v1148
      %vm1485 = vcmp.eq.f32.partialorder %v1222, %v1153
      %vm1486 = vcmp.eq.f32.partialorder %v1223, %v1158
      %vm1487 = vcmp.eq.f32.partialorder %v1224, %v1163
      %vm1488 = vcmp.eq.f32.partialorder %v1225, %v1168
      %vm1489 = vcmp.eq.f32.partialorder %v1226, %v1173
      %vm1490 = vcmp.eq.f32.partialorder %v1227, %v1178
      %vm1491 = vcmp.eq.f32.partialorder %v1228, %v1183
      %vm1492 = vcmp.eq.f32.partialorder %v1229, %v1188
      %vm1493 = vcmp.eq.f32.partialorder %v1230, %v1193
      %vm1494 = vcmp.eq.f32.partialorder %v1231, %v1198
      %vm1495 = vcmp.lt.s32.totalorder %v1250, %v1233
      %vm1496 = vcmp.lt.s32.totalorder %v1250, %v1234
      %vm1497 = vcmp.lt.s32.totalorder %v1250, %v1235
      %vm1498 = vcmp.lt.s32.totalorder %v1250, %v1236
      %vm1499 = vcmp.lt.s32.totalorder %v1250, %v1237
      %vm1500 = vcmp.lt.s32.totalorder %v1250, %v1238
      %vm1501 = vcmp.lt.s32.totalorder %v1250, %v1239
      %vm1502 = vcmp.lt.s32.totalorder %v1250, %v1240
      %vm1503 = vcmp.lt.s32.totalorder %v1250, %v1241
      %vm1504 = vcmp.lt.s32.totalorder %v1250, %v1242
      %vm1505 = vcmp.lt.s32.totalorder %v1250, %v1243
      %vm1506 = vcmp.lt.s32.totalorder %v1250, %v1244
      %vm1507 = vcmp.lt.s32.totalorder %v1250, %v1245
      %vm1508 = vcmp.lt.s32.totalorder %v1250, %v1246
      %vm1509 = vcmp.lt.s32.totalorder %v1250, %v1247
      %vm1510 = vcmp.lt.s32.totalorder %v1250, %v1248
      %vm1511 = vmand %vm1479, %vm1495
      %vm1512 = vmand %vm1480, %vm1496
      %vm1513 = vmand %vm1481, %vm1497
      %vm1514 = vmand %vm1482, %vm1498
      %vm1515 = vmand %vm1483, %vm1499
      %vm1516 = vmand %vm1484, %vm1500
      %vm1517 = vmand %vm1485, %vm1501
      %vm1518 = vmand %vm1486, %vm1502
      %vm1519 = vmand %vm1487, %vm1503
      %vm1520 = vmand %vm1488, %vm1504
      %vm1521 = vmand %vm1489, %vm1505
      %vm1522 = vmand %vm1490, %vm1506
      %vm1523 = vmand %vm1491, %vm1507
      %vm1524 = vmand %vm1492, %vm1508
      %vm1525 = vmand %vm1493, %vm1509
      %vm1526 = vmand %vm1494, %vm1510
      %vm1527 = vmor %vm1463, %vm1511
      %vm1528 = vmor %vm1464, %vm1512
      %vm1529 = vmor %vm1465, %vm1513
      %vm1530 = vmor %vm1466, %vm1514
      %vm1531 = vmor %vm1467, %vm1515
      %vm1532 = vmor %vm1468, %vm1516
      %vm1533 = vmor %vm1469, %vm1517
      %vm1534 = vmor %vm1470, %vm1518
      %vm1535 = vmor %vm1471, %vm1519
      %vm1536 = vmor %vm1472, %vm1520
      %vm1537 = vmor %vm1473, %vm1521
      %vm1538 = vmor %vm1474, %vm1522
      %vm1539 = vmor %vm1475, %vm1523
      %vm1540 = vmor %vm1476, %vm1524
      %vm1541 = vmor %vm1477, %vm1525
      %vm1542 = vmor %vm1478, %vm1526
      %vm1543 = vmand %vm1447, %vm1527
      %vm1544 = vmand %vm1448, %vm1528
      %vm1545 = vmand %vm1449, %vm1529
      %vm1546 = vmand %vm1450, %vm1530
      %vm1547 = vmand %vm1451, %vm1531
      %vm1548 = vmand %vm1452, %vm1532
      %vm1549 = vmand %vm1453, %vm1533
      %vm1550 = vmand %vm1454, %vm1534
      %vm1551 = vmand %vm1455, %vm1535
      %vm1552 = vmand %vm1456, %vm1536
      %vm1553 = vmand %vm1457, %vm1537
      %vm1554 = vmand %vm1458, %vm1538
      %vm1555 = vmand %vm1459, %vm1539
      %vm1556 = vmand %vm1460, %vm1540
      %vm1557 = vmand %vm1461, %vm1541
      %vm1558 = vmand %vm1462, %vm1542
      %v1559 = vsel %vm1543, 1.0, 0.0
      %v1560 = vsel %vm1544, 1.0, 0.0
      %v1561 = vsel %vm1545, 1.0, 0.0
      %v1562 = vsel %vm1546, 1.0, 0.0
      %v1563 = vsel %vm1547, 1.0, 0.0
      %v1564 = vsel %vm1548, 1.0, 0.0
      %v1565 = vsel %vm1549, 1.0, 0.0
      %v1566 = vsel %vm1550, 1.0, 0.0
      %v1567 = vsel %vm1551, 1.0, 0.0
      %v1568 = vsel %vm1552, 1.0, 0.0
      %v1569 = vsel %vm1553, 1.0, 0.0
      %v1570 = vsel %vm1554, 1.0, 0.0
      %v1571 = vsel %vm1555, 1.0, 0.0
      %v1572 = vsel %vm1556, 1.0, 0.0
      %v1573 = vsel %vm1557, 1.0, 0.0
      %v1574 = vsel %vm1558, 1.0, 0.0
      %1575 = vmatprep.subr.mxu0 0.0
      %1576 = vmatpush1.msra.mxu0 1.0
      %1577 = vmatprep.subr.mxu0 0.0
      %1578 = vmatpush1.msra.mxu0 1.0
      %1579 = vmatprep.subr.mxu0 0.0
      %1580 = vmatpush1.msra.mxu0 1.0
      %1581 = vmatprep.subr.mxu0 0.0
      %1582 = vmatpush1.msra.mxu0 1.0
      %1583 = vmatprep.subr.mxu0 0.0
      %1584 = vmatpush1.msra.mxu0 1.0
      %1585 = vmatprep.subr.mxu0 0.0
      %1586 = vmatpush1.msra.mxu0 1.0
      %1587 = vmatprep.subr.mxu0 0.0
      %1588 = vmatpush1.msra.mxu0 1.0
      %1589 = vmatprep.subr.mxu0 0.0
      %1590 = vmatpush1.msra.mxu0 1.0
      %1591 = vmatprep.subr.mxu0 0.0
      %1592 = vmatpush1.msra.mxu0 1.0
      %1593 = vmatprep.subr.mxu0 0.0
      %1594 = vmatpush1.msra.mxu0 1.0
      %1595 = vmatprep.subr.mxu0 0.0
      %1596 = vmatpush1.msra.mxu0 1.0
      %1597 = vmatprep.subr.mxu0 0.0
      %1598 = vmatpush1.msra.mxu0 1.0
      %1599 = vmatprep.subr.mxu0 0.0
      %1600 = vmatpush1.msra.mxu0 1.0
      %1601 = vmatprep.subr.mxu0 0.0
      %1602 = vmatpush1.msra.mxu0 1.0
      %1603 = vmatprep.subr.mxu0 0.0
      %1604 = vmatpush1.msra.mxu0 1.0
      %1605 = vmatprep.subr.mxu0 0.0
      %1606 = vmatpush1.msra.mxu0 1.0
      %1607 = vmatprep.subr.mxu0 0.0
      %1608 = vmatpush2.msra.mxu0 0.0
      %1609 = vmatprep.subr.mxu0 0.0
      %1610 = vmatpush2.msra.mxu0 0.0
      %1611 = vmatprep.subr.mxu0 0.0
      %1612 = vmatpush2.msra.mxu0 0.0
      %1613 = vmatprep.subr.mxu0 0.0
      %1614 = vmatpush2.msra.mxu0 0.0
      %1615 = vmatprep.subr.mxu0 0.0
      %1616 = vmatpush2.msra.mxu0 0.0
      %1617 = vmatprep.subr.mxu0 0.0
      %1618 = vmatpush2.msra.mxu0 0.0
      %1619 = vmatprep.subr.mxu0 0.0
      %1620 = vmatpush2.msra.mxu0 0.0
      %1621 = vmatprep.subr.mxu0 0.0
      %1622 = vmatpush2.msra.mxu0 0.0
      %1623 = vmatprep.subr.mxu0 0.0
      %1624 = vmatpush2.msra.mxu0 0.0
      %1625 = vmatprep.subr.mxu0 0.0
      %1626 = vmatpush2.msra.mxu0 0.0
      %1627 = vmatprep.subr.mxu0 0.0
      %1628 = vmatpush2.msra.mxu0 0.0
      %1629 = vmatprep.subr.mxu0 0.0
      %1630 = vmatpush2.msra.mxu0 0.0
      %1631 = vmatprep.subr.mxu0 0.0
      %1632 = vmatpush2.msra.mxu0 0.0
      %1633 = vmatprep.subr.mxu0 0.0
      %1634 = vmatpush2.msra.mxu0 0.0
      %1635 = vmatprep.subr.mxu0 0.0
      %1636 = vmatpush2.msra.mxu0 0.0
      %1637 = vmatprep.subr.mxu0 0.0
      %1638 = vmatpush2.msra.mxu0 0.0
      %1639 = vmatprep.mubr.f32.mxu0 0.0
      %1640 = vmatmul.mubr.f32.gmra.mxu0 %v1559
      %v1641 = vpop.f32.mrf.mxu0
      %v1642 = vadd.f32 0.0, %v1641
      %v1643 = vpop.f32.mrf.mxu0
      %1644 = vmatprep.mubr.f32.mxu0 0.0
      %1645 = vmatmul.mubr.f32.gmra.mxu0 %v1560
      %v1646 = vpop.f32.mrf.mxu0
      %v1647 = vadd.f32 0.0, %v1646
      %v1648 = vpop.f32.mrf.mxu0
      %1649 = vmatprep.mubr.f32.mxu0 0.0
      %1650 = vmatmul.mubr.f32.gmra.mxu0 %v1561
      %v1651 = vpop.f32.mrf.mxu0
      %v1652 = vadd.f32 0.0, %v1651
      %v1653 = vpop.f32.mrf.mxu0
      %1654 = vmatprep.mubr.f32.mxu0 0.0
      %1655 = vmatmul.mubr.f32.gmra.mxu0 %v1562
      %v1656 = vpop.f32.mrf.mxu0
      %v1657 = vadd.f32 0.0, %v1656
      %v1658 = vpop.f32.mrf.mxu0
      %1659 = vmatprep.mubr.f32.mxu0 0.0
      %1660 = vmatmul.mubr.f32.gmra.mxu0 %v1563
      %v1661 = vpop.f32.mrf.mxu0
      %v1662 = vadd.f32 0.0, %v1661
      %v1663 = vpop.f32.mrf.mxu0
      %1664 = vmatprep.mubr.f32.mxu0 0.0
      %1665 = vmatmul.mubr.f32.gmra.mxu0 %v1564
      %v1666 = vpop.f32.mrf.mxu0
      %v1667 = vadd.f32 0.0, %v1666
      %v1668 = vpop.f32.mrf.mxu0
      %1669 = vmatprep.mubr.f32.mxu0 0.0
      %1670 = vmatmul.mubr.f32.gmra.mxu0 %v1565
      %v1671 = vpop.f32.mrf.mxu0
      %v1672 = vadd.f32 0.0, %v1671
      %v1673 = vpop.f32.mrf.mxu0
      %1674 = vmatprep.mubr.f32.mxu0 0.0
      %1675 = vmatmul.mubr.f32.gmra.mxu0 %v1566
      %v1676 = vpop.f32.mrf.mxu0
      %v1677 = vadd.f32 0.0, %v1676
      %v1678 = vpop.f32.mrf.mxu0
      %1679 = vmatprep.mubr.f32.mxu0 0.0
      %1680 = vmatmul.mubr.f32.gmra.mxu0 %v1567
      %v1681 = vpop.f32.mrf.mxu0
      %v1682 = vadd.f32 0.0, %v1681
      %v1683 = vpop.f32.mrf.mxu0
      %1684 = vmatprep.mubr.f32.mxu0 0.0
      %1685 = vmatmul.mubr.f32.gmra.mxu0 %v1568
      %v1686 = vpop.f32.mrf.mxu0
      %v1687 = vadd.f32 0.0, %v1686
      %v1688 = vpop.f32.mrf.mxu0
      %1689 = vmatprep.mubr.f32.mxu0 0.0
      %1690 = vmatmul.mubr.f32.gmra.mxu0 %v1569
      %v1691 = vpop.f32.mrf.mxu0
      %v1692 = vadd.f32 0.0, %v1691
      %v1693 = vpop.f32.mrf.mxu0
      %1694 = vmatprep.mubr.f32.mxu0 0.0
      %1695 = vmatmul.mubr.f32.gmra.mxu0 %v1570
      %v1696 = vpop.f32.mrf.mxu0
      %v1697 = vadd.f32 0.0, %v1696
      %v1698 = vpop.f32.mrf.mxu0
      %1699 = vmatprep.mubr.f32.mxu0 0.0
      %1700 = vmatmul.mubr.f32.gmra.mxu0 %v1571
      %v1701 = vpop.f32.mrf.mxu0
      %v1702 = vadd.f32 0.0, %v1701
      %v1703 = vpop.f32.mrf.mxu0
      %1704 = vmatprep.mubr.f32.mxu0 0.0
      %1705 = vmatmul.mubr.f32.gmra.mxu0 %v1572
      %v1706 = vpop.f32.mrf.mxu0
      %v1707 = vadd.f32 0.0, %v1706
      %v1708 = vpop.f32.mrf.mxu0
      %1709 = vmatprep.mubr.f32.mxu0 0.0
      %1710 = vmatmul.mubr.f32.gmra.mxu0 %v1573
      %v1711 = vpop.f32.mrf.mxu0
      %v1712 = vadd.f32 0.0, %v1711
      %v1713 = vpop.f32.mrf.mxu0
      %1714 = vmatprep.mubr.f32.mxu0 0.0
      %1715 = vmatmul.mubr.f32.gmra.mxu0 %v1574
      %v1716 = vpop.f32.mrf.mxu0
      %v1717 = vadd.f32 0.0, %v1716
      %v1718 = vpop.f32.mrf.mxu0
      %1719 = vdwg.mxu0
      %v1720 = vsel %vm1447, 1.0, 0.0
      %v1721 = vsel %vm1448, 1.0, 0.0
      %v1722 = vsel %vm1449, 1.0, 0.0
      %v1723 = vsel %vm1450, 1.0, 0.0
      %v1724 = vsel %vm1451, 1.0, 0.0
      %v1725 = vsel %vm1452, 1.0, 0.0
      %v1726 = vsel %vm1453, 1.0, 0.0
      %v1727 = vsel %vm1454, 1.0, 0.0
      %v1728 = vsel %vm1455, 1.0, 0.0
      %v1729 = vsel %vm1456, 1.0, 0.0
      %v1730 = vsel %vm1457, 1.0, 0.0
      %v1731 = vsel %vm1458, 1.0, 0.0
      %v1732 = vsel %vm1459, 1.0, 0.0
      %v1733 = vsel %vm1460, 1.0, 0.0
      %v1734 = vsel %vm1461, 1.0, 0.0
      %v1735 = vsel %vm1462, 1.0, 0.0
      %1736 = vmatprep.subr.mxu0 0.0
      %1737 = vmatpush1.msra.mxu0 1.0
      %1738 = vmatprep.subr.mxu0 0.0
      %1739 = vmatpush1.msra.mxu0 1.0
      %1740 = vmatprep.subr.mxu0 0.0
      %1741 = vmatpush1.msra.mxu0 1.0
      %1742 = vmatprep.subr.mxu0 0.0
      %1743 = vmatpush1.msra.mxu0 1.0
      %1744 = vmatprep.subr.mxu0 0.0
      %1745 = vmatpush1.msra.mxu0 1.0
      %1746 = vmatprep.subr.mxu0 0.0
      %1747 = vmatpush1.msra.mxu0 1.0
      %1748 = vmatprep.subr.mxu0 0.0
      %1749 = vmatpush1.msra.mxu0 1.0
      %1750 = vmatprep.subr.mxu0 0.0
      %1751 = vmatpush1.msra.mxu0 1.0
      %1752 = vmatprep.subr.mxu0 0.0
      %1753 = vmatpush1.msra.mxu0 1.0
      %1754 = vmatprep.subr.mxu0 0.0
      %1755 = vmatpush1.msra.mxu0 1.0
      %1756 = vmatprep.subr.mxu0 0.0
      %1757 = vmatpush1.msra.mxu0 1.0
      %1758 = vmatprep.subr.mxu0 0.0
      %1759 = vmatpush1.msra.mxu0 1.0
      %1760 = vmatprep.subr.mxu0 0.0
      %1761 = vmatpush1.msra.mxu0 1.0
      %1762 = vmatprep.subr.mxu0 0.0
      %1763 = vmatpush1.msra.mxu0 1.0
      %1764 = vmatprep.subr.mxu0 0.0
      %1765 = vmatpush1.msra.mxu0 1.0
      %1766 = vmatprep.subr.mxu0 0.0
      %1767 = vmatpush1.msra.mxu0 1.0
      %1768 = vmatprep.subr.mxu0 0.0
      %1769 = vmatpush2.msra.mxu0 0.0
      %1770 = vmatprep.subr.mxu0 0.0
      %1771 = vmatpush2.msra.mxu0 0.0
      %1772 = vmatprep.subr.mxu0 0.0
      %1773 = vmatpush2.msra.mxu0 0.0
      %1774 = vmatprep.subr.mxu0 0.0
      %1775 = vmatpush2.msra.mxu0 0.0
      %1776 = vmatprep.subr.mxu0 0.0
      %1777 = vmatpush2.msra.mxu0 0.0
      %1778 = vmatprep.subr.mxu0 0.0
      %1779 = vmatpush2.msra.mxu0 0.0
      %1780 = vmatprep.subr.mxu0 0.0
      %1781 = vmatpush2.msra.mxu0 0.0
      %1782 = vmatprep.subr.mxu0 0.0
      %1783 = vmatpush2.msra.mxu0 0.0
      %1784 = vmatprep.subr.mxu0 0.0
      %1785 = vmatpush2.msra.mxu0 0.0
      %1786 = vmatprep.subr.mxu0 0.0
      %1787 = vmatpush2.msra.mxu0 0.0
      %1788 = vmatprep.subr.mxu0 0.0
      %1789 = vmatpush2.msra.mxu0 0.0
      %1790 = vmatprep.subr.mxu0 0.0
      %1791 = vmatpush2.msra.mxu0 0.0
      %1792 = vmatprep.subr.mxu0 0.0
      %1793 = vmatpush2.msra.mxu0 0.0
      %1794 = vmatprep.subr.mxu0 0.0
      %1795 = vmatpush2.msra.mxu0 0.0
      %1796 = vmatprep.subr.mxu0 0.0
      %1797 = vmatpush2.msra.mxu0 0.0
      %1798 = vmatprep.subr.mxu0 0.0
      %1799 = vmatpush2.msra.mxu0 0.0
      %1800 = vmatprep.mubr.f32.mxu0 0.0
      %1801 = vmatmul.mubr.f32.gmra.mxu0 %v1720
      %v1802 = vpop.f32.mrf.mxu0
      %v1803 = vadd.f32 0.0, %v1802
      %v1804 = vpop.f32.mrf.mxu0
      %1805 = vmatprep.mubr.f32.mxu0 0.0
      %1806 = vmatmul.mubr.f32.gmra.mxu0 %v1721
      %v1807 = vpop.f32.mrf.mxu0
      %v1808 = vadd.f32 0.0, %v1807
      %v1809 = vpop.f32.mrf.mxu0
      %1810 = vmatprep.mubr.f32.mxu0 0.0
      %1811 = vmatmul.mubr.f32.gmra.mxu0 %v1722
      %v1812 = vpop.f32.mrf.mxu0
      %v1813 = vadd.f32 0.0, %v1812
      %v1814 = vpop.f32.mrf.mxu0
      %1815 = vmatprep.mubr.f32.mxu0 0.0
      %1816 = vmatmul.mubr.f32.gmra.mxu0 %v1723
      %v1817 = vpop.f32.mrf.mxu0
      %v1818 = vadd.f32 0.0, %v1817
      %v1819 = vpop.f32.mrf.mxu0
      %1820 = vmatprep.mubr.f32.mxu0 0.0
      %1821 = vmatmul.mubr.f32.gmra.mxu0 %v1724
      %v1822 = vpop.f32.mrf.mxu0
      %v1823 = vadd.f32 0.0, %v1822
      %v1824 = vpop.f32.mrf.mxu0
      %1825 = vmatprep.mubr.f32.mxu0 0.0
      %1826 = vmatmul.mubr.f32.gmra.mxu0 %v1725
      %v1827 = vpop.f32.mrf.mxu0
      %v1828 = vadd.f32 0.0, %v1827
      %v1829 = vpop.f32.mrf.mxu0
      %1830 = vmatprep.mubr.f32.mxu0 0.0
      %1831 = vmatmul.mubr.f32.gmra.mxu0 %v1726
      %v1832 = vpop.f32.mrf.mxu0
      %v1833 = vadd.f32 0.0, %v1832
      %v1834 = vpop.f32.mrf.mxu0
      %1835 = vmatprep.mubr.f32.mxu0 0.0
      %1836 = vmatmul.mubr.f32.gmra.mxu0 %v1727
      %v1837 = vpop.f32.mrf.mxu0
      %v1838 = vadd.f32 0.0, %v1837
      %v1839 = vpop.f32.mrf.mxu0
      %1840 = vmatprep.mubr.f32.mxu0 0.0
      %1841 = vmatmul.mubr.f32.gmra.mxu0 %v1728
      %v1842 = vpop.f32.mrf.mxu0
      %v1843 = vadd.f32 0.0, %v1842
      %v1844 = vpop.f32.mrf.mxu0
      %1845 = vmatprep.mubr.f32.mxu0 0.0
      %1846 = vmatmul.mubr.f32.gmra.mxu0 %v1729
      %v1847 = vpop.f32.mrf.mxu0
      %v1848 = vadd.f32 0.0, %v1847
      %v1849 = vpop.f32.mrf.mxu0
      %1850 = vmatprep.mubr.f32.mxu0 0.0
      %1851 = vmatmul.mubr.f32.gmra.mxu0 %v1730
      %v1852 = vpop.f32.mrf.mxu0
      %v1853 = vadd.f32 0.0, %v1852
      %v1854 = vpop.f32.mrf.mxu0
      %1855 = vmatprep.mubr.f32.mxu0 0.0
      %1856 = vmatmul.mubr.f32.gmra.mxu0 %v1731
      %v1857 = vpop.f32.mrf.mxu0
      %v1858 = vadd.f32 0.0, %v1857
      %v1859 = vpop.f32.mrf.mxu0
      %1860 = vmatprep.mubr.f32.mxu0 0.0
      %1861 = vmatmul.mubr.f32.gmra.mxu0 %v1732
      %v1862 = vpop.f32.mrf.mxu0
      %v1863 = vadd.f32 0.0, %v1862
      %v1864 = vpop.f32.mrf.mxu0
      %1865 = vmatprep.mubr.f32.mxu0 0.0
      %1866 = vmatmul.mubr.f32.gmra.mxu0 %v1733
      %v1867 = vpop.f32.mrf.mxu0
      %v1868 = vadd.f32 0.0, %v1867
      %v1869 = vpop.f32.mrf.mxu0
      %1870 = vmatprep.mubr.f32.mxu0 0.0
      %1871 = vmatmul.mubr.f32.gmra.mxu0 %v1734
      %v1872 = vpop.f32.mrf.mxu0
      %v1873 = vadd.f32 0.0, %v1872
      %v1874 = vpop.f32.mrf.mxu0
      %1875 = vmatprep.mubr.f32.mxu0 0.0
      %1876 = vmatmul.mubr.f32.gmra.mxu0 %v1735
      %v1877 = vpop.f32.mrf.mxu0
      %v1878 = vadd.f32 0.0, %v1877
      %v1879 = vpop.f32.mrf.mxu0
      %1880 = vdwg.mxu0
      %v1881 = vmul.f32 %v1803, 0.8
      %v1882 = vmul.f32 %v1808, 0.8
      %v1883 = vmul.f32 %v1813, 0.8
      %v1884 = vmul.f32 %v1818, 0.8
      %v1885 = vmul.f32 %v1823, 0.8
      %v1886 = vmul.f32 %v1828, 0.8
      %v1887 = vmul.f32 %v1833, 0.8
      %v1888 = vmul.f32 %v1838, 0.8
      %v1889 = vmul.f32 %v1843, 0.8
      %v1890 = vmul.f32 %v1848, 0.8
      %v1891 = vmul.f32 %v1853, 0.8
      %v1892 = vmul.f32 %v1858, 0.8
      %v1893 = vmul.f32 %v1863, 0.8
      %v1894 = vmul.f32 %v1868, 0.8
      %v1895 = vmul.f32 %v1873, 0.8
      %v1896 = vmul.f32 %v1878, 0.8
      %v1897 = vceil.f32 %v1881
      %v1898 = vceil.f32 %v1882
      %v1899 = vceil.f32 %v1883
      %v1900 = vceil.f32 %v1884
      %v1901 = vceil.f32 %v1885
      %v1902 = vceil.f32 %v1886
      %v1903 = vceil.f32 %v1887
      %v1904 = vceil.f32 %v1888
      %v1905 = vceil.f32 %v1889
      %v1906 = vceil.f32 %v1890
      %v1907 = vceil.f32 %v1891
      %v1908 = vceil.f32 %v1892
      %v1909 = vceil.f32 %v1893
      %v1910 = vceil.f32 %v1894
      %v1911 = vceil.f32 %v1895
      %v1912 = vceil.f32 %v1896
      %vm1913 = vcmp.lt.f32.partialorder %v1642, %v1897
      %vm1914 = vcmp.lt.f32.partialorder %v1647, %v1898
      %vm1915 = vcmp.lt.f32.partialorder %v1652, %v1899
      %vm1916 = vcmp.lt.f32.partialorder %v1657, %v1900
      %vm1917 = vcmp.lt.f32.partialorder %v1662, %v1901
      %vm1918 = vcmp.lt.f32.partialorder %v1667, %v1902
      %vm1919 = vcmp.lt.f32.partialorder %v1672, %v1903
      %vm1920 = vcmp.lt.f32.partialorder %v1677, %v1904
      %vm1921 = vcmp.lt.f32.partialorder %v1682, %v1905
      %vm1922 = vcmp.lt.f32.partialorder %v1687, %v1906
      %vm1923 = vcmp.lt.f32.partialorder %v1692, %v1907
      %vm1924 = vcmp.lt.f32.partialorder %v1697, %v1908
      %vm1925 = vcmp.lt.f32.partialorder %v1702, %v1909
      %vm1926 = vcmp.lt.f32.partialorder %v1707, %v1910
      %vm1927 = vcmp.lt.f32.partialorder %v1712, %v1911
      %vm1928 = vcmp.lt.f32.partialorder %v1717, %v1912
      %vm1929 = vmand %vm1913, %vm1088
      %vm1930 = vmand %vm1914, %vm1089
      %vm1931 = vmand %vm1915, %vm1090
      %vm1932 = vmand %vm1916, %vm1091
      %vm1933 = vmand %vm1917, %vm1092
      %vm1934 = vmand %vm1918, %vm1093
      %vm1935 = vmand %vm1919, %vm1094
      %vm1936 = vmand %vm1920, %vm1095
      %vm1937 = vmand %vm1921, %vm1096
      %vm1938 = vmand %vm1922, %vm1097
      %vm1939 = vmand %vm1923, %vm1098
      %vm1940 = vmand %vm1924, %vm1099
      %vm1941 = vmand %vm1925, %vm1100
      %vm1942 = vmand %vm1926, %vm1101
      %vm1943 = vmand %vm1927, %vm1102
      %vm1944 = vmand %vm1928, %vm1103
      %v1945 = vsel %vm1929, 1, 0
      %v1946 = vsel %vm1930, 1, 0
      %v1947 = vsel %vm1931, 1, 0
      %v1948 = vsel %vm1932, 1, 0
      %v1949 = vsel %vm1933, 1, 0
      %v1950 = vsel %vm1934, 1, 0
      %v1951 = vsel %vm1935, 1, 0
      %v1952 = vsel %vm1936, 1, 0
      %v1953 = vsel %vm1937, 1, 0
      %v1954 = vsel %vm1938, 1, 0
      %v1955 = vsel %vm1939, 1, 0
      %v1956 = vsel %vm1940, 1, 0
      %v1957 = vsel %vm1941, 1, 0
      %v1958 = vsel %vm1942, 1, 0
      %v1959 = vsel %vm1943, 1, 0
      %v1960 = vsel %vm1944, 1, 0
      %v1961 = vcvt.s32.f32 %v1945
      %v1962 = vcvt.s32.f32 %v1946
      %v1963 = vcvt.s32.f32 %v1947
      %v1964 = vcvt.s32.f32 %v1948
      %v1965 = vcvt.s32.f32 %v1949
      %v1966 = vcvt.s32.f32 %v1950
      %v1967 = vcvt.s32.f32 %v1951
      %v1968 = vcvt.s32.f32 %v1952
      %v1969 = vcvt.s32.f32 %v1953
      %v1970 = vcvt.s32.f32 %v1954
      %v1971 = vcvt.s32.f32 %v1955
      %v1972 = vcvt.s32.f32 %v1956
      %v1973 = vcvt.s32.f32 %v1957
      %v1974 = vcvt.s32.f32 %v1958
      %v1975 = vcvt.s32.f32 %v1959
      %v1976 = vcvt.s32.f32 %v1960
      %v1977 = vmul.f32 %v1072, %v1961
      %v1978 = vmul.f32 %v1073, %v1962
      %v1979 = vmul.f32 %v1074, %v1963
      %v1980 = vmul.f32 %v1075, %v1964
      %v1981 = vmul.f32 %v1076, %v1965
      %v1982 = vmul.f32 %v1077, %v1966
      %v1983 = vmul.f32 %v1078, %v1967
      %v1984 = vmul.f32 %v1079, %v1968
      %v1985 = vmul.f32 %v1080, %v1969
      %v1986 = vmul.f32 %v1081, %v1970
      %v1987 = vmul.f32 %v1082, %v1971
      %v1988 = vmul.f32 %v1083, %v1972
      %v1989 = vmul.f32 %v1084, %v1973
      %v1990 = vmul.f32 %v1085, %v1974
      %v1991 = vmul.f32 %v1086, %v1975
      %v1992 = vmul.f32 %v1087, %v1976
      %1994 = vset.pattern.permute.xlu0 0
      %1995 = vperm.xlu0 %1994, %v1977
      %v1996 = vpop.permute.xlu0 %1995
      %1999 = vset.pattern.permute.xlu0 0
      %2000 = vperm.xlu0 %1999, %v1978
      %v2001 = vpop.permute.xlu0 %2000
      %2004 = vset.pattern.permute.xlu0 0
      %2005 = vperm.xlu0 %2004, %v1979
      %v2006 = vpop.permute.xlu0 %2005
      %2009 = vset.pattern.permute.xlu0 0
      %2010 = vperm.xlu0 %2009, %v1980
      %v2011 = vpop.permute.xlu0 %2010
      %2014 = vset.pattern.permute.xlu0 0
      %2015 = vperm.xlu0 %2014, %v1981
      %v2016 = vpop.permute.xlu0 %2015
      %2019 = vset.pattern.permute.xlu0 0
      %2020 = vperm.xlu0 %2019, %v1982
      %v2021 = vpop.permute.xlu0 %2020
      %2024 = vset.pattern.permute.xlu0 0
      %2025 = vperm.xlu0 %2024, %v1983
      %v2026 = vpop.permute.xlu0 %2025
      %2029 = vset.pattern.permute.xlu0 0
      %2030 = vperm.xlu0 %2029, %v1984
      %v2031 = vpop.permute.xlu0 %2030
      %2034 = vset.pattern.permute.xlu0 0
      %2035 = vperm.xlu0 %2034, %v1985
      %v2036 = vpop.permute.xlu0 %2035
      %2039 = vset.pattern.permute.xlu0 0
      %2040 = vperm.xlu0 %2039, %v1986
      %v2041 = vpop.permute.xlu0 %2040
      %2044 = vset.pattern.permute.xlu0 0
      %2045 = vperm.xlu0 %2044, %v1987
      %v2046 = vpop.permute.xlu0 %2045
      %2049 = vset.pattern.permute.xlu0 0
      %2050 = vperm.xlu0 %2049, %v1988
      %v2051 = vpop.permute.xlu0 %2050
      %2054 = vset.pattern.permute.xlu0 0
      %2055 = vperm.xlu0 %2054, %v1989
      %v2056 = vpop.permute.xlu0 %2055
      %2059 = vset.pattern.permute.xlu0 0
      %2060 = vperm.xlu0 %2059, %v1990
      %v2061 = vpop.permute.xlu0 %2060
      %2064 = vset.pattern.permute.xlu0 0
      %2065 = vperm.xlu0 %2064, %v1991
      %v2066 = vpop.permute.xlu0 %2065
      %2069 = vset.pattern.permute.xlu0 0
      %2070 = vperm.xlu0 %2069, %v1992
      %v2071 = vpop.permute.xlu0 %2070
      %v2073 = vmul.f32 %v903, %v1996
      %v2074 = vmul.f32 %v904, %v2001
      %v2075 = vmul.f32 %v905, %v2006
      %v2076 = vmul.f32 %v906, %v2011
      %v2077 = vmul.f32 %v907, %v2016
      %v2078 = vmul.f32 %v908, %v2021
      %v2079 = vmul.f32 %v909, %v2026
      %v2080 = vmul.f32 %v910, %v2031
      %v2081 = vmul.f32 %v911, %v2036
      %v2082 = vmul.f32 %v912, %v2041
      %v2083 = vmul.f32 %v913, %v2046
      %v2084 = vmul.f32 %v914, %v2051
      %v2085 = vmul.f32 %v915, %v2056
      %v2086 = vmul.f32 %v916, %v2061
      %v2087 = vmul.f32 %v917, %v2066
      %v2088 = vmul.f32 %v918, %v2071
      %v2089 = vld [vmem:[%s324] sm:$0xf]
      %v2090 = vpack.c.bf16 %v1962, %v1961
      %v2091 = vpack.c.bf16 %v1964, %v1963
      %v2092 = vpack.c.bf16 %v1966, %v1965
      %v2093 = vpack.c.bf16 %v1968, %v1967
      %v2094 = vpack.c.bf16 %v1970, %v1969
      %v2095 = vpack.c.bf16 %v1972, %v1971
      %v2096 = vpack.c.bf16 %v1974, %v1973
      %v2097 = vpack.c.bf16 %v1976, %v1975
      %2098 = vmatprep.subr.bf16.mxu0 0
      %2099 = vmatpush1.bf16.msra.mxu0 %v2097
      %2100 = vmatprep.subr.bf16.mxu0 0
      %2101 = vmatpush1.bf16.msra.mxu0 %v2096
      %2102 = vmatprep.subr.bf16.mxu0 0
      %2103 = vmatpush1.bf16.msra.mxu0 %v2095
      %2104 = vmatprep.subr.bf16.mxu0 0
      %2105 = vmatpush1.bf16.msra.mxu0 %v2094
      %2106 = vmatprep.subr.bf16.mxu0 0
      %2107 = vmatpush1.bf16.msra.mxu0 %v2093
      %2108 = vmatprep.subr.bf16.mxu0 0
      %2109 = vmatpush1.bf16.msra.mxu0 %v2092
      %2110 = vmatprep.subr.bf16.mxu0 0
      %2111 = vmatpush1.bf16.msra.mxu0 %v2091
      %2112 = vmatprep.subr.bf16.mxu0 0
      %2113 = vmatpush1.bf16.msra.mxu0 %v2090
      %2114 = vmatprep.subr.bf16.mxu0 0
      %2115 = vmatpush2.bf16.msra.mxu0 0
      %2116 = vmatprep.subr.bf16.mxu0 0
      %2117 = vmatpush2.bf16.msra.mxu0 0
      %2118 = vmatprep.subr.bf16.mxu0 0
      %2119 = vmatpush2.bf16.msra.mxu0 0
      %2120 = vmatprep.subr.bf16.mxu0 0
      %2121 = vmatpush2.bf16.msra.mxu0 0
      %2122 = vmatprep.subr.bf16.mxu0 0
      %2123 = vmatpush2.bf16.msra.mxu0 0
      %2124 = vmatprep.subr.bf16.mxu0 0
      %2125 = vmatpush2.bf16.msra.mxu0 0
      %2126 = vmatprep.subr.bf16.mxu0 0
      %2127 = vmatpush2.bf16.msra.mxu0 0
      %2128 = vmatprep.subr.bf16.mxu0 0
      %2129 = vmatpush2.bf16.msra.mxu0 0
      %2130 = vmatprep.mubr.bf16.mxu0 0
      %2131 = vmatmul.mubr.bf16.gmra.mxu0 %v2089
      %v2132 = vpop.f32.mrf.mxu0
      %v2133 = vadd.f32 0.0, %v2132
      %v2134 = vpop.f32.mrf.mxu0
      %v2135 = vpop.f32.mrf.mxu0
      %v2136 = vpop.f32.mrf.mxu0
      %2137 = vdwg.mxu0
      %vm2138 = vcmp.gt.f32.partialorder %v1961, 0.0
      %vm2139 = vcmp.gt.f32.partialorder %v1962, 0.0
      %vm2140 = vcmp.gt.f32.partialorder %v1963, 0.0
      %vm2141 = vcmp.gt.f32.partialorder %v1964, 0.0
      %vm2142 = vcmp.gt.f32.partialorder %v1965, 0.0
      %vm2143 = vcmp.gt.f32.partialorder %v1966, 0.0
      %vm2144 = vcmp.gt.f32.partialorder %v1967, 0.0
      %vm2145 = vcmp.gt.f32.partialorder %v1968, 0.0
      %vm2146 = vcmp.gt.f32.partialorder %v1969, 0.0
      %vm2147 = vcmp.gt.f32.partialorder %v1970, 0.0
      %vm2148 = vcmp.gt.f32.partialorder %v1971, 0.0
      %vm2149 = vcmp.gt.f32.partialorder %v1972, 0.0
      %vm2150 = vcmp.gt.f32.partialorder %v1973, 0.0
      %vm2151 = vcmp.gt.f32.partialorder %v1974, 0.0
      %vm2152 = vcmp.gt.f32.partialorder %v1975, 0.0
      %vm2153 = vcmp.gt.f32.partialorder %v1976, 0.0
      %v2154 = vsel %vm2138, 1, 0
      %v2155 = vsel %vm2139, 1, 0
      %v2156 = vsel %vm2140, 1, 0
      %v2157 = vsel %vm2141, 1, 0
      %v2158 = vsel %vm2142, 1, 0
      %v2159 = vsel %vm2143, 1, 0
      %v2160 = vsel %vm2144, 1, 0
      %v2161 = vsel %vm2145, 1, 0
      %v2162 = vsel %vm2146, 1, 0
      %v2163 = vsel %vm2147, 1, 0
      %v2164 = vsel %vm2148, 1, 0
      %v2165 = vsel %vm2149, 1, 0
      %v2166 = vsel %vm2150, 1, 0
      %v2167 = vsel %vm2151, 1, 0
      %v2168 = vsel %vm2152, 1, 0
      %v2169 = vsel %vm2153, 1, 0
      %2170 = vset.pattern.permute.xlu0 0
      %2171 = vperm.xlu0 %2170, %v2154
      %v2172 = vpop.permute.xlu0 %2171
      %2173 = vset.pattern.permute.xlu0 0
      %2174 = vperm.xlu0 %2173, %v2155
      %v2175 = vpop.permute.xlu0 %2174
      %2176 = vset.pattern.permute.xlu0 0
      %2177 = vperm.xlu0 %2176, %v2156
      %v2178 = vpop.permute.xlu0 %2177
      %2179 = vset.pattern.permute.xlu0 0
      %2180 = vperm.xlu0 %2179, %v2157
      %v2181 = vpop.permute.xlu0 %2180
      %2182 = vset.pattern.permute.xlu0 0
      %2183 = vperm.xlu0 %2182, %v2158
      %v2184 = vpop.permute.xlu0 %2183
      %2185 = vset.pattern.permute.xlu0 0
      %2186 = vperm.xlu0 %2185, %v2159
      %v2187 = vpop.permute.xlu0 %2186
      %2188 = vset.pattern.permute.xlu0 0
      %2189 = vperm.xlu0 %2188, %v2160
      %v2190 = vpop.permute.xlu0 %2189
      %2191 = vset.pattern.permute.xlu0 0
      %2192 = vperm.xlu0 %2191, %v2161
      %v2193 = vpop.permute.xlu0 %2192
      %2194 = vset.pattern.permute.xlu0 0
      %2195 = vperm.xlu0 %2194, %v2162
      %v2196 = vpop.permute.xlu0 %2195
      %2197 = vset.pattern.permute.xlu0 0
      %2198 = vperm.xlu0 %2197, %v2163
      %v2199 = vpop.permute.xlu0 %2198
      %2200 = vset.pattern.permute.xlu0 0
      %2201 = vperm.xlu0 %2200, %v2164
      %v2202 = vpop.permute.xlu0 %2201
      %2203 = vset.pattern.permute.xlu0 0
      %2204 = vperm.xlu0 %2203, %v2165
      %v2205 = vpop.permute.xlu0 %2204
      %2206 = vset.pattern.permute.xlu0 0
      %2207 = vperm.xlu0 %2206, %v2166
      %v2208 = vpop.permute.xlu0 %2207
      %2209 = vset.pattern.permute.xlu0 0
      %2210 = vperm.xlu0 %2209, %v2167
      %v2211 = vpop.permute.xlu0 %2210
      %2212 = vset.pattern.permute.xlu0 0
      %2213 = vperm.xlu0 %2212, %v2168
      %v2214 = vpop.permute.xlu0 %2213
      %2215 = vset.pattern.permute.xlu0 0
      %2216 = vperm.xlu0 %2215, %v2169
      %v2217 = vpop.permute.xlu0 %2216
      %vm2218 = vcmp.eq.s32.totalorder %v2172, 1
      %vm2219 = vcmp.eq.s32.totalorder %v2175, 1
      %vm2220 = vcmp.eq.s32.totalorder %v2178, 1
      %vm2221 = vcmp.eq.s32.totalorder %v2181, 1
      %vm2222 = vcmp.eq.s32.totalorder %v2184, 1
      %vm2223 = vcmp.eq.s32.totalorder %v2187, 1
      %vm2224 = vcmp.eq.s32.totalorder %v2190, 1
      %vm2225 = vcmp.eq.s32.totalorder %v2193, 1
      %vm2226 = vcmp.eq.s32.totalorder %v2196, 1
      %vm2227 = vcmp.eq.s32.totalorder %v2199, 1
      %vm2228 = vcmp.eq.s32.totalorder %v2202, 1
      %vm2229 = vcmp.eq.s32.totalorder %v2205, 1
      %vm2230 = vcmp.eq.s32.totalorder %v2208, 1
      %vm2231 = vcmp.eq.s32.totalorder %v2211, 1
      %vm2232 = vcmp.eq.s32.totalorder %v2214, 1
      %vm2233 = vcmp.eq.s32.totalorder %v2217, 1
      %v2234 = vsel %vm2218, %v2073, -inf
      %v2235 = vsel %vm2219, %v2074, -inf
      %v2236 = vsel %vm2220, %v2075, -inf
      %v2237 = vsel %vm2221, %v2076, -inf
      %v2238 = vsel %vm2222, %v2077, -inf
      %v2239 = vsel %vm2223, %v2078, -inf
      %v2240 = vsel %vm2224, %v2079, -inf
      %v2241 = vsel %vm2225, %v2080, -inf
      %v2242 = vsel %vm2226, %v2081, -inf
      %v2243 = vsel %vm2227, %v2082, -inf
      %v2244 = vsel %vm2228, %v2083, -inf
      %v2245 = vsel %vm2229, %v2084, -inf
      %v2246 = vsel %vm2230, %v2085, -inf
      %v2247 = vsel %vm2231, %v2086, -inf
      %v2248 = vsel %vm2232, %v2087, -inf
      %v2249 = vsel %vm2233, %v2088, -inf
      %v2250 = vmax.f32 %v2234, %v2235
      %v2251 = vrot.slane %v2250, 4
      %v2252 = vmax.f32 %v2250, %v2251
      %v2253 = vrot.slane %v2252, 2
      %v2254 = vmax.f32 %v2252, %v2253
      %v2255 = vrot.slane %v2254, 1
      %v2256 = vmax.f32 %v2254, %v2255
      %v2257 = vmax.f32 %v2236, %v2237
      %v2258 = vrot.slane %v2257, 4
      %v2259 = vmax.f32 %v2257, %v2258
      %v2260 = vrot.slane %v2259, 2
      %v2261 = vmax.f32 %v2259, %v2260
      %v2262 = vrot.slane %v2261, 1
      %v2263 = vmax.f32 %v2261, %v2262
      %v2264 = vmax.f32 %v2238, %v2239
      %v2265 = vrot.slane %v2264, 4
      %v2266 = vmax.f32 %v2264, %v2265
      %v2267 = vrot.slane %v2266, 2
      %v2268 = vmax.f32 %v2266, %v2267
      %v2269 = vrot.slane %v2268, 1
      %v2270 = vmax.f32 %v2268, %v2269
      %v2271 = vmax.f32 %v2240, %v2241
      %v2272 = vrot.slane %v2271, 4
      %v2273 = vmax.f32 %v2271, %v2272
      %v2274 = vrot.slane %v2273, 2
      %v2275 = vmax.f32 %v2273, %v2274
      %v2276 = vrot.slane %v2275, 1
      %v2277 = vmax.f32 %v2275, %v2276
      %v2278 = vmax.f32 %v2242, %v2243
      %v2279 = vrot.slane %v2278, 4
      %v2280 = vmax.f32 %v2278, %v2279
      %v2281 = vrot.slane %v2280, 2
      %v2282 = vmax.f32 %v2280, %v2281
      %v2283 = vrot.slane %v2282, 1
      %v2284 = vmax.f32 %v2282, %v2283
      %v2285 = vmax.f32 %v2244, %v2245
      %v2286 = vrot.slane %v2285, 4
      %v2287 = vmax.f32 %v2285, %v2286
      %v2288 = vrot.slane %v2287, 2
      %v2289 = vmax.f32 %v2287, %v2288
      %v2290 = vrot.slane %v2289, 1
      %v2291 = vmax.f32 %v2289, %v2290
      %v2292 = vmax.f32 %v2246, %v2247
      %v2293 = vrot.slane %v2292, 4
      %v2294 = vmax.f32 %v2292, %v2293
      %v2295 = vrot.slane %v2294, 2
      %v2296 = vmax.f32 %v2294, %v2295
      %v2297 = vrot.slane %v2296, 1
      %v2298 = vmax.f32 %v2296, %v2297
      %v2299 = vmax.f32 %v2248, %v2249
      %v2300 = vrot.slane %v2299, 4
      %v2301 = vmax.f32 %v2299, %v2300
      %v2302 = vrot.slane %v2301, 2
      %v2303 = vmax.f32 %v2301, %v2302
      %v2304 = vrot.slane %v2303, 1
      %v2305 = vmax.f32 %v2303, %v2304
      %vm2306 = vcmp.gt.f32.partialorder %v2133, 0.0
      %v2307 = vsel %vm2306, 1, 0
      %2308 = vset.pattern.permute.xlu0 0
      %2309 = vperm.xlu0 %2308, %v2307
      %v2310 = vpop.permute.xlu0 %2309
      %vm2311 = vcmp.eq.s32.totalorder %v2310, 1
      %vm2320 = vcmask 1041409
      %v2321 = vsel %vm2320, %v2263, %v2256
      %vm2322 = vcmask 1042434
      %v2323 = vsel %vm2322, %v2270, %v2321
      %vm2324 = vcmask 1043459
      %v2325 = vsel %vm2324, %v2277, %v2323
      %vm2326 = vcmask 1044484
      %v2327 = vsel %vm2326, %v2284, %v2325
      %vm2328 = vcmask 1045509
      %v2329 = vsel %vm2328, %v2291, %v2327
      %vm2330 = vcmask 1046534
      %v2331 = vsel %vm2330, %v2298, %v2329
      %vm2332 = vcmask 1047559
      %v2333 = vsel %vm2332, %v2305, %v2331
      %v2335 = vsel %vm2311, %v2333, 0.0
      %v2336 = vadd.f32 %v2335, 0.0
      %v2337 = vadd.f32 %v2073, %v2074
      %v2338 = vrot.slane %v2337, 4
      %v2339 = vadd.f32 %v2337, %v2338
      %v2340 = vrot.slane %v2339, 2
      %v2341 = vadd.f32 %v2339, %v2340
      %v2342 = vrot.slane %v2341, 1
      %v2343 = vadd.f32 %v2341, %v2342
      %v2344 = vadd.f32 %v2075, %v2076
      %v2345 = vrot.slane %v2344, 4
      %v2346 = vadd.f32 %v2344, %v2345
      %v2347 = vrot.slane %v2346, 2
      %v2348 = vadd.f32 %v2346, %v2347
      %v2349 = vrot.slane %v2348, 1
      %v2350 = vadd.f32 %v2348, %v2349
      %v2351 = vadd.f32 %v2077, %v2078
      %v2352 = vrot.slane %v2351, 4
      %v2353 = vadd.f32 %v2351, %v2352
      %v2354 = vrot.slane %v2353, 2
      %v2355 = vadd.f32 %v2353, %v2354
      %v2356 = vrot.slane %v2355, 1
      %v2357 = vadd.f32 %v2355, %v2356
      %v2358 = vadd.f32 %v2079, %v2080
      %v2359 = vrot.slane %v2358, 4
      %v2360 = vadd.f32 %v2358, %v2359
      %v2361 = vrot.slane %v2360, 2
      %v2362 = vadd.f32 %v2360, %v2361
      %v2363 = vrot.slane %v2362, 1
      %v2364 = vadd.f32 %v2362, %v2363
      %v2365 = vadd.f32 %v2081, %v2082
      %v2366 = vrot.slane %v2365, 4
      %v2367 = vadd.f32 %v2365, %v2366
      %v2368 = vrot.slane %v2367, 2
      %v2369 = vadd.f32 %v2367, %v2368
      %v2370 = vrot.slane %v2369, 1
      %v2371 = vadd.f32 %v2369, %v2370
      %v2372 = vadd.f32 %v2083, %v2084
      %v2373 = vrot.slane %v2372, 4
      %v2374 = vadd.f32 %v2372, %v2373
      %v2375 = vrot.slane %v2374, 2
      %v2376 = vadd.f32 %v2374, %v2375
      %v2377 = vrot.slane %v2376, 1
      %v2378 = vadd.f32 %v2376, %v2377
      %v2379 = vadd.f32 %v2085, %v2086
      %v2380 = vrot.slane %v2379, 4
      %v2381 = vadd.f32 %v2379, %v2380
      %v2382 = vrot.slane %v2381, 2
      %v2383 = vadd.f32 %v2381, %v2382
      %v2384 = vrot.slane %v2383, 1
      %v2385 = vadd.f32 %v2383, %v2384
      %v2386 = vadd.f32 %v2087, %v2088
      %v2387 = vrot.slane %v2386, 4
      %v2388 = vadd.f32 %v2386, %v2387
      %v2389 = vrot.slane %v2388, 2
      %v2390 = vadd.f32 %v2388, %v2389
      %v2391 = vrot.slane %v2390, 1
      %v2392 = vadd.f32 %v2390, %v2391
      %v2393 = vmax.f32 %v2133, 1.0
      %2395 = vset.pattern.permute.xlu0 0
      %2396 = vperm.xlu0 %2395, %v2393
      %v2397 = vpop.permute.xlu0 %2396
      %v2398 = vrot.slane %v2397, 1
      %v2399 = vrot.slane %v2397, 2
      %v2400 = vrot.slane %v2397, 3
      %v2401 = vrot.slane %v2397, 4
      %v2402 = vrot.slane %v2397, 5
      %v2403 = vrot.slane %v2397, 6
      %v2404 = vrot.slane %v2397, 7
      %v2413 = vrcp.pop %v2397
      %v2414 = vmul.f32 %v2343, %v2413
      %v2415 = vrcp.pop %v2398
      %v2416 = vmul.f32 %v2350, %v2415
      %v2417 = vrcp.pop %v2399
      %v2418 = vmul.f32 %v2357, %v2417
      %v2419 = vrcp.pop %v2400
      %v2420 = vmul.f32 %v2364, %v2419
      %v2421 = vrcp.pop %v2401
      %v2422 = vmul.f32 %v2371, %v2421
      %v2423 = vrcp.pop %v2402
      %v2424 = vmul.f32 %v2378, %v2423
      %v2425 = vrcp.pop %v2403
      %v2426 = vmul.f32 %v2385, %v2425
      %v2427 = vrcp.pop %v2404
      %v2428 = vmul.f32 %v2392, %v2427
      %v2429 = vadd.f32 %v2414, 0.0
      %v2430 = vadd.f32 %v2416, 0.0
      %v2431 = vadd.f32 %v2418, 0.0
      %v2432 = vadd.f32 %v2420, 0.0
      %v2433 = vadd.f32 %v2422, 0.0
      %v2434 = vadd.f32 %v2424, 0.0
      %v2435 = vadd.f32 %v2426, 0.0
      %v2436 = vadd.f32 %v2428, 0.0
      %v2437 = vld [vmem:[%s4 + $0x80] sm:$0xf]
      %v2438 = vld [vmem:[%s4 + $0x84] sm:$0xf]
      %v2439 = vld [vmem:[%s4 + $0x88] sm:$0xf]
      %v2440 = vld [vmem:[%s4 + $0x8c] sm:$0xf]
      %v2441 = vld [vmem:[%s4 + $0x90] sm:$0xf]
      %v2442 = vld [vmem:[%s4 + $0x94] sm:$0xf]
      %v2443 = vld [vmem:[%s4 + $0x98] sm:$0xf]
      %v2444 = vld [vmem:[%s4 + $0x9c] sm:$0xf]
      %v2445 = vld [vmem:[%s4 + $0xa0] sm:$0xf]
      %v2446 = vld [vmem:[%s4 + $0xa4] sm:$0xf]
      %v2447 = vld [vmem:[%s4 + $0xa8] sm:$0xf]
      %v2448 = vld [vmem:[%s4 + $0xac] sm:$0xf]
      %v2449 = vld [vmem:[%s4 + $0xb0] sm:$0xf]
      %v2450 = vld [vmem:[%s4 + $0xb4] sm:$0xf]
      %v2451 = vld [vmem:[%s4 + $0xb8] sm:$0xf]
      %v2452 = vld [vmem:[%s4 + $0xbc] sm:$0xf]
      %v2453 = vld [vmem:[%s4 + $0xc0] sm:$0xf]
      %v2454 = vld [vmem:[%s4 + $0xc4] sm:$0xf]
      %v2455 = vld [vmem:[%s4 + $0xc8] sm:$0xf]
      %v2456 = vld [vmem:[%s4 + $0xcc] sm:$0xf]
      %v2457 = vld [vmem:[%s4 + $0xd0] sm:$0xf]
      %v2458 = vld [vmem:[%s4 + $0xd4] sm:$0xf]
      %v2459 = vld [vmem:[%s4 + $0xd8] sm:$0xf]
      %v2460 = vld [vmem:[%s4 + $0xdc] sm:$0xf]
      %v2461 = vld [vmem:[%s4 + $0xe0] sm:$0xf]
      %v2462 = vld [vmem:[%s4 + $0xe4] sm:$0xf]
      %v2463 = vld [vmem:[%s4 + $0xe8] sm:$0xf]
      %v2464 = vld [vmem:[%s4 + $0xec] sm:$0xf]
      %v2465 = vld [vmem:[%s4 + $0xf0] sm:$0xf]
      %v2466 = vld [vmem:[%s4 + $0xf4] sm:$0xf]
      %v2467 = vld [vmem:[%s4 + $0xf8] sm:$0xf]
      %v2468 = vld [vmem:[%s4 + $0xfc] sm:$0xf]
      %v2469 = vld [vmem:[%s6 + $0x1] sm:$0x1]
      %v2470 = vpack.c.bf16 %v2074, %v2073
      %v2471 = vpack.c.bf16 %v2076, %v2075
      %v2472 = vpack.c.bf16 %v2078, %v2077
      %v2473 = vpack.c.bf16 %v2080, %v2079
      %v2474 = vpack.c.bf16 %v2082, %v2081
      %v2475 = vpack.c.bf16 %v2084, %v2083
      %v2476 = vpack.c.bf16 %v2086, %v2085
      %v2477 = vpack.c.bf16 %v2088, %v2087
      %2478 = vmatprep.subr.bf16.mxu0 0
      %2479 = vmatpush1.bf16.msra.mxu0 %v2477
      %2480 = vmatprep.subr.bf16.mxu0 0
      %2481 = vmatpush1.bf16.msra.mxu0 %v2476
      %2482 = vmatprep.subr.bf16.mxu0 0
      %2483 = vmatpush1.bf16.msra.mxu0 %v2475
      %2484 = vmatprep.subr.bf16.mxu0 0
      %2485 = vmatpush1.bf16.msra.mxu0 %v2474
      %2486 = vmatprep.subr.bf16.mxu0 0
      %2487 = vmatpush1.bf16.msra.mxu0 %v2473
      %2488 = vmatprep.subr.bf16.mxu0 0
      %2489 = vmatpush1.bf16.msra.mxu0 %v2472
      %2490 = vmatprep.subr.bf16.mxu0 0
      %2491 = vmatpush1.bf16.msra.mxu0 %v2471
      %2492 = vmatprep.subr.bf16.mxu0 0
      %2493 = vmatpush1.bf16.msra.mxu0 %v2470
      %2494 = vmatprep.subr.bf16.mxu0 0
      %2495 = vmatpush2.bf16.msra.mxu0 0
      %2496 = vmatprep.subr.bf16.mxu0 0
      %2497 = vmatpush2.bf16.msra.mxu0 0
      %2498 = vmatprep.subr.bf16.mxu0 0
      %2499 = vmatpush2.bf16.msra.mxu0 0
      %2500 = vmatprep.subr.bf16.mxu0 0
      %2501 = vmatpush2.bf16.msra.mxu0 0
      %2502 = vmatprep.subr.bf16.mxu0 0
      %2503 = vmatpush2.bf16.msra.mxu0 0
      %2504 = vmatprep.subr.bf16.mxu0 0
      %2505 = vmatpush2.bf16.msra.mxu0 0
      %2506 = vmatprep.subr.bf16.mxu0 0
      %2507 = vmatpush2.bf16.msra.mxu0 0
      %2508 = vmatprep.subr.bf16.mxu0 0
      %2509 = vmatpush2.bf16.msra.mxu0 0
      %2510 = vmatprep.mubr.bf16.mxu0 0
      %2511 = vmatmul.mubr.bf16.gmra.mxu0 %v472
      %v2512 = vpop.f32.mrf.mxu0
      %v2513 = vadd.f32 0.0, %v2512
      %v2514 = vpop.f32.mrf.mxu0
      %v2515 = vpop.f32.mrf.mxu0
      %v2516 = vadd.f32 0.0, %v2515
      %v2517 = vpop.f32.mrf.mxu0
      %2518 = vmatprep.mubr.bf16.mxu0 0
      %2519 = vmatmul.mubr.bf16.gmra.mxu0 %v473
      %v2520 = vpop.f32.mrf.mxu0
      %v2521 = vadd.f32 0.0, %v2520
      %v2522 = vpop.f32.mrf.mxu0
      %v2523 = vpop.f32.mrf.mxu0
      %v2524 = vadd.f32 0.0, %v2523
      %v2525 = vpop.f32.mrf.mxu0
      %2526 = vmatprep.mubr.bf16.mxu0 0
      %2527 = vmatmul.mubr.bf16.gmra.mxu0 %v474
      %v2528 = vpop.f32.mrf.mxu0
      %v2529 = vadd.f32 0.0, %v2528
      %v2530 = vpop.f32.mrf.mxu0
      %v2531 = vpop.f32.mrf.mxu0
      %v2532 = vadd.f32 0.0, %v2531
      %v2533 = vpop.f32.mrf.mxu0
      %2534 = vmatprep.mubr.bf16.mxu0 0
      %2535 = vmatmul.mubr.bf16.gmra.mxu0 %v475
      %v2536 = vpop.f32.mrf.mxu0
      %v2537 = vadd.f32 0.0, %v2536
      %v2538 = vpop.f32.mrf.mxu0
      %v2539 = vpop.f32.mrf.mxu0
      %v2540 = vadd.f32 0.0, %v2539
      %v2541 = vpop.f32.mrf.mxu0
      %2542 = vmatprep.mubr.bf16.mxu0 0
      %2543 = vmatmul.mubr.bf16.gmra.mxu0 %v476
      %v2544 = vpop.f32.mrf.mxu0
      %v2545 = vadd.f32 0.0, %v2544
      %v2546 = vpop.f32.mrf.mxu0
      %v2547 = vpop.f32.mrf.mxu0
      %v2548 = vadd.f32 0.0, %v2547
      %v2549 = vpop.f32.mrf.mxu0
      %2550 = vmatprep.mubr.bf16.mxu0 0
      %2551 = vmatmul.mubr.bf16.gmra.mxu0 %v477
      %v2552 = vpop.f32.mrf.mxu0
      %v2553 = vadd.f32 0.0, %v2552
      %v2554 = vpop.f32.mrf.mxu0
      %v2555 = vpop.f32.mrf.mxu0
      %v2556 = vadd.f32 0.0, %v2555
      %v2557 = vpop.f32.mrf.mxu0
      %2558 = vmatprep.mubr.bf16.mxu0 0
      %2559 = vmatmul.mubr.bf16.gmra.mxu0 %v478
      %v2560 = vpop.f32.mrf.mxu0
      %v2561 = vadd.f32 0.0, %v2560
      %v2562 = vpop.f32.mrf.mxu0
      %v2563 = vpop.f32.mrf.mxu0
      %v2564 = vadd.f32 0.0, %v2563
      %v2565 = vpop.f32.mrf.mxu0
      %2566 = vmatprep.mubr.bf16.mxu0 0
      %2567 = vmatmul.mubr.bf16.gmra.mxu0 %v479
      %v2568 = vpop.f32.mrf.mxu0
      %v2569 = vadd.f32 0.0, %v2568
      %v2570 = vpop.f32.mrf.mxu0
      %v2571 = vpop.f32.mrf.mxu0
      %v2572 = vadd.f32 0.0, %v2571
      %v2573 = vpop.f32.mrf.mxu0
      %2574 = vdwg.mxu0
      %v2575 = vpack.c.bf16 %v2516, %v2513
      %v2576 = vpack.c.bf16 %v2524, %v2521
      %v2577 = vpack.c.bf16 %v2532, %v2529
      %v2578 = vpack.c.bf16 %v2540, %v2537
      %v2579 = vpack.c.bf16 %v2548, %v2545
      %v2580 = vpack.c.bf16 %v2556, %v2553
      %v2581 = vpack.c.bf16 %v2564, %v2561
      %v2582 = vpack.c.bf16 %v2572, %v2569
      %v2599 = vunpack.c.l.b16 %v2453
      %v2600 = vunpack.c.l.b16 %v2454
      %v2601 = vunpack.c.l.b16 %v2455
      %v2602 = vunpack.c.l.b16 %v2456
      %v2603 = vunpack.c.l.b16 %v2457
      %v2604 = vunpack.c.l.b16 %v2458
      %v2605 = vunpack.c.l.b16 %v2459
      %v2606 = vunpack.c.l.b16 %v2460
      %v2607 = vunpack.c.l.b16 %v2461
      %v2608 = vunpack.c.l.b16 %v2462
      %v2609 = vunpack.c.l.b16 %v2463
      %v2610 = vunpack.c.l.b16 %v2464
      %v2611 = vunpack.c.l.b16 %v2465
      %v2612 = vunpack.c.l.b16 %v2466
      %v2613 = vunpack.c.l.b16 %v2467
      %v2614 = vunpack.c.l.b16 %v2468
      %v2615 = vpack.c.b16 %v2600, %v2599
      %v2616 = vpack.c.b16 %v2602, %v2601
      %v2617 = vpack.c.b16 %v2604, %v2603
      %v2618 = vpack.c.b16 %v2606, %v2605
      %v2619 = vpack.c.b16 %v2608, %v2607
      %v2620 = vpack.c.b16 %v2610, %v2609
      %v2621 = vpack.c.b16 %v2612, %v2611
      %v2622 = vpack.c.b16 %v2614, %v2613
      %2631 = vmatprep.subr.bf16.mxu0 0
      %2632 = vmatpush1.bf16.msra.mxu0 %v2622
      %2633 = vmatprep.subr.bf16.mxu0 0
      %2634 = vmatpush1.bf16.msra.mxu0 %v2621
      %2635 = vmatprep.subr.bf16.mxu0 0
      %2636 = vmatpush1.bf16.msra.mxu0 %v2620
      %2637 = vmatprep.subr.bf16.mxu0 0
      %2638 = vmatpush1.bf16.msra.mxu0 %v2619
      %2639 = vmatprep.subr.bf16.mxu0 0
      %2640 = vmatpush1.bf16.msra.mxu0 %v2618
      %2641 = vmatprep.subr.bf16.mxu0 0
      %2642 = vmatpush1.bf16.msra.mxu0 %v2617
      %2643 = vmatprep.subr.bf16.mxu0 0
      %2644 = vmatpush1.bf16.msra.mxu0 %v2616
      %2645 = vmatprep.subr.bf16.mxu0 0
      %2646 = vmatpush1.bf16.msra.mxu0 %v2615
      %2647 = vmatprep.subr.bf16.mxu0 0
      %2648 = vmatpush2.bf16.msra.mxu0 0
      %2649 = vmatprep.subr.bf16.mxu0 0
      %2650 = vmatpush2.bf16.msra.mxu0 0
      %2651 = vmatprep.subr.bf16.mxu0 0
      %2652 = vmatpush2.bf16.msra.mxu0 0
      %2653 = vmatprep.subr.bf16.mxu0 0
      %2654 = vmatpush2.bf16.msra.mxu0 0
      %2655 = vmatprep.subr.bf16.mxu0 0
      %2656 = vmatpush2.bf16.msra.mxu0 0
      %2657 = vmatprep.subr.bf16.mxu0 0
      %2658 = vmatpush2.bf16.msra.mxu0 0
      %2659 = vmatprep.subr.bf16.mxu0 0
      %2660 = vmatpush2.bf16.msra.mxu0 0
      %2661 = vmatprep.subr.bf16.mxu0 0
      %2662 = vmatpush2.bf16.msra.mxu0 0
      %2663 = vmatprep.mubr.bf16.mxu0 0
      %2664 = vmatmul.mubr.bf16.gmra.mxu0 %v2470
      %v2665 = vpop.f32.mrf.mxu0
      %v2666 = vadd.f32 0.0, %v2665
      %v2667 = vpop.f32.mrf.mxu0
      %v2668 = vpop.f32.mrf.mxu0
      %v2669 = vadd.f32 0.0, %v2668
      %v2670 = vpop.f32.mrf.mxu0
      %2671 = vmatprep.mubr.bf16.mxu0 0
      %2672 = vmatmul.mubr.bf16.gmra.mxu0 %v2471
      %v2673 = vpop.f32.mrf.mxu0
      %v2674 = vadd.f32 0.0, %v2673
      %v2675 = vpop.f32.mrf.mxu0
      %v2676 = vpop.f32.mrf.mxu0
      %v2677 = vadd.f32 0.0, %v2676
      %v2678 = vpop.f32.mrf.mxu0
      %2679 = vmatprep.mubr.bf16.mxu0 0
      %2680 = vmatmul.mubr.bf16.gmra.mxu0 %v2472
      %v2681 = vpop.f32.mrf.mxu0
      %v2682 = vadd.f32 0.0, %v2681
      %v2683 = vpop.f32.mrf.mxu0
      %v2684 = vpop.f32.mrf.mxu0
      %v2685 = vadd.f32 0.0, %v2684
      %v2686 = vpop.f32.mrf.mxu0
      %2687 = vmatprep.mubr.bf16.mxu0 0
      %2688 = vmatmul.mubr.bf16.gmra.mxu0 %v2473
      %v2689 = vpop.f32.mrf.mxu0
      %v2690 = vadd.f32 0.0, %v2689
      %v2691 = vpop.f32.mrf.mxu0
      %v2692 = vpop.f32.mrf.mxu0
      %v2693 = vadd.f32 0.0, %v2692
      %v2694 = vpop.f32.mrf.mxu0
      %2695 = vmatprep.mubr.bf16.mxu0 0
      %2696 = vmatmul.mubr.bf16.gmra.mxu0 %v2474
      %v2697 = vpop.f32.mrf.mxu0
      %v2698 = vadd.f32 0.0, %v2697
      %v2699 = vpop.f32.mrf.mxu0
      %v2700 = vpop.f32.mrf.mxu0
      %v2701 = vadd.f32 0.0, %v2700
      %v2702 = vpop.f32.mrf.mxu0
      %2703 = vmatprep.mubr.bf16.mxu0 0
      %2704 = vmatmul.mubr.bf16.gmra.mxu0 %v2475
      %v2705 = vpop.f32.mrf.mxu0
      %v2706 = vadd.f32 0.0, %v2705
      %v2707 = vpop.f32.mrf.mxu0
      %v2708 = vpop.f32.mrf.mxu0
      %v2709 = vadd.f32 0.0, %v2708
      %v2710 = vpop.f32.mrf.mxu0
      %2711 = vmatprep.mubr.bf16.mxu0 0
      %2712 = vmatmul.mubr.bf16.gmra.mxu0 %v2476
      %v2713 = vpop.f32.mrf.mxu0
      %v2714 = vadd.f32 0.0, %v2713
      %v2715 = vpop.f32.mrf.mxu0
      %v2716 = vpop.f32.mrf.mxu0
      %v2717 = vadd.f32 0.0, %v2716
      %v2718 = vpop.f32.mrf.mxu0
      %2719 = vmatprep.mubr.bf16.mxu0 0
      %2720 = vmatmul.mubr.bf16.gmra.mxu0 %v2477
      %v2721 = vpop.f32.mrf.mxu0
      %v2722 = vadd.f32 0.0, %v2721
      %v2723 = vpop.f32.mrf.mxu0
      %v2724 = vpop.f32.mrf.mxu0
      %v2725 = vadd.f32 0.0, %v2724
      %v2726 = vpop.f32.mrf.mxu0
      %2727 = vdwg.mxu0
      %v2744 = vunpack.c.l.b16 %v2437
      %v2745 = vunpack.c.l.b16 %v2438
      %v2746 = vunpack.c.l.b16 %v2439
      %v2747 = vunpack.c.l.b16 %v2440
      %v2748 = vunpack.c.l.b16 %v2441
      %v2749 = vunpack.c.l.b16 %v2442
      %v2750 = vunpack.c.l.b16 %v2443
      %v2751 = vunpack.c.l.b16 %v2444
      %v2752 = vunpack.c.l.b16 %v2445
      %v2753 = vunpack.c.l.b16 %v2446
      %v2754 = vunpack.c.l.b16 %v2447
      %v2755 = vunpack.c.l.b16 %v2448
      %v2756 = vunpack.c.l.b16 %v2449
      %v2757 = vunpack.c.l.b16 %v2450
      %v2758 = vunpack.c.l.b16 %v2451
      %v2759 = vunpack.c.l.b16 %v2452
      %v2760 = vpack.c.b16 %v2745, %v2744
      %v2761 = vpack.c.b16 %v2747, %v2746
      %v2762 = vpack.c.b16 %v2749, %v2748
      %v2763 = vpack.c.b16 %v2751, %v2750
      %v2764 = vpack.c.b16 %v2753, %v2752
      %v2765 = vpack.c.b16 %v2755, %v2754
      %v2766 = vpack.c.b16 %v2757, %v2756
      %v2767 = vpack.c.b16 %v2759, %v2758
      %2776 = vmatprep.subr.bf16.mxu0 0
      %2777 = vmatpush1.bf16.msra.mxu0 %v2767
      %2778 = vmatprep.subr.bf16.mxu0 0
      %2779 = vmatpush1.bf16.msra.mxu0 %v2766
      %2780 = vmatprep.subr.bf16.mxu0 0
      %2781 = vmatpush1.bf16.msra.mxu0 %v2765
      %2782 = vmatprep.subr.bf16.mxu0 0
      %2783 = vmatpush1.bf16.msra.mxu0 %v2764
      %2784 = vmatprep.subr.bf16.mxu0 0
      %2785 = vmatpush1.bf16.msra.mxu0 %v2763
      %2786 = vmatprep.subr.bf16.mxu0 0
      %2787 = vmatpush1.bf16.msra.mxu0 %v2762
      %2788 = vmatprep.subr.bf16.mxu0 0
      %2789 = vmatpush1.bf16.msra.mxu0 %v2761
      %2790 = vmatprep.subr.bf16.mxu0 0
      %2791 = vmatpush1.bf16.msra.mxu0 %v2760
      %2792 = vmatprep.subr.bf16.mxu0 0
      %2793 = vmatpush2.bf16.msra.mxu0 0
      %2794 = vmatprep.subr.bf16.mxu0 0
      %2795 = vmatpush2.bf16.msra.mxu0 0
      %2796 = vmatprep.subr.bf16.mxu0 0
      %2797 = vmatpush2.bf16.msra.mxu0 0
      %2798 = vmatprep.subr.bf16.mxu0 0
      %2799 = vmatpush2.bf16.msra.mxu0 0
      %2800 = vmatprep.subr.bf16.mxu0 0
      %2801 = vmatpush2.bf16.msra.mxu0 0
      %2802 = vmatprep.subr.bf16.mxu0 0
      %2803 = vmatpush2.bf16.msra.mxu0 0
      %2804 = vmatprep.subr.bf16.mxu0 0
      %2805 = vmatpush2.bf16.msra.mxu0 0
      %2806 = vmatprep.subr.bf16.mxu0 0
      %2807 = vmatpush2.bf16.msra.mxu0 0
      %2808 = vmatprep.mubr.bf16.mxu0 0
      %2809 = vmatmul.mubr.bf16.gmra.mxu0 %v2575
      %v2810 = vpop.f32.mrf.mxu0
      %v2811 = vadd.f32 %v2666, %v2810
      %v2812 = vpop.f32.mrf.mxu0
      %v2813 = vpop.f32.mrf.mxu0
      %v2814 = vadd.f32 %v2669, %v2813
      %v2815 = vpop.f32.mrf.mxu0
      %2816 = vmatprep.mubr.bf16.mxu0 0
      %2817 = vmatmul.mubr.bf16.gmra.mxu0 %v2576
      %v2818 = vpop.f32.mrf.mxu0
      %v2819 = vadd.f32 %v2674, %v2818
      %v2820 = vpop.f32.mrf.mxu0
      %v2821 = vpop.f32.mrf.mxu0
      %v2822 = vadd.f32 %v2677, %v2821
      %v2823 = vpop.f32.mrf.mxu0
      %2824 = vmatprep.mubr.bf16.mxu0 0
      %2825 = vmatmul.mubr.bf16.gmra.mxu0 %v2577
      %v2826 = vpop.f32.mrf.mxu0
      %v2827 = vadd.f32 %v2682, %v2826
      %v2828 = vpop.f32.mrf.mxu0
      %v2829 = vpop.f32.mrf.mxu0
      %v2830 = vadd.f32 %v2685, %v2829
      %v2831 = vpop.f32.mrf.mxu0
      %2832 = vmatprep.mubr.bf16.mxu0 0
      %2833 = vmatmul.mubr.bf16.gmra.mxu0 %v2578
      %v2834 = vpop.f32.mrf.mxu0
      %v2835 = vadd.f32 %v2690, %v2834
      %v2836 = vpop.f32.mrf.mxu0
      %v2837 = vpop.f32.mrf.mxu0
      %v2838 = vadd.f32 %v2693, %v2837
      %v2839 = vpop.f32.mrf.mxu0
      %2840 = vmatprep.mubr.bf16.mxu0 0
      %2841 = vmatmul.mubr.bf16.gmra.mxu0 %v2579
      %v2842 = vpop.f32.mrf.mxu0
      %v2843 = vadd.f32 %v2698, %v2842
      %v2844 = vpop.f32.mrf.mxu0
      %v2845 = vpop.f32.mrf.mxu0
      %v2846 = vadd.f32 %v2701, %v2845
      %v2847 = vpop.f32.mrf.mxu0
      %2848 = vmatprep.mubr.bf16.mxu0 0
      %2849 = vmatmul.mubr.bf16.gmra.mxu0 %v2580
      %v2850 = vpop.f32.mrf.mxu0
      %v2851 = vadd.f32 %v2706, %v2850
      %v2852 = vpop.f32.mrf.mxu0
      %v2853 = vpop.f32.mrf.mxu0
      %v2854 = vadd.f32 %v2709, %v2853
      %v2855 = vpop.f32.mrf.mxu0
      %2856 = vmatprep.mubr.bf16.mxu0 0
      %2857 = vmatmul.mubr.bf16.gmra.mxu0 %v2581
      %v2858 = vpop.f32.mrf.mxu0
      %v2859 = vadd.f32 %v2714, %v2858
      %v2860 = vpop.f32.mrf.mxu0
      %v2861 = vpop.f32.mrf.mxu0
      %v2862 = vadd.f32 %v2717, %v2861
      %v2863 = vpop.f32.mrf.mxu0
      %2864 = vmatprep.mubr.bf16.mxu0 0
      %2865 = vmatmul.mubr.bf16.gmra.mxu0 %v2582
      %v2866 = vpop.f32.mrf.mxu0
      %v2867 = vadd.f32 %v2722, %v2866
      %v2868 = vpop.f32.mrf.mxu0
      %v2869 = vpop.f32.mrf.mxu0
      %v2870 = vadd.f32 %v2725, %v2869
      %v2871 = vpop.f32.mrf.mxu0
      %2872 = vdwg.mxu0
      %v2873 = vlaneseq
      %v2874 = vshrl.u32 %v2873, 7
      %v2875 = vsub.s32 0, %v2874
      %v2876 = vrot.slane %v2469, %v2875
      %v2877 = vadd.f32 %v2811, %v2876
      %v2878 = vadd.f32 %v2814, %v2876
      %v2879 = vadd.f32 %v2819, %v2876
      %v2880 = vadd.f32 %v2822, %v2876
      %v2881 = vadd.f32 %v2827, %v2876
      %v2882 = vadd.f32 %v2830, %v2876
      %v2883 = vadd.f32 %v2835, %v2876
      %v2884 = vadd.f32 %v2838, %v2876
      %v2885 = vadd.f32 %v2843, %v2876
      %v2886 = vadd.f32 %v2846, %v2876
      %v2887 = vadd.f32 %v2851, %v2876
      %v2888 = vadd.f32 %v2854, %v2876
      %v2889 = vadd.f32 %v2859, %v2876
      %v2890 = vadd.f32 %v2862, %v2876
      %v2891 = vadd.f32 %v2867, %v2876
      %v2892 = vadd.f32 %v2870, %v2876
      %v2893 = vmax.f32 %v2877, 0.0
      %v2894 = vmax.f32 %v2878, 0.0
      %v2895 = vmax.f32 %v2879, 0.0
      %v2896 = vmax.f32 %v2880, 0.0
      %v2897 = vmax.f32 %v2881, 0.0
      %v2898 = vmax.f32 %v2882, 0.0
      %v2899 = vmax.f32 %v2883, 0.0
      %v2900 = vmax.f32 %v2884, 0.0
      %v2901 = vmax.f32 %v2885, 0.0
      %v2902 = vmax.f32 %v2886, 0.0
      %v2903 = vmax.f32 %v2887, 0.0
      %v2904 = vmax.f32 %v2888, 0.0
      %v2905 = vmax.f32 %v2889, 0.0
      %v2906 = vmax.f32 %v2890, 0.0
      %v2907 = vmax.f32 %v2891, 0.0
      %v2908 = vmax.f32 %v2892, 0.0
      %v2909 = vpack.c.bf16 %v2894, %v2893
      %v2910 = vpack.c.bf16 %v2896, %v2895
      %v2911 = vpack.c.bf16 %v2898, %v2897
      %v2912 = vpack.c.bf16 %v2900, %v2899
      %v2913 = vpack.c.bf16 %v2902, %v2901
      %v2914 = vpack.c.bf16 %v2904, %v2903
      %v2915 = vpack.c.bf16 %v2906, %v2905
      %v2916 = vpack.c.bf16 %v2908, %v2907
      %2917 = vrot.lane.b32.xlu0 %v959, 127
      %v2918 = vpop.permute.xlu0 %2917
      %2919 = vrot.lane.b32.xlu0 %v960, 127
      %v2920 = vpop.permute.xlu0 %2919
      %2921 = vrot.lane.b32.xlu0 %v961, 127
      %v2922 = vpop.permute.xlu0 %2921
      %2923 = vrot.lane.b32.xlu0 %v962, 127
      %v2924 = vpop.permute.xlu0 %2923
      %2925 = vrot.lane.b32.xlu0 %v963, 127
      %v2926 = vpop.permute.xlu0 %2925
      %2927 = vrot.lane.b32.xlu0 %v964, 127
      %v2928 = vpop.permute.xlu0 %2927
      %2929 = vrot.lane.b32.xlu0 %v965, 127
      %v2930 = vpop.permute.xlu0 %2929
      %2931 = vrot.lane.b32.xlu0 %v966, 127
      %v2932 = vpop.permute.xlu0 %2931
      %2941 = vmatprep.subr.bf16.mxu0 0
      %2942 = vmatpush1.bf16.msra.mxu0 %v2932
      %2943 = vmatprep.subr.bf16.mxu0 0
      %2944 = vmatpush1.bf16.msra.mxu0 %v2930
      %2945 = vmatprep.subr.bf16.mxu0 0
      %2946 = vmatpush1.bf16.msra.mxu0 %v2928
      %2947 = vmatprep.subr.bf16.mxu0 0
      %2948 = vmatpush1.bf16.msra.mxu0 %v2926
      %2949 = vmatprep.subr.bf16.mxu0 0
      %2950 = vmatpush1.bf16.msra.mxu0 %v2924
      %2951 = vmatprep.subr.bf16.mxu0 0
      %2952 = vmatpush1.bf16.msra.mxu0 %v2922
      %2953 = vmatprep.subr.bf16.mxu0 0
      %2954 = vmatpush1.bf16.msra.mxu0 %v2920
      %2955 = vmatprep.subr.bf16.mxu0 0
      %2956 = vmatpush1.bf16.msra.mxu0 %v2918
      %2957 = vmatprep.subr.bf16.mxu0 0
      %2958 = vmatpush2.bf16.msra.mxu0 0
      %2959 = vmatprep.subr.bf16.mxu0 0
      %2960 = vmatpush2.bf16.msra.mxu0 0
      %2961 = vmatprep.subr.bf16.mxu0 0
      %2962 = vmatpush2.bf16.msra.mxu0 0
      %2963 = vmatprep.subr.bf16.mxu0 0
      %2964 = vmatpush2.bf16.msra.mxu0 0
      %2965 = vmatprep.subr.bf16.mxu0 0
      %2966 = vmatpush2.bf16.msra.mxu0 0
      %2967 = vmatprep.subr.bf16.mxu0 0
      %2968 = vmatpush2.bf16.msra.mxu0 0
      %2969 = vmatprep.subr.bf16.mxu0 0
      %2970 = vmatpush2.bf16.msra.mxu0 0
      %2971 = vmatprep.subr.bf16.mxu0 0
      %2972 = vmatpush2.bf16.msra.mxu0 0
      %2973 = vmatprep.mubr.bf16.mxu0 0
      %2974 = vmatmul.mubr.bf16.gmra.mxu0 %v2909
      %v2975 = vpop.f32.mrf.mxu0
      %v2976 = vadd.f32 0.0, %v2975
      %v2977 = vpop.f32.mrf.mxu0
      %v2978 = vpop.f32.mrf.mxu0
      %v2979 = vadd.f32 0.0, %v2978
      %v2980 = vpop.f32.mrf.mxu0
      %2981 = vmatprep.mubr.bf16.mxu0 0
      %2982 = vmatmul.mubr.bf16.gmra.mxu0 %v2910
      %v2983 = vpop.f32.mrf.mxu0
      %v2984 = vadd.f32 0.0, %v2983
      %v2985 = vpop.f32.mrf.mxu0
      %v2986 = vpop.f32.mrf.mxu0
      %v2987 = vadd.f32 0.0, %v2986
      %v2988 = vpop.f32.mrf.mxu0
      %2989 = vmatprep.mubr.bf16.mxu0 0
      %2990 = vmatmul.mubr.bf16.gmra.mxu0 %v2911
      %v2991 = vpop.f32.mrf.mxu0
      %v2992 = vadd.f32 0.0, %v2991
      %v2993 = vpop.f32.mrf.mxu0
      %v2994 = vpop.f32.mrf.mxu0
      %v2995 = vadd.f32 0.0, %v2994
      %v2996 = vpop.f32.mrf.mxu0
      %2997 = vmatprep.mubr.bf16.mxu0 0
      %2998 = vmatmul.mubr.bf16.gmra.mxu0 %v2912
      %v2999 = vpop.f32.mrf.mxu0
      %v3000 = vadd.f32 0.0, %v2999
      %v3001 = vpop.f32.mrf.mxu0
      %v3002 = vpop.f32.mrf.mxu0
      %v3003 = vadd.f32 0.0, %v3002
      %v3004 = vpop.f32.mrf.mxu0
      %3005 = vmatprep.mubr.bf16.mxu0 0
      %3006 = vmatmul.mubr.bf16.gmra.mxu0 %v2913
      %v3007 = vpop.f32.mrf.mxu0
      %v3008 = vadd.f32 0.0, %v3007
      %v3009 = vpop.f32.mrf.mxu0
      %v3010 = vpop.f32.mrf.mxu0
      %v3011 = vadd.f32 0.0, %v3010
      %v3012 = vpop.f32.mrf.mxu0
      %3013 = vmatprep.mubr.bf16.mxu0 0
      %3014 = vmatmul.mubr.bf16.gmra.mxu0 %v2914
      %v3015 = vpop.f32.mrf.mxu0
      %v3016 = vadd.f32 0.0, %v3015
      %v3017 = vpop.f32.mrf.mxu0
      %v3018 = vpop.f32.mrf.mxu0
      %v3019 = vadd.f32 0.0, %v3018
      %v3020 = vpop.f32.mrf.mxu0
      %3021 = vmatprep.mubr.bf16.mxu0 0
      %3022 = vmatmul.mubr.bf16.gmra.mxu0 %v2915
      %v3023 = vpop.f32.mrf.mxu0
      %v3024 = vadd.f32 0.0, %v3023
      %v3025 = vpop.f32.mrf.mxu0
      %v3026 = vpop.f32.mrf.mxu0
      %v3027 = vadd.f32 0.0, %v3026
      %v3028 = vpop.f32.mrf.mxu0
      %3029 = vmatprep.mubr.bf16.mxu0 0
      %3030 = vmatmul.mubr.bf16.gmra.mxu0 %v2916
      %v3031 = vpop.f32.mrf.mxu0
      %v3032 = vadd.f32 0.0, %v3031
      %v3033 = vpop.f32.mrf.mxu0
      %v3034 = vpop.f32.mrf.mxu0
      %v3035 = vadd.f32 0.0, %v3034
      %v3036 = vpop.f32.mrf.mxu0
      %3037 = vdwg.mxu0
      %v3038 = vtanh.pop %v2976
      %v3039 = vtanh.pop %v2979
      %v3040 = vtanh.pop %v2984
      %v3041 = vtanh.pop %v2987
      %v3042 = vtanh.pop %v2992
      %v3043 = vtanh.pop %v2995
      %v3044 = vtanh.pop %v3000
      %v3045 = vtanh.pop %v3003
      %v3046 = vtanh.pop %v3008
      %v3047 = vtanh.pop %v3011
      %v3048 = vtanh.pop %v3016
      %v3049 = vtanh.pop %v3019
      %v3050 = vtanh.pop %v3024
      %v3051 = vtanh.pop %v3027
      %v3052 = vtanh.pop %v3032
      %v3053 = vtanh.pop %v3035
      %v3054 = vsel %vm2138, %v3038, -inf
      %v3055 = vsel %vm2139, %v3039, -inf
      %v3056 = vsel %vm2140, %v3040, -inf
      %v3057 = vsel %vm2141, %v3041, -inf
      %v3058 = vsel %vm2142, %v3042, -inf
      %v3059 = vsel %vm2143, %v3043, -inf
      %v3060 = vsel %vm2144, %v3044, -inf
      %v3061 = vsel %vm2145, %v3045, -inf
      %v3062 = vsel %vm2146, %v3046, -inf
      %v3063 = vsel %vm2147, %v3047, -inf
      %v3064 = vsel %vm2148, %v3048, -inf
      %v3065 = vsel %vm2149, %v3049, -inf
      %v3066 = vsel %vm2150, %v3050, -inf
      %v3067 = vsel %vm2151, %v3051, -inf
      %v3068 = vsel %vm2152, %v3052, -inf
      %v3069 = vsel %vm2153, %v3053, -inf
      %3071 = vset.pattern.permute.xlu0 0
      %3072 = vperm.xlu0 %3071, %v3054
      %v3073 = vpop.permute.xlu0 %3072
      %3076 = vset.pattern.permute.xlu0 0
      %3077 = vperm.xlu0 %3076, %v3055
      %v3078 = vpop.permute.xlu0 %3077
      %3081 = vset.pattern.permute.xlu0 0
      %3082 = vperm.xlu0 %3081, %v3056
      %v3083 = vpop.permute.xlu0 %3082
      %3086 = vset.pattern.permute.xlu0 0
      %3087 = vperm.xlu0 %3086, %v3057
      %v3088 = vpop.permute.xlu0 %3087
      %3091 = vset.pattern.permute.xlu0 0
      %3092 = vperm.xlu0 %3091, %v3058
      %v3093 = vpop.permute.xlu0 %3092
      %3096 = vset.pattern.permute.xlu0 0
      %3097 = vperm.xlu0 %3096, %v3059
      %v3098 = vpop.permute.xlu0 %3097
      %3101 = vset.pattern.permute.xlu0 0
      %3102 = vperm.xlu0 %3101, %v3060
      %v3103 = vpop.permute.xlu0 %3102
      %3106 = vset.pattern.permute.xlu0 0
      %3107 = vperm.xlu0 %3106, %v3061
      %v3108 = vpop.permute.xlu0 %3107
      %3111 = vset.pattern.permute.xlu0 0
      %3112 = vperm.xlu0 %3111, %v3062
      %v3113 = vpop.permute.xlu0 %3112
      %3116 = vset.pattern.permute.xlu0 0
      %3117 = vperm.xlu0 %3116, %v3063
      %v3118 = vpop.permute.xlu0 %3117
      %3121 = vset.pattern.permute.xlu0 0
      %3122 = vperm.xlu0 %3121, %v3064
      %v3123 = vpop.permute.xlu0 %3122
      %3126 = vset.pattern.permute.xlu0 0
      %3127 = vperm.xlu0 %3126, %v3065
      %v3128 = vpop.permute.xlu0 %3127
      %3131 = vset.pattern.permute.xlu0 0
      %3132 = vperm.xlu0 %3131, %v3066
      %v3133 = vpop.permute.xlu0 %3132
      %3136 = vset.pattern.permute.xlu0 0
      %3137 = vperm.xlu0 %3136, %v3067
      %v3138 = vpop.permute.xlu0 %3137
      %3141 = vset.pattern.permute.xlu0 0
      %3142 = vperm.xlu0 %3141, %v3068
      %v3143 = vpop.permute.xlu0 %3142
      %3146 = vset.pattern.permute.xlu0 0
      %3147 = vperm.xlu0 %3146, %v3069
      %v3148 = vpop.permute.xlu0 %3147
      %3150 = vxpose.xlu0.b32.start [1/16] %v3073, 128
      %3151 = vxpose.xlu0.b32.cont [2/16] %v3078, 128
      %3152 = vxpose.xlu0.b32.cont [3/16] %v3083, 128
      %3153 = vxpose.xlu0.b32.cont [4/16] %v3088, 128
      %3154 = vxpose.xlu0.b32.cont [5/16] %v3093, 128
      %3155 = vxpose.xlu0.b32.cont [6/16] %v3098, 128
      %3156 = vxpose.xlu0.b32.cont [7/16] %v3103, 128
      %3157 = vxpose.xlu0.b32.cont [8/16] %v3108, 128
      %3158 = vxpose.xlu0.b32.cont [9/16] %v3113, 128
      %3159 = vxpose.xlu0.b32.cont [10/16] %v3118, 128
      %3160 = vxpose.xlu0.b32.cont [11/16] %v3123, 128
      %3161 = vxpose.xlu0.b32.cont [12/16] %v3128, 128
      %3162 = vxpose.xlu0.b32.cont [13/16] %v3133, 128
      %3163 = vxpose.xlu0.b32.cont [14/16] %v3138, 128
      %3164 = vxpose.xlu0.b32.cont [15/16] %v3143, 128
      %3165 = vxpose.xlu0.b32.end [16/16] %v3148, 128
      %v3166 = vpop.trf.xlu0
      %v3167 = vpop.trf.xlu0
      %v3168 = vpop.trf.xlu0
      %v3169 = vpop.trf.xlu0
      %v3170 = vpop.trf.xlu0
      %v3171 = vpop.trf.xlu0
      %v3172 = vpop.trf.xlu0
      %v3173 = vpop.trf.xlu0
      %v3174 = vpop.trf.xlu0
      %v3175 = vpop.trf.xlu0
      %v3176 = vpop.trf.xlu0
      %v3177 = vpop.trf.xlu0
      %v3178 = vpop.trf.xlu0
      %v3179 = vpop.trf.xlu0
      %v3180 = vpop.trf.xlu0
      %v3181 = vpop.trf.xlu0
      %vm3182 = vmand %vm1319, %vm2218
      %vm3183 = vmand %vm1320, %vm2219
      %vm3184 = vmand %vm1321, %vm2220
      %vm3185 = vmand %vm1322, %vm2221
      %vm3186 = vmand %vm1323, %vm2222
      %vm3187 = vmand %vm1324, %vm2223
      %vm3188 = vmand %vm1325, %vm2224
      %vm3189 = vmand %vm1326, %vm2225
      %vm3190 = vmand %vm1327, %vm2226
      %vm3191 = vmand %vm1328, %vm2227
      %vm3192 = vmand %vm1329, %vm2228
      %vm3193 = vmand %vm1330, %vm2229
      %vm3194 = vmand %vm1331, %vm2230
      %vm3195 = vmand %vm1332, %vm2231
      %vm3196 = vmand %vm1333, %vm2232
      %vm3197 = vmand %vm1334, %vm2233
      %vm3198 = vcmp.gt.f32.partialorder %v3166, -2.0
      %vm3199 = vcmp.gt.f32.partialorder %v3167, -2.0
      %vm3200 = vcmp.gt.f32.partialorder %v3168, -2.0
      %vm3201 = vcmp.gt.f32.partialorder %v3169, -2.0
      %vm3202 = vcmp.gt.f32.partialorder %v3170, -2.0
      %vm3203 = vcmp.gt.f32.partialorder %v3171, -2.0
      %vm3204 = vcmp.gt.f32.partialorder %v3172, -2.0
      %vm3205 = vcmp.gt.f32.partialorder %v3173, -2.0
      %vm3206 = vcmp.gt.f32.partialorder %v3174, -2.0
      %vm3207 = vcmp.gt.f32.partialorder %v3175, -2.0
      %vm3208 = vcmp.gt.f32.partialorder %v3176, -2.0
      %vm3209 = vcmp.gt.f32.partialorder %v3177, -2.0
      %vm3210 = vcmp.gt.f32.partialorder %v3178, -2.0
      %vm3211 = vcmp.gt.f32.partialorder %v3179, -2.0
      %vm3212 = vcmp.gt.f32.partialorder %v3180, -2.0
      %vm3213 = vcmp.gt.f32.partialorder %v3181, -2.0
      %vm3214 = vmand %vm3182, %vm3198
      %vm3215 = vmand %vm3183, %vm3199
      %vm3216 = vmand %vm3184, %vm3200
      %vm3217 = vmand %vm3185, %vm3201
      %vm3218 = vmand %vm3186, %vm3202
      %vm3219 = vmand %vm3187, %vm3203
      %vm3220 = vmand %vm3188, %vm3204
      %vm3221 = vmand %vm3189, %vm3205
      %vm3222 = vmand %vm3190, %vm3206
      %vm3223 = vmand %vm3191, %vm3207
      %vm3224 = vmand %vm3192, %vm3208
      %vm3225 = vmand %vm3193, %vm3209
      %vm3226 = vmand %vm3194, %vm3210
      %vm3227 = vmand %vm3195, %vm3211
      %vm3228 = vmand %vm3196, %vm3212
      %vm3229 = vmand %vm3197, %vm3213
      %vm3230 = vcmp.gt.f32.partialorder %v3166, %v3073
      %vm3231 = vcmp.gt.f32.partialorder %v3167, %v3078
      %vm3232 = vcmp.gt.f32.partialorder %v3168, %v3083
      %vm3233 = vcmp.gt.f32.partialorder %v3169, %v3088
      %vm3234 = vcmp.gt.f32.partialorder %v3170, %v3093
      %vm3235 = vcmp.gt.f32.partialorder %v3171, %v3098
      %vm3236 = vcmp.gt.f32.partialorder %v3172, %v3103
      %vm3237 = vcmp.gt.f32.partialorder %v3173, %v3108
      %vm3238 = vcmp.gt.f32.partialorder %v3174, %v3113
      %vm3239 = vcmp.gt.f32.partialorder %v3175, %v3118
      %vm3240 = vcmp.gt.f32.partialorder %v3176, %v3123
      %vm3241 = vcmp.gt.f32.partialorder %v3177, %v3128
      %vm3242 = vcmp.gt.f32.partialorder %v3178, %v3133
      %vm3243 = vcmp.gt.f32.partialorder %v3179, %v3138
      %vm3244 = vcmp.gt.f32.partialorder %v3180, %v3143
      %vm3245 = vcmp.gt.f32.partialorder %v3181, %v3148
      %vm3246 = vcmp.eq.f32.partialorder %v3166, %v3073
      %vm3247 = vcmp.eq.f32.partialorder %v3167, %v3078
      %vm3248 = vcmp.eq.f32.partialorder %v3168, %v3083
      %vm3249 = vcmp.eq.f32.partialorder %v3169, %v3088
      %vm3250 = vcmp.eq.f32.partialorder %v3170, %v3093
      %vm3251 = vcmp.eq.f32.partialorder %v3171, %v3098
      %vm3252 = vcmp.eq.f32.partialorder %v3172, %v3103
      %vm3253 = vcmp.eq.f32.partialorder %v3173, %v3108
      %vm3254 = vcmp.eq.f32.partialorder %v3174, %v3113
      %vm3255 = vcmp.eq.f32.partialorder %v3175, %v3118
      %vm3256 = vcmp.eq.f32.partialorder %v3176, %v3123
      %vm3257 = vcmp.eq.f32.partialorder %v3177, %v3128
      %vm3258 = vcmp.eq.f32.partialorder %v3178, %v3133
      %vm3259 = vcmp.eq.f32.partialorder %v3179, %v3138
      %vm3260 = vcmp.eq.f32.partialorder %v3180, %v3143
      %vm3261 = vcmp.eq.f32.partialorder %v3181, %v3148
      %vm3262 = vmand %vm3246, %vm1495
      %vm3263 = vmand %vm3247, %vm1496
      %vm3264 = vmand %vm3248, %vm1497
      %vm3265 = vmand %vm3249, %vm1498
      %vm3266 = vmand %vm3250, %vm1499
      %vm3267 = vmand %vm3251, %vm1500
      %vm3268 = vmand %vm3252, %vm1501
      %vm3269 = vmand %vm3253, %vm1502
      %vm3270 = vmand %vm3254, %vm1503
      %vm3271 = vmand %vm3255, %vm1504
      %vm3272 = vmand %vm3256, %vm1505
      %vm3273 = vmand %vm3257, %vm1506
      %vm3274 = vmand %vm3258, %vm1507
      %vm3275 = vmand %vm3259, %vm1508
      %vm3276 = vmand %vm3260, %vm1509
      %vm3277 = vmand %vm3261, %vm1510
      %vm3278 = vmor %vm3230, %vm3262
      %vm3279 = vmor %vm3231, %vm3263
      %vm3280 = vmor %vm3232, %vm3264
      %vm3281 = vmor %vm3233, %vm3265
      %vm3282 = vmor %vm3234, %vm3266
      %vm3283 = vmor %vm3235, %vm3267
      %vm3284 = vmor %vm3236, %vm3268
      %vm3285 = vmor %vm3237, %vm3269
      %vm3286 = vmor %vm3238, %vm3270
      %vm3287 = vmor %vm3239, %vm3271
      %vm3288 = vmor %vm3240, %vm3272
      %vm3289 = vmor %vm3241, %vm3273
      %vm3290 = vmor %vm3242, %vm3274
      %vm3291 = vmor %vm3243, %vm3275
      %vm3292 = vmor %vm3244, %vm3276
      %vm3293 = vmor %vm3245, %vm3277
      %vm3294 = vmand %vm3214, %vm3278
      %vm3295 = vmand %vm3215, %vm3279
      %vm3296 = vmand %vm3216, %vm3280
      %vm3297 = vmand %vm3217, %vm3281
      %vm3298 = vmand %vm3218, %vm3282
      %vm3299 = vmand %vm3219, %vm3283
      %vm3300 = vmand %vm3220, %vm3284
      %vm3301 = vmand %vm3221, %vm3285
      %vm3302 = vmand %vm3222, %vm3286
      %vm3303 = vmand %vm3223, %vm3287
      %vm3304 = vmand %vm3224, %vm3288
      %vm3305 = vmand %vm3225, %vm3289
      %vm3306 = vmand %vm3226, %vm3290
      %vm3307 = vmand %vm3227, %vm3291
      %vm3308 = vmand %vm3228, %vm3292
      %vm3309 = vmand %vm3229, %vm3293
      %v3310 = vsel %vm3294, 1.0, 0.0
      %v3311 = vsel %vm3295, 1.0, 0.0
      %v3312 = vsel %vm3296, 1.0, 0.0
      %v3313 = vsel %vm3297, 1.0, 0.0
      %v3314 = vsel %vm3298, 1.0, 0.0
      %v3315 = vsel %vm3299, 1.0, 0.0
      %v3316 = vsel %vm3300, 1.0, 0.0
      %v3317 = vsel %vm3301, 1.0, 0.0
      %v3318 = vsel %vm3302, 1.0, 0.0
      %v3319 = vsel %vm3303, 1.0, 0.0
      %v3320 = vsel %vm3304, 1.0, 0.0
      %v3321 = vsel %vm3305, 1.0, 0.0
      %v3322 = vsel %vm3306, 1.0, 0.0
      %v3323 = vsel %vm3307, 1.0, 0.0
      %v3324 = vsel %vm3308, 1.0, 0.0
      %v3325 = vsel %vm3309, 1.0, 0.0
      %3326 = vmatprep.subr.mxu0 0.0
      %3327 = vmatpush1.msra.mxu0 1.0
      %3328 = vmatprep.subr.mxu0 0.0
      %3329 = vmatpush1.msra.mxu0 1.0
      %3330 = vmatprep.subr.mxu0 0.0
      %3331 = vmatpush1.msra.mxu0 1.0
      %3332 = vmatprep.subr.mxu0 0.0
      %3333 = vmatpush1.msra.mxu0 1.0
      %3334 = vmatprep.subr.mxu0 0.0
      %3335 = vmatpush1.msra.mxu0 1.0
      %3336 = vmatprep.subr.mxu0 0.0
      %3337 = vmatpush1.msra.mxu0 1.0
      %3338 = vmatprep.subr.mxu0 0.0
      %3339 = vmatpush1.msra.mxu0 1.0
      %3340 = vmatprep.subr.mxu0 0.0
      %3341 = vmatpush1.msra.mxu0 1.0
      %3342 = vmatprep.subr.mxu0 0.0
      %3343 = vmatpush1.msra.mxu0 1.0
      %3344 = vmatprep.subr.mxu0 0.0
      %3345 = vmatpush1.msra.mxu0 1.0
      %3346 = vmatprep.subr.mxu0 0.0
      %3347 = vmatpush1.msra.mxu0 1.0
      %3348 = vmatprep.subr.mxu0 0.0
      %3349 = vmatpush1.msra.mxu0 1.0
      %3350 = vmatprep.subr.mxu0 0.0
      %3351 = vmatpush1.msra.mxu0 1.0
      %3352 = vmatprep.subr.mxu0 0.0
      %3353 = vmatpush1.msra.mxu0 1.0
      %3354 = vmatprep.subr.mxu0 0.0
      %3355 = vmatpush1.msra.mxu0 1.0
      %3356 = vmatprep.subr.mxu0 0.0
      %3357 = vmatpush1.msra.mxu0 1.0
      %3358 = vmatprep.subr.mxu0 0.0
      %3359 = vmatpush2.msra.mxu0 0.0
      %3360 = vmatprep.subr.mxu0 0.0
      %3361 = vmatpush2.msra.mxu0 0.0
      %3362 = vmatprep.subr.mxu0 0.0
      %3363 = vmatpush2.msra.mxu0 0.0
      %3364 = vmatprep.subr.mxu0 0.0
      %3365 = vmatpush2.msra.mxu0 0.0
      %3366 = vmatprep.subr.mxu0 0.0
      %3367 = vmatpush2.msra.mxu0 0.0
      %3368 = vmatprep.subr.mxu0 0.0
      %3369 = vmatpush2.msra.mxu0 0.0
      %3370 = vmatprep.subr.mxu0 0.0
      %3371 = vmatpush2.msra.mxu0 0.0
      %3372 = vmatprep.subr.mxu0 0.0
      %3373 = vmatpush2.msra.mxu0 0.0
      %3374 = vmatprep.subr.mxu0 0.0
      %3375 = vmatpush2.msra.mxu0 0.0
      %3376 = vmatprep.subr.mxu0 0.0
      %3377 = vmatpush2.msra.mxu0 0.0
      %3378 = vmatprep.subr.mxu0 0.0
      %3379 = vmatpush2.msra.mxu0 0.0
      %3380 = vmatprep.subr.mxu0 0.0
      %3381 = vmatpush2.msra.mxu0 0.0
      %3382 = vmatprep.subr.mxu0 0.0
      %3383 = vmatpush2.msra.mxu0 0.0
      %3384 = vmatprep.subr.mxu0 0.0
      %3385 = vmatpush2.msra.mxu0 0.0
      %3386 = vmatprep.subr.mxu0 0.0
      %3387 = vmatpush2.msra.mxu0 0.0
      %3388 = vmatprep.subr.mxu0 0.0
      %3389 = vmatpush2.msra.mxu0 0.0
      %3390 = vmatprep.mubr.f32.mxu0 0.0
      %3391 = vmatmul.mubr.f32.gmra.mxu0 %v3310
      %v3392 = vpop.f32.mrf.mxu0
      %v3393 = vadd.f32 0.0, %v3392
      %v3394 = vpop.f32.mrf.mxu0
      %3395 = vmatprep.mubr.f32.mxu0 0.0
      %3396 = vmatmul.mubr.f32.gmra.mxu0 %v3311
      %v3397 = vpop.f32.mrf.mxu0
      %v3398 = vadd.f32 0.0, %v3397
      %v3399 = vpop.f32.mrf.mxu0
      %3400 = vmatprep.mubr.f32.mxu0 0.0
      %3401 = vmatmul.mubr.f32.gmra.mxu0 %v3312
      %v3402 = vpop.f32.mrf.mxu0
      %v3403 = vadd.f32 0.0, %v3402
      %v3404 = vpop.f32.mrf.mxu0
      %3405 = vmatprep.mubr.f32.mxu0 0.0
      %3406 = vmatmul.mubr.f32.gmra.mxu0 %v3313
      %v3407 = vpop.f32.mrf.mxu0
      %v3408 = vadd.f32 0.0, %v3407
      %v3409 = vpop.f32.mrf.mxu0
      %3410 = vmatprep.mubr.f32.mxu0 0.0
      %3411 = vmatmul.mubr.f32.gmra.mxu0 %v3314
      %v3412 = vpop.f32.mrf.mxu0
      %v3413 = vadd.f32 0.0, %v3412
      %v3414 = vpop.f32.mrf.mxu0
      %3415 = vmatprep.mubr.f32.mxu0 0.0
      %3416 = vmatmul.mubr.f32.gmra.mxu0 %v3315
      %v3417 = vpop.f32.mrf.mxu0
      %v3418 = vadd.f32 0.0, %v3417
      %v3419 = vpop.f32.mrf.mxu0
      %3420 = vmatprep.mubr.f32.mxu0 0.0
      %3421 = vmatmul.mubr.f32.gmra.mxu0 %v3316
      %v3422 = vpop.f32.mrf.mxu0
      %v3423 = vadd.f32 0.0, %v3422
      %v3424 = vpop.f32.mrf.mxu0
      %3425 = vmatprep.mubr.f32.mxu0 0.0
      %3426 = vmatmul.mubr.f32.gmra.mxu0 %v3317
      %v3427 = vpop.f32.mrf.mxu0
      %v3428 = vadd.f32 0.0, %v3427
      %v3429 = vpop.f32.mrf.mxu0
      %3430 = vmatprep.mubr.f32.mxu0 0.0
      %3431 = vmatmul.mubr.f32.gmra.mxu0 %v3318
      %v3432 = vpop.f32.mrf.mxu0
      %v3433 = vadd.f32 0.0, %v3432
      %v3434 = vpop.f32.mrf.mxu0
      %3435 = vmatprep.mubr.f32.mxu0 0.0
      %3436 = vmatmul.mubr.f32.gmra.mxu0 %v3319
      %v3437 = vpop.f32.mrf.mxu0
      %v3438 = vadd.f32 0.0, %v3437
      %v3439 = vpop.f32.mrf.mxu0
      %3440 = vmatprep.mubr.f32.mxu0 0.0
      %3441 = vmatmul.mubr.f32.gmra.mxu0 %v3320
      %v3442 = vpop.f32.mrf.mxu0
      %v3443 = vadd.f32 0.0, %v3442
      %v3444 = vpop.f32.mrf.mxu0
      %3445 = vmatprep.mubr.f32.mxu0 0.0
      %3446 = vmatmul.mubr.f32.gmra.mxu0 %v3321
      %v3447 = vpop.f32.mrf.mxu0
      %v3448 = vadd.f32 0.0, %v3447
      %v3449 = vpop.f32.mrf.mxu0
      %3450 = vmatprep.mubr.f32.mxu0 0.0
      %3451 = vmatmul.mubr.f32.gmra.mxu0 %v3322
      %v3452 = vpop.f32.mrf.mxu0
      %v3453 = vadd.f32 0.0, %v3452
      %v3454 = vpop.f32.mrf.mxu0
      %3455 = vmatprep.mubr.f32.mxu0 0.0
      %3456 = vmatmul.mubr.f32.gmra.mxu0 %v3323
      %v3457 = vpop.f32.mrf.mxu0
      %v3458 = vadd.f32 0.0, %v3457
      %v3459 = vpop.f32.mrf.mxu0
      %3460 = vmatprep.mubr.f32.mxu0 0.0
      %3461 = vmatmul.mubr.f32.gmra.mxu0 %v3324
      %v3462 = vpop.f32.mrf.mxu0
      %v3463 = vadd.f32 0.0, %v3462
      %v3464 = vpop.f32.mrf.mxu0
      %3465 = vmatprep.mubr.f32.mxu0 0.0
      %3466 = vmatmul.mubr.f32.gmra.mxu0 %v3325
      %v3467 = vpop.f32.mrf.mxu0
      %v3468 = vadd.f32 0.0, %v3467
      %v3469 = vpop.f32.mrf.mxu0
      %3470 = vdwg.mxu0
      %v3471 = vsel %vm3214, 1.0, 0.0
      %v3472 = vsel %vm3215, 1.0, 0.0
      %v3473 = vsel %vm3216, 1.0, 0.0
      %v3474 = vsel %vm3217, 1.0, 0.0
      %v3475 = vsel %vm3218, 1.0, 0.0
      %v3476 = vsel %vm3219, 1.0, 0.0
      %v3477 = vsel %vm3220, 1.0, 0.0
      %v3478 = vsel %vm3221, 1.0, 0.0
      %v3479 = vsel %vm3222, 1.0, 0.0
      %v3480 = vsel %vm3223, 1.0, 0.0
      %v3481 = vsel %vm3224, 1.0, 0.0
      %v3482 = vsel %vm3225, 1.0, 0.0
      %v3483 = vsel %vm3226, 1.0, 0.0
      %v3484 = vsel %vm3227, 1.0, 0.0
      %v3485 = vsel %vm3228, 1.0, 0.0
      %v3486 = vsel %vm3229, 1.0, 0.0
      %3487 = vmatprep.subr.mxu0 0.0
      %3488 = vmatpush1.msra.mxu0 1.0
      %3489 = vmatprep.subr.mxu0 0.0
      %3490 = vmatpush1.msra.mxu0 1.0
      %3491 = vmatprep.subr.mxu0 0.0
      %3492 = vmatpush1.msra.mxu0 1.0
      %3493 = vmatprep.subr.mxu0 0.0
      %3494 = vmatpush1.msra.mxu0 1.0
      %3495 = vmatprep.subr.mxu0 0.0
      %3496 = vmatpush1.msra.mxu0 1.0
      %3497 = vmatprep.subr.mxu0 0.0
      %3498 = vmatpush1.msra.mxu0 1.0
      %3499 = vmatprep.subr.mxu0 0.0
      %3500 = vmatpush1.msra.mxu0 1.0
      %3501 = vmatprep.subr.mxu0 0.0
      %3502 = vmatpush1.msra.mxu0 1.0
      %3503 = vmatprep.subr.mxu0 0.0
      %3504 = vmatpush1.msra.mxu0 1.0
      %3505 = vmatprep.subr.mxu0 0.0
      %3506 = vmatpush1.msra.mxu0 1.0
      %3507 = vmatprep.subr.mxu0 0.0
      %3508 = vmatpush1.msra.mxu0 1.0
      %3509 = vmatprep.subr.mxu0 0.0
      %3510 = vmatpush1.msra.mxu0 1.0
      %3511 = vmatprep.subr.mxu0 0.0
      %3512 = vmatpush1.msra.mxu0 1.0
      %3513 = vmatprep.subr.mxu0 0.0
      %3514 = vmatpush1.msra.mxu0 1.0
      %3515 = vmatprep.subr.mxu0 0.0
      %3516 = vmatpush1.msra.mxu0 1.0
      %3517 = vmatprep.subr.mxu0 0.0
      %3518 = vmatpush1.msra.mxu0 1.0
      %3519 = vmatprep.subr.mxu0 0.0
      %3520 = vmatpush2.msra.mxu0 0.0
      %3521 = vmatprep.subr.mxu0 0.0
      %3522 = vmatpush2.msra.mxu0 0.0
      %3523 = vmatprep.subr.mxu0 0.0
      %3524 = vmatpush2.msra.mxu0 0.0
      %3525 = vmatprep.subr.mxu0 0.0
      %3526 = vmatpush2.msra.mxu0 0.0
      %3527 = vmatprep.subr.mxu0 0.0
      %3528 = vmatpush2.msra.mxu0 0.0
      %3529 = vmatprep.subr.mxu0 0.0
      %3530 = vmatpush2.msra.mxu0 0.0
      %3531 = vmatprep.subr.mxu0 0.0
      %3532 = vmatpush2.msra.mxu0 0.0
      %3533 = vmatprep.subr.mxu0 0.0
      %3534 = vmatpush2.msra.mxu0 0.0
      %3535 = vmatprep.subr.mxu0 0.0
      %3536 = vmatpush2.msra.mxu0 0.0
      %3537 = vmatprep.subr.mxu0 0.0
      %3538 = vmatpush2.msra.mxu0 0.0
      %3539 = vmatprep.subr.mxu0 0.0
      %3540 = vmatpush2.msra.mxu0 0.0
      %3541 = vmatprep.subr.mxu0 0.0
      %3542 = vmatpush2.msra.mxu0 0.0
      %3543 = vmatprep.subr.mxu0 0.0
      %3544 = vmatpush2.msra.mxu0 0.0
      %3545 = vmatprep.subr.mxu0 0.0
      %3546 = vmatpush2.msra.mxu0 0.0
      %3547 = vmatprep.subr.mxu0 0.0
      %3548 = vmatpush2.msra.mxu0 0.0
      %3549 = vmatprep.subr.mxu0 0.0
      %3550 = vmatpush2.msra.mxu0 0.0
      %3551 = vmatprep.mubr.f32.mxu0 0.0
      %3552 = vmatmul.mubr.f32.gmra.mxu0 %v3471
      %v3553 = vpop.f32.mrf.mxu0
      %v3554 = vadd.f32 0.0, %v3553
      %v3555 = vpop.f32.mrf.mxu0
      %3556 = vmatprep.mubr.f32.mxu0 0.0
      %3557 = vmatmul.mubr.f32.gmra.mxu0 %v3472
      %v3558 = vpop.f32.mrf.mxu0
      %v3559 = vadd.f32 0.0, %v3558
      %v3560 = vpop.f32.mrf.mxu0
      %3561 = vmatprep.mubr.f32.mxu0 0.0
      %3562 = vmatmul.mubr.f32.gmra.mxu0 %v3473
      %v3563 = vpop.f32.mrf.mxu0
      %v3564 = vadd.f32 0.0, %v3563
      %v3565 = vpop.f32.mrf.mxu0
      %3566 = vmatprep.mubr.f32.mxu0 0.0
      %3567 = vmatmul.mubr.f32.gmra.mxu0 %v3474
      %v3568 = vpop.f32.mrf.mxu0
      %v3569 = vadd.f32 0.0, %v3568
      %v3570 = vpop.f32.mrf.mxu0
      %3571 = vmatprep.mubr.f32.mxu0 0.0
      %3572 = vmatmul.mubr.f32.gmra.mxu0 %v3475
      %v3573 = vpop.f32.mrf.mxu0
      %v3574 = vadd.f32 0.0, %v3573
      %v3575 = vpop.f32.mrf.mxu0
      %3576 = vmatprep.mubr.f32.mxu0 0.0
      %3577 = vmatmul.mubr.f32.gmra.mxu0 %v3476
      %v3578 = vpop.f32.mrf.mxu0
      %v3579 = vadd.f32 0.0, %v3578
      %v3580 = vpop.f32.mrf.mxu0
      %3581 = vmatprep.mubr.f32.mxu0 0.0
      %3582 = vmatmul.mubr.f32.gmra.mxu0 %v3477
      %v3583 = vpop.f32.mrf.mxu0
      %v3584 = vadd.f32 0.0, %v3583
      %v3585 = vpop.f32.mrf.mxu0
      %3586 = vmatprep.mubr.f32.mxu0 0.0
      %3587 = vmatmul.mubr.f32.gmra.mxu0 %v3478
      %v3588 = vpop.f32.mrf.mxu0
      %v3589 = vadd.f32 0.0, %v3588
      %v3590 = vpop.f32.mrf.mxu0
      %3591 = vmatprep.mubr.f32.mxu0 0.0
      %3592 = vmatmul.mubr.f32.gmra.mxu0 %v3479
      %v3593 = vpop.f32.mrf.mxu0
      %v3594 = vadd.f32 0.0, %v3593
      %v3595 = vpop.f32.mrf.mxu0
      %3596 = vmatprep.mubr.f32.mxu0 0.0
      %3597 = vmatmul.mubr.f32.gmra.mxu0 %v3480
      %v3598 = vpop.f32.mrf.mxu0
      %v3599 = vadd.f32 0.0, %v3598
      %v3600 = vpop.f32.mrf.mxu0
      %3601 = vmatprep.mubr.f32.mxu0 0.0
      %3602 = vmatmul.mubr.f32.gmra.mxu0 %v3481
      %v3603 = vpop.f32.mrf.mxu0
      %v3604 = vadd.f32 0.0, %v3603
      %v3605 = vpop.f32.mrf.mxu0
      %3606 = vmatprep.mubr.f32.mxu0 0.0
      %3607 = vmatmul.mubr.f32.gmra.mxu0 %v3482
      %v3608 = vpop.f32.mrf.mxu0
      %v3609 = vadd.f32 0.0, %v3608
      %v3610 = vpop.f32.mrf.mxu0
      %3611 = vmatprep.mubr.f32.mxu0 0.0
      %3612 = vmatmul.mubr.f32.gmra.mxu0 %v3483
      %v3613 = vpop.f32.mrf.mxu0
      %v3614 = vadd.f32 0.0, %v3613
      %v3615 = vpop.f32.mrf.mxu0
      %3616 = vmatprep.mubr.f32.mxu0 0.0
      %3617 = vmatmul.mubr.f32.gmra.mxu0 %v3484
      %v3618 = vpop.f32.mrf.mxu0
      %v3619 = vadd.f32 0.0, %v3618
      %v3620 = vpop.f32.mrf.mxu0
      %3621 = vmatprep.mubr.f32.mxu0 0.0
      %3622 = vmatmul.mubr.f32.gmra.mxu0 %v3485
      %v3623 = vpop.f32.mrf.mxu0
      %v3624 = vadd.f32 0.0, %v3623
      %v3625 = vpop.f32.mrf.mxu0
      %3626 = vmatprep.mubr.f32.mxu0 0.0
      %3627 = vmatmul.mubr.f32.gmra.mxu0 %v3486
      %v3628 = vpop.f32.mrf.mxu0
      %v3629 = vadd.f32 0.0, %v3628
      %v3630 = vpop.f32.mrf.mxu0
      %3631 = vdwg.mxu0
      %v3632 = vmul.f32 %v3554, 0.8
      %v3633 = vmul.f32 %v3559, 0.8
      %v3634 = vmul.f32 %v3564, 0.8
      %v3635 = vmul.f32 %v3569, 0.8
      %v3636 = vmul.f32 %v3574, 0.8
      %v3637 = vmul.f32 %v3579, 0.8
      %v3638 = vmul.f32 %v3584, 0.8
      %v3639 = vmul.f32 %v3589, 0.8
      %v3640 = vmul.f32 %v3594, 0.8
      %v3641 = vmul.f32 %v3599, 0.8
      %v3642 = vmul.f32 %v3604, 0.8
      %v3643 = vmul.f32 %v3609, 0.8
      %v3644 = vmul.f32 %v3614, 0.8
      %v3645 = vmul.f32 %v3619, 0.8
      %v3646 = vmul.f32 %v3624, 0.8
      %v3647 = vmul.f32 %v3629, 0.8
      %v3648 = vceil.f32 %v3632
      %v3649 = vceil.f32 %v3633
      %v3650 = vceil.f32 %v3634
      %v3651 = vceil.f32 %v3635
      %v3652 = vceil.f32 %v3636
      %v3653 = vceil.f32 %v3637
      %v3654 = vceil.f32 %v3638
      %v3655 = vceil.f32 %v3639
      %v3656 = vceil.f32 %v3640
      %v3657 = vceil.f32 %v3641
      %v3658 = vceil.f32 %v3642
      %v3659 = vceil.f32 %v3643
      %v3660 = vceil.f32 %v3644
      %v3661 = vceil.f32 %v3645
      %v3662 = vceil.f32 %v3646
      %v3663 = vceil.f32 %v3647
      %vm3664 = vcmp.lt.f32.partialorder %v3393, %v3648
      %vm3665 = vcmp.lt.f32.partialorder %v3398, %v3649
      %vm3666 = vcmp.lt.f32.partialorder %v3403, %v3650
      %vm3667 = vcmp.lt.f32.partialorder %v3408, %v3651
      %vm3668 = vcmp.lt.f32.partialorder %v3413, %v3652
      %vm3669 = vcmp.lt.f32.partialorder %v3418, %v3653
      %vm3670 = vcmp.lt.f32.partialorder %v3423, %v3654
      %vm3671 = vcmp.lt.f32.partialorder %v3428, %v3655
      %vm3672 = vcmp.lt.f32.partialorder %v3433, %v3656
      %vm3673 = vcmp.lt.f32.partialorder %v3438, %v3657
      %vm3674 = vcmp.lt.f32.partialorder %v3443, %v3658
      %vm3675 = vcmp.lt.f32.partialorder %v3448, %v3659
      %vm3676 = vcmp.lt.f32.partialorder %v3453, %v3660
      %vm3677 = vcmp.lt.f32.partialorder %v3458, %v3661
      %vm3678 = vcmp.lt.f32.partialorder %v3463, %v3662
      %vm3679 = vcmp.lt.f32.partialorder %v3468, %v3663
      %vm3680 = vmand %vm3664, %vm2138
      %vm3681 = vmand %vm3665, %vm2139
      %vm3682 = vmand %vm3666, %vm2140
      %vm3683 = vmand %vm3667, %vm2141
      %vm3684 = vmand %vm3668, %vm2142
      %vm3685 = vmand %vm3669, %vm2143
      %vm3686 = vmand %vm3670, %vm2144
      %vm3687 = vmand %vm3671, %vm2145
      %vm3688 = vmand %vm3672, %vm2146
      %vm3689 = vmand %vm3673, %vm2147
      %vm3690 = vmand %vm3674, %vm2148
      %vm3691 = vmand %vm3675, %vm2149
      %vm3692 = vmand %vm3676, %vm2150
      %vm3693 = vmand %vm3677, %vm2151
      %vm3694 = vmand %vm3678, %vm2152
      %vm3695 = vmand %vm3679, %vm2153
      %v3696 = vsel %vm3680, 1, 0
      %v3697 = vsel %vm3681, 1, 0
      %v3698 = vsel %vm3682, 1, 0
      %v3699 = vsel %vm3683, 1, 0
      %v3700 = vsel %vm3684, 1, 0
      %v3701 = vsel %vm3685, 1, 0
      %v3702 = vsel %vm3686, 1, 0
      %v3703 = vsel %vm3687, 1, 0
      %v3704 = vsel %vm3688, 1, 0
      %v3705 = vsel %vm3689, 1, 0
      %v3706 = vsel %vm3690, 1, 0
      %v3707 = vsel %vm3691, 1, 0
      %v3708 = vsel %vm3692, 1, 0
      %v3709 = vsel %vm3693, 1, 0
      %v3710 = vsel %vm3694, 1, 0
      %v3711 = vsel %vm3695, 1, 0
      %v3712 = vcvt.s32.f32 %v3696
      %v3713 = vcvt.s32.f32 %v3697
      %v3714 = vcvt.s32.f32 %v3698
      %v3715 = vcvt.s32.f32 %v3699
      %v3716 = vcvt.s32.f32 %v3700
      %v3717 = vcvt.s32.f32 %v3701
      %v3718 = vcvt.s32.f32 %v3702
      %v3719 = vcvt.s32.f32 %v3703
      %v3720 = vcvt.s32.f32 %v3704
      %v3721 = vcvt.s32.f32 %v3705
      %v3722 = vcvt.s32.f32 %v3706
      %v3723 = vcvt.s32.f32 %v3707
      %v3724 = vcvt.s32.f32 %v3708
      %v3725 = vcvt.s32.f32 %v3709
      %v3726 = vcvt.s32.f32 %v3710
      %v3727 = vcvt.s32.f32 %v3711
      %v3728 = vmul.f32 %v3038, %v3712
      %v3729 = vmul.f32 %v3039, %v3713
      %v3730 = vmul.f32 %v3040, %v3714
      %v3731 = vmul.f32 %v3041, %v3715
      %v3732 = vmul.f32 %v3042, %v3716
      %v3733 = vmul.f32 %v3043, %v3717
      %v3734 = vmul.f32 %v3044, %v3718
      %v3735 = vmul.f32 %v3045, %v3719
      %v3736 = vmul.f32 %v3046, %v3720
      %v3737 = vmul.f32 %v3047, %v3721
      %v3738 = vmul.f32 %v3048, %v3722
      %v3739 = vmul.f32 %v3049, %v3723
      %v3740 = vmul.f32 %v3050, %v3724
      %v3741 = vmul.f32 %v3051, %v3725
      %v3742 = vmul.f32 %v3052, %v3726
      %v3743 = vmul.f32 %v3053, %v3727
      %3745 = vset.pattern.permute.xlu0 0
      %3746 = vperm.xlu0 %3745, %v3728
      %v3747 = vpop.permute.xlu0 %3746
      %3750 = vset.pattern.permute.xlu0 0
      %3751 = vperm.xlu0 %3750, %v3729
      %v3752 = vpop.permute.xlu0 %3751
      %3755 = vset.pattern.permute.xlu0 0
      %3756 = vperm.xlu0 %3755, %v3730
      %v3757 = vpop.permute.xlu0 %3756
      %3760 = vset.pattern.permute.xlu0 0
      %3761 = vperm.xlu0 %3760, %v3731
      %v3762 = vpop.permute.xlu0 %3761
      %3765 = vset.pattern.permute.xlu0 0
      %3766 = vperm.xlu0 %3765, %v3732
      %v3767 = vpop.permute.xlu0 %3766
      %3770 = vset.pattern.permute.xlu0 0
      %3771 = vperm.xlu0 %3770, %v3733
      %v3772 = vpop.permute.xlu0 %3771
      %3775 = vset.pattern.permute.xlu0 0
      %3776 = vperm.xlu0 %3775, %v3734
      %v3777 = vpop.permute.xlu0 %3776
      %3780 = vset.pattern.permute.xlu0 0
      %3781 = vperm.xlu0 %3780, %v3735
      %v3782 = vpop.permute.xlu0 %3781
      %3785 = vset.pattern.permute.xlu0 0
      %3786 = vperm.xlu0 %3785, %v3736
      %v3787 = vpop.permute.xlu0 %3786
      %3790 = vset.pattern.permute.xlu0 0
      %3791 = vperm.xlu0 %3790, %v3737
      %v3792 = vpop.permute.xlu0 %3791
      %3795 = vset.pattern.permute.xlu0 0
      %3796 = vperm.xlu0 %3795, %v3738
      %v3797 = vpop.permute.xlu0 %3796
      %3800 = vset.pattern.permute.xlu0 0
      %3801 = vperm.xlu0 %3800, %v3739
      %v3802 = vpop.permute.xlu0 %3801
      %3805 = vset.pattern.permute.xlu0 0
      %3806 = vperm.xlu0 %3805, %v3740
      %v3807 = vpop.permute.xlu0 %3806
      %3810 = vset.pattern.permute.xlu0 0
      %3811 = vperm.xlu0 %3810, %v3741
      %v3812 = vpop.permute.xlu0 %3811
      %3815 = vset.pattern.permute.xlu0 0
      %3816 = vperm.xlu0 %3815, %v3742
      %v3817 = vpop.permute.xlu0 %3816
      %3820 = vset.pattern.permute.xlu0 0
      %3821 = vperm.xlu0 %3820, %v3743
      %v3822 = vpop.permute.xlu0 %3821
      %v3824 = vmul.f32 %v2893, %v3747
      %v3825 = vmul.f32 %v2894, %v3752
      %v3826 = vmul.f32 %v2895, %v3757
      %v3827 = vmul.f32 %v2896, %v3762
      %v3828 = vmul.f32 %v2897, %v3767
      %v3829 = vmul.f32 %v2898, %v3772
      %v3830 = vmul.f32 %v2899, %v3777
      %v3831 = vmul.f32 %v2900, %v3782
      %v3832 = vmul.f32 %v2901, %v3787
      %v3833 = vmul.f32 %v2902, %v3792
      %v3834 = vmul.f32 %v2903, %v3797
      %v3835 = vmul.f32 %v2904, %v3802
      %v3836 = vmul.f32 %v2905, %v3807
      %v3837 = vmul.f32 %v2906, %v3812
      %v3838 = vmul.f32 %v2907, %v3817
      %v3839 = vmul.f32 %v2908, %v3822
      %v3840 = vpack.c.bf16 %v3713, %v3712
      %v3841 = vpack.c.bf16 %v3715, %v3714
      %v3842 = vpack.c.bf16 %v3717, %v3716
      %v3843 = vpack.c.bf16 %v3719, %v3718
      %v3844 = vpack.c.bf16 %v3721, %v3720
      %v3845 = vpack.c.bf16 %v3723, %v3722
      %v3846 = vpack.c.bf16 %v3725, %v3724
      %v3847 = vpack.c.bf16 %v3727, %v3726
      %3848 = vmatprep.subr.bf16.mxu0 0
      %3849 = vmatpush1.bf16.msra.mxu0 %v3847
      %3850 = vmatprep.subr.bf16.mxu0 0
      %3851 = vmatpush1.bf16.msra.mxu0 %v3846
      %3852 = vmatprep.subr.bf16.mxu0 0
      %3853 = vmatpush1.bf16.msra.mxu0 %v3845
      %3854 = vmatprep.subr.bf16.mxu0 0
      %3855 = vmatpush1.bf16.msra.mxu0 %v3844
      %3856 = vmatprep.subr.bf16.mxu0 0
      %3857 = vmatpush1.bf16.msra.mxu0 %v3843
      %3858 = vmatprep.subr.bf16.mxu0 0
      %3859 = vmatpush1.bf16.msra.mxu0 %v3842
      %3860 = vmatprep.subr.bf16.mxu0 0
      %3861 = vmatpush1.bf16.msra.mxu0 %v3841
      %3862 = vmatprep.subr.bf16.mxu0 0
      %3863 = vmatpush1.bf16.msra.mxu0 %v3840
      %3864 = vmatprep.subr.bf16.mxu0 0
      %3865 = vmatpush2.bf16.msra.mxu0 0
      %3866 = vmatprep.subr.bf16.mxu0 0
      %3867 = vmatpush2.bf16.msra.mxu0 0
      %3868 = vmatprep.subr.bf16.mxu0 0
      %3869 = vmatpush2.bf16.msra.mxu0 0
      %3870 = vmatprep.subr.bf16.mxu0 0
      %3871 = vmatpush2.bf16.msra.mxu0 0
      %3872 = vmatprep.subr.bf16.mxu0 0
      %3873 = vmatpush2.bf16.msra.mxu0 0
      %3874 = vmatprep.subr.bf16.mxu0 0
      %3875 = vmatpush2.bf16.msra.mxu0 0
      %3876 = vmatprep.subr.bf16.mxu0 0
      %3877 = vmatpush2.bf16.msra.mxu0 0
      %3878 = vmatprep.subr.bf16.mxu0 0
      %3879 = vmatpush2.bf16.msra.mxu0 0
      %3880 = vmatprep.mubr.bf16.mxu0 0
      %3881 = vmatmul.mubr.bf16.gmra.mxu0 %v2089
      %v3882 = vpop.f32.mrf.mxu0
      %v3883 = vadd.f32 0.0, %v3882
      %v3884 = vpop.f32.mrf.mxu0
      %v3885 = vpop.f32.mrf.mxu0
      %v3886 = vpop.f32.mrf.mxu0
      %3887 = vdwg.mxu0
      %vm3888 = vcmp.gt.f32.partialorder %v3712, 0.0
      %vm3889 = vcmp.gt.f32.partialorder %v3713, 0.0
      %vm3890 = vcmp.gt.f32.partialorder %v3714, 0.0
      %vm3891 = vcmp.gt.f32.partialorder %v3715, 0.0
      %vm3892 = vcmp.gt.f32.partialorder %v3716, 0.0
      %vm3893 = vcmp.gt.f32.partialorder %v3717, 0.0
      %vm3894 = vcmp.gt.f32.partialorder %v3718, 0.0
      %vm3895 = vcmp.gt.f32.partialorder %v3719, 0.0
      %vm3896 = vcmp.gt.f32.partialorder %v3720, 0.0
      %vm3897 = vcmp.gt.f32.partialorder %v3721, 0.0
      %vm3898 = vcmp.gt.f32.partialorder %v3722, 0.0
      %vm3899 = vcmp.gt.f32.partialorder %v3723, 0.0
      %vm3900 = vcmp.gt.f32.partialorder %v3724, 0.0
      %vm3901 = vcmp.gt.f32.partialorder %v3725, 0.0
      %vm3902 = vcmp.gt.f32.partialorder %v3726, 0.0
      %vm3903 = vcmp.gt.f32.partialorder %v3727, 0.0
      %v3904 = vsel %vm3888, 1, 0
      %v3905 = vsel %vm3889, 1, 0
      %v3906 = vsel %vm3890, 1, 0
      %v3907 = vsel %vm3891, 1, 0
      %v3908 = vsel %vm3892, 1, 0
      %v3909 = vsel %vm3893, 1, 0
      %v3910 = vsel %vm3894, 1, 0
      %v3911 = vsel %vm3895, 1, 0
      %v3912 = vsel %vm3896, 1, 0
      %v3913 = vsel %vm3897, 1, 0
      %v3914 = vsel %vm3898, 1, 0
      %v3915 = vsel %vm3899, 1, 0
      %v3916 = vsel %vm3900, 1, 0
      %v3917 = vsel %vm3901, 1, 0
      %v3918 = vsel %vm3902, 1, 0
      %v3919 = vsel %vm3903, 1, 0
      %3920 = vset.pattern.permute.xlu0 0
      %3921 = vperm.xlu0 %3920, %v3904
      %v3922 = vpop.permute.xlu0 %3921
      %3923 = vset.pattern.permute.xlu0 0
      %3924 = vperm.xlu0 %3923, %v3905
      %v3925 = vpop.permute.xlu0 %3924
      %3926 = vset.pattern.permute.xlu0 0
      %3927 = vperm.xlu0 %3926, %v3906
      %v3928 = vpop.permute.xlu0 %3927
      %3929 = vset.pattern.permute.xlu0 0
      %3930 = vperm.xlu0 %3929, %v3907
      %v3931 = vpop.permute.xlu0 %3930
      %3932 = vset.pattern.permute.xlu0 0
      %3933 = vperm.xlu0 %3932, %v3908
      %v3934 = vpop.permute.xlu0 %3933
      %3935 = vset.pattern.permute.xlu0 0
      %3936 = vperm.xlu0 %3935, %v3909
      %v3937 = vpop.permute.xlu0 %3936
      %3938 = vset.pattern.permute.xlu0 0
      %3939 = vperm.xlu0 %3938, %v3910
      %v3940 = vpop.permute.xlu0 %3939
      %3941 = vset.pattern.permute.xlu0 0
      %3942 = vperm.xlu0 %3941, %v3911
      %v3943 = vpop.permute.xlu0 %3942
      %3944 = vset.pattern.permute.xlu0 0
      %3945 = vperm.xlu0 %3944, %v3912
      %v3946 = vpop.permute.xlu0 %3945
      %3947 = vset.pattern.permute.xlu0 0
      %3948 = vperm.xlu0 %3947, %v3913
      %v3949 = vpop.permute.xlu0 %3948
      %3950 = vset.pattern.permute.xlu0 0
      %3951 = vperm.xlu0 %3950, %v3914
      %v3952 = vpop.permute.xlu0 %3951
      %3953 = vset.pattern.permute.xlu0 0
      %3954 = vperm.xlu0 %3953, %v3915
      %v3955 = vpop.permute.xlu0 %3954
      %3956 = vset.pattern.permute.xlu0 0
      %3957 = vperm.xlu0 %3956, %v3916
      %v3958 = vpop.permute.xlu0 %3957
      %3959 = vset.pattern.permute.xlu0 0
      %3960 = vperm.xlu0 %3959, %v3917
      %v3961 = vpop.permute.xlu0 %3960
      %3962 = vset.pattern.permute.xlu0 0
      %3963 = vperm.xlu0 %3962, %v3918
      %v3964 = vpop.permute.xlu0 %3963
      %3965 = vset.pattern.permute.xlu0 0
      %3966 = vperm.xlu0 %3965, %v3919
      %v3967 = vpop.permute.xlu0 %3966
      %vm3968 = vcmp.eq.s32.totalorder %v3922, 1
      %vm3969 = vcmp.eq.s32.totalorder %v3925, 1
      %vm3970 = vcmp.eq.s32.totalorder %v3928, 1
      %vm3971 = vcmp.eq.s32.totalorder %v3931, 1
      %vm3972 = vcmp.eq.s32.totalorder %v3934, 1
      %vm3973 = vcmp.eq.s32.totalorder %v3937, 1
      %vm3974 = vcmp.eq.s32.totalorder %v3940, 1
      %vm3975 = vcmp.eq.s32.totalorder %v3943, 1
      %vm3976 = vcmp.eq.s32.totalorder %v3946, 1
      %vm3977 = vcmp.eq.s32.totalorder %v3949, 1
      %vm3978 = vcmp.eq.s32.totalorder %v3952, 1
      %vm3979 = vcmp.eq.s32.totalorder %v3955, 1
      %vm3980 = vcmp.eq.s32.totalorder %v3958, 1
      %vm3981 = vcmp.eq.s32.totalorder %v3961, 1
      %vm3982 = vcmp.eq.s32.totalorder %v3964, 1
      %vm3983 = vcmp.eq.s32.totalorder %v3967, 1
      %v3984 = vsel %vm3968, %v3824, -inf
      %v3985 = vsel %vm3969, %v3825, -inf
      %v3986 = vsel %vm3970, %v3826, -inf
      %v3987 = vsel %vm3971, %v3827, -inf
      %v3988 = vsel %vm3972, %v3828, -inf
      %v3989 = vsel %vm3973, %v3829, -inf
      %v3990 = vsel %vm3974, %v3830, -inf
      %v3991 = vsel %vm3975, %v3831, -inf
      %v3992 = vsel %vm3976, %v3832, -inf
      %v3993 = vsel %vm3977, %v3833, -inf
      %v3994 = vsel %vm3978, %v3834, -inf
      %v3995 = vsel %vm3979, %v3835, -inf
      %v3996 = vsel %vm3980, %v3836, -inf
      %v3997 = vsel %vm3981, %v3837, -inf
      %v3998 = vsel %vm3982, %v3838, -inf
      %v3999 = vsel %vm3983, %v3839, -inf
      %v4000 = vmax.f32 %v3984, %v3985
      %v4001 = vrot.slane %v4000, 4
      %v4002 = vmax.f32 %v4000, %v4001
      %v4003 = vrot.slane %v4002, 2
      %v4004 = vmax.f32 %v4002, %v4003
      %v4005 = vrot.slane %v4004, 1
      %v4006 = vmax.f32 %v4004, %v4005
      %v4007 = vmax.f32 %v3986, %v3987
      %v4008 = vrot.slane %v4007, 4
      %v4009 = vmax.f32 %v4007, %v4008
      %v4010 = vrot.slane %v4009, 2
      %v4011 = vmax.f32 %v4009, %v4010
      %v4012 = vrot.slane %v4011, 1
      %v4013 = vmax.f32 %v4011, %v4012
      %v4014 = vmax.f32 %v3988, %v3989
      %v4015 = vrot.slane %v4014, 4
      %v4016 = vmax.f32 %v4014, %v4015
      %v4017 = vrot.slane %v4016, 2
      %v4018 = vmax.f32 %v4016, %v4017
      %v4019 = vrot.slane %v4018, 1
      %v4020 = vmax.f32 %v4018, %v4019
      %v4021 = vmax.f32 %v3990, %v3991
      %v4022 = vrot.slane %v4021, 4
      %v4023 = vmax.f32 %v4021, %v4022
      %v4024 = vrot.slane %v4023, 2
      %v4025 = vmax.f32 %v4023, %v4024
      %v4026 = vrot.slane %v4025, 1
      %v4027 = vmax.f32 %v4025, %v4026
      %v4028 = vmax.f32 %v3992, %v3993
      %v4029 = vrot.slane %v4028, 4
      %v4030 = vmax.f32 %v4028, %v4029
      %v4031 = vrot.slane %v4030, 2
      %v4032 = vmax.f32 %v4030, %v4031
      %v4033 = vrot.slane %v4032, 1
      %v4034 = vmax.f32 %v4032, %v4033
      %v4035 = vmax.f32 %v3994, %v3995
      %v4036 = vrot.slane %v4035, 4
      %v4037 = vmax.f32 %v4035, %v4036
      %v4038 = vrot.slane %v4037, 2
      %v4039 = vmax.f32 %v4037, %v4038
      %v4040 = vrot.slane %v4039, 1
      %v4041 = vmax.f32 %v4039, %v4040
      %v4042 = vmax.f32 %v3996, %v3997
      %v4043 = vrot.slane %v4042, 4
      %v4044 = vmax.f32 %v4042, %v4043
      %v4045 = vrot.slane %v4044, 2
      %v4046 = vmax.f32 %v4044, %v4045
      %v4047 = vrot.slane %v4046, 1
      %v4048 = vmax.f32 %v4046, %v4047
      %v4049 = vmax.f32 %v3998, %v3999
      %v4050 = vrot.slane %v4049, 4
      %v4051 = vmax.f32 %v4049, %v4050
      %v4052 = vrot.slane %v4051, 2
      %v4053 = vmax.f32 %v4051, %v4052
      %v4054 = vrot.slane %v4053, 1
      %v4055 = vmax.f32 %v4053, %v4054
      %vm4056 = vcmp.gt.f32.partialorder %v3883, 0.0
      %v4057 = vsel %vm4056, 1, 0
      %4058 = vset.pattern.permute.xlu0 0
      %4059 = vperm.xlu0 %4058, %v4057
      %v4060 = vpop.permute.xlu0 %4059
      %vm4061 = vcmp.eq.s32.totalorder %v4060, 1
      %v4070 = vsel %vm2320, %v4013, %v4006
      %v4071 = vsel %vm2322, %v4020, %v4070
      %v4072 = vsel %vm2324, %v4027, %v4071
      %v4073 = vsel %vm2326, %v4034, %v4072
      %v4074 = vsel %vm2328, %v4041, %v4073
      %v4075 = vsel %vm2330, %v4048, %v4074
      %v4076 = vsel %vm2332, %v4055, %v4075
      %v4078 = vsel %vm4061, %v4076, 0.0
      %v4079 = vadd.f32 %v2336, %v4078
      %v4080 = vadd.f32 %v3824, %v3825
      %v4081 = vrot.slane %v4080, 4
      %v4082 = vadd.f32 %v4080, %v4081
      %v4083 = vrot.slane %v4082, 2
      %v4084 = vadd.f32 %v4082, %v4083
      %v4085 = vrot.slane %v4084, 1
      %v4086 = vadd.f32 %v4084, %v4085
      %v4087 = vadd.f32 %v3826, %v3827
      %v4088 = vrot.slane %v4087, 4
      %v4089 = vadd.f32 %v4087, %v4088
      %v4090 = vrot.slane %v4089, 2
      %v4091 = vadd.f32 %v4089, %v4090
      %v4092 = vrot.slane %v4091, 1
      %v4093 = vadd.f32 %v4091, %v4092
      %v4094 = vadd.f32 %v3828, %v3829
      %v4095 = vrot.slane %v4094, 4
      %v4096 = vadd.f32 %v4094, %v4095
      %v4097 = vrot.slane %v4096, 2
      %v4098 = vadd.f32 %v4096, %v4097
      %v4099 = vrot.slane %v4098, 1
      %v4100 = vadd.f32 %v4098, %v4099
      %v4101 = vadd.f32 %v3830, %v3831
      %v4102 = vrot.slane %v4101, 4
      %v4103 = vadd.f32 %v4101, %v4102
      %v4104 = vrot.slane %v4103, 2
      %v4105 = vadd.f32 %v4103, %v4104
      %v4106 = vrot.slane %v4105, 1
      %v4107 = vadd.f32 %v4105, %v4106
      %v4108 = vadd.f32 %v3832, %v3833
      %v4109 = vrot.slane %v4108, 4
      %v4110 = vadd.f32 %v4108, %v4109
      %v4111 = vrot.slane %v4110, 2
      %v4112 = vadd.f32 %v4110, %v4111
      %v4113 = vrot.slane %v4112, 1
      %v4114 = vadd.f32 %v4112, %v4113
      %v4115 = vadd.f32 %v3834, %v3835
      %v4116 = vrot.slane %v4115, 4
      %v4117 = vadd.f32 %v4115, %v4116
      %v4118 = vrot.slane %v4117, 2
      %v4119 = vadd.f32 %v4117, %v4118
      %v4120 = vrot.slane %v4119, 1
      %v4121 = vadd.f32 %v4119, %v4120
      %v4122 = vadd.f32 %v3836, %v3837
      %v4123 = vrot.slane %v4122, 4
      %v4124 = vadd.f32 %v4122, %v4123
      %v4125 = vrot.slane %v4124, 2
      %v4126 = vadd.f32 %v4124, %v4125
      %v4127 = vrot.slane %v4126, 1
      %v4128 = vadd.f32 %v4126, %v4127
      %v4129 = vadd.f32 %v3838, %v3839
      %v4130 = vrot.slane %v4129, 4
      %v4131 = vadd.f32 %v4129, %v4130
      %v4132 = vrot.slane %v4131, 2
      %v4133 = vadd.f32 %v4131, %v4132
      %v4134 = vrot.slane %v4133, 1
      %v4135 = vadd.f32 %v4133, %v4134
      %v4136 = vmax.f32 %v3883, 1.0
      %4138 = vset.pattern.permute.xlu0 0
      %4139 = vperm.xlu0 %4138, %v4136
      %v4140 = vpop.permute.xlu0 %4139
      %v4141 = vrot.slane %v4140, 1
      %v4142 = vrot.slane %v4140, 2
      %v4143 = vrot.slane %v4140, 3
      %v4144 = vrot.slane %v4140, 4
      %v4145 = vrot.slane %v4140, 5
      %v4146 = vrot.slane %v4140, 6
      %v4147 = vrot.slane %v4140, 7
      %v4156 = vrcp.pop %v4140
      %v4157 = vmul.f32 %v4086, %v4156
      %v4158 = vrcp.pop %v4141
      %v4159 = vmul.f32 %v4093, %v4158
      %v4160 = vrcp.pop %v4142
      %v4161 = vmul.f32 %v4100, %v4160
      %v4162 = vrcp.pop %v4143
      %v4163 = vmul.f32 %v4107, %v4162
      %v4164 = vrcp.pop %v4144
      %v4165 = vmul.f32 %v4114, %v4164
      %v4166 = vrcp.pop %v4145
      %v4167 = vmul.f32 %v4121, %v4166
      %v4168 = vrcp.pop %v4146
      %v4169 = vmul.f32 %v4128, %v4168
      %v4170 = vrcp.pop %v4147
      %v4171 = vmul.f32 %v4135, %v4170
      %v4172 = vadd.f32 %v2429, %v4157
      %v4173 = vadd.f32 %v2430, %v4159
      %v4174 = vadd.f32 %v2431, %v4161
      %v4175 = vadd.f32 %v2432, %v4163
      %v4176 = vadd.f32 %v2433, %v4165
      %v4177 = vadd.f32 %v2434, %v4167
      %v4178 = vadd.f32 %v2435, %v4169
      %v4179 = vadd.f32 %v2436, %v4171
      %v4180 = vld [vmem:[%s4 + $0x100] sm:$0xf]
      %v4181 = vld [vmem:[%s4 + $0x104] sm:$0xf]
      %v4182 = vld [vmem:[%s4 + $0x108] sm:$0xf]
      %v4183 = vld [vmem:[%s4 + $0x10c] sm:$0xf]
      %v4184 = vld [vmem:[%s4 + $0x110] sm:$0xf]
      %v4185 = vld [vmem:[%s4 + $0x114] sm:$0xf]
      %v4186 = vld [vmem:[%s4 + $0x118] sm:$0xf]
      %v4187 = vld [vmem:[%s4 + $0x11c] sm:$0xf]
      %v4188 = vld [vmem:[%s4 + $0x120] sm:$0xf]
      %v4189 = vld [vmem:[%s4 + $0x124] sm:$0xf]
      %v4190 = vld [vmem:[%s4 + $0x128] sm:$0xf]
      %v4191 = vld [vmem:[%s4 + $0x12c] sm:$0xf]
      %v4192 = vld [vmem:[%s4 + $0x130] sm:$0xf]
      %v4193 = vld [vmem:[%s4 + $0x134] sm:$0xf]
      %v4194 = vld [vmem:[%s4 + $0x138] sm:$0xf]
      %v4195 = vld [vmem:[%s4 + $0x13c] sm:$0xf]
      %v4196 = vld [vmem:[%s4 + $0x140] sm:$0xf]
      %v4197 = vld [vmem:[%s4 + $0x144] sm:$0xf]
      %v4198 = vld [vmem:[%s4 + $0x148] sm:$0xf]
      %v4199 = vld [vmem:[%s4 + $0x14c] sm:$0xf]
      %v4200 = vld [vmem:[%s4 + $0x150] sm:$0xf]
      %v4201 = vld [vmem:[%s4 + $0x154] sm:$0xf]
      %v4202 = vld [vmem:[%s4 + $0x158] sm:$0xf]
      %v4203 = vld [vmem:[%s4 + $0x15c] sm:$0xf]
      %v4204 = vld [vmem:[%s4 + $0x160] sm:$0xf]
      %v4205 = vld [vmem:[%s4 + $0x164] sm:$0xf]
      %v4206 = vld [vmem:[%s4 + $0x168] sm:$0xf]
      %v4207 = vld [vmem:[%s4 + $0x16c] sm:$0xf]
      %v4208 = vld [vmem:[%s4 + $0x170] sm:$0xf]
      %v4209 = vld [vmem:[%s4 + $0x174] sm:$0xf]
      %v4210 = vld [vmem:[%s4 + $0x178] sm:$0xf]
      %v4211 = vld [vmem:[%s4 + $0x17c] sm:$0xf]
      %v4212 = vld [vmem:[%s6 + $0x2] sm:$0x1]
      %v4213 = vpack.c.bf16 %v3825, %v3824
      %v4214 = vpack.c.bf16 %v3827, %v3826
      %v4215 = vpack.c.bf16 %v3829, %v3828
      %v4216 = vpack.c.bf16 %v3831, %v3830
      %v4217 = vpack.c.bf16 %v3833, %v3832
      %v4218 = vpack.c.bf16 %v3835, %v3834
      %v4219 = vpack.c.bf16 %v3837, %v3836
      %v4220 = vpack.c.bf16 %v3839, %v3838
      %4221 = vmatprep.subr.bf16.mxu0 0
      %4222 = vmatpush1.bf16.msra.mxu0 %v4220
      %4223 = vmatprep.subr.bf16.mxu0 0
      %4224 = vmatpush1.bf16.msra.mxu0 %v4219
      %4225 = vmatprep.subr.bf16.mxu0 0
      %4226 = vmatpush1.bf16.msra.mxu0 %v4218
      %4227 = vmatprep.subr.bf16.mxu0 0
      %4228 = vmatpush1.bf16.msra.mxu0 %v4217
      %4229 = vmatprep.subr.bf16.mxu0 0
      %4230 = vmatpush1.bf16.msra.mxu0 %v4216
      %4231 = vmatprep.subr.bf16.mxu0 0
      %4232 = vmatpush1.bf16.msra.mxu0 %v4215
      %4233 = vmatprep.subr.bf16.mxu0 0
      %4234 = vmatpush1.bf16.msra.mxu0 %v4214
      %4235 = vmatprep.subr.bf16.mxu0 0
      %4236 = vmatpush1.bf16.msra.mxu0 %v4213
      %4237 = vmatprep.subr.bf16.mxu0 0
      %4238 = vmatpush2.bf16.msra.mxu0 0
      %4239 = vmatprep.subr.bf16.mxu0 0
      %4240 = vmatpush2.bf16.msra.mxu0 0
      %4241 = vmatprep.subr.bf16.mxu0 0
      %4242 = vmatpush2.bf16.msra.mxu0 0
      %4243 = vmatprep.subr.bf16.mxu0 0
      %4244 = vmatpush2.bf16.msra.mxu0 0
      %4245 = vmatprep.subr.bf16.mxu0 0
      %4246 = vmatpush2.bf16.msra.mxu0 0
      %4247 = vmatprep.subr.bf16.mxu0 0
      %4248 = vmatpush2.bf16.msra.mxu0 0
      %4249 = vmatprep.subr.bf16.mxu0 0
      %4250 = vmatpush2.bf16.msra.mxu0 0
      %4251 = vmatprep.subr.bf16.mxu0 0
      %4252 = vmatpush2.bf16.msra.mxu0 0
      %4253 = vmatprep.mubr.bf16.mxu0 0
      %4254 = vmatmul.mubr.bf16.gmra.mxu0 %v472
      %v4255 = vpop.f32.mrf.mxu0
      %v4256 = vadd.f32 0.0, %v4255
      %v4257 = vpop.f32.mrf.mxu0
      %v4258 = vpop.f32.mrf.mxu0
      %v4259 = vadd.f32 0.0, %v4258
      %v4260 = vpop.f32.mrf.mxu0
      %4261 = vmatprep.mubr.bf16.mxu0 0
      %4262 = vmatmul.mubr.bf16.gmra.mxu0 %v473
      %v4263 = vpop.f32.mrf.mxu0
      %v4264 = vadd.f32 0.0, %v4263
      %v4265 = vpop.f32.mrf.mxu0
      %v4266 = vpop.f32.mrf.mxu0
      %v4267 = vadd.f32 0.0, %v4266
      %v4268 = vpop.f32.mrf.mxu0
      %4269 = vmatprep.mubr.bf16.mxu0 0
      %4270 = vmatmul.mubr.bf16.gmra.mxu0 %v474
      %v4271 = vpop.f32.mrf.mxu0
      %v4272 = vadd.f32 0.0, %v4271
      %v4273 = vpop.f32.mrf.mxu0
      %v4274 = vpop.f32.mrf.mxu0
      %v4275 = vadd.f32 0.0, %v4274
      %v4276 = vpop.f32.mrf.mxu0
      %4277 = vmatprep.mubr.bf16.mxu0 0
      %4278 = vmatmul.mubr.bf16.gmra.mxu0 %v475
      %v4279 = vpop.f32.mrf.mxu0
      %v4280 = vadd.f32 0.0, %v4279
      %v4281 = vpop.f32.mrf.mxu0
      %v4282 = vpop.f32.mrf.mxu0
      %v4283 = vadd.f32 0.0, %v4282
      %v4284 = vpop.f32.mrf.mxu0
      %4285 = vmatprep.mubr.bf16.mxu0 0
      %4286 = vmatmul.mubr.bf16.gmra.mxu0 %v476
      %v4287 = vpop.f32.mrf.mxu0
      %v4288 = vadd.f32 0.0, %v4287
      %v4289 = vpop.f32.mrf.mxu0
      %v4290 = vpop.f32.mrf.mxu0
      %v4291 = vadd.f32 0.0, %v4290
      %v4292 = vpop.f32.mrf.mxu0
      %4293 = vmatprep.mubr.bf16.mxu0 0
      %4294 = vmatmul.mubr.bf16.gmra.mxu0 %v477
      %v4295 = vpop.f32.mrf.mxu0
      %v4296 = vadd.f32 0.0, %v4295
      %v4297 = vpop.f32.mrf.mxu0
      %v4298 = vpop.f32.mrf.mxu0
      %v4299 = vadd.f32 0.0, %v4298
      %v4300 = vpop.f32.mrf.mxu0
      %4301 = vmatprep.mubr.bf16.mxu0 0
      %4302 = vmatmul.mubr.bf16.gmra.mxu0 %v478
      %v4303 = vpop.f32.mrf.mxu0
      %v4304 = vadd.f32 0.0, %v4303
      %v4305 = vpop.f32.mrf.mxu0
      %v4306 = vpop.f32.mrf.mxu0
      %v4307 = vadd.f32 0.0, %v4306
      %v4308 = vpop.f32.mrf.mxu0
      %4309 = vmatprep.mubr.bf16.mxu0 0
      %4310 = vmatmul.mubr.bf16.gmra.mxu0 %v479
      %v4311 = vpop.f32.mrf.mxu0
      %v4312 = vadd.f32 0.0, %v4311
      %v4313 = vpop.f32.mrf.mxu0
      %v4314 = vpop.f32.mrf.mxu0
      %v4315 = vadd.f32 0.0, %v4314
      %v4316 = vpop.f32.mrf.mxu0
      %4317 = vdwg.mxu0
      %v4318 = vpack.c.bf16 %v4259, %v4256
      %v4319 = vpack.c.bf16 %v4267, %v4264
      %v4320 = vpack.c.bf16 %v4275, %v4272
      %v4321 = vpack.c.bf16 %v4283, %v4280
      %v4322 = vpack.c.bf16 %v4291, %v4288
      %v4323 = vpack.c.bf16 %v4299, %v4296
      %v4324 = vpack.c.bf16 %v4307, %v4304
      %v4325 = vpack.c.bf16 %v4315, %v4312
      %v4342 = vunpack.c.l.b16 %v4196
      %v4343 = vunpack.c.l.b16 %v4197
      %v4344 = vunpack.c.l.b16 %v4198
      %v4345 = vunpack.c.l.b16 %v4199
      %v4346 = vunpack.c.l.b16 %v4200
      %v4347 = vunpack.c.l.b16 %v4201
      %v4348 = vunpack.c.l.b16 %v4202
      %v4349 = vunpack.c.l.b16 %v4203
      %v4350 = vunpack.c.l.b16 %v4204
      %v4351 = vunpack.c.l.b16 %v4205
      %v4352 = vunpack.c.l.b16 %v4206
      %v4353 = vunpack.c.l.b16 %v4207
      %v4354 = vunpack.c.l.b16 %v4208
      %v4355 = vunpack.c.l.b16 %v4209
      %v4356 = vunpack.c.l.b16 %v4210
      %v4357 = vunpack.c.l.b16 %v4211
      %v4358 = vpack.c.b16 %v4343, %v4342
      %v4359 = vpack.c.b16 %v4345, %v4344
      %v4360 = vpack.c.b16 %v4347, %v4346
      %v4361 = vpack.c.b16 %v4349, %v4348
      %v4362 = vpack.c.b16 %v4351, %v4350
      %v4363 = vpack.c.b16 %v4353, %v4352
      %v4364 = vpack.c.b16 %v4355, %v4354
      %v4365 = vpack.c.b16 %v4357, %v4356
      %4374 = vmatprep.subr.bf16.mxu0 0
      %4375 = vmatpush1.bf16.msra.mxu0 %v4365
      %4376 = vmatprep.subr.bf16.mxu0 0
      %4377 = vmatpush1.bf16.msra.mxu0 %v4364
      %4378 = vmatprep.subr.bf16.mxu0 0
      %4379 = vmatpush1.bf16.msra.mxu0 %v4363
      %4380 = vmatprep.subr.bf16.mxu0 0
      %4381 = vmatpush1.bf16.msra.mxu0 %v4362
      %4382 = vmatprep.subr.bf16.mxu0 0
      %4383 = vmatpush1.bf16.msra.mxu0 %v4361
      %4384 = vmatprep.subr.bf16.mxu0 0
      %4385 = vmatpush1.bf16.msra.mxu0 %v4360
      %4386 = vmatprep.subr.bf16.mxu0 0
      %4387 = vmatpush1.bf16.msra.mxu0 %v4359
      %4388 = vmatprep.subr.bf16.mxu0 0
      %4389 = vmatpush1.bf16.msra.mxu0 %v4358
      %4390 = vmatprep.subr.bf16.mxu0 0
      %4391 = vmatpush2.bf16.msra.mxu0 0
      %4392 = vmatprep.subr.bf16.mxu0 0
      %4393 = vmatpush2.bf16.msra.mxu0 0
      %4394 = vmatprep.subr.bf16.mxu0 0
      %4395 = vmatpush2.bf16.msra.mxu0 0
      %4396 = vmatprep.subr.bf16.mxu0 0
      %4397 = vmatpush2.bf16.msra.mxu0 0
      %4398 = vmatprep.subr.bf16.mxu0 0
      %4399 = vmatpush2.bf16.msra.mxu0 0
      %4400 = vmatprep.subr.bf16.mxu0 0
      %4401 = vmatpush2.bf16.msra.mxu0 0
      %4402 = vmatprep.subr.bf16.mxu0 0
      %4403 = vmatpush2.bf16.msra.mxu0 0
      %4404 = vmatprep.subr.bf16.mxu0 0
      %4405 = vmatpush2.bf16.msra.mxu0 0
      %4406 = vmatprep.mubr.bf16.mxu0 0
      %4407 = vmatmul.mubr.bf16.gmra.mxu0 %v4213
      %v4408 = vpop.f32.mrf.mxu0
      %v4409 = vadd.f32 0.0, %v4408
      %v4410 = vpop.f32.mrf.mxu0
      %v4411 = vpop.f32.mrf.mxu0
      %v4412 = vadd.f32 0.0, %v4411
      %v4413 = vpop.f32.mrf.mxu0
      %4414 = vmatprep.mubr.bf16.mxu0 0
      %4415 = vmatmul.mubr.bf16.gmra.mxu0 %v4214
      %v4416 = vpop.f32.mrf.mxu0
      %v4417 = vadd.f32 0.0, %v4416
      %v4418 = vpop.f32.mrf.mxu0
      %v4419 = vpop.f32.mrf.mxu0
      %v4420 = vadd.f32 0.0, %v4419
      %v4421 = vpop.f32.mrf.mxu0
      %4422 = vmatprep.mubr.bf16.mxu0 0
      %4423 = vmatmul.mubr.bf16.gmra.mxu0 %v4215
      %v4424 = vpop.f32.mrf.mxu0
      %v4425 = vadd.f32 0.0, %v4424
      %v4426 = vpop.f32.mrf.mxu0
      %v4427 = vpop.f32.mrf.mxu0
      %v4428 = vadd.f32 0.0, %v4427
      %v4429 = vpop.f32.mrf.mxu0
      %4430 = vmatprep.mubr.bf16.mxu0 0
      %4431 = vmatmul.mubr.bf16.gmra.mxu0 %v4216
      %v4432 = vpop.f32.mrf.mxu0
      %v4433 = vadd.f32 0.0, %v4432
      %v4434 = vpop.f32.mrf.mxu0
      %v4435 = vpop.f32.mrf.mxu0
      %v4436 = vadd.f32 0.0, %v4435
      %v4437 = vpop.f32.mrf.mxu0
      %4438 = vmatprep.mubr.bf16.mxu0 0
      %4439 = vmatmul.mubr.bf16.gmra.mxu0 %v4217
      %v4440 = vpop.f32.mrf.mxu0
      %v4441 = vadd.f32 0.0, %v4440
      %v4442 = vpop.f32.mrf.mxu0
      %v4443 = vpop.f32.mrf.mxu0
      %v4444 = vadd.f32 0.0, %v4443
      %v4445 = vpop.f32.mrf.mxu0
      %4446 = vmatprep.mubr.bf16.mxu0 0
      %4447 = vmatmul.mubr.bf16.gmra.mxu0 %v4218
      %v4448 = vpop.f32.mrf.mxu0
      %v4449 = vadd.f32 0.0, %v4448
      %v4450 = vpop.f32.mrf.mxu0
      %v4451 = vpop.f32.mrf.mxu0
      %v4452 = vadd.f32 0.0, %v4451
      %v4453 = vpop.f32.mrf.mxu0
      %4454 = vmatprep.mubr.bf16.mxu0 0
      %4455 = vmatmul.mubr.bf16.gmra.mxu0 %v4219
      %v4456 = vpop.f32.mrf.mxu0
      %v4457 = vadd.f32 0.0, %v4456
      %v4458 = vpop.f32.mrf.mxu0
      %v4459 = vpop.f32.mrf.mxu0
      %v4460 = vadd.f32 0.0, %v4459
      %v4461 = vpop.f32.mrf.mxu0
      %4462 = vmatprep.mubr.bf16.mxu0 0
      %4463 = vmatmul.mubr.bf16.gmra.mxu0 %v4220
      %v4464 = vpop.f32.mrf.mxu0
      %v4465 = vadd.f32 0.0, %v4464
      %v4466 = vpop.f32.mrf.mxu0
      %v4467 = vpop.f32.mrf.mxu0
      %v4468 = vadd.f32 0.0, %v4467
      %v4469 = vpop.f32.mrf.mxu0
      %4470 = vdwg.mxu0
      %v4487 = vunpack.c.l.b16 %v4180
      %v4488 = vunpack.c.l.b16 %v4181
      %v4489 = vunpack.c.l.b16 %v4182
      %v4490 = vunpack.c.l.b16 %v4183
      %v4491 = vunpack.c.l.b16 %v4184
      %v4492 = vunpack.c.l.b16 %v4185
      %v4493 = vunpack.c.l.b16 %v4186
      %v4494 = vunpack.c.l.b16 %v4187
      %v4495 = vunpack.c.l.b16 %v4188
      %v4496 = vunpack.c.l.b16 %v4189
      %v4497 = vunpack.c.l.b16 %v4190
      %v4498 = vunpack.c.l.b16 %v4191
      %v4499 = vunpack.c.l.b16 %v4192
      %v4500 = vunpack.c.l.b16 %v4193
      %v4501 = vunpack.c.l.b16 %v4194
      %v4502 = vunpack.c.l.b16 %v4195
      %v4503 = vpack.c.b16 %v4488, %v4487
      %v4504 = vpack.c.b16 %v4490, %v4489
      %v4505 = vpack.c.b16 %v4492, %v4491
      %v4506 = vpack.c.b16 %v4494, %v4493
      %v4507 = vpack.c.b16 %v4496, %v4495
      %v4508 = vpack.c.b16 %v4498, %v4497
      %v4509 = vpack.c.b16 %v4500, %v4499
      %v4510 = vpack.c.b16 %v4502, %v4501
      %4519 = vmatprep.subr.bf16.mxu0 0
      %4520 = vmatpush1.bf16.msra.mxu0 %v4510
      %4521 = vmatprep.subr.bf16.mxu0 0
      %4522 = vmatpush1.bf16.msra.mxu0 %v4509
      %4523 = vmatprep.subr.bf16.mxu0 0
      %4524 = vmatpush1.bf16.msra.mxu0 %v4508
      %4525 = vmatprep.subr.bf16.mxu0 0
      %4526 = vmatpush1.bf16.msra.mxu0 %v4507
      %4527 = vmatprep.subr.bf16.mxu0 0
      %4528 = vmatpush1.bf16.msra.mxu0 %v4506
      %4529 = vmatprep.subr.bf16.mxu0 0
      %4530 = vmatpush1.bf16.msra.mxu0 %v4505
      %4531 = vmatprep.subr.bf16.mxu0 0
      %4532 = vmatpush1.bf16.msra.mxu0 %v4504
      %4533 = vmatprep.subr.bf16.mxu0 0
      %4534 = vmatpush1.bf16.msra.mxu0 %v4503
      %4535 = vmatprep.subr.bf16.mxu0 0
      %4536 = vmatpush2.bf16.msra.mxu0 0
      %4537 = vmatprep.subr.bf16.mxu0 0
      %4538 = vmatpush2.bf16.msra.mxu0 0
      %4539 = vmatprep.subr.bf16.mxu0 0
      %4540 = vmatpush2.bf16.msra.mxu0 0
      %4541 = vmatprep.subr.bf16.mxu0 0
      %4542 = vmatpush2.bf16.msra.mxu0 0
      %4543 = vmatprep.subr.bf16.mxu0 0
      %4544 = vmatpush2.bf16.msra.mxu0 0
      %4545 = vmatprep.subr.bf16.mxu0 0
      %4546 = vmatpush2.bf16.msra.mxu0 0
      %4547 = vmatprep.subr.bf16.mxu0 0
      %4548 = vmatpush2.bf16.msra.mxu0 0
      %4549 = vmatprep.subr.bf16.mxu0 0
      %4550 = vmatpush2.bf16.msra.mxu0 0
      %4551 = vmatprep.mubr.bf16.mxu0 0
      %4552 = vmatmul.mubr.bf16.gmra.mxu0 %v4318
      %v4553 = vpop.f32.mrf.mxu0
      %v4554 = vadd.f32 %v4409, %v4553
      %v4555 = vpop.f32.mrf.mxu0
      %v4556 = vpop.f32.mrf.mxu0
      %v4557 = vadd.f32 %v4412, %v4556
      %v4558 = vpop.f32.mrf.mxu0
      %4559 = vmatprep.mubr.bf16.mxu0 0
      %4560 = vmatmul.mubr.bf16.gmra.mxu0 %v4319
      %v4561 = vpop.f32.mrf.mxu0
      %v4562 = vadd.f32 %v4417, %v4561
      %v4563 = vpop.f32.mrf.mxu0
      %v4564 = vpop.f32.mrf.mxu0
      %v4565 = vadd.f32 %v4420, %v4564
      %v4566 = vpop.f32.mrf.mxu0
      %4567 = vmatprep.mubr.bf16.mxu0 0
      %4568 = vmatmul.mubr.bf16.gmra.mxu0 %v4320
      %v4569 = vpop.f32.mrf.mxu0
      %v4570 = vadd.f32 %v4425, %v4569
      %v4571 = vpop.f32.mrf.mxu0
      %v4572 = vpop.f32.mrf.mxu0
      %v4573 = vadd.f32 %v4428, %v4572
      %v4574 = vpop.f32.mrf.mxu0
      %4575 = vmatprep.mubr.bf16.mxu0 0
      %4576 = vmatmul.mubr.bf16.gmra.mxu0 %v4321
      %v4577 = vpop.f32.mrf.mxu0
      %v4578 = vadd.f32 %v4433, %v4577
      %v4579 = vpop.f32.mrf.mxu0
      %v4580 = vpop.f32.mrf.mxu0
      %v4581 = vadd.f32 %v4436, %v4580
      %v4582 = vpop.f32.mrf.mxu0
      %4583 = vmatprep.mubr.bf16.mxu0 0
      %4584 = vmatmul.mubr.bf16.gmra.mxu0 %v4322
      %v4585 = vpop.f32.mrf.mxu0
      %v4586 = vadd.f32 %v4441, %v4585
      %v4587 = vpop.f32.mrf.mxu0
      %v4588 = vpop.f32.mrf.mxu0
      %v4589 = vadd.f32 %v4444, %v4588
      %v4590 = vpop.f32.mrf.mxu0
      %4591 = vmatprep.mubr.bf16.mxu0 0
      %4592 = vmatmul.mubr.bf16.gmra.mxu0 %v4323
      %v4593 = vpop.f32.mrf.mxu0
      %v4594 = vadd.f32 %v4449, %v4593
      %v4595 = vpop.f32.mrf.mxu0
      %v4596 = vpop.f32.mrf.mxu0
      %v4597 = vadd.f32 %v4452, %v4596
      %v4598 = vpop.f32.mrf.mxu0
      %4599 = vmatprep.mubr.bf16.mxu0 0
      %4600 = vmatmul.mubr.bf16.gmra.mxu0 %v4324
      %v4601 = vpop.f32.mrf.mxu0
      %v4602 = vadd.f32 %v4457, %v4601
      %v4603 = vpop.f32.mrf.mxu0
      %v4604 = vpop.f32.mrf.mxu0
      %v4605 = vadd.f32 %v4460, %v4604
      %v4606 = vpop.f32.mrf.mxu0
      %4607 = vmatprep.mubr.bf16.mxu0 0
      %4608 = vmatmul.mubr.bf16.gmra.mxu0 %v4325
      %v4609 = vpop.f32.mrf.mxu0
      %v4610 = vadd.f32 %v4465, %v4609
      %v4611 = vpop.f32.mrf.mxu0
      %v4612 = vpop.f32.mrf.mxu0
      %v4613 = vadd.f32 %v4468, %v4612
      %v4614 = vpop.f32.mrf.mxu0
      %4615 = vdwg.mxu0
      %v4616 = vlaneseq
      %v4617 = vshrl.u32 %v4616, 7
      %v4618 = vsub.s32 0, %v4617
      %v4619 = vrot.slane %v4212, %v4618
      %v4620 = vadd.f32 %v4554, %v4619
      %v4621 = vadd.f32 %v4557, %v4619
      %v4622 = vadd.f32 %v4562, %v4619
      %v4623 = vadd.f32 %v4565, %v4619
      %v4624 = vadd.f32 %v4570, %v4619
      %v4625 = vadd.f32 %v4573, %v4619
      %v4626 = vadd.f32 %v4578, %v4619
      %v4627 = vadd.f32 %v4581, %v4619
      %v4628 = vadd.f32 %v4586, %v4619
      %v4629 = vadd.f32 %v4589, %v4619
      %v4630 = vadd.f32 %v4594, %v4619
      %v4631 = vadd.f32 %v4597, %v4619
      %v4632 = vadd.f32 %v4602, %v4619
      %v4633 = vadd.f32 %v4605, %v4619
      %v4634 = vadd.f32 %v4610, %v4619
      %v4635 = vadd.f32 %v4613, %v4619
      %v4636 = vmax.f32 %v4620, 0.0
      %v4637 = vmax.f32 %v4621, 0.0
      %v4638 = vmax.f32 %v4622, 0.0
      %v4639 = vmax.f32 %v4623, 0.0
      %v4640 = vmax.f32 %v4624, 0.0
      %v4641 = vmax.f32 %v4625, 0.0
      %v4642 = vmax.f32 %v4626, 0.0
      %v4643 = vmax.f32 %v4627, 0.0
      %v4644 = vmax.f32 %v4628, 0.0
      %v4645 = vmax.f32 %v4629, 0.0
      %v4646 = vmax.f32 %v4630, 0.0
      %v4647 = vmax.f32 %v4631, 0.0
      %v4648 = vmax.f32 %v4632, 0.0
      %v4649 = vmax.f32 %v4633, 0.0
      %v4650 = vmax.f32 %v4634, 0.0
      %v4651 = vmax.f32 %v4635, 0.0
      %v4652 = vpack.c.bf16 %v4637, %v4636
      %v4653 = vpack.c.bf16 %v4639, %v4638
      %v4654 = vpack.c.bf16 %v4641, %v4640
      %v4655 = vpack.c.bf16 %v4643, %v4642
      %v4656 = vpack.c.bf16 %v4645, %v4644
      %v4657 = vpack.c.bf16 %v4647, %v4646
      %v4658 = vpack.c.bf16 %v4649, %v4648
      %v4659 = vpack.c.bf16 %v4651, %v4650
      %4660 = vrot.lane.b32.xlu0 %v959, 126
      %v4661 = vpop.permute.xlu0 %4660
      %4662 = vrot.lane.b32.xlu0 %v960, 126
      %v4663 = vpop.permute.xlu0 %4662
      %4664 = vrot.lane.b32.xlu0 %v961, 126
      %v4665 = vpop.permute.xlu0 %4664
      %4666 = vrot.lane.b32.xlu0 %v962, 126
      %v4667 = vpop.permute.xlu0 %4666
      %4668 = vrot.lane.b32.xlu0 %v963, 126
      %v4669 = vpop.permute.xlu0 %4668
      %4670 = vrot.lane.b32.xlu0 %v964, 126
      %v4671 = vpop.permute.xlu0 %4670
      %4672 = vrot.lane.b32.xlu0 %v965, 126
      %v4673 = vpop.permute.xlu0 %4672
      %4674 = vrot.lane.b32.xlu0 %v966, 126
      %v4675 = vpop.permute.xlu0 %4674
      %4684 = vmatprep.subr.bf16.mxu0 0
      %4685 = vmatpush1.bf16.msra.mxu0 %v4675
      %4686 = vmatprep.subr.bf16.mxu0 0
      %4687 = vmatpush1.bf16.msra.mxu0 %v4673
      %4688 = vmatprep.subr.bf16.mxu0 0
      %4689 = vmatpush1.bf16.msra.mxu0 %v4671
      %4690 = vmatprep.subr.bf16.mxu0 0
      %4691 = vmatpush1.bf16.msra.mxu0 %v4669
      %4692 = vmatprep.subr.bf16.mxu0 0
      %4693 = vmatpush1.bf16.msra.mxu0 %v4667
      %4694 = vmatprep.subr.bf16.mxu0 0
      %4695 = vmatpush1.bf16.msra.mxu0 %v4665
      %4696 = vmatprep.subr.bf16.mxu0 0
      %4697 = vmatpush1.bf16.msra.mxu0 %v4663
      %4698 = vmatprep.subr.bf16.mxu0 0
      %4699 = vmatpush1.bf16.msra.mxu0 %v4661
      %4700 = vmatprep.subr.bf16.mxu0 0
      %4701 = vmatpush2.bf16.msra.mxu0 0
      %4702 = vmatprep.subr.bf16.mxu0 0
      %4703 = vmatpush2.bf16.msra.mxu0 0
      %4704 = vmatprep.subr.bf16.mxu0 0
      %4705 = vmatpush2.bf16.msra.mxu0 0
      %4706 = vmatprep.subr.bf16.mxu0 0
      %4707 = vmatpush2.bf16.msra.mxu0 0
      %4708 = vmatprep.subr.bf16.mxu0 0
      %4709 = vmatpush2.bf16.msra.mxu0 0
      %4710 = vmatprep.subr.bf16.mxu0 0
      %4711 = vmatpush2.bf16.msra.mxu0 0
      %4712 = vmatprep.subr.bf16.mxu0 0
      %4713 = vmatpush2.bf16.msra.mxu0 0
      %4714 = vmatprep.subr.bf16.mxu0 0
      %4715 = vmatpush2.bf16.msra.mxu0 0
      %4716 = vmatprep.mubr.bf16.mxu0 0
      %4717 = vmatmul.mubr.bf16.gmra.mxu0 %v4652
      %v4718 = vpop.f32.mrf.mxu0
      %v4719 = vadd.f32 0.0, %v4718
      %v4720 = vpop.f32.mrf.mxu0
      %v4721 = vpop.f32.mrf.mxu0
      %v4722 = vadd.f32 0.0, %v4721
      %v4723 = vpop.f32.mrf.mxu0
      %4724 = vmatprep.mubr.bf16.mxu0 0
      %4725 = vmatmul.mubr.bf16.gmra.mxu0 %v4653
      %v4726 = vpop.f32.mrf.mxu0
      %v4727 = vadd.f32 0.0, %v4726
      %v4728 = vpop.f32.mrf.mxu0
      %v4729 = vpop.f32.mrf.mxu0
      %v4730 = vadd.f32 0.0, %v4729
      %v4731 = vpop.f32.mrf.mxu0
      %4732 = vmatprep.mubr.bf16.mxu0 0
      %4733 = vmatmul.mubr.bf16.gmra.mxu0 %v4654
      %v4734 = vpop.f32.mrf.mxu0
      %v4735 = vadd.f32 0.0, %v4734
      %v4736 = vpop.f32.mrf.mxu0
      %v4737 = vpop.f32.mrf.mxu0
      %v4738 = vadd.f32 0.0, %v4737
      %v4739 = vpop.f32.mrf.mxu0
      %4740 = vmatprep.mubr.bf16.mxu0 0
      %4741 = vmatmul.mubr.bf16.gmra.mxu0 %v4655
      %v4742 = vpop.f32.mrf.mxu0
      %v4743 = vadd.f32 0.0, %v4742
      %v4744 = vpop.f32.mrf.mxu0
      %v4745 = vpop.f32.mrf.mxu0
      %v4746 = vadd.f32 0.0, %v4745
      %v4747 = vpop.f32.mrf.mxu0
      %4748 = vmatprep.mubr.bf16.mxu0 0
      %4749 = vmatmul.mubr.bf16.gmra.mxu0 %v4656
      %v4750 = vpop.f32.mrf.mxu0
      %v4751 = vadd.f32 0.0, %v4750
      %v4752 = vpop.f32.mrf.mxu0
      %v4753 = vpop.f32.mrf.mxu0
      %v4754 = vadd.f32 0.0, %v4753
      %v4755 = vpop.f32.mrf.mxu0
      %4756 = vmatprep.mubr.bf16.mxu0 0
      %4757 = vmatmul.mubr.bf16.gmra.mxu0 %v4657
      %v4758 = vpop.f32.mrf.mxu0
      %v4759 = vadd.f32 0.0, %v4758
      %v4760 = vpop.f32.mrf.mxu0
      %v4761 = vpop.f32.mrf.mxu0
      %v4762 = vadd.f32 0.0, %v4761
      %v4763 = vpop.f32.mrf.mxu0
      %4764 = vmatprep.mubr.bf16.mxu0 0
      %4765 = vmatmul.mubr.bf16.gmra.mxu0 %v4658
      %v4766 = vpop.f32.mrf.mxu0
      %v4767 = vadd.f32 0.0, %v4766
      %v4768 = vpop.f32.mrf.mxu0
      %v4769 = vpop.f32.mrf.mxu0
      %v4770 = vadd.f32 0.0, %v4769
      %v4771 = vpop.f32.mrf.mxu0
      %4772 = vmatprep.mubr.bf16.mxu0 0
      %4773 = vmatmul.mubr.bf16.gmra.mxu0 %v4659
      %v4774 = vpop.f32.mrf.mxu0
      %v4775 = vadd.f32 0.0, %v4774
      %v4776 = vpop.f32.mrf.mxu0
      %v4777 = vpop.f32.mrf.mxu0
      %v4778 = vadd.f32 0.0, %v4777
      %v4779 = vpop.f32.mrf.mxu0
      %4780 = vdwg.mxu0
      %v4781 = vtanh.pop %v4719
      %v4782 = vtanh.pop %v4722
      %v4783 = vtanh.pop %v4727
      %v4784 = vtanh.pop %v4730
      %v4785 = vtanh.pop %v4735
      %v4786 = vtanh.pop %v4738
      %v4787 = vtanh.pop %v4743
      %v4788 = vtanh.pop %v4746
      %v4789 = vtanh.pop %v4751
      %v4790 = vtanh.pop %v4754
      %v4791 = vtanh.pop %v4759
      %v4792 = vtanh.pop %v4762
      %v4793 = vtanh.pop %v4767
      %v4794 = vtanh.pop %v4770
      %v4795 = vtanh.pop %v4775
      %v4796 = vtanh.pop %v4778
      %v4797 = vsel %vm3888, %v4781, -inf
      %v4798 = vsel %vm3889, %v4782, -inf
      %v4799 = vsel %vm3890, %v4783, -inf
      %v4800 = vsel %vm3891, %v4784, -inf
      %v4801 = vsel %vm3892, %v4785, -inf
      %v4802 = vsel %vm3893, %v4786, -inf
      %v4803 = vsel %vm3894, %v4787, -inf
      %v4804 = vsel %vm3895, %v4788, -inf
      %v4805 = vsel %vm3896, %v4789, -inf
      %v4806 = vsel %vm3897, %v4790, -inf
      %v4807 = vsel %vm3898, %v4791, -inf
      %v4808 = vsel %vm3899, %v4792, -inf
      %v4809 = vsel %vm3900, %v4793, -inf
      %v4810 = vsel %vm3901, %v4794, -inf
      %v4811 = vsel %vm3902, %v4795, -inf
      %v4812 = vsel %vm3903, %v4796, -inf
      %4814 = vset.pattern.permute.xlu0 0
      %4815 = vperm.xlu0 %4814, %v4797
      %v4816 = vpop.permute.xlu0 %4815
      %4819 = vset.pattern.permute.xlu0 0
      %4820 = vperm.xlu0 %4819, %v4798
      %v4821 = vpop.permute.xlu0 %4820
      %4824 = vset.pattern.permute.xlu0 0
      %4825 = vperm.xlu0 %4824, %v4799
      %v4826 = vpop.permute.xlu0 %4825
      %4829 = vset.pattern.permute.xlu0 0
      %4830 = vperm.xlu0 %4829, %v4800
      %v4831 = vpop.permute.xlu0 %4830
      %4834 = vset.pattern.permute.xlu0 0
      %4835 = vperm.xlu0 %4834, %v4801
      %v4836 = vpop.permute.xlu0 %4835
      %4839 = vset.pattern.permute.xlu0 0
      %4840 = vperm.xlu0 %4839, %v4802
      %v4841 = vpop.permute.xlu0 %4840
      %4844 = vset.pattern.permute.xlu0 0
      %4845 = vperm.xlu0 %4844, %v4803
      %v4846 = vpop.permute.xlu0 %4845
      %4849 = vset.pattern.permute.xlu0 0
      %4850 = vperm.xlu0 %4849, %v4804
      %v4851 = vpop.permute.xlu0 %4850
      %4854 = vset.pattern.permute.xlu0 0
      %4855 = vperm.xlu0 %4854, %v4805
      %v4856 = vpop.permute.xlu0 %4855
      %4859 = vset.pattern.permute.xlu0 0
      %4860 = vperm.xlu0 %4859, %v4806
      %v4861 = vpop.permute.xlu0 %4860
      %4864 = vset.pattern.permute.xlu0 0
      %4865 = vperm.xlu0 %4864, %v4807
      %v4866 = vpop.permute.xlu0 %4865
      %4869 = vset.pattern.permute.xlu0 0
      %4870 = vperm.xlu0 %4869, %v4808
      %v4871 = vpop.permute.xlu0 %4870
      %4874 = vset.pattern.permute.xlu0 0
      %4875 = vperm.xlu0 %4874, %v4809
      %v4876 = vpop.permute.xlu0 %4875
      %4879 = vset.pattern.permute.xlu0 0
      %4880 = vperm.xlu0 %4879, %v4810
      %v4881 = vpop.permute.xlu0 %4880
      %4884 = vset.pattern.permute.xlu0 0
      %4885 = vperm.xlu0 %4884, %v4811
      %v4886 = vpop.permute.xlu0 %4885
      %4889 = vset.pattern.permute.xlu0 0
      %4890 = vperm.xlu0 %4889, %v4812
      %v4891 = vpop.permute.xlu0 %4890
      %4893 = vxpose.xlu0.b32.start [1/16] %v4816, 128
      %4894 = vxpose.xlu0.b32.cont [2/16] %v4821, 128
      %4895 = vxpose.xlu0.b32.cont [3/16] %v4826, 128
      %4896 = vxpose.xlu0.b32.cont [4/16] %v4831, 128
      %4897 = vxpose.xlu0.b32.cont [5/16] %v4836, 128
      %4898 = vxpose.xlu0.b32.cont [6/16] %v4841, 128
      %4899 = vxpose.xlu0.b32.cont [7/16] %v4846, 128
      %4900 = vxpose.xlu0.b32.cont [8/16] %v4851, 128
      %4901 = vxpose.xlu0.b32.cont [9/16] %v4856, 128
      %4902 = vxpose.xlu0.b32.cont [10/16] %v4861, 128
      %4903 = vxpose.xlu0.b32.cont [11/16] %v4866, 128
      %4904 = vxpose.xlu0.b32.cont [12/16] %v4871, 128
      %4905 = vxpose.xlu0.b32.cont [13/16] %v4876, 128
      %4906 = vxpose.xlu0.b32.cont [14/16] %v4881, 128
      %4907 = vxpose.xlu0.b32.cont [15/16] %v4886, 128
      %4908 = vxpose.xlu0.b32.end [16/16] %v4891, 128
      %v4909 = vpop.trf.xlu0
      %v4910 = vpop.trf.xlu0
      %v4911 = vpop.trf.xlu0
      %v4912 = vpop.trf.xlu0
      %v4913 = vpop.trf.xlu0
      %v4914 = vpop.trf.xlu0
      %v4915 = vpop.trf.xlu0
      %v4916 = vpop.trf.xlu0
      %v4917 = vpop.trf.xlu0
      %v4918 = vpop.trf.xlu0
      %v4919 = vpop.trf.xlu0
      %v4920 = vpop.trf.xlu0
      %v4921 = vpop.trf.xlu0
      %v4922 = vpop.trf.xlu0
      %v4923 = vpop.trf.xlu0
      %v4924 = vpop.trf.xlu0
      %vm4925 = vmand %vm1319, %vm3968
      %vm4926 = vmand %vm1320, %vm3969
      %vm4927 = vmand %vm1321, %vm3970
      %vm4928 = vmand %vm1322, %vm3971
      %vm4929 = vmand %vm1323, %vm3972
      %vm4930 = vmand %vm1324, %vm3973
      %vm4931 = vmand %vm1325, %vm3974
      %vm4932 = vmand %vm1326, %vm3975
      %vm4933 = vmand %vm1327, %vm3976
      %vm4934 = vmand %vm1328, %vm3977
      %vm4935 = vmand %vm1329, %vm3978
      %vm4936 = vmand %vm1330, %vm3979
      %vm4937 = vmand %vm1331, %vm3980
      %vm4938 = vmand %vm1332, %vm3981
      %vm4939 = vmand %vm1333, %vm3982
      %vm4940 = vmand %vm1334, %vm3983
      %vm4941 = vcmp.gt.f32.partialorder %v4909, -2.0
      %vm4942 = vcmp.gt.f32.partialorder %v4910, -2.0
      %vm4943 = vcmp.gt.f32.partialorder %v4911, -2.0
      %vm4944 = vcmp.gt.f32.partialorder %v4912, -2.0
      %vm4945 = vcmp.gt.f32.partialorder %v4913, -2.0
      %vm4946 = vcmp.gt.f32.partialorder %v4914, -2.0
      %vm4947 = vcmp.gt.f32.partialorder %v4915, -2.0
      %vm4948 = vcmp.gt.f32.partialorder %v4916, -2.0
      %vm4949 = vcmp.gt.f32.partialorder %v4917, -2.0
      %vm4950 = vcmp.gt.f32.partialorder %v4918, -2.0
      %vm4951 = vcmp.gt.f32.partialorder %v4919, -2.0
      %vm4952 = vcmp.gt.f32.partialorder %v4920, -2.0
      %vm4953 = vcmp.gt.f32.partialorder %v4921, -2.0
      %vm4954 = vcmp.gt.f32.partialorder %v4922, -2.0
      %vm4955 = vcmp.gt.f32.partialorder %v4923, -2.0
      %vm4956 = vcmp.gt.f32.partialorder %v4924, -2.0
      %vm4957 = vmand %vm4925, %vm4941
      %vm4958 = vmand %vm4926, %vm4942
      %vm4959 = vmand %vm4927, %vm4943
      %vm4960 = vmand %vm4928, %vm4944
      %vm4961 = vmand %vm4929, %vm4945
      %vm4962 = vmand %vm4930, %vm4946
      %vm4963 = vmand %vm4931, %vm4947
      %vm4964 = vmand %vm4932, %vm4948
      %vm4965 = vmand %vm4933, %vm4949
      %vm4966 = vmand %vm4934, %vm4950
      %vm4967 = vmand %vm4935, %vm4951
      %vm4968 = vmand %vm4936, %vm4952
      %vm4969 = vmand %vm4937, %vm4953
      %vm4970 = vmand %vm4938, %vm4954
      %vm4971 = vmand %vm4939, %vm4955
      %vm4972 = vmand %vm4940, %vm4956
      %vm4973 = vcmp.gt.f32.partialorder %v4909, %v4816
      %vm4974 = vcmp.gt.f32.partialorder %v4910, %v4821
      %vm4975 = vcmp.gt.f32.partialorder %v4911, %v4826
      %vm4976 = vcmp.gt.f32.partialorder %v4912, %v4831
      %vm4977 = vcmp.gt.f32.partialorder %v4913, %v4836
      %vm4978 = vcmp.gt.f32.partialorder %v4914, %v4841
      %vm4979 = vcmp.gt.f32.partialorder %v4915, %v4846
      %vm4980 = vcmp.gt.f32.partialorder %v4916, %v4851
      %vm4981 = vcmp.gt.f32.partialorder %v4917, %v4856
      %vm4982 = vcmp.gt.f32.partialorder %v4918, %v4861
      %vm4983 = vcmp.gt.f32.partialorder %v4919, %v4866
      %vm4984 = vcmp.gt.f32.partialorder %v4920, %v4871
      %vm4985 = vcmp.gt.f32.partialorder %v4921, %v4876
      %vm4986 = vcmp.gt.f32.partialorder %v4922, %v4881
      %vm4987 = vcmp.gt.f32.partialorder %v4923, %v4886
      %vm4988 = vcmp.gt.f32.partialorder %v4924, %v4891
      %vm4989 = vcmp.eq.f32.partialorder %v4909, %v4816
      %vm4990 = vcmp.eq.f32.partialorder %v4910, %v4821
      %vm4991 = vcmp.eq.f32.partialorder %v4911, %v4826
      %vm4992 = vcmp.eq.f32.partialorder %v4912, %v4831
      %vm4993 = vcmp.eq.f32.partialorder %v4913, %v4836
      %vm4994 = vcmp.eq.f32.partialorder %v4914, %v4841
      %vm4995 = vcmp.eq.f32.partialorder %v4915, %v4846
      %vm4996 = vcmp.eq.f32.partialorder %v4916, %v4851
      %vm4997 = vcmp.eq.f32.partialorder %v4917, %v4856
      %vm4998 = vcmp.eq.f32.partialorder %v4918, %v4861
      %vm4999 = vcmp.eq.f32.partialorder %v4919, %v4866
      %vm5000 = vcmp.eq.f32.partialorder %v4920, %v4871
      %vm5001 = vcmp.eq.f32.partialorder %v4921, %v4876
      %vm5002 = vcmp.eq.f32.partialorder %v4922, %v4881
      %vm5003 = vcmp.eq.f32.partialorder %v4923, %v4886
      %vm5004 = vcmp.eq.f32.partialorder %v4924, %v4891
      %vm5005 = vmand %vm4989, %vm1495
      %vm5006 = vmand %vm4990, %vm1496
      %vm5007 = vmand %vm4991, %vm1497
      %vm5008 = vmand %vm4992, %vm1498
      %vm5009 = vmand %vm4993, %vm1499
      %vm5010 = vmand %vm4994, %vm1500
      %vm5011 = vmand %vm4995, %vm1501
      %vm5012 = vmand %vm4996, %vm1502
      %vm5013 = vmand %vm4997, %vm1503
      %vm5014 = vmand %vm4998, %vm1504
      %vm5015 = vmand %vm4999, %vm1505
      %vm5016 = vmand %vm5000, %vm1506
      %vm5017 = vmand %vm5001, %vm1507
      %vm5018 = vmand %vm5002, %vm1508
      %vm5019 = vmand %vm5003, %vm1509
      %vm5020 = vmand %vm5004, %vm1510
      %vm5021 = vmor %vm4973, %vm5005
      %vm5022 = vmor %vm4974, %vm5006
      %vm5023 = vmor %vm4975, %vm5007
      %vm5024 = vmor %vm4976, %vm5008
      %vm5025 = vmor %vm4977, %vm5009
      %vm5026 = vmor %vm4978, %vm5010
      %vm5027 = vmor %vm4979, %vm5011
      %vm5028 = vmor %vm4980, %vm5012
      %vm5029 = vmor %vm4981, %vm5013
      %vm5030 = vmor %vm4982, %vm5014
      %vm5031 = vmor %vm4983, %vm5015
      %vm5032 = vmor %vm4984, %vm5016
      %vm5033 = vmor %vm4985, %vm5017
      %vm5034 = vmor %vm4986, %vm5018
      %vm5035 = vmor %vm4987, %vm5019
      %vm5036 = vmor %vm4988, %vm5020
      %vm5037 = vmand %vm4957, %vm5021
      %vm5038 = vmand %vm4958, %vm5022
      %vm5039 = vmand %vm4959, %vm5023
      %vm5040 = vmand %vm4960, %vm5024
      %vm5041 = vmand %vm4961, %vm5025
      %vm5042 = vmand %vm4962, %vm5026
      %vm5043 = vmand %vm4963, %vm5027
      %vm5044 = vmand %vm4964, %vm5028
      %vm5045 = vmand %vm4965, %vm5029
      %vm5046 = vmand %vm4966, %vm5030
      %vm5047 = vmand %vm4967, %vm5031
      %vm5048 = vmand %vm4968, %vm5032
      %vm5049 = vmand %vm4969, %vm5033
      %vm5050 = vmand %vm4970, %vm5034
      %vm5051 = vmand %vm4971, %vm5035
      %vm5052 = vmand %vm4972, %vm5036
      %v5053 = vsel %vm5037, 1.0, 0.0
      %v5054 = vsel %vm5038, 1.0, 0.0
      %v5055 = vsel %vm5039, 1.0, 0.0
      %v5056 = vsel %vm5040, 1.0, 0.0
      %v5057 = vsel %vm5041, 1.0, 0.0
      %v5058 = vsel %vm5042, 1.0, 0.0
      %v5059 = vsel %vm5043, 1.0, 0.0
      %v5060 = vsel %vm5044, 1.0, 0.0
      %v5061 = vsel %vm5045, 1.0, 0.0
      %v5062 = vsel %vm5046, 1.0, 0.0
      %v5063 = vsel %vm5047, 1.0, 0.0
      %v5064 = vsel %vm5048, 1.0, 0.0
      %v5065 = vsel %vm5049, 1.0, 0.0
      %v5066 = vsel %vm5050, 1.0, 0.0
      %v5067 = vsel %vm5051, 1.0, 0.0
      %v5068 = vsel %vm5052, 1.0, 0.0
      %5069 = vmatprep.subr.mxu0 0.0
      %5070 = vmatpush1.msra.mxu0 1.0
      %5071 = vmatprep.subr.mxu0 0.0
      %5072 = vmatpush1.msra.mxu0 1.0
      %5073 = vmatprep.subr.mxu0 0.0
      %5074 = vmatpush1.msra.mxu0 1.0
      %5075 = vmatprep.subr.mxu0 0.0
      %5076 = vmatpush1.msra.mxu0 1.0
      %5077 = vmatprep.subr.mxu0 0.0
      %5078 = vmatpush1.msra.mxu0 1.0
      %5079 = vmatprep.subr.mxu0 0.0
      %5080 = vmatpush1.msra.mxu0 1.0
      %5081 = vmatprep.subr.mxu0 0.0
      %5082 = vmatpush1.msra.mxu0 1.0
      %5083 = vmatprep.subr.mxu0 0.0
      %5084 = vmatpush1.msra.mxu0 1.0
      %5085 = vmatprep.subr.mxu0 0.0
      %5086 = vmatpush1.msra.mxu0 1.0
      %5087 = vmatprep.subr.mxu0 0.0
      %5088 = vmatpush1.msra.mxu0 1.0
      %5089 = vmatprep.subr.mxu0 0.0
      %5090 = vmatpush1.msra.mxu0 1.0
      %5091 = vmatprep.subr.mxu0 0.0
      %5092 = vmatpush1.msra.mxu0 1.0
      %5093 = vmatprep.subr.mxu0 0.0
      %5094 = vmatpush1.msra.mxu0 1.0
      %5095 = vmatprep.subr.mxu0 0.0
      %5096 = vmatpush1.msra.mxu0 1.0
      %5097 = vmatprep.subr.mxu0 0.0
      %5098 = vmatpush1.msra.mxu0 1.0
      %5099 = vmatprep.subr.mxu0 0.0
      %5100 = vmatpush1.msra.mxu0 1.0
      %5101 = vmatprep.subr.mxu0 0.0
      %5102 = vmatpush2.msra.mxu0 0.0
      %5103 = vmatprep.subr.mxu0 0.0
      %5104 = vmatpush2.msra.mxu0 0.0
      %5105 = vmatprep.subr.mxu0 0.0
      %5106 = vmatpush2.msra.mxu0 0.0
      %5107 = vmatprep.subr.mxu0 0.0
      %5108 = vmatpush2.msra.mxu0 0.0
      %5109 = vmatprep.subr.mxu0 0.0
      %5110 = vmatpush2.msra.mxu0 0.0
      %5111 = vmatprep.subr.mxu0 0.0
      %5112 = vmatpush2.msra.mxu0 0.0
      %5113 = vmatprep.subr.mxu0 0.0
      %5114 = vmatpush2.msra.mxu0 0.0
      %5115 = vmatprep.subr.mxu0 0.0
      %5116 = vmatpush2.msra.mxu0 0.0
      %5117 = vmatprep.subr.mxu0 0.0
      %5118 = vmatpush2.msra.mxu0 0.0
      %5119 = vmatprep.subr.mxu0 0.0
      %5120 = vmatpush2.msra.mxu0 0.0
      %5121 = vmatprep.subr.mxu0 0.0
      %5122 = vmatpush2.msra.mxu0 0.0
      %5123 = vmatprep.subr.mxu0 0.0
      %5124 = vmatpush2.msra.mxu0 0.0
      %5125 = vmatprep.subr.mxu0 0.0
      %5126 = vmatpush2.msra.mxu0 0.0
      %5127 = vmatprep.subr.mxu0 0.0
      %5128 = vmatpush2.msra.mxu0 0.0
      %5129 = vmatprep.subr.mxu0 0.0
      %5130 = vmatpush2.msra.mxu0 0.0
      %5131 = vmatprep.subr.mxu0 0.0
      %5132 = vmatpush2.msra.mxu0 0.0
      %5133 = vmatprep.mubr.f32.mxu0 0.0
      %5134 = vmatmul.mubr.f32.gmra.mxu0 %v5053
      %v5135 = vpop.f32.mrf.mxu0
      %v5136 = vadd.f32 0.0, %v5135
      %v5137 = vpop.f32.mrf.mxu0
      %5138 = vmatprep.mubr.f32.mxu0 0.0
      %5139 = vmatmul.mubr.f32.gmra.mxu0 %v5054
      %v5140 = vpop.f32.mrf.mxu0
      %v5141 = vadd.f32 0.0, %v5140
      %v5142 = vpop.f32.mrf.mxu0
      %5143 = vmatprep.mubr.f32.mxu0 0.0
      %5144 = vmatmul.mubr.f32.gmra.mxu0 %v5055
      %v5145 = vpop.f32.mrf.mxu0
      %v5146 = vadd.f32 0.0, %v5145
      %v5147 = vpop.f32.mrf.mxu0
      %5148 = vmatprep.mubr.f32.mxu0 0.0
      %5149 = vmatmul.mubr.f32.gmra.mxu0 %v5056
      %v5150 = vpop.f32.mrf.mxu0
      %v5151 = vadd.f32 0.0, %v5150
      %v5152 = vpop.f32.mrf.mxu0
      %5153 = vmatprep.mubr.f32.mxu0 0.0
      %5154 = vmatmul.mubr.f32.gmra.mxu0 %v5057
      %v5155 = vpop.f32.mrf.mxu0
      %v5156 = vadd.f32 0.0, %v5155
      %v5157 = vpop.f32.mrf.mxu0
      %5158 = vmatprep.mubr.f32.mxu0 0.0
      %5159 = vmatmul.mubr.f32.gmra.mxu0 %v5058
      %v5160 = vpop.f32.mrf.mxu0
      %v5161 = vadd.f32 0.0, %v5160
      %v5162 = vpop.f32.mrf.mxu0
      %5163 = vmatprep.mubr.f32.mxu0 0.0
      %5164 = vmatmul.mubr.f32.gmra.mxu0 %v5059
      %v5165 = vpop.f32.mrf.mxu0
      %v5166 = vadd.f32 0.0, %v5165
      %v5167 = vpop.f32.mrf.mxu0
      %5168 = vmatprep.mubr.f32.mxu0 0.0
      %5169 = vmatmul.mubr.f32.gmra.mxu0 %v5060
      %v5170 = vpop.f32.mrf.mxu0
      %v5171 = vadd.f32 0.0, %v5170
      %v5172 = vpop.f32.mrf.mxu0
      %5173 = vmatprep.mubr.f32.mxu0 0.0
      %5174 = vmatmul.mubr.f32.gmra.mxu0 %v5061
      %v5175 = vpop.f32.mrf.mxu0
      %v5176 = vadd.f32 0.0, %v5175
      %v5177 = vpop.f32.mrf.mxu0
      %5178 = vmatprep.mubr.f32.mxu0 0.0
      %5179 = vmatmul.mubr.f32.gmra.mxu0 %v5062
      %v5180 = vpop.f32.mrf.mxu0
      %v5181 = vadd.f32 0.0, %v5180
      %v5182 = vpop.f32.mrf.mxu0
      %5183 = vmatprep.mubr.f32.mxu0 0.0
      %5184 = vmatmul.mubr.f32.gmra.mxu0 %v5063
      %v5185 = vpop.f32.mrf.mxu0
      %v5186 = vadd.f32 0.0, %v5185
      %v5187 = vpop.f32.mrf.mxu0
      %5188 = vmatprep.mubr.f32.mxu0 0.0
      %5189 = vmatmul.mubr.f32.gmra.mxu0 %v5064
      %v5190 = vpop.f32.mrf.mxu0
      %v5191 = vadd.f32 0.0, %v5190
      %v5192 = vpop.f32.mrf.mxu0
      %5193 = vmatprep.mubr.f32.mxu0 0.0
      %5194 = vmatmul.mubr.f32.gmra.mxu0 %v5065
      %v5195 = vpop.f32.mrf.mxu0
      %v5196 = vadd.f32 0.0, %v5195
      %v5197 = vpop.f32.mrf.mxu0
      %5198 = vmatprep.mubr.f32.mxu0 0.0
      %5199 = vmatmul.mubr.f32.gmra.mxu0 %v5066
      %v5200 = vpop.f32.mrf.mxu0
      %v5201 = vadd.f32 0.0, %v5200
      %v5202 = vpop.f32.mrf.mxu0
      %5203 = vmatprep.mubr.f32.mxu0 0.0
      %5204 = vmatmul.mubr.f32.gmra.mxu0 %v5067
      %v5205 = vpop.f32.mrf.mxu0
      %v5206 = vadd.f32 0.0, %v5205
      %v5207 = vpop.f32.mrf.mxu0
      %5208 = vmatprep.mubr.f32.mxu0 0.0
      %5209 = vmatmul.mubr.f32.gmra.mxu0 %v5068
      %v5210 = vpop.f32.mrf.mxu0
      %v5211 = vadd.f32 0.0, %v5210
      %v5212 = vpop.f32.mrf.mxu0
      %5213 = vdwg.mxu0
      %v5214 = vsel %vm4957, 1.0, 0.0
      %v5215 = vsel %vm4958, 1.0, 0.0
      %v5216 = vsel %vm4959, 1.0, 0.0
      %v5217 = vsel %vm4960, 1.0, 0.0
      %v5218 = vsel %vm4961, 1.0, 0.0
      %v5219 = vsel %vm4962, 1.0, 0.0
      %v5220 = vsel %vm4963, 1.0, 0.0
      %v5221 = vsel %vm4964, 1.0, 0.0
      %v5222 = vsel %vm4965, 1.0, 0.0
      %v5223 = vsel %vm4966, 1.0, 0.0
      %v5224 = vsel %vm4967, 1.0, 0.0
      %v5225 = vsel %vm4968, 1.0, 0.0
      %v5226 = vsel %vm4969, 1.0, 0.0
      %v5227 = vsel %vm4970, 1.0, 0.0
      %v5228 = vsel %vm4971, 1.0, 0.0
      %v5229 = vsel %vm4972, 1.0, 0.0
      %5230 = vmatprep.subr.mxu0 0.0
      %5231 = vmatpush1.msra.mxu0 1.0
      %5232 = vmatprep.subr.mxu0 0.0
      %5233 = vmatpush1.msra.mxu0 1.0
      %5234 = vmatprep.subr.mxu0 0.0
      %5235 = vmatpush1.msra.mxu0 1.0
      %5236 = vmatprep.subr.mxu0 0.0
      %5237 = vmatpush1.msra.mxu0 1.0
      %5238 = vmatprep.subr.mxu0 0.0
      %5239 = vmatpush1.msra.mxu0 1.0
      %5240 = vmatprep.subr.mxu0 0.0
      %5241 = vmatpush1.msra.mxu0 1.0
      %5242 = vmatprep.subr.mxu0 0.0
      %5243 = vmatpush1.msra.mxu0 1.0
      %5244 = vmatprep.subr.mxu0 0.0
      %5245 = vmatpush1.msra.mxu0 1.0
      %5246 = vmatprep.subr.mxu0 0.0
      %5247 = vmatpush1.msra.mxu0 1.0
      %5248 = vmatprep.subr.mxu0 0.0
      %5249 = vmatpush1.msra.mxu0 1.0
      %5250 = vmatprep.subr.mxu0 0.0
      %5251 = vmatpush1.msra.mxu0 1.0
      %5252 = vmatprep.subr.mxu0 0.0
      %5253 = vmatpush1.msra.mxu0 1.0
      %5254 = vmatprep.subr.mxu0 0.0
      %5255 = vmatpush1.msra.mxu0 1.0
      %5256 = vmatprep.subr.mxu0 0.0
      %5257 = vmatpush1.msra.mxu0 1.0
      %5258 = vmatprep.subr.mxu0 0.0
      %5259 = vmatpush1.msra.mxu0 1.0
      %5260 = vmatprep.subr.mxu0 0.0
      %5261 = vmatpush1.msra.mxu0 1.0
      %5262 = vmatprep.subr.mxu0 0.0
      %5263 = vmatpush2.msra.mxu0 0.0
      %5264 = vmatprep.subr.mxu0 0.0
      %5265 = vmatpush2.msra.mxu0 0.0
      %5266 = vmatprep.subr.mxu0 0.0
      %5267 = vmatpush2.msra.mxu0 0.0
      %5268 = vmatprep.subr.mxu0 0.0
      %5269 = vmatpush2.msra.mxu0 0.0
      %5270 = vmatprep.subr.mxu0 0.0
      %5271 = vmatpush2.msra.mxu0 0.0
      %5272 = vmatprep.subr.mxu0 0.0
      %5273 = vmatpush2.msra.mxu0 0.0
      %5274 = vmatprep.subr.mxu0 0.0
      %5275 = vmatpush2.msra.mxu0 0.0
      %5276 = vmatprep.subr.mxu0 0.0
      %5277 = vmatpush2.msra.mxu0 0.0
      %5278 = vmatprep.subr.mxu0 0.0
      %5279 = vmatpush2.msra.mxu0 0.0
      %5280 = vmatprep.subr.mxu0 0.0
      %5281 = vmatpush2.msra.mxu0 0.0
      %5282 = vmatprep.subr.mxu0 0.0
      %5283 = vmatpush2.msra.mxu0 0.0
      %5284 = vmatprep.subr.mxu0 0.0
      %5285 = vmatpush2.msra.mxu0 0.0
      %5286 = vmatprep.subr.mxu0 0.0
      %5287 = vmatpush2.msra.mxu0 0.0
      %5288 = vmatprep.subr.mxu0 0.0
      %5289 = vmatpush2.msra.mxu0 0.0
      %5290 = vmatprep.subr.mxu0 0.0
      %5291 = vmatpush2.msra.mxu0 0.0
      %5292 = vmatprep.subr.mxu0 0.0
      %5293 = vmatpush2.msra.mxu0 0.0
      %5294 = vmatprep.mubr.f32.mxu0 0.0
      %5295 = vmatmul.mubr.f32.gmra.mxu0 %v5214
      %v5296 = vpop.f32.mrf.mxu0
      %v5297 = vadd.f32 0.0, %v5296
      %v5298 = vpop.f32.mrf.mxu0
      %5299 = vmatprep.mubr.f32.mxu0 0.0
      %5300 = vmatmul.mubr.f32.gmra.mxu0 %v5215
      %v5301 = vpop.f32.mrf.mxu0
      %v5302 = vadd.f32 0.0, %v5301
      %v5303 = vpop.f32.mrf.mxu0
      %5304 = vmatprep.mubr.f32.mxu0 0.0
      %5305 = vmatmul.mubr.f32.gmra.mxu0 %v5216
      %v5306 = vpop.f32.mrf.mxu0
      %v5307 = vadd.f32 0.0, %v5306
      %v5308 = vpop.f32.mrf.mxu0
      %5309 = vmatprep.mubr.f32.mxu0 0.0
      %5310 = vmatmul.mubr.f32.gmra.mxu0 %v5217
      %v5311 = vpop.f32.mrf.mxu0
      %v5312 = vadd.f32 0.0, %v5311
      %v5313 = vpop.f32.mrf.mxu0
      %5314 = vmatprep.mubr.f32.mxu0 0.0
      %5315 = vmatmul.mubr.f32.gmra.mxu0 %v5218
      %v5316 = vpop.f32.mrf.mxu0
      %v5317 = vadd.f32 0.0, %v5316
      %v5318 = vpop.f32.mrf.mxu0
      %5319 = vmatprep.mubr.f32.mxu0 0.0
      %5320 = vmatmul.mubr.f32.gmra.mxu0 %v5219
      %v5321 = vpop.f32.mrf.mxu0
      %v5322 = vadd.f32 0.0, %v5321
      %v5323 = vpop.f32.mrf.mxu0
      %5324 = vmatprep.mubr.f32.mxu0 0.0
      %5325 = vmatmul.mubr.f32.gmra.mxu0 %v5220
      %v5326 = vpop.f32.mrf.mxu0
      %v5327 = vadd.f32 0.0, %v5326
      %v5328 = vpop.f32.mrf.mxu0
      %5329 = vmatprep.mubr.f32.mxu0 0.0
      %5330 = vmatmul.mubr.f32.gmra.mxu0 %v5221
      %v5331 = vpop.f32.mrf.mxu0
      %v5332 = vadd.f32 0.0, %v5331
      %v5333 = vpop.f32.mrf.mxu0
      %5334 = vmatprep.mubr.f32.mxu0 0.0
      %5335 = vmatmul.mubr.f32.gmra.mxu0 %v5222
      %v5336 = vpop.f32.mrf.mxu0
      %v5337 = vadd.f32 0.0, %v5336
      %v5338 = vpop.f32.mrf.mxu0
      %5339 = vmatprep.mubr.f32.mxu0 0.0
      %5340 = vmatmul.mubr.f32.gmra.mxu0 %v5223
      %v5341 = vpop.f32.mrf.mxu0
      %v5342 = vadd.f32 0.0, %v5341
      %v5343 = vpop.f32.mrf.mxu0
      %5344 = vmatprep.mubr.f32.mxu0 0.0
      %5345 = vmatmul.mubr.f32.gmra.mxu0 %v5224
      %v5346 = vpop.f32.mrf.mxu0
      %v5347 = vadd.f32 0.0, %v5346
      %v5348 = vpop.f32.mrf.mxu0
      %5349 = vmatprep.mubr.f32.mxu0 0.0
      %5350 = vmatmul.mubr.f32.gmra.mxu0 %v5225
      %v5351 = vpop.f32.mrf.mxu0
      %v5352 = vadd.f32 0.0, %v5351
      %v5353 = vpop.f32.mrf.mxu0
      %5354 = vmatprep.mubr.f32.mxu0 0.0
      %5355 = vmatmul.mubr.f32.gmra.mxu0 %v5226
      %v5356 = vpop.f32.mrf.mxu0
      %v5357 = vadd.f32 0.0, %v5356
      %v5358 = vpop.f32.mrf.mxu0
      %5359 = vmatprep.mubr.f32.mxu0 0.0
      %5360 = vmatmul.mubr.f32.gmra.mxu0 %v5227
      %v5361 = vpop.f32.mrf.mxu0
      %v5362 = vadd.f32 0.0, %v5361
      %v5363 = vpop.f32.mrf.mxu0
      %5364 = vmatprep.mubr.f32.mxu0 0.0
      %5365 = vmatmul.mubr.f32.gmra.mxu0 %v5228
      %v5366 = vpop.f32.mrf.mxu0
      %v5367 = vadd.f32 0.0, %v5366
      %v5368 = vpop.f32.mrf.mxu0
      %5369 = vmatprep.mubr.f32.mxu0 0.0
      %5370 = vmatmul.mubr.f32.gmra.mxu0 %v5229
      %v5371 = vpop.f32.mrf.mxu0
      %v5372 = vadd.f32 0.0, %v5371
      %v5373 = vpop.f32.mrf.mxu0
      %5374 = vdwg.mxu0
      %v5375 = vmul.f32 %v5297, 0.8
      %v5376 = vmul.f32 %v5302, 0.8
      %v5377 = vmul.f32 %v5307, 0.8
      %v5378 = vmul.f32 %v5312, 0.8
      %v5379 = vmul.f32 %v5317, 0.8
      %v5380 = vmul.f32 %v5322, 0.8
      %v5381 = vmul.f32 %v5327, 0.8
      %v5382 = vmul.f32 %v5332, 0.8
      %v5383 = vmul.f32 %v5337, 0.8
      %v5384 = vmul.f32 %v5342, 0.8
      %v5385 = vmul.f32 %v5347, 0.8
      %v5386 = vmul.f32 %v5352, 0.8
      %v5387 = vmul.f32 %v5357, 0.8
      %v5388 = vmul.f32 %v5362, 0.8
      %v5389 = vmul.f32 %v5367, 0.8
      %v5390 = vmul.f32 %v5372, 0.8
      %v5391 = vceil.f32 %v5375
      %v5392 = vceil.f32 %v5376
      %v5393 = vceil.f32 %v5377
      %v5394 = vceil.f32 %v5378
      %v5395 = vceil.f32 %v5379
      %v5396 = vceil.f32 %v5380
      %v5397 = vceil.f32 %v5381
      %v5398 = vceil.f32 %v5382
      %v5399 = vceil.f32 %v5383
      %v5400 = vceil.f32 %v5384
      %v5401 = vceil.f32 %v5385
      %v5402 = vceil.f32 %v5386
      %v5403 = vceil.f32 %v5387
      %v5404 = vceil.f32 %v5388
      %v5405 = vceil.f32 %v5389
      %v5406 = vceil.f32 %v5390
      %vm5407 = vcmp.lt.f32.partialorder %v5136, %v5391
      %vm5408 = vcmp.lt.f32.partialorder %v5141, %v5392
      %vm5409 = vcmp.lt.f32.partialorder %v5146, %v5393
      %vm5410 = vcmp.lt.f32.partialorder %v5151, %v5394
      %vm5411 = vcmp.lt.f32.partialorder %v5156, %v5395
      %vm5412 = vcmp.lt.f32.partialorder %v5161, %v5396
      %vm5413 = vcmp.lt.f32.partialorder %v5166, %v5397
      %vm5414 = vcmp.lt.f32.partialorder %v5171, %v5398
      %vm5415 = vcmp.lt.f32.partialorder %v5176, %v5399
      %vm5416 = vcmp.lt.f32.partialorder %v5181, %v5400
      %vm5417 = vcmp.lt.f32.partialorder %v5186, %v5401
      %vm5418 = vcmp.lt.f32.partialorder %v5191, %v5402
      %vm5419 = vcmp.lt.f32.partialorder %v5196, %v5403
      %vm5420 = vcmp.lt.f32.partialorder %v5201, %v5404
      %vm5421 = vcmp.lt.f32.partialorder %v5206, %v5405
      %vm5422 = vcmp.lt.f32.partialorder %v5211, %v5406
      %vm5423 = vmand %vm5407, %vm3888
      %vm5424 = vmand %vm5408, %vm3889
      %vm5425 = vmand %vm5409, %vm3890
      %vm5426 = vmand %vm5410, %vm3891
      %vm5427 = vmand %vm5411, %vm3892
      %vm5428 = vmand %vm5412, %vm3893
      %vm5429 = vmand %vm5413, %vm3894
      %vm5430 = vmand %vm5414, %vm3895
      %vm5431 = vmand %vm5415, %vm3896
      %vm5432 = vmand %vm5416, %vm3897
      %vm5433 = vmand %vm5417, %vm3898
      %vm5434 = vmand %vm5418, %vm3899
      %vm5435 = vmand %vm5419, %vm3900
      %vm5436 = vmand %vm5420, %vm3901
      %vm5437 = vmand %vm5421, %vm3902
      %vm5438 = vmand %vm5422, %vm3903
      %v5439 = vsel %vm5423, 1, 0
      %v5440 = vsel %vm5424, 1, 0
      %v5441 = vsel %vm5425, 1, 0
      %v5442 = vsel %vm5426, 1, 0
      %v5443 = vsel %vm5427, 1, 0
      %v5444 = vsel %vm5428, 1, 0
      %v5445 = vsel %vm5429, 1, 0
      %v5446 = vsel %vm5430, 1, 0
      %v5447 = vsel %vm5431, 1, 0
      %v5448 = vsel %vm5432, 1, 0
      %v5449 = vsel %vm5433, 1, 0
      %v5450 = vsel %vm5434, 1, 0
      %v5451 = vsel %vm5435, 1, 0
      %v5452 = vsel %vm5436, 1, 0
      %v5453 = vsel %vm5437, 1, 0
      %v5454 = vsel %vm5438, 1, 0
      %v5455 = vcvt.s32.f32 %v5439
      %v5456 = vcvt.s32.f32 %v5440
      %v5457 = vcvt.s32.f32 %v5441
      %v5458 = vcvt.s32.f32 %v5442
      %v5459 = vcvt.s32.f32 %v5443
      %v5460 = vcvt.s32.f32 %v5444
      %v5461 = vcvt.s32.f32 %v5445
      %v5462 = vcvt.s32.f32 %v5446
      %v5463 = vcvt.s32.f32 %v5447
      %v5464 = vcvt.s32.f32 %v5448
      %v5465 = vcvt.s32.f32 %v5449
      %v5466 = vcvt.s32.f32 %v5450
      %v5467 = vcvt.s32.f32 %v5451
      %v5468 = vcvt.s32.f32 %v5452
      %v5469 = vcvt.s32.f32 %v5453
      %v5470 = vcvt.s32.f32 %v5454
      %v5471 = vmul.f32 %v4781, %v5455
      %v5472 = vmul.f32 %v4782, %v5456
      %v5473 = vmul.f32 %v4783, %v5457
      %v5474 = vmul.f32 %v4784, %v5458
      %v5475 = vmul.f32 %v4785, %v5459
      %v5476 = vmul.f32 %v4786, %v5460
      %v5477 = vmul.f32 %v4787, %v5461
      %v5478 = vmul.f32 %v4788, %v5462
      %v5479 = vmul.f32 %v4789, %v5463
      %v5480 = vmul.f32 %v4790, %v5464
      %v5481 = vmul.f32 %v4791, %v5465
      %v5482 = vmul.f32 %v4792, %v5466
      %v5483 = vmul.f32 %v4793, %v5467
      %v5484 = vmul.f32 %v4794, %v5468
      %v5485 = vmul.f32 %v4795, %v5469
      %v5486 = vmul.f32 %v4796, %v5470
      %5488 = vset.pattern.permute.xlu0 0
      %5489 = vperm.xlu0 %5488, %v5471
      %v5490 = vpop.permute.xlu0 %5489
      %5493 = vset.pattern.permute.xlu0 0
      %5494 = vperm.xlu0 %5493, %v5472
      %v5495 = vpop.permute.xlu0 %5494
      %5498 = vset.pattern.permute.xlu0 0
      %5499 = vperm.xlu0 %5498, %v5473
      %v5500 = vpop.permute.xlu0 %5499
      %5503 = vset.pattern.permute.xlu0 0
      %5504 = vperm.xlu0 %5503, %v5474
      %v5505 = vpop.permute.xlu0 %5504
      %5508 = vset.pattern.permute.xlu0 0
      %5509 = vperm.xlu0 %5508, %v5475
      %v5510 = vpop.permute.xlu0 %5509
      %5513 = vset.pattern.permute.xlu0 0
      %5514 = vperm.xlu0 %5513, %v5476
      %v5515 = vpop.permute.xlu0 %5514
      %5518 = vset.pattern.permute.xlu0 0
      %5519 = vperm.xlu0 %5518, %v5477
      %v5520 = vpop.permute.xlu0 %5519
      %5523 = vset.pattern.permute.xlu0 0
      %5524 = vperm.xlu0 %5523, %v5478
      %v5525 = vpop.permute.xlu0 %5524
      %5528 = vset.pattern.permute.xlu0 0
      %5529 = vperm.xlu0 %5528, %v5479
      %v5530 = vpop.permute.xlu0 %5529
      %5533 = vset.pattern.permute.xlu0 0
      %5534 = vperm.xlu0 %5533, %v5480
      %v5535 = vpop.permute.xlu0 %5534
      %5538 = vset.pattern.permute.xlu0 0
      %5539 = vperm.xlu0 %5538, %v5481
      %v5540 = vpop.permute.xlu0 %5539
      %5543 = vset.pattern.permute.xlu0 0
      %5544 = vperm.xlu0 %5543, %v5482
      %v5545 = vpop.permute.xlu0 %5544
      %5548 = vset.pattern.permute.xlu0 0
      %5549 = vperm.xlu0 %5548, %v5483
      %v5550 = vpop.permute.xlu0 %5549
      %5553 = vset.pattern.permute.xlu0 0
      %5554 = vperm.xlu0 %5553, %v5484
      %v5555 = vpop.permute.xlu0 %5554
      %5558 = vset.pattern.permute.xlu0 0
      %5559 = vperm.xlu0 %5558, %v5485
      %v5560 = vpop.permute.xlu0 %5559
      %5563 = vset.pattern.permute.xlu0 0
      %5564 = vperm.xlu0 %5563, %v5486
      %v5565 = vpop.permute.xlu0 %5564
      %v5567 = vmul.f32 %v4636, %v5490
      %v5568 = vmul.f32 %v4637, %v5495
      %v5569 = vmul.f32 %v4638, %v5500
      %v5570 = vmul.f32 %v4639, %v5505
      %v5571 = vmul.f32 %v4640, %v5510
      %v5572 = vmul.f32 %v4641, %v5515
      %v5573 = vmul.f32 %v4642, %v5520
      %v5574 = vmul.f32 %v4643, %v5525
      %v5575 = vmul.f32 %v4644, %v5530
      %v5576 = vmul.f32 %v4645, %v5535
      %v5577 = vmul.f32 %v4646, %v5540
      %v5578 = vmul.f32 %v4647, %v5545
      %v5579 = vmul.f32 %v4648, %v5550
      %v5580 = vmul.f32 %v4649, %v5555
      %v5581 = vmul.f32 %v4650, %v5560
      %v5582 = vmul.f32 %v4651, %v5565
      %v5583 = vpack.c.bf16 %v5456, %v5455
      %v5584 = vpack.c.bf16 %v5458, %v5457
      %v5585 = vpack.c.bf16 %v5460, %v5459
      %v5586 = vpack.c.bf16 %v5462, %v5461
      %v5587 = vpack.c.bf16 %v5464, %v5463
      %v5588 = vpack.c.bf16 %v5466, %v5465
      %v5589 = vpack.c.bf16 %v5468, %v5467
      %v5590 = vpack.c.bf16 %v5470, %v5469
      %5591 = vmatprep.subr.bf16.mxu0 0
      %5592 = vmatpush1.bf16.msra.mxu0 %v5590
      %5593 = vmatprep.subr.bf16.mxu0 0
      %5594 = vmatpush1.bf16.msra.mxu0 %v5589
      %5595 = vmatprep.subr.bf16.mxu0 0
      %5596 = vmatpush1.bf16.msra.mxu0 %v5588
      %5597 = vmatprep.subr.bf16.mxu0 0
      %5598 = vmatpush1.bf16.msra.mxu0 %v5587
      %5599 = vmatprep.subr.bf16.mxu0 0
      %5600 = vmatpush1.bf16.msra.mxu0 %v5586
      %5601 = vmatprep.subr.bf16.mxu0 0
      %5602 = vmatpush1.bf16.msra.mxu0 %v5585
      %5603 = vmatprep.subr.bf16.mxu0 0
      %5604 = vmatpush1.bf16.msra.mxu0 %v5584
      %5605 = vmatprep.subr.bf16.mxu0 0
      %5606 = vmatpush1.bf16.msra.mxu0 %v5583
      %5607 = vmatprep.subr.bf16.mxu0 0
      %5608 = vmatpush2.bf16.msra.mxu0 0
      %5609 = vmatprep.subr.bf16.mxu0 0
      %5610 = vmatpush2.bf16.msra.mxu0 0
      %5611 = vmatprep.subr.bf16.mxu0 0
      %5612 = vmatpush2.bf16.msra.mxu0 0
      %5613 = vmatprep.subr.bf16.mxu0 0
      %5614 = vmatpush2.bf16.msra.mxu0 0
      %5615 = vmatprep.subr.bf16.mxu0 0
      %5616 = vmatpush2.bf16.msra.mxu0 0
      %5617 = vmatprep.subr.bf16.mxu0 0
      %5618 = vmatpush2.bf16.msra.mxu0 0
      %5619 = vmatprep.subr.bf16.mxu0 0
      %5620 = vmatpush2.bf16.msra.mxu0 0
      %5621 = vmatprep.subr.bf16.mxu0 0
      %5622 = vmatpush2.bf16.msra.mxu0 0
      %5623 = vmatprep.mubr.bf16.mxu0 0
      %5624 = vmatmul.mubr.bf16.gmra.mxu0 %v2089
      %v5625 = vpop.f32.mrf.mxu0
      %v5626 = vadd.f32 0.0, %v5625
      %v5627 = vpop.f32.mrf.mxu0
      %v5628 = vpop.f32.mrf.mxu0
      %v5629 = vpop.f32.mrf.mxu0
      %5630 = vdwg.mxu0
      %vm5631 = vcmp.gt.f32.partialorder %v5455, 0.0
      %vm5632 = vcmp.gt.f32.partialorder %v5456, 0.0
      %vm5633 = vcmp.gt.f32.partialorder %v5457, 0.0
      %vm5634 = vcmp.gt.f32.partialorder %v5458, 0.0
      %vm5635 = vcmp.gt.f32.partialorder %v5459, 0.0
      %vm5636 = vcmp.gt.f32.partialorder %v5460, 0.0
      %vm5637 = vcmp.gt.f32.partialorder %v5461, 0.0
      %vm5638 = vcmp.gt.f32.partialorder %v5462, 0.0
      %vm5639 = vcmp.gt.f32.partialorder %v5463, 0.0
      %vm5640 = vcmp.gt.f32.partialorder %v5464, 0.0
      %vm5641 = vcmp.gt.f32.partialorder %v5465, 0.0
      %vm5642 = vcmp.gt.f32.partialorder %v5466, 0.0
      %vm5643 = vcmp.gt.f32.partialorder %v5467, 0.0
      %vm5644 = vcmp.gt.f32.partialorder %v5468, 0.0
      %vm5645 = vcmp.gt.f32.partialorder %v5469, 0.0
      %vm5646 = vcmp.gt.f32.partialorder %v5470, 0.0
      %v5647 = vsel %vm5631, 1, 0
      %v5648 = vsel %vm5632, 1, 0
      %v5649 = vsel %vm5633, 1, 0
      %v5650 = vsel %vm5634, 1, 0
      %v5651 = vsel %vm5635, 1, 0
      %v5652 = vsel %vm5636, 1, 0
      %v5653 = vsel %vm5637, 1, 0
      %v5654 = vsel %vm5638, 1, 0
      %v5655 = vsel %vm5639, 1, 0
      %v5656 = vsel %vm5640, 1, 0
      %v5657 = vsel %vm5641, 1, 0
      %v5658 = vsel %vm5642, 1, 0
      %v5659 = vsel %vm5643, 1, 0
      %v5660 = vsel %vm5644, 1, 0
      %v5661 = vsel %vm5645, 1, 0
      %v5662 = vsel %vm5646, 1, 0
      %5663 = vset.pattern.permute.xlu0 0
      %5664 = vperm.xlu0 %5663, %v5647
      %v5665 = vpop.permute.xlu0 %5664
      %5666 = vset.pattern.permute.xlu0 0
      %5667 = vperm.xlu0 %5666, %v5648
      %v5668 = vpop.permute.xlu0 %5667
      %5669 = vset.pattern.permute.xlu0 0
      %5670 = vperm.xlu0 %5669, %v5649
      %v5671 = vpop.permute.xlu0 %5670
      %5672 = vset.pattern.permute.xlu0 0
      %5673 = vperm.xlu0 %5672, %v5650
      %v5674 = vpop.permute.xlu0 %5673
      %5675 = vset.pattern.permute.xlu0 0
      %5676 = vperm.xlu0 %5675, %v5651
      %v5677 = vpop.permute.xlu0 %5676
      %5678 = vset.pattern.permute.xlu0 0
      %5679 = vperm.xlu0 %5678, %v5652
      %v5680 = vpop.permute.xlu0 %5679
      %5681 = vset.pattern.permute.xlu0 0
      %5682 = vperm.xlu0 %5681, %v5653
      %v5683 = vpop.permute.xlu0 %5682
      %5684 = vset.pattern.permute.xlu0 0
      %5685 = vperm.xlu0 %5684, %v5654
      %v5686 = vpop.permute.xlu0 %5685
      %5687 = vset.pattern.permute.xlu0 0
      %5688 = vperm.xlu0 %5687, %v5655
      %v5689 = vpop.permute.xlu0 %5688
      %5690 = vset.pattern.permute.xlu0 0
      %5691 = vperm.xlu0 %5690, %v5656
      %v5692 = vpop.permute.xlu0 %5691
      %5693 = vset.pattern.permute.xlu0 0
      %5694 = vperm.xlu0 %5693, %v5657
      %v5695 = vpop.permute.xlu0 %5694
      %5696 = vset.pattern.permute.xlu0 0
      %5697 = vperm.xlu0 %5696, %v5658
      %v5698 = vpop.permute.xlu0 %5697
      %5699 = vset.pattern.permute.xlu0 0
      %5700 = vperm.xlu0 %5699, %v5659
      %v5701 = vpop.permute.xlu0 %5700
      %5702 = vset.pattern.permute.xlu0 0
      %5703 = vperm.xlu0 %5702, %v5660
      %v5704 = vpop.permute.xlu0 %5703
      %5705 = vset.pattern.permute.xlu0 0
      %5706 = vperm.xlu0 %5705, %v5661
      %v5707 = vpop.permute.xlu0 %5706
      %5708 = vset.pattern.permute.xlu0 0
      %5709 = vperm.xlu0 %5708, %v5662
      %v5710 = vpop.permute.xlu0 %5709
      %vm5711 = vcmp.eq.s32.totalorder %v5665, 1
      %vm5712 = vcmp.eq.s32.totalorder %v5668, 1
      %vm5713 = vcmp.eq.s32.totalorder %v5671, 1
      %vm5714 = vcmp.eq.s32.totalorder %v5674, 1
      %vm5715 = vcmp.eq.s32.totalorder %v5677, 1
      %vm5716 = vcmp.eq.s32.totalorder %v5680, 1
      %vm5717 = vcmp.eq.s32.totalorder %v5683, 1
      %vm5718 = vcmp.eq.s32.totalorder %v5686, 1
      %vm5719 = vcmp.eq.s32.totalorder %v5689, 1
      %vm5720 = vcmp.eq.s32.totalorder %v5692, 1
      %vm5721 = vcmp.eq.s32.totalorder %v5695, 1
      %vm5722 = vcmp.eq.s32.totalorder %v5698, 1
      %vm5723 = vcmp.eq.s32.totalorder %v5701, 1
      %vm5724 = vcmp.eq.s32.totalorder %v5704, 1
      %vm5725 = vcmp.eq.s32.totalorder %v5707, 1
      %vm5726 = vcmp.eq.s32.totalorder %v5710, 1
      %v5727 = vsel %vm5711, %v5567, -inf
      %v5728 = vsel %vm5712, %v5568, -inf
      %v5729 = vsel %vm5713, %v5569, -inf
      %v5730 = vsel %vm5714, %v5570, -inf
      %v5731 = vsel %vm5715, %v5571, -inf
      %v5732 = vsel %vm5716, %v5572, -inf
      %v5733 = vsel %vm5717, %v5573, -inf
      %v5734 = vsel %vm5718, %v5574, -inf
      %v5735 = vsel %vm5719, %v5575, -inf
      %v5736 = vsel %vm5720, %v5576, -inf
      %v5737 = vsel %vm5721, %v5577, -inf
      %v5738 = vsel %vm5722, %v5578, -inf
      %v5739 = vsel %vm5723, %v5579, -inf
      %v5740 = vsel %vm5724, %v5580, -inf
      %v5741 = vsel %vm5725, %v5581, -inf
      %v5742 = vsel %vm5726, %v5582, -inf
      %v5743 = vmax.f32 %v5727, %v5728
      %v5744 = vrot.slane %v5743, 4
      %v5745 = vmax.f32 %v5743, %v5744
      %v5746 = vrot.slane %v5745, 2
      %v5747 = vmax.f32 %v5745, %v5746
      %v5748 = vrot.slane %v5747, 1
      %v5749 = vmax.f32 %v5747, %v5748
      %v5750 = vmax.f32 %v5729, %v5730
      %v5751 = vrot.slane %v5750, 4
      %v5752 = vmax.f32 %v5750, %v5751
      %v5753 = vrot.slane %v5752, 2
      %v5754 = vmax.f32 %v5752, %v5753
      %v5755 = vrot.slane %v5754, 1
      %v5756 = vmax.f32 %v5754, %v5755
      %v5757 = vmax.f32 %v5731, %v5732
      %v5758 = vrot.slane %v5757, 4
      %v5759 = vmax.f32 %v5757, %v5758
      %v5760 = vrot.slane %v5759, 2
      %v5761 = vmax.f32 %v5759, %v5760
      %v5762 = vrot.slane %v5761, 1
      %v5763 = vmax.f32 %v5761, %v5762
      %v5764 = vmax.f32 %v5733, %v5734
      %v5765 = vrot.slane %v5764, 4
      %v5766 = vmax.f32 %v5764, %v5765
      %v5767 = vrot.slane %v5766, 2
      %v5768 = vmax.f32 %v5766, %v5767
      %v5769 = vrot.slane %v5768, 1
      %v5770 = vmax.f32 %v5768, %v5769
      %v5771 = vmax.f32 %v5735, %v5736
      %v5772 = vrot.slane %v5771, 4
      %v5773 = vmax.f32 %v5771, %v5772
      %v5774 = vrot.slane %v5773, 2
      %v5775 = vmax.f32 %v5773, %v5774
      %v5776 = vrot.slane %v5775, 1
      %v5777 = vmax.f32 %v5775, %v5776
      %v5778 = vmax.f32 %v5737, %v5738
      %v5779 = vrot.slane %v5778, 4
      %v5780 = vmax.f32 %v5778, %v5779
      %v5781 = vrot.slane %v5780, 2
      %v5782 = vmax.f32 %v5780, %v5781
      %v5783 = vrot.slane %v5782, 1
      %v5784 = vmax.f32 %v5782, %v5783
      %v5785 = vmax.f32 %v5739, %v5740
      %v5786 = vrot.slane %v5785, 4
      %v5787 = vmax.f32 %v5785, %v5786
      %v5788 = vrot.slane %v5787, 2
      %v5789 = vmax.f32 %v5787, %v5788
      %v5790 = vrot.slane %v5789, 1
      %v5791 = vmax.f32 %v5789, %v5790
      %v5792 = vmax.f32 %v5741, %v5742
      %v5793 = vrot.slane %v5792, 4
      %v5794 = vmax.f32 %v5792, %v5793
      %v5795 = vrot.slane %v5794, 2
      %v5796 = vmax.f32 %v5794, %v5795
      %v5797 = vrot.slane %v5796, 1
      %v5798 = vmax.f32 %v5796, %v5797
      %vm5799 = vcmp.gt.f32.partialorder %v5626, 0.0
      %v5800 = vsel %vm5799, 1, 0
      %5801 = vset.pattern.permute.xlu0 0
      %5802 = vperm.xlu0 %5801, %v5800
      %v5803 = vpop.permute.xlu0 %5802
      %vm5804 = vcmp.eq.s32.totalorder %v5803, 1
      %v5813 = vsel %vm2320, %v5756, %v5749
      %v5814 = vsel %vm2322, %v5763, %v5813
      %v5815 = vsel %vm2324, %v5770, %v5814
      %v5816 = vsel %vm2326, %v5777, %v5815
      %v5817 = vsel %vm2328, %v5784, %v5816
      %v5818 = vsel %vm2330, %v5791, %v5817
      %v5819 = vsel %vm2332, %v5798, %v5818
      %v5821 = vsel %vm5804, %v5819, 0.0
      %v5822 = vadd.f32 %v4079, %v5821
      %v5823 = vadd.f32 %v5567, %v5568
      %v5824 = vrot.slane %v5823, 4
      %v5825 = vadd.f32 %v5823, %v5824
      %v5826 = vrot.slane %v5825, 2
      %v5827 = vadd.f32 %v5825, %v5826
      %v5828 = vrot.slane %v5827, 1
      %v5829 = vadd.f32 %v5827, %v5828
      %v5830 = vadd.f32 %v5569, %v5570
      %v5831 = vrot.slane %v5830, 4
      %v5832 = vadd.f32 %v5830, %v5831
      %v5833 = vrot.slane %v5832, 2
      %v5834 = vadd.f32 %v5832, %v5833
      %v5835 = vrot.slane %v5834, 1
      %v5836 = vadd.f32 %v5834, %v5835
      %v5837 = vadd.f32 %v5571, %v5572
      %v5838 = vrot.slane %v5837, 4
      %v5839 = vadd.f32 %v5837, %v5838
      %v5840 = vrot.slane %v5839, 2
      %v5841 = vadd.f32 %v5839, %v5840
      %v5842 = vrot.slane %v5841, 1
      %v5843 = vadd.f32 %v5841, %v5842
      %v5844 = vadd.f32 %v5573, %v5574
      %v5845 = vrot.slane %v5844, 4
      %v5846 = vadd.f32 %v5844, %v5845
      %v5847 = vrot.slane %v5846, 2
      %v5848 = vadd.f32 %v5846, %v5847
      %v5849 = vrot.slane %v5848, 1
      %v5850 = vadd.f32 %v5848, %v5849
      %v5851 = vadd.f32 %v5575, %v5576
      %v5852 = vrot.slane %v5851, 4
      %v5853 = vadd.f32 %v5851, %v5852
      %v5854 = vrot.slane %v5853, 2
      %v5855 = vadd.f32 %v5853, %v5854
      %v5856 = vrot.slane %v5855, 1
      %v5857 = vadd.f32 %v5855, %v5856
      %v5858 = vadd.f32 %v5577, %v5578
      %v5859 = vrot.slane %v5858, 4
      %v5860 = vadd.f32 %v5858, %v5859
      %v5861 = vrot.slane %v5860, 2
      %v5862 = vadd.f32 %v5860, %v5861
      %v5863 = vrot.slane %v5862, 1
      %v5864 = vadd.f32 %v5862, %v5863
      %v5865 = vadd.f32 %v5579, %v5580
      %v5866 = vrot.slane %v5865, 4
      %v5867 = vadd.f32 %v5865, %v5866
      %v5868 = vrot.slane %v5867, 2
      %v5869 = vadd.f32 %v5867, %v5868
      %v5870 = vrot.slane %v5869, 1
      %v5871 = vadd.f32 %v5869, %v5870
      %v5872 = vadd.f32 %v5581, %v5582
      %v5873 = vrot.slane %v5872, 4
      %v5874 = vadd.f32 %v5872, %v5873
      %v5875 = vrot.slane %v5874, 2
      %v5876 = vadd.f32 %v5874, %v5875
      %v5877 = vrot.slane %v5876, 1
      %v5878 = vadd.f32 %v5876, %v5877
      %v5879 = vmax.f32 %v5626, 1.0
      %5881 = vset.pattern.permute.xlu0 0
      %5882 = vperm.xlu0 %5881, %v5879
      %v5883 = vpop.permute.xlu0 %5882
      %v5884 = vrot.slane %v5883, 1
      %v5885 = vrot.slane %v5883, 2
      %v5886 = vrot.slane %v5883, 3
      %v5887 = vrot.slane %v5883, 4
      %v5888 = vrot.slane %v5883, 5
      %v5889 = vrot.slane %v5883, 6
      %v5890 = vrot.slane %v5883, 7
      %v5899 = vrcp.pop %v5883
      %v5900 = vmul.f32 %v5829, %v5899
      %v5901 = vrcp.pop %v5884
      %v5902 = vmul.f32 %v5836, %v5901
      %v5903 = vrcp.pop %v5885
      %v5904 = vmul.f32 %v5843, %v5903
      %v5905 = vrcp.pop %v5886
      %v5906 = vmul.f32 %v5850, %v5905
      %v5907 = vrcp.pop %v5887
      %v5908 = vmul.f32 %v5857, %v5907
      %v5909 = vrcp.pop %v5888
      %v5910 = vmul.f32 %v5864, %v5909
      %v5911 = vrcp.pop %v5889
      %v5912 = vmul.f32 %v5871, %v5911
      %v5913 = vrcp.pop %v5890
      %v5914 = vmul.f32 %v5878, %v5913
      %v5915 = vadd.f32 %v4172, %v5900
      %v5916 = vadd.f32 %v4173, %v5902
      %v5917 = vadd.f32 %v4174, %v5904
      %v5918 = vadd.f32 %v4175, %v5906
      %v5919 = vadd.f32 %v4176, %v5908
      %v5920 = vadd.f32 %v4177, %v5910
      %v5921 = vadd.f32 %v4178, %v5912
      %v5922 = vadd.f32 %v4179, %v5914
      %v5923 = vld [vmem:[%s5] sm:$0xf]
      %v5924 = vld [vmem:[%s5 + $0x4] sm:$0xf]
      %v5925 = vld [vmem:[%s5 + $0x8] sm:$0xf]
      %v5926 = vld [vmem:[%s5 + $0xc] sm:$0xf]
      %v5927 = vld [vmem:[%s5 + $0x10] sm:$0xf]
      %v5928 = vld [vmem:[%s5 + $0x14] sm:$0xf]
      %v5929 = vld [vmem:[%s5 + $0x18] sm:$0xf]
      %v5930 = vld [vmem:[%s5 + $0x1c] sm:$0xf]
      %v5931 = vld [vmem:[%s5 + $0x20] sm:$0xf]
      %v5932 = vld [vmem:[%s5 + $0x24] sm:$0xf]
      %v5933 = vld [vmem:[%s5 + $0x28] sm:$0xf]
      %v5934 = vld [vmem:[%s5 + $0x2c] sm:$0xf]
      %v5935 = vld [vmem:[%s5 + $0x30] sm:$0xf]
      %v5936 = vld [vmem:[%s5 + $0x34] sm:$0xf]
      %v5937 = vld [vmem:[%s5 + $0x38] sm:$0xf]
      %v5938 = vld [vmem:[%s5 + $0x3c] sm:$0xf]
      %v5939 = vld [vmem:[%s5 + $0x40] sm:$0xf]
      %v5940 = vld [vmem:[%s5 + $0x44] sm:$0xf]
      %v5941 = vld [vmem:[%s5 + $0x48] sm:$0xf]
      %v5942 = vld [vmem:[%s5 + $0x4c] sm:$0xf]
      %v5943 = vld [vmem:[%s5 + $0x50] sm:$0xf]
      %v5944 = vld [vmem:[%s5 + $0x54] sm:$0xf]
      %v5945 = vld [vmem:[%s5 + $0x58] sm:$0xf]
      %v5946 = vld [vmem:[%s5 + $0x5c] sm:$0xf]
      %v5947 = vld [vmem:[%s5 + $0x60] sm:$0xf]
      %v5948 = vld [vmem:[%s5 + $0x64] sm:$0xf]
      %v5949 = vld [vmem:[%s5 + $0x68] sm:$0xf]
      %v5950 = vld [vmem:[%s5 + $0x6c] sm:$0xf]
      %v5951 = vld [vmem:[%s5 + $0x70] sm:$0xf]
      %v5952 = vld [vmem:[%s5 + $0x74] sm:$0xf]
      %v5953 = vld [vmem:[%s5 + $0x78] sm:$0xf]
      %v5954 = vld [vmem:[%s5 + $0x7c] sm:$0xf]
      %v5955 = vld [vmem:[%s5 + $0x80] sm:$0xf]
      %v5956 = vld [vmem:[%s5 + $0x84] sm:$0xf]
      %v5957 = vld [vmem:[%s5 + $0x88] sm:$0xf]
      %v5958 = vld [vmem:[%s5 + $0x8c] sm:$0xf]
      %v5959 = vld [vmem:[%s5 + $0x90] sm:$0xf]
      %v5960 = vld [vmem:[%s5 + $0x94] sm:$0xf]
      %v5961 = vld [vmem:[%s5 + $0x98] sm:$0xf]
      %v5962 = vld [vmem:[%s5 + $0x9c] sm:$0xf]
      %v5963 = vld [vmem:[%s5 + $0xa0] sm:$0xf]
      %v5964 = vld [vmem:[%s5 + $0xa4] sm:$0xf]
      %v5965 = vld [vmem:[%s5 + $0xa8] sm:$0xf]
      %v5966 = vld [vmem:[%s5 + $0xac] sm:$0xf]
      %v5967 = vld [vmem:[%s5 + $0xb0] sm:$0xf]
      %v5968 = vld [vmem:[%s5 + $0xb4] sm:$0xf]
      %v5969 = vld [vmem:[%s5 + $0xb8] sm:$0xf]
      %v5970 = vld [vmem:[%s5 + $0xbc] sm:$0xf]
      %v5971 = vld [vmem:[%s6 + $0x3] sm:$0x1]
      %v5972 = vld [vmem:[%s6 + $0x4] sm:$0x1]
      %v5973 = vld [vmem:[%s6 + $0x5] sm:$0x1]
      %v5974 = vld [vmem:[%s6 + $0x6] sm:$0x1]
      %v5975 = vpack.c.bf16 %v5822, %v5822
      %v5976 = vpack.c.bf16 %v5915, %v5915
      %v5977 = vpack.c.bf16 %v5916, %v5916
      %v5978 = vpack.c.bf16 %v5917, %v5917
      %v5979 = vpack.c.bf16 %v5918, %v5918
      %v5980 = vpack.c.bf16 %v5919, %v5919
      %v5981 = vpack.c.bf16 %v5920, %v5920
      %v5982 = vpack.c.bf16 %v5921, %v5921
      %v5983 = vpack.c.bf16 %v5922, %v5922
      %v5992 = vunpack.c.l.b16 %v5976
      %v5993 = vunpack.c.l.b16 %v5977
      %v5994 = vunpack.c.l.b16 %v5978
      %v5995 = vunpack.c.l.b16 %v5979
      %v5996 = vunpack.c.l.b16 %v5980
      %v5997 = vunpack.c.l.b16 %v5981
      %v5998 = vunpack.c.l.b16 %v5982
      %v5999 = vunpack.c.l.b16 %v5983
      %v6000 = vrot.slane %v5993, 7
      %v6001 = vsel %vm2320, %v6000, %v5992
      %v6002 = vrot.slane %v5994, 6
      %v6003 = vsel %vm2322, %v6002, %v6001
      %v6004 = vrot.slane %v5995, 5
      %v6005 = vsel %vm2324, %v6004, %v6003
      %v6006 = vrot.slane %v5996, 4
      %v6007 = vsel %vm2326, %v6006, %v6005
      %v6008 = vrot.slane %v5997, 3
      %v6009 = vsel %vm2328, %v6008, %v6007
      %v6010 = vrot.slane %v5998, 2
      %v6011 = vsel %vm2330, %v6010, %v6009
      %v6012 = vrot.slane %v5999, 1
      %v6013 = vsel %vm2332, %v6012, %v6011
      %v6014 = vpack.c.b16 %v6013, %v6013
      %v6032 = vunpack.c.l.b16 %v5939
      %v6033 = vunpack.c.l.b16 %v5940
      %v6034 = vunpack.c.l.b16 %v5941
      %v6035 = vunpack.c.l.b16 %v5942
      %v6036 = vunpack.c.l.b16 %v5943
      %v6037 = vunpack.c.l.b16 %v5944
      %v6038 = vunpack.c.l.b16 %v5945
      %v6039 = vunpack.c.l.b16 %v5946
      %v6040 = vunpack.c.l.b16 %v5947
      %v6041 = vunpack.c.l.b16 %v5948
      %v6042 = vunpack.c.l.b16 %v5949
      %v6043 = vunpack.c.l.b16 %v5950
      %v6044 = vunpack.c.l.b16 %v5951
      %v6045 = vunpack.c.l.b16 %v5952
      %v6046 = vunpack.c.l.b16 %v5953
      %v6047 = vunpack.c.l.b16 %v5954
      %v6048 = vpack.c.b16 %v6033, %v6032
      %v6049 = vpack.c.b16 %v6035, %v6034
      %v6050 = vpack.c.b16 %v6037, %v6036
      %v6051 = vpack.c.b16 %v6039, %v6038
      %v6052 = vpack.c.b16 %v6041, %v6040
      %v6053 = vpack.c.b16 %v6043, %v6042
      %v6054 = vpack.c.b16 %v6045, %v6044
      %v6055 = vpack.c.b16 %v6047, %v6046
      %6064 = vmatprep.subr.bf16.mxu0 0
      %6065 = vmatpush1.bf16.msra.mxu0 %v6055
      %6066 = vmatprep.subr.bf16.mxu0 0
      %6067 = vmatpush1.bf16.msra.mxu0 %v6054
      %6068 = vmatprep.subr.bf16.mxu0 0
      %6069 = vmatpush1.bf16.msra.mxu0 %v6053
      %6070 = vmatprep.subr.bf16.mxu0 0
      %6071 = vmatpush1.bf16.msra.mxu0 %v6052
      %6072 = vmatprep.subr.bf16.mxu0 0
      %6073 = vmatpush1.bf16.msra.mxu0 %v6051
      %6074 = vmatprep.subr.bf16.mxu0 0
      %6075 = vmatpush1.bf16.msra.mxu0 %v6050
      %6076 = vmatprep.subr.bf16.mxu0 0
      %6077 = vmatpush1.bf16.msra.mxu0 %v6049
      %6078 = vmatprep.subr.bf16.mxu0 0
      %6079 = vmatpush1.bf16.msra.mxu0 %v6048
      %6080 = vmatprep.subr.bf16.mxu0 0
      %6081 = vmatpush2.bf16.msra.mxu0 0
      %6082 = vmatprep.subr.bf16.mxu0 0
      %6083 = vmatpush2.bf16.msra.mxu0 0
      %6084 = vmatprep.subr.bf16.mxu0 0
      %6085 = vmatpush2.bf16.msra.mxu0 0
      %6086 = vmatprep.subr.bf16.mxu0 0
      %6087 = vmatpush2.bf16.msra.mxu0 0
      %6088 = vmatprep.subr.bf16.mxu0 0
      %6089 = vmatpush2.bf16.msra.mxu0 0
      %6090 = vmatprep.subr.bf16.mxu0 0
      %6091 = vmatpush2.bf16.msra.mxu0 0
      %6092 = vmatprep.subr.bf16.mxu0 0
      %6093 = vmatpush2.bf16.msra.mxu0 0
      %6094 = vmatprep.subr.bf16.mxu0 0
      %6095 = vmatpush2.bf16.msra.mxu0 0
      %6096 = vmatprep.mubr.bf16.mxu0 0
      %6097 = vmatmul.mubr.bf16.gmra.mxu0 %v6014
      %v6098 = vpop.f32.mrf.mxu0
      %v6099 = vadd.f32 0.0, %v6098
      %v6100 = vpop.f32.mrf.mxu0
      %v6101 = vpop.f32.mrf.mxu0
      %v6102 = vpop.f32.mrf.mxu0
      %6103 = vdwg.mxu0
      %v6120 = vunpack.c.l.b16 %v5923
      %v6121 = vunpack.c.l.b16 %v5924
      %v6122 = vunpack.c.l.b16 %v5925
      %v6123 = vunpack.c.l.b16 %v5926
      %v6124 = vunpack.c.l.b16 %v5927
      %v6125 = vunpack.c.l.b16 %v5928
      %v6126 = vunpack.c.l.b16 %v5929
      %v6127 = vunpack.c.l.b16 %v5930
      %v6128 = vunpack.c.l.b16 %v5931
      %v6129 = vunpack.c.l.b16 %v5932
      %v6130 = vunpack.c.l.b16 %v5933
      %v6131 = vunpack.c.l.b16 %v5934
      %v6132 = vunpack.c.l.b16 %v5935
      %v6133 = vunpack.c.l.b16 %v5936
      %v6134 = vunpack.c.l.b16 %v5937
      %v6135 = vunpack.c.l.b16 %v5938
      %v6136 = vpack.c.b16 %v6121, %v6120
      %v6137 = vpack.c.b16 %v6123, %v6122
      %v6138 = vpack.c.b16 %v6125, %v6124
      %v6139 = vpack.c.b16 %v6127, %v6126
      %v6140 = vpack.c.b16 %v6129, %v6128
      %v6141 = vpack.c.b16 %v6131, %v6130
      %v6142 = vpack.c.b16 %v6133, %v6132
      %v6143 = vpack.c.b16 %v6135, %v6134
      %6152 = vmatprep.subr.bf16.mxu0 0
      %6153 = vmatpush1.bf16.msra.mxu0 %v6143
      %6154 = vmatprep.subr.bf16.mxu0 0
      %6155 = vmatpush1.bf16.msra.mxu0 %v6142
      %6156 = vmatprep.subr.bf16.mxu0 0
      %6157 = vmatpush1.bf16.msra.mxu0 %v6141
      %6158 = vmatprep.subr.bf16.mxu0 0
      %6159 = vmatpush1.bf16.msra.mxu0 %v6140
      %6160 = vmatprep.subr.bf16.mxu0 0
      %6161 = vmatpush1.bf16.msra.mxu0 %v6139
      %6162 = vmatprep.subr.bf16.mxu0 0
      %6163 = vmatpush1.bf16.msra.mxu0 %v6138
      %6164 = vmatprep.subr.bf16.mxu0 0
      %6165 = vmatpush1.bf16.msra.mxu0 %v6137
      %6166 = vmatprep.subr.bf16.mxu0 0
      %6167 = vmatpush1.bf16.msra.mxu0 %v6136
      %6168 = vmatprep.subr.bf16.mxu0 0
      %6169 = vmatpush2.bf16.msra.mxu0 0
      %6170 = vmatprep.subr.bf16.mxu0 0
      %6171 = vmatpush2.bf16.msra.mxu0 0
      %6172 = vmatprep.subr.bf16.mxu0 0
      %6173 = vmatpush2.bf16.msra.mxu0 0
      %6174 = vmatprep.subr.bf16.mxu0 0
      %6175 = vmatpush2.bf16.msra.mxu0 0
      %6176 = vmatprep.subr.bf16.mxu0 0
      %6177 = vmatpush2.bf16.msra.mxu0 0
      %6178 = vmatprep.subr.bf16.mxu0 0
      %6179 = vmatpush2.bf16.msra.mxu0 0
      %6180 = vmatprep.subr.bf16.mxu0 0
      %6181 = vmatpush2.bf16.msra.mxu0 0
      %6182 = vmatprep.subr.bf16.mxu0 0
      %6183 = vmatpush2.bf16.msra.mxu0 0
      %6184 = vmatprep.mubr.bf16.mxu0 0
      %6185 = vmatmul.mubr.bf16.gmra.mxu0 %v5975
      %v6186 = vpop.f32.mrf.mxu0
      %v6187 = vadd.f32 %v6099, %v6186
      %v6188 = vpop.f32.mrf.mxu0
      %v6189 = vpop.f32.mrf.mxu0
      %v6190 = vpop.f32.mrf.mxu0
      %6191 = vdwg.mxu0
      %v6192 = vlaneseq
      %v6193 = vshrl.u32 %v6192, 7
      %v6194 = vsub.s32 0, %v6193
      %v6195 = vrot.slane %v5971, %v6194
      %v6196 = vadd.f32 %v6187, %v6195
      %v6197 = vmax.f32 %v6196, 0.0
      %v6198 = vpack.c.bf16 %v6197, %v6197
      %v6199 = vlaneseq
      %v6200 = vshrl.u32 %v6199, 7
      %v6201 = vsub.s32 0, %v6200
      %v6202 = vrot.slane %v5972, %v6201
      %v6219 = vunpack.c.l.b16 %v5955
      %v6220 = vunpack.c.l.b16 %v5956
      %v6221 = vunpack.c.l.b16 %v5957
      %v6222 = vunpack.c.l.b16 %v5958
      %v6223 = vunpack.c.l.b16 %v5959
      %v6224 = vunpack.c.l.b16 %v5960
      %v6225 = vunpack.c.l.b16 %v5961
      %v6226 = vunpack.c.l.b16 %v5962
      %v6227 = vunpack.c.l.b16 %v5963
      %v6228 = vunpack.c.l.b16 %v5964
      %v6229 = vunpack.c.l.b16 %v5965
      %v6230 = vunpack.c.l.b16 %v5966
      %v6231 = vunpack.c.l.b16 %v5967
      %v6232 = vunpack.c.l.b16 %v5968
      %v6233 = vunpack.c.l.b16 %v5969
      %v6234 = vunpack.c.l.b16 %v5970
      %v6235 = vpack.c.b16 %v6220, %v6219
      %v6236 = vpack.c.b16 %v6222, %v6221
      %v6237 = vpack.c.b16 %v6224, %v6223
      %v6238 = vpack.c.b16 %v6226, %v6225
      %v6239 = vpack.c.b16 %v6228, %v6227
      %v6240 = vpack.c.b16 %v6230, %v6229
      %v6241 = vpack.c.b16 %v6232, %v6231
      %v6242 = vpack.c.b16 %v6234, %v6233
      %6251 = vmatprep.subr.bf16.mxu0 0
      %6252 = vmatpush1.bf16.msra.mxu0 %v6242
      %6253 = vmatprep.subr.bf16.mxu0 0
      %6254 = vmatpush1.bf16.msra.mxu0 %v6241
      %6255 = vmatprep.subr.bf16.mxu0 0
      %6256 = vmatpush1.bf16.msra.mxu0 %v6240
      %6257 = vmatprep.subr.bf16.mxu0 0
      %6258 = vmatpush1.bf16.msra.mxu0 %v6239
      %6259 = vmatprep.subr.bf16.mxu0 0
      %6260 = vmatpush1.bf16.msra.mxu0 %v6238
      %6261 = vmatprep.subr.bf16.mxu0 0
      %6262 = vmatpush1.bf16.msra.mxu0 %v6237
      %6263 = vmatprep.subr.bf16.mxu0 0
      %6264 = vmatpush1.bf16.msra.mxu0 %v6236
      %6265 = vmatprep.subr.bf16.mxu0 0
      %6266 = vmatpush1.bf16.msra.mxu0 %v6235
      %6267 = vmatprep.subr.bf16.mxu0 0
      %6268 = vmatpush2.bf16.msra.mxu0 0
      %6269 = vmatprep.subr.bf16.mxu0 0
      %6270 = vmatpush2.bf16.msra.mxu0 0
      %6271 = vmatprep.subr.bf16.mxu0 0
      %6272 = vmatpush2.bf16.msra.mxu0 0
      %6273 = vmatprep.subr.bf16.mxu0 0
      %6274 = vmatpush2.bf16.msra.mxu0 0
      %6275 = vmatprep.subr.bf16.mxu0 0
      %6276 = vmatpush2.bf16.msra.mxu0 0
      %6277 = vmatprep.subr.bf16.mxu0 0
      %6278 = vmatpush2.bf16.msra.mxu0 0
      %6279 = vmatprep.subr.bf16.mxu0 0
      %6280 = vmatpush2.bf16.msra.mxu0 0
      %6281 = vmatprep.subr.bf16.mxu0 0
      %6282 = vmatpush2.bf16.msra.mxu0 0
      %6283 = vmatprep.mubr.bf16.mxu0 0
      %6284 = vmatmul.mubr.bf16.gmra.mxu0 %v6198
      %v6285 = vpop.f32.mrf.mxu0
      %v6286 = vadd.f32 %v6202, %v6285
      %v6287 = vpop.f32.mrf.mxu0
      %v6288 = vpop.f32.mrf.mxu0
      %v6289 = vpop.f32.mrf.mxu0
      %6290 = vdwg.mxu0
      %v6291 = vmax.f32 %v6286, 0.0
      %v6292 = vlaneseq
      %v6293 = vshrl.u32 %v6292, 7
      %v6294 = vsub.s32 0, %v6293
      %v6295 = vrot.slane %v5973, %v6294
      %v6296 = vmul.f32 %v6291, %v6295
      %6297 = vadd.xlane.f32.xlu0 %v6296
      %v6298 = vpop.xlane.xlu0 %6297
      %v6299 = vlaneseq
      %v6300 = vshrl.u32 %v6299, 7
      %v6301 = vsub.s32 0, %v6300
      %v6302 = vrot.slane %v5974, %v6301
      %v6303 = vadd.f32 %v6298, %v6302
      %vm6304 = vcmask 7168
      %6305 = vst.msk [vmem:[%s333] sm:$0xff] %vm6304, %v6303
      %p6306 = scmp.lt.s32.totalorder %s18, 1
      %s6307 = scalar_select %p6306, %s18, 1
      %s6308 = smul.addr %s6307, 8
      %s6309 = scalar_lea.vmem %s7, %s6308
      // Predicated region
      $region49: #{net_forward.1} parent=47 // pred_check
        %p6310 = pneg %p203
      $region50: #{net_forward.1} parent=47 // pred_check_branch
        %6312 = sbr.rel (%p6310) target = $region52
      $region51: #{net_forward.1} parent=47 // pred_region
        _
      $region52: #{net_forward.1} parent=47 // pred_fallthru
        _
    $region48: #{net_forward.1} parent=5 // pred_fallthru
      _
    %p6313 = scmp.le.s32.totalorder 2, %s13
    // Predicated region
    $region53: #{net_forward.1} parent=5 // pred_check
      %p6314 = pneg %p6313
    $region54: #{net_forward.1} parent=5 // pred_check_branch
      %6316 = sbr.rel (%p6314) target = $region56
    $region55: #{net_forward.1} parent=5 // pred_region
      %s6317 = ssub.s32 %s13, 2
      // Predicated region
      $region57: #{net_forward.1} parent=55 // pred_check
        %p6318 = pneg %p209
      $region58: #{net_forward.1} parent=55 // pred_check_branch
        %6320 = sbr.rel (%p6318) target = $region60
      $region59: #{net_forward.1} parent=55 // pred_region
        %p6321 = scmp.lt.s32.totalorder %s19, 1
        %s6322 = scalar_select %p6321, %s19, 1
        %s6323 = smul.addr %s6322, 8
        %s6324 = scalar_lea.vmem %s7, %s6323
      $region60: #{net_forward.1} parent=55 // pred_fallthru
        _
    $region56: #{net_forward.1} parent=5 // pred_fallthru
      _
  $region6: #{net_forward.1} parent=0 // loop_footer
    %s17 = sadd.s32 1, %s13
  $region7: #{net_forward.1} parent=0 // loop_footer_branch
    %12 = sbr.rel target = $region3
  $region8: #{net_forward.1} parent=0 // loop_exit
    _

</llo_original>
